<compile_context>
chip_gen: v6e
topology: v6e:2x2x1
jax: 0.10.0
libtpu: 0.0.40
codegen_flags: <defaults>
</compile_context>

<pallas_src>
import jax
import jax.numpy as jnp
from jax.experimental import pallas as pl
from jax.experimental.pallas import tpu as pltpu


_TM = 512                      # row tile for gridded matmul stages
_VMEM_LIMIT = 32 * 1024 * 1024  # well above actual need, <= scoped VMEM on all gens
_NEG_INF = -1e30
_FC1_PAD = 512                 # 500 -> 512 (lane-dense hidden dim)
_FC2_PAD = 128                 # 10  -> 128 (lane-dense logit store)


def _round_up(x, m):
    return (x + m - 1) // m * m


def _row_tiling(m):
    """(row_tile, padded_rows): full-array block when small, 512-row grid else."""
    if m <= _TM:
        return m, m
    return _TM, _round_up(m, _TM)


def _compiler_params():
    return pltpu.CompilerParams(
        dimension_semantics=("parallel",),   # row blocks are independent
        vmem_limit_bytes=_VMEM_LIMIT,
    )


# ----------------------------------------------------------------------------
# Kernels
# ----------------------------------------------------------------------------
def _conv_pool_relu_kernel(x0_ref, x1_ref, x2_ref, x3_ref, w_ref, b_ref, o_ref):
    """Fused 3x3 conv (im2col matmul) + bias + 2x2 max-pool + ReLU.

    x{0..3} are the im2col patch matrices of the four positions of each 2x2
    pooling window, so pooling is an elementwise max of four MXU results and
    the full-resolution conv output never exists in HBM.
    bf16 operands, f32 accumulation, f32 epilogue math, bf16 store.
    """
    w = w_ref[...]

    def mm(x_ref):
        return jnp.dot(x_ref[...], w, preferred_element_type=jnp.float32)

    m = jnp.maximum(jnp.maximum(mm(x0_ref), mm(x1_ref)),
                    jnp.maximum(mm(x2_ref), mm(x3_ref)))
    o_ref[...] = jnp.maximum(m + b_ref[...], 0.0).astype(o_ref.dtype)


def _mlp_head_kernel(x_ref, w1_ref, b1_ref, w2_ref, b2_ref, o_ref):
    """fc1 + ReLU + fc2 + log_softmax, fused; all tiles lane-dense (512 / 128)."""
    h = jnp.dot(x_ref[...], w1_ref[...], preferred_element_type=jnp.float32)
    h = jnp.maximum(h + b1_ref[...], 0.0).astype(w2_ref.dtype)           # bf16
    z = jnp.dot(h, w2_ref[...], preferred_element_type=jnp.float32) + b2_ref[...]
    z = z - jnp.max(z, axis=-1, keepdims=True)          # pads sit at ~-1e30
    o_ref[...] = z - jnp.log(jnp.sum(jnp.exp(z), axis=-1, keepdims=True))


# ----------------------------------------------------------------------------
# pallas_call wrappers
# ----------------------------------------------------------------------------
def _conv_pool_relu(phases, w_mat, b):
    """phases: 4 x [M, 9*Cin] bf16; w_mat: [9*Cin, Cout] bf16; b: [Cout] f32."""
    m, k = phases[0].shape
    cout = w_mat.shape[1]
    tm, m_pad = _row_tiling(m)
    if m_pad != m:
        phases = [jnp.pad(p, ((0, m_pad - m), (0, 0))) for p in phases]

    row_spec = pl.BlockSpec((tm, k), lambda i: (i, 0))
    full = lambda shape: pl.BlockSpec(shape, lambda i: (0, 0))

    out = pl.pallas_call(
        _conv_pool_relu_kernel,
        out_shape=jax.ShapeDtypeStruct((m_pad, cout), jnp.bfloat16),
        grid=(m_pad // tm,),
        in_specs=[row_spec] * 4 + [full(w_mat.shape), full((1, cout))],
        out_specs=pl.BlockSpec((tm, cout), lambda i: (i, 0)),
        compiler_params=_compiler_params(),
    )(*phases, w_mat, b.reshape(1, cout).astype(jnp.float32))
    return out[:m]


def _mlp_head(x, w1, b1, w2, b2):
    m = x.shape[0]
    k1, n1 = w1.shape
    n2 = w2.shape[1]
    tm, m_pad = _row_tiling(m)
    if m_pad != m:
        x = jnp.pad(x, ((0, m_pad - m), (0, 0)))

    full = lambda shape: pl.BlockSpec(shape, lambda i: (0, 0))

    out = pl.pallas_call(
        _mlp_head_kernel,
        out_shape=jax.ShapeDtypeStruct((m_pad, n2), jnp.float32),
        grid=(m_pad // tm,),
        in_specs=[pl.BlockSpec((tm, k1), lambda i: (i, 0)),
                  full((k1, n1)), full((1, n1)),
                  full((n1, n2)), full((1, n2))],
        out_specs=pl.BlockSpec((tm, n2), lambda i: (i, 0)),
        compiler_params=_compiler_params(),
    )(x, w1, b1.reshape(1, n1).astype(jnp.float32),
      w2, b2.reshape(1, n2).astype(jnp.float32))
    return out[:m]


# ----------------------------------------------------------------------------
# Glue: pooled-phase im2col (layout-only XLA work between stages)
# ----------------------------------------------------------------------------
def _pool_phase_patches(a):
    """a: [B, H, W, Cin] -> 4 patch matrices [B*H2*W2, 9*Cin], one per position
    of the 2x2 pooling window. Patch column order = (kh, kw, cin)."""
    bsz, h, w, cin = a.shape
    h2, w2 = h // 2, w // 2                      # floor, matches PyTorch pooling
    ap = jnp.pad(a, ((0, 0), (1, 1), (1, 1), (0, 0)))
    phases = []
    for ph in range(2):
        for pw in range(2):
            taps = []
            for kh in range(3):
                for kw in range(3):
                    rs, cs = ph + kh, pw + kw
                    taps.append(ap[:, rs:rs + 2 * h2:2, cs:cs + 2 * w2:2, :])
            p = jnp.stack(taps, axis=3)          # [B, H2, W2, 9, Cin]
            phases.append(p.reshape(bsz * h2 * w2, 9 * cin))
    return phases, (bsz, h2, w2)


def conv3x3_pool_relu(a, w_mat, b):
    """3x3 conv (stride 1, pad 1) + bias + max_pool2d(2,2) + ReLU, NHWC bf16."""
    cout = w_mat.shape[1]
    phases, (bsz, h2, w2) = _pool_phase_patches(a)
    out = _conv_pool_relu(phases, w_mat, b)
    return out.reshape(bsz, h2, w2, cout)


# ----------------------------------------------------------------------------
# Parameters (PyTorch layout) + one-time packing
# ----------------------------------------------------------------------------
def init_torch_params(key):
    ks = jax.random.split(key, 10)

    def init(k, shape, scale=0.05):
        return (scale * jax.random.normal(k, shape)).astype(jnp.float32)

    return {
        "conv1_w": init(ks[0], (16, 1, 3, 3)),  "conv1_b": init(ks[1], (16,)),
        "conv2_w": init(ks[2], (32, 16, 3, 3)), "conv2_b": init(ks[3], (32,)),
        "conv3_w": init(ks[4], (64, 32, 3, 3)), "conv3_b": init(ks[5], (64,)),
        "fc1_w": init(ks[6], (500, 64 * 3 * 3)), "fc1_b": init(ks[7], (500,)),
        "fc2_w": init(ks[8], (10, 500)),         "fc2_b": init(ks[9], (10,)),
    }


def pack_params(tp):
    """One-time weight packing, hoisted out of the forward pass."""
    def conv_w(w):                                   # [Cout,Cin,3,3] -> [9*Cin,Cout]
        cout, cin = w.shape[0], w.shape[1]
        return jnp.transpose(w, (2, 3, 1, 0)).reshape(9 * cin, cout).astype(jnp.bfloat16)

    # PyTorch flattens NCHW -> (c,h,w); our activations flatten NHWC -> (h,w,c).
    # Fold the permutation into the packed fc1 weight so no transpose is needed
    # on the activation path.
    w1 = tp["fc1_w"].reshape(500, 64, 3, 3)                       # [out,c,h,w]
    w1 = jnp.transpose(w1, (2, 3, 1, 0)).reshape(576, 500)        # [(h,w,c),out]
    w1 = jnp.pad(w1, ((0, 0), (0, _FC1_PAD - 500))).astype(jnp.bfloat16)
    b1 = jnp.pad(tp["fc1_b"], (0, _FC1_PAD - 500))                # pads -> 0

    w2 = jnp.transpose(tp["fc2_w"], (1, 0))                       # [500,10]
    w2 = jnp.pad(w2, ((0, _FC1_PAD - 500), (0, _FC2_PAD - 10))).astype(jnp.bfloat16)
    b2 = jnp.pad(tp["fc2_b"], (0, _FC2_PAD - 10),
                 constant_values=_NEG_INF)       # padded logits -> -1e30 (ignored)

    return {
        "c1w": conv_w(tp["conv1_w"]), "c1b": tp["conv1_b"],
        "c2w": conv_w(tp["conv2_w"]), "c2b": tp["conv2_b"],
        "c3w": conv_w(tp["conv3_w"]), "c3b": tp["conv3_b"],
        "w1": w1, "b1": b1, "w2": w2, "b2": b2,
    }


# ----------------------------------------------------------------------------
# Forward pass
# ----------------------------------------------------------------------------
def net_forward(packed, x_nchw):
    x = jnp.transpose(x_nchw, (0, 2, 3, 1)).astype(jnp.bfloat16)   # [B,28,28,1]
    x = conv3x3_pool_relu(x, packed["c1w"], packed["c1b"])         # [B,14,14,16]
    x = conv3x3_pool_relu(x, packed["c2w"], packed["c2b"])         # [B, 7, 7,32]
    x = conv3x3_pool_relu(x, packed["c3w"], packed["c3b"])         # [B, 3, 3,64]
    bsz = x.shape[0]
    x = x.reshape(bsz, 3 * 3 * 64)        # NHWC flatten; fc1 weight is permuted to match
    logits = _mlp_head(x, packed["w1"], packed["b1"], packed["w2"], packed["b2"])
    return logits[:, :10]                 # drop lane padding of the logit tile


# ----------------------------------------------------------------------------
# Pure-JAX reference (implements the PyTorch module exactly, f32)
# ----------------------------------------------------------------------------
def _reference_forward(tp, x_nchw):
    def conv(x, w, b):
        y = jax.lax.conv_general_dilated(
            x, w, window_strides=(1, 1), padding=((1, 1), (1, 1)),
            dimension_numbers=("NCHW", "OIHW", "NCHW"))
        return y + b.reshape(1, -1, 1, 1)

    def pool_relu(x):
        y = jax.lax.reduce_window(x, -jnp.inf, jax.lax.max,
                                  (1, 1, 2, 2), (1, 1, 2, 2), "VALID")
        return jnp.maximum(y, 0.0)

    x = pool_relu(conv(x_nchw, tp["conv1_w"], tp["conv1_b"]))
    x = pool_relu(conv(x, tp["conv2_w"], tp["conv2_b"]))
    x = pool_relu(conv(x, tp["conv3_w"], tp["conv3_b"]))
    x = x.reshape(x.shape[0], -1)                          # NCHW flatten (torch order)
    x = jnp.maximum(x @ tp["fc1_w"].T + tp["fc1_b"], 0.0)
    z = x @ tp["fc2_w"].T + tp["fc2_b"]
    return jax.nn.log_softmax(z, axis=-1)


if __name__ == "__main__":
    key = jax.random.PRNGKey(0)
    k_params, k_x = jax.random.split(key)

    torch_params = init_torch_params(k_params)
    packed = pack_params(torch_params)

    batch = 8
    x = jax.random.normal(k_x, (batch, 1, 28, 28), dtype=jnp.float32)

    out = jax.block_until_ready(jax.jit(net_forward)(packed, x))

    assert out.shape == (batch, 10)
    assert out.dtype == jnp.float32
    assert bool(jnp.all(jnp.isfinite(out)))
    # log_softmax rows sum (in prob space) to 1
    assert jnp.allclose(jnp.sum(jnp.exp(out), axis=-1), 1.0, atol=1e-3)
    # match the f32 XLA reference (bf16 MXU operands -> small drift allowed)
    ref = jax.block_until_ready(jax.jit(_reference_forward)(torch_params, x))
    assert jnp.allclose(out, ref, atol=5e-2), float(jnp.max(jnp.abs(out - ref)))

    print("KERNEL_OK")
</pallas_src>

<mosaic_0001>
module attributes {stable_mosaic.version = 11 : i64} {
  func.func @_conv_pool_relu_kernel(%arg0: i32, %arg1: memref<512x9xbf16, #tpu.memory_space<vmem>>, %arg2: memref<512x9xbf16, #tpu.memory_space<vmem>>, %arg3: memref<512x9xbf16, #tpu.memory_space<vmem>>, %arg4: memref<512x9xbf16, #tpu.memory_space<vmem>>, %arg5: memref<9x16xbf16, #tpu.memory_space<vmem>>, %arg6: memref<1x16xf32, #tpu.memory_space<vmem>>, %arg7: memref<512x16xbf16, #tpu.memory_space<vmem>>) attributes {dimension_semantics = [#tpu.dimension_semantics<parallel>], iteration_bounds = array<i64: 4>, scalar_prefetch = 0 : i64, scratch_operands = 0 : i64, tpu.core_type = #tpu.core_type<tc>, window_params = [{transform_indices = @transform_0, window_bounds = array<i64: 512, 9>}, {transform_indices = @transform_1, window_bounds = array<i64: 512, 9>}, {transform_indices = @transform_2, window_bounds = array<i64: 512, 9>}, {transform_indices = @transform_3, window_bounds = array<i64: 512, 9>}, {pipeline_mode = #tpu.pipeline_mode<synchronous>, transform_indices = @transform_4, window_bounds = array<i64: 9, 16>}, {pipeline_mode = #tpu.pipeline_mode<synchronous>, transform_indices = @transform_5, window_bounds = array<i64: 1, 16>}, {transform_indices = @transform_6, window_bounds = array<i64: 512, 16>}]} {
    %c0 = arith.constant 0 : index
    %c0_0 = arith.constant 0 : index
    %0 = vector.load %arg5[%c0, %c0_0] : memref<9x16xbf16, #tpu.memory_space<vmem>>, vector<9x16xbf16>
    %c0_1 = arith.constant 0 : index
    %c0_2 = arith.constant 0 : index
    %1 = vector.load %arg1[%c0_1, %c0_2] : memref<512x9xbf16, #tpu.memory_space<vmem>>, vector<512x9xbf16>
    %cst = arith.constant dense<0.000000e+00> : vector<512x16xf32>
    %2 = tpu.matmul %1, %0, %cst {dimension_numbers = #tpu.dot_dimension_numbers<[1], [0], [0], [1], [0, 0, 1, 1], [], []>} : vector<512x9xbf16>, vector<9x16xbf16>, vector<512x16xf32> -> vector<512x16xf32>
    %c0_3 = arith.constant 0 : index
    %c0_4 = arith.constant 0 : index
    %3 = vector.load %arg2[%c0_3, %c0_4] : memref<512x9xbf16, #tpu.memory_space<vmem>>, vector<512x9xbf16>
    %cst_5 = arith.constant dense<0.000000e+00> : vector<512x16xf32>
    %4 = tpu.matmul %3, %0, %cst_5 {dimension_numbers = #tpu.dot_dimension_numbers<[1], [0], [0], [1], [0, 0, 1, 1], [], []>} : vector<512x9xbf16>, vector<9x16xbf16>, vector<512x16xf32> -> vector<512x16xf32>
    %5 = arith.maximumf %2, %4 : vector<512x16xf32>
    %c0_6 = arith.constant 0 : index
    %c0_7 = arith.constant 0 : index
    %6 = vector.load %arg3[%c0_6, %c0_7] : memref<512x9xbf16, #tpu.memory_space<vmem>>, vector<512x9xbf16>
    %cst_8 = arith.constant dense<0.000000e+00> : vector<512x16xf32>
    %7 = tpu.matmul %6, %0, %cst_8 {dimension_numbers = #tpu.dot_dimension_numbers<[1], [0], [0], [1], [0, 0, 1, 1], [], []>} : vector<512x9xbf16>, vector<9x16xbf16>, vector<512x16xf32> -> vector<512x16xf32>
    %c0_9 = arith.constant 0 : index
    %c0_10 = arith.constant 0 : index
    %8 = vector.load %arg4[%c0_9, %c0_10] : memref<512x9xbf16, #tpu.memory_space<vmem>>, vector<512x9xbf16>
    %cst_11 = arith.constant dense<0.000000e+00> : vector<512x16xf32>
    %9 = tpu.matmul %8, %0, %cst_11 {dimension_numbers = #tpu.dot_dimension_numbers<[1], [0], [0], [1], [0, 0, 1, 1], [], []>} : vector<512x9xbf16>, vector<9x16xbf16>, vector<512x16xf32> -> vector<512x16xf32>
    %10 = arith.maximumf %7, %9 : vector<512x16xf32>
    %11 = arith.maximumf %5, %10 : vector<512x16xf32>
    %c0_12 = arith.constant 0 : index
    %c0_13 = arith.constant 0 : index
    %12 = vector.load %arg6[%c0_12, %c0_13] : memref<1x16xf32, #tpu.memory_space<vmem>>, vector<1x16xf32>
    %13 = vector.broadcast %12 : vector<1x16xf32> to vector<512x16xf32>
    %14 = arith.addf %11, %13 : vector<512x16xf32>
    %cst_14 = arith.constant 0.000000e+00 : f32
    %15 = vector.broadcast %cst_14 : f32 to vector<512x16xf32>
    %16 = arith.maximumf %14, %15 : vector<512x16xf32>
    %17 = arith.truncf %16 : vector<512x16xf32> to vector<512x16xbf16>
    %c0_15 = arith.constant 0 : index
    %c0_16 = arith.constant 0 : index
    %18 = vector.load %arg7[%c0_15, %c0_16] : memref<512x16xbf16, #tpu.memory_space<vmem>>, vector<512x16xbf16>
    tpu.vector_store %arg7[%c0_15, %c0_16], %17 {strides = array<i32>} : memref<512x16xbf16, #tpu.memory_space<vmem>>, vector<512x16xbf16>,
    return
  }
  func.func @transform_0(%arg0: i32) -> (i32, i32) {
    %c0_i32 = arith.constant 0 : i32
    %c0_i32_0 = arith.constant 0 : i32
    return %arg0, %c0_i32 : i32, i32
  }
  func.func @transform_1(%arg0: i32) -> (i32, i32) {
    %c0_i32 = arith.constant 0 : i32
    %c0_i32_0 = arith.constant 0 : i32
    return %arg0, %c0_i32 : i32, i32
  }
  func.func @transform_2(%arg0: i32) -> (i32, i32) {
    %c0_i32 = arith.constant 0 : i32
    %c0_i32_0 = arith.constant 0 : i32
    return %arg0, %c0_i32 : i32, i32
  }
  func.func @transform_3(%arg0: i32) -> (i32, i32) {
    %c0_i32 = arith.constant 0 : i32
    %c0_i32_0 = arith.constant 0 : i32
    return %arg0, %c0_i32 : i32, i32
  }
  func.func @transform_4(%arg0: i32) -> (i32, i32) {
    %c0_i32 = arith.constant 0 : i32
    %c0_i32_0 = arith.constant 0 : i32
    %c0_i32_1 = arith.constant 0 : i32
    return %c0_i32, %c0_i32_0 : i32, i32
  }
  func.func @transform_5(%arg0: i32) -> (i32, i32) {
    %c0_i32 = arith.constant 0 : i32
    %c0_i32_0 = arith.constant 0 : i32
    %c0_i32_1 = arith.constant 0 : i32
    return %c0_i32, %c0_i32_0 : i32, i32
  }
  func.func @transform_6(%arg0: i32) -> (i32, i32) {
    %c0_i32 = arith.constant 0 : i32
    %c0_i32_0 = arith.constant 0 : i32
    return %arg0, %c0_i32 : i32, i32
  }
}

module attributes {stable_mosaic.version = 11 : i64} {
  func.func @_conv_pool_relu_kernel(%arg0: i32, %arg1: memref<392x144xbf16, #tpu.memory_space<vmem>>, %arg2: memref<392x144xbf16, #tpu.memory_space<vmem>>, %arg3: memref<392x144xbf16, #tpu.memory_space<vmem>>, %arg4: memref<392x144xbf16, #tpu.memory_space<vmem>>, %arg5: memref<144x32xbf16, #tpu.memory_space<vmem>>, %arg6: memref<1x32xf32, #tpu.memory_space<vmem>>, %arg7: memref<392x32xbf16, #tpu.memory_space<vmem>>) attributes {dimension_semantics = [#tpu.dimension_semantics<parallel>], iteration_bounds = array<i64: 1>, scalar_prefetch = 0 : i64, scratch_operands = 0 : i64, tpu.core_type = #tpu.core_type<tc>, window_params = [{transform_indices = @transform_0, window_bounds = array<i64: 392, 144>}, {transform_indices = @transform_1, window_bounds = array<i64: 392, 144>}, {transform_indices = @transform_2, window_bounds = array<i64: 392, 144>}, {transform_indices = @transform_3, window_bounds = array<i64: 392, 144>}, {pipeline_mode = #tpu.pipeline_mode<synchronous>, transform_indices = @transform_4, window_bounds = array<i64: 144, 32>}, {pipeline_mode = #tpu.pipeline_mode<synchronous>, transform_indices = @transform_5, window_bounds = array<i64: 1, 32>}, {transform_indices = @transform_6, window_bounds = array<i64: 392, 32>}]} {
    %c0 = arith.constant 0 : index
    %c0_0 = arith.constant 0 : index
    %0 = vector.load %arg5[%c0, %c0_0] : memref<144x32xbf16, #tpu.memory_space<vmem>>, vector<144x32xbf16>
    %c0_1 = arith.constant 0 : index
    %c0_2 = arith.constant 0 : index
    %1 = vector.load %arg1[%c0_1, %c0_2] : memref<392x144xbf16, #tpu.memory_space<vmem>>, vector<392x144xbf16>
    %cst = arith.constant dense<0.000000e+00> : vector<392x32xf32>
    %2 = tpu.matmul %1, %0, %cst {dimension_numbers = #tpu.dot_dimension_numbers<[1], [0], [0], [1], [0, 0, 1, 1], [], []>} : vector<392x144xbf16>, vector<144x32xbf16>, vector<392x32xf32> -> vector<392x32xf32>
    %c0_3 = arith.constant 0 : index
    %c0_4 = arith.constant 0 : index
    %3 = vector.load %arg2[%c0_3, %c0_4] : memref<392x144xbf16, #tpu.memory_space<vmem>>, vector<392x144xbf16>
    %cst_5 = arith.constant dense<0.000000e+00> : vector<392x32xf32>
    %4 = tpu.matmul %3, %0, %cst_5 {dimension_numbers = #tpu.dot_dimension_numbers<[1], [0], [0], [1], [0, 0, 1, 1], [], []>} : vector<392x144xbf16>, vector<144x32xbf16>, vector<392x32xf32> -> vector<392x32xf32>
    %5 = arith.maximumf %2, %4 : vector<392x32xf32>
    %c0_6 = arith.constant 0 : index
    %c0_7 = arith.constant 0 : index
    %6 = vector.load %arg3[%c0_6, %c0_7] : memref<392x144xbf16, #tpu.memory_space<vmem>>, vector<392x144xbf16>
    %cst_8 = arith.constant dense<0.000000e+00> : vector<392x32xf32>
    %7 = tpu.matmul %6, %0, %cst_8 {dimension_numbers = #tpu.dot_dimension_numbers<[1], [0], [0], [1], [0, 0, 1, 1], [], []>} : vector<392x144xbf16>, vector<144x32xbf16>, vector<392x32xf32> -> vector<392x32xf32>
    %c0_9 = arith.constant 0 : index
    %c0_10 = arith.constant 0 : index
    %8 = vector.load %arg4[%c0_9, %c0_10] : memref<392x144xbf16, #tpu.memory_space<vmem>>, vector<392x144xbf16>
    %cst_11 = arith.constant dense<0.000000e+00> : vector<392x32xf32>
    %9 = tpu.matmul %8, %0, %cst_11 {dimension_numbers = #tpu.dot_dimension_numbers<[1], [0], [0], [1], [0, 0, 1, 1], [], []>} : vector<392x144xbf16>, vector<144x32xbf16>, vector<392x32xf32> -> vector<392x32xf32>
    %10 = arith.maximumf %7, %9 : vector<392x32xf32>
    %11 = arith.maximumf %5, %10 : vector<392x32xf32>
    %c0_12 = arith.constant 0 : index
    %c0_13 = arith.constant 0 : index
    %12 = vector.load %arg6[%c0_12, %c0_13] : memref<1x32xf32, #tpu.memory_space<vmem>>, vector<1x32xf32>
    %13 = vector.broadcast %12 : vector<1x32xf32> to vector<392x32xf32>
    %14 = arith.addf %11, %13 : vector<392x32xf32>
    %cst_14 = arith.constant 0.000000e+00 : f32
    %15 = vector.broadcast %cst_14 : f32 to vector<392x32xf32>
    %16 = arith.maximumf %14, %15 : vector<392x32xf32>
    %17 = arith.truncf %16 : vector<392x32xf32> to vector<392x32xbf16>
    %c0_15 = arith.constant 0 : index
    %c0_16 = arith.constant 0 : index
    %18 = vector.load %arg7[%c0_15, %c0_16] : memref<392x32xbf16, #tpu.memory_space<vmem>>, vector<392x32xbf16>
    tpu.vector_store %arg7[%c0_15, %c0_16], %17 {strides = array<i32>} : memref<392x32xbf16, #tpu.memory_space<vmem>>, vector<392x32xbf16>,
    return
  }
  func.func @transform_0(%arg0: i32) -> (i32, i32) {
    %c0_i32 = arith.constant 0 : i32
    %c0_i32_0 = arith.constant 0 : i32
    return %arg0, %c0_i32 : i32, i32
  }
  func.func @transform_1(%arg0: i32) -> (i32, i32) {
    %c0_i32 = arith.constant 0 : i32
    %c0_i32_0 = arith.constant 0 : i32
    return %arg0, %c0_i32 : i32, i32
  }
  func.func @transform_2(%arg0: i32) -> (i32, i32) {
    %c0_i32 = arith.constant 0 : i32
    %c0_i32_0 = arith.constant 0 : i32
    return %arg0, %c0_i32 : i32, i32
  }
  func.func @transform_3(%arg0: i32) -> (i32, i32) {
    %c0_i32 = arith.constant 0 : i32
    %c0_i32_0 = arith.constant 0 : i32
    return %arg0, %c0_i32 : i32, i32
  }
  func.func @transform_4(%arg0: i32) -> (i32, i32) {
    %c0_i32 = arith.constant 0 : i32
    %c0_i32_0 = arith.constant 0 : i32
    %c0_i32_1 = arith.constant 0 : i32
    return %c0_i32, %c0_i32_0 : i32, i32
  }
  func.func @transform_5(%arg0: i32) -> (i32, i32) {
    %c0_i32 = arith.constant 0 : i32
    %c0_i32_0 = arith.constant 0 : i32
    %c0_i32_1 = arith.constant 0 : i32
    return %c0_i32, %c0_i32_0 : i32, i32
  }
  func.func @transform_6(%arg0: i32) -> (i32, i32) {
    %c0_i32 = arith.constant 0 : i32
    %c0_i32_0 = arith.constant 0 : i32
    return %arg0, %c0_i32 : i32, i32
  }
}

module attributes {stable_mosaic.version = 11 : i64} {
  func.func @_conv_pool_relu_kernel(%arg0: i32, %arg1: memref<72x288xbf16, #tpu.memory_space<vmem>>, %arg2: memref<72x288xbf16, #tpu.memory_space<vmem>>, %arg3: memref<72x288xbf16, #tpu.memory_space<vmem>>, %arg4: memref<72x288xbf16, #tpu.memory_space<vmem>>, %arg5: memref<288x64xbf16, #tpu.memory_space<vmem>>, %arg6: memref<1x64xf32, #tpu.memory_space<vmem>>, %arg7: memref<72x64xbf16, #tpu.memory_space<vmem>>) attributes {dimension_semantics = [#tpu.dimension_semantics<parallel>], iteration_bounds = array<i64: 1>, scalar_prefetch = 0 : i64, scratch_operands = 0 : i64, tpu.core_type = #tpu.core_type<tc>, window_params = [{transform_indices = @transform_0, window_bounds = array<i64: 72, 288>}, {transform_indices = @transform_1, window_bounds = array<i64: 72, 288>}, {transform_indices = @transform_2, window_bounds = array<i64: 72, 288>}, {transform_indices = @transform_3, window_bounds = array<i64: 72, 288>}, {pipeline_mode = #tpu.pipeline_mode<synchronous>, transform_indices = @transform_4, window_bounds = array<i64: 288, 64>}, {pipeline_mode = #tpu.pipeline_mode<synchronous>, transform_indices = @transform_5, window_bounds = array<i64: 1, 64>}, {transform_indices = @transform_6, window_bounds = array<i64: 72, 64>}]} {
    %c0 = arith.constant 0 : index
    %c0_0 = arith.constant 0 : index
    %0 = vector.load %arg5[%c0, %c0_0] : memref<288x64xbf16, #tpu.memory_space<vmem>>, vector<288x64xbf16>
    %c0_1 = arith.constant 0 : index
    %c0_2 = arith.constant 0 : index
    %1 = vector.load %arg1[%c0_1, %c0_2] : memref<72x288xbf16, #tpu.memory_space<vmem>>, vector<72x288xbf16>
    %cst = arith.constant dense<0.000000e+00> : vector<72x64xf32>
    %2 = tpu.matmul %1, %0, %cst {dimension_numbers = #tpu.dot_dimension_numbers<[1], [0], [0], [1], [0, 0, 1, 1], [], []>} : vector<72x288xbf16>, vector<288x64xbf16>, vector<72x64xf32> -> vector<72x64xf32>
    %c0_3 = arith.constant 0 : index
    %c0_4 = arith.constant 0 : index
    %3 = vector.load %arg2[%c0_3, %c0_4] : memref<72x288xbf16, #tpu.memory_space<vmem>>, vector<72x288xbf16>
    %cst_5 = arith.constant dense<0.000000e+00> : vector<72x64xf32>
    %4 = tpu.matmul %3, %0, %cst_5 {dimension_numbers = #tpu.dot_dimension_numbers<[1], [0], [0], [1], [0, 0, 1, 1], [], []>} : vector<72x288xbf16>, vector<288x64xbf16>, vector<72x64xf32> -> vector<72x64xf32>
    %5 = arith.maximumf %2, %4 : vector<72x64xf32>
    %c0_6 = arith.constant 0 : index
    %c0_7 = arith.constant 0 : index
    %6 = vector.load %arg3[%c0_6, %c0_7] : memref<72x288xbf16, #tpu.memory_space<vmem>>, vector<72x288xbf16>
    %cst_8 = arith.constant dense<0.000000e+00> : vector<72x64xf32>
    %7 = tpu.matmul %6, %0, %cst_8 {dimension_numbers = #tpu.dot_dimension_numbers<[1], [0], [0], [1], [0, 0, 1, 1], [], []>} : vector<72x288xbf16>, vector<288x64xbf16>, vector<72x64xf32> -> vector<72x64xf32>
    %c0_9 = arith.constant 0 : index
    %c0_10 = arith.constant 0 : index
    %8 = vector.load %arg4[%c0_9, %c0_10] : memref<72x288xbf16, #tpu.memory_space<vmem>>, vector<72x288xbf16>
    %cst_11 = arith.constant dense<0.000000e+00> : vector<72x64xf32>
    %9 = tpu.matmul %8, %0, %cst_11 {dimension_numbers = #tpu.dot_dimension_numbers<[1], [0], [0], [1], [0, 0, 1, 1], [], []>} : vector<72x288xbf16>, vector<288x64xbf16>, vector<72x64xf32> -> vector<72x64xf32>
    %10 = arith.maximumf %7, %9 : vector<72x64xf32>
    %11 = arith.maximumf %5, %10 : vector<72x64xf32>
    %c0_12 = arith.constant 0 : index
    %c0_13 = arith.constant 0 : index
    %12 = vector.load %arg6[%c0_12, %c0_13] : memref<1x64xf32, #tpu.memory_space<vmem>>, vector<1x64xf32>
    %13 = vector.broadcast %12 : vector<1x64xf32> to vector<72x64xf32>
    %14 = arith.addf %11, %13 : vector<72x64xf32>
    %cst_14 = arith.constant 0.000000e+00 : f32
    %15 = vector.broadcast %cst_14 : f32 to vector<72x64xf32>
    %16 = arith.maximumf %14, %15 : vector<72x64xf32>
    %17 = arith.truncf %16 : vector<72x64xf32> to vector<72x64xbf16>
    %c0_15 = arith.constant 0 : index
    %c0_16 = arith.constant 0 : index
    %18 = vector.load %arg7[%c0_15, %c0_16] : memref<72x64xbf16, #tpu.memory_space<vmem>>, vector<72x64xbf16>
    tpu.vector_store %arg7[%c0_15, %c0_16], %17 {strides = array<i32>} : memref<72x64xbf16, #tpu.memory_space<vmem>>, vector<72x64xbf16>,
    return
  }
  func.func @transform_0(%arg0: i32) -> (i32, i32) {
    %c0_i32 = arith.constant 0 : i32
    %c0_i32_0 = arith.constant 0 : i32
    return %arg0, %c0_i32 : i32, i32
  }
  func.func @transform_1(%arg0: i32) -> (i32, i32) {
    %c0_i32 = arith.constant 0 : i32
    %c0_i32_0 = arith.constant 0 : i32
    return %arg0, %c0_i32 : i32, i32
  }
  func.func @transform_2(%arg0: i32) -> (i32, i32) {
    %c0_i32 = arith.constant 0 : i32
    %c0_i32_0 = arith.constant 0 : i32
    return %arg0, %c0_i32 : i32, i32
  }
  func.func @transform_3(%arg0: i32) -> (i32, i32) {
    %c0_i32 = arith.constant 0 : i32
    %c0_i32_0 = arith.constant 0 : i32
    return %arg0, %c0_i32 : i32, i32
  }
  func.func @transform_4(%arg0: i32) -> (i32, i32) {
    %c0_i32 = arith.constant 0 : i32
    %c0_i32_0 = arith.constant 0 : i32
    %c0_i32_1 = arith.constant 0 : i32
    return %c0_i32, %c0_i32_0 : i32, i32
  }
  func.func @transform_5(%arg0: i32) -> (i32, i32) {
    %c0_i32 = arith.constant 0 : i32
    %c0_i32_0 = arith.constant 0 : i32
    %c0_i32_1 = arith.constant 0 : i32
    return %c0_i32, %c0_i32_0 : i32, i32
  }
  func.func @transform_6(%arg0: i32) -> (i32, i32) {
    %c0_i32 = arith.constant 0 : i32
    %c0_i32_0 = arith.constant 0 : i32
    return %arg0, %c0_i32 : i32, i32
  }
}

module attributes {stable_mosaic.version = 11 : i64} {
  func.func @_mlp_head_kernel(%arg0: i32, %arg1: memref<8x576xbf16, #tpu.memory_space<vmem>>, %arg2: memref<576x512xbf16, #tpu.memory_space<vmem>>, %arg3: memref<1x512xf32, #tpu.memory_space<vmem>>, %arg4: memref<512x128xbf16, #tpu.memory_space<vmem>>, %arg5: memref<1x128xf32, #tpu.memory_space<vmem>>, %arg6: memref<8x128xf32, #tpu.memory_space<vmem>>) attributes {dimension_semantics = [#tpu.dimension_semantics<parallel>], iteration_bounds = array<i64: 1>, scalar_prefetch = 0 : i64, scratch_operands = 0 : i64, tpu.core_type = #tpu.core_type<tc>, window_params = [{transform_indices = @transform_0, window_bounds = array<i64: 8, 576>}, {pipeline_mode = #tpu.pipeline_mode<synchronous>, transform_indices = @transform_1, window_bounds = array<i64: 576, 512>}, {pipeline_mode = #tpu.pipeline_mode<synchronous>, transform_indices = @transform_2, window_bounds = array<i64: 1, 512>}, {pipeline_mode = #tpu.pipeline_mode<synchronous>, transform_indices = @transform_3, window_bounds = array<i64: 512, 128>}, {pipeline_mode = #tpu.pipeline_mode<synchronous>, transform_indices = @transform_4, window_bounds = array<i64: 1, 128>}, {transform_indices = @transform_5, window_bounds = array<i64: 8, 128>}]} {
    %c0 = arith.constant 0 : index
    %c0_0 = arith.constant 0 : index
    %0 = vector.load %arg1[%c0, %c0_0] : memref<8x576xbf16, #tpu.memory_space<vmem>>, vector<8x576xbf16>
    %c0_1 = arith.constant 0 : index
    %c0_2 = arith.constant 0 : index
    %1 = vector.load %arg2[%c0_1, %c0_2] : memref<576x512xbf16, #tpu.memory_space<vmem>>, vector<576x512xbf16>
    %cst = arith.constant dense<0.000000e+00> : vector<8x512xf32>
    %2 = tpu.matmul %0, %1, %cst {dimension_numbers = #tpu.dot_dimension_numbers<[1], [0], [0], [1], [0, 0, 1, 1], [], []>} : vector<8x576xbf16>, vector<576x512xbf16>, vector<8x512xf32> -> vector<8x512xf32>
    %c0_3 = arith.constant 0 : index
    %c0_4 = arith.constant 0 : index
    %3 = vector.load %arg3[%c0_3, %c0_4] : memref<1x512xf32, #tpu.memory_space<vmem>>, vector<1x512xf32>
    %4 = vector.broadcast %3 : vector<1x512xf32> to vector<8x512xf32>
    %5 = arith.addf %2, %4 : vector<8x512xf32>
    %cst_5 = arith.constant 0.000000e+00 : f32
    %6 = vector.broadcast %cst_5 : f32 to vector<8x512xf32>
    %7 = arith.maximumf %5, %6 : vector<8x512xf32>
    %8 = arith.truncf %7 : vector<8x512xf32> to vector<8x512xbf16>
    %c0_6 = arith.constant 0 : index
    %c0_7 = arith.constant 0 : index
    %9 = vector.load %arg4[%c0_6, %c0_7] : memref<512x128xbf16, #tpu.memory_space<vmem>>, vector<512x128xbf16>
    %cst_8 = arith.constant dense<0.000000e+00> : vector<8x128xf32>
    %10 = tpu.matmul %8, %9, %cst_8 {dimension_numbers = #tpu.dot_dimension_numbers<[1], [0], [0], [1], [0, 0, 1, 1], [], []>} : vector<8x512xbf16>, vector<512x128xbf16>, vector<8x128xf32> -> vector<8x128xf32>
    %c0_9 = arith.constant 0 : index
    %c0_10 = arith.constant 0 : index
    %11 = vector.load %arg5[%c0_9, %c0_10] : memref<1x128xf32, #tpu.memory_space<vmem>>, vector<1x128xf32>
    %12 = vector.broadcast %11 : vector<1x128xf32> to vector<8x128xf32>
    %13 = arith.addf %10, %12 : vector<8x128xf32>
    %cst_11 = arith.constant dense<0xFF800000> : vector<8xf32>
    %14 = vector.multi_reduction <maximumf>, %13, %cst_11 [1] : vector<8x128xf32> to vector<8xf32>
    %15 = vector.shape_cast %14 : vector<8xf32> to vector<8x1xf32>
    %16 = vector.broadcast %15 : vector<8x1xf32> to vector<8x128xf32>
    %17 = arith.subf %13, %16 : vector<8x128xf32>
    %18 = math.exp %17 : vector<8x128xf32>
    %cst_12 = arith.constant dense<0.000000e+00> : vector<8xf32>
    %19 = vector.multi_reduction <add>, %18, %cst_12 [1] : vector<8x128xf32> to vector<8xf32>
    %20 = vector.shape_cast %19 : vector<8xf32> to vector<8x1xf32>
    %21 = math.log %20 : vector<8x1xf32>
    %22 = vector.broadcast %21 : vector<8x1xf32> to vector<8x128xf32>
    %23 = arith.subf %17, %22 : vector<8x128xf32>
    %c0_13 = arith.constant 0 : index
    %c0_14 = arith.constant 0 : index
    %24 = vector.load %arg6[%c0_13, %c0_14] : memref<8x128xf32, #tpu.memory_space<vmem>>, vector<8x128xf32>
    tpu.vector_store %arg6[%c0_13, %c0_14], %23 {strides = array<i32>} : memref<8x128xf32, #tpu.memory_space<vmem>>, vector<8x128xf32>,
    return
  }
  func.func @transform_0(%arg0: i32) -> (i32, i32) {
    %c0_i32 = arith.constant 0 : i32
    %c0_i32_0 = arith.constant 0 : i32
    return %arg0, %c0_i32 : i32, i32
  }
  func.func @transform_1(%arg0: i32) -> (i32, i32) {
    %c0_i32 = arith.constant 0 : i32
    %c0_i32_0 = arith.constant 0 : i32
    %c0_i32_1 = arith.constant 0 : i32
    return %c0_i32, %c0_i32_0 : i32, i32
  }
  func.func @transform_2(%arg0: i32) -> (i32, i32) {
    %c0_i32 = arith.constant 0 : i32
    %c0_i32_0 = arith.constant 0 : i32
    %c0_i32_1 = arith.constant 0 : i32
    return %c0_i32, %c0_i32_0 : i32, i32
  }
  func.func @transform_3(%arg0: i32) -> (i32, i32) {
    %c0_i32 = arith.constant 0 : i32
    %c0_i32_0 = arith.constant 0 : i32
    %c0_i32_1 = arith.constant 0 : i32
    return %c0_i32, %c0_i32_0 : i32, i32
  }
  func.func @transform_4(%arg0: i32) -> (i32, i32) {
    %c0_i32 = arith.constant 0 : i32
    %c0_i32_0 = arith.constant 0 : i32
    %c0_i32_1 = arith.constant 0 : i32
    return %c0_i32, %c0_i32_0 : i32, i32
  }
  func.func @transform_5(%arg0: i32) -> (i32, i32) {
    %c0_i32 = arith.constant 0 : i32
    %c0_i32_0 = arith.constant 0 : i32
    return %arg0, %c0_i32 : i32, i32
  }
}

</mosaic_0001>

<llo_original>
// kernel: net_forward.4
$region0: #{net_forward.4}
  #allocation0 [shape = 'u32[]', space=smem, size = 0x4, offset = 0x4, fixed_abs, tag = 'smem constant byte address 0x4 - core index']
  #allocation1 [shape = 'u32[144,128]{1,0:T(1,128)}', space=vmem, size = 0x12000, scoped, tag = 'internal scratch']
  %s0 = inlined_call_operand.vmem [shape: bf16[2048,9], index: 0, kind: input, shape index: {}]
  %s1 = inlined_call_operand.vmem [shape: bf16[2048,9], index: 1, kind: input, shape index: {}]
  %s2 = inlined_call_operand.vmem [shape: bf16[2048,9], index: 2, kind: input, shape index: {}]
  %s3 = inlined_call_operand.vmem [shape: bf16[2048,9], index: 3, kind: input, shape index: {}]
  %s4 = inlined_call_operand.vmem [shape: bf16[9,16], index: 4, kind: input, shape index: {}]
  %s5 = inlined_call_operand.vmem [shape: f32[1,16], index: 5, kind: input, shape index: {}]
  %s6 = inlined_call_operand.vmem [shape: bf16[2048,16], index: 6, kind: output, shape index: {}]
  %s7 = sld [smem:[#allocation0]]
  $region57: #{net_forward.4} parent=0
    _
  %s9 = ssub.s32 1, %s7
  %s10 = scalar_select 0, %s9, %s7
  loop: start=0, step=1, limit=6
  $region2: #{net_forward.4} parent=0 // loop_pre_header
    _
  $region3: #{net_forward.4} parent=0 // loop_header
    %s12 = sphi 0, %s16
    %p13 = scmp.ge.s32.totalorder %s12, 6
    %s22 = sphi 0, %s24
    %s25 = sphi 0, %s22
    %s26 = sphi 0, %s25
    %s42 = sphi 0, %s26
    %s48 = sphi 0, %s50
    %s51 = sphi 0, %s48
    %s52 = sphi 0, %s51
    %s68 = sphi 0, %s52
    %s74 = sphi 0, %s76
    %s77 = sphi 0, %s74
    %s78 = sphi 0, %s77
    %s94 = sphi 0, %s78
    %s100 = sphi 0, %s102
    %s103 = sphi 0, %s100
    %s104 = sphi 0, %s103
    %s120 = sphi 0, %s104
    %s124 = sphi 0, %s124
    %s126 = sphi 0, %s124
    %s127 = sphi 0, %s126
    %s141 = sphi 0, %s127
    %s145 = sphi 0, %s145
    %s147 = sphi 0, %s145
    %s148 = sphi 0, %s147
    %s162 = sphi 0, %s148
    %s168 = sphi 0, %s170
    %s171 = sphi 0, %s168
    %s172 = sphi 0, %s171
    %s188 = sphi 0, %s172
  $region4: #{net_forward.4} parent=0 // loop_header_branch
    %15 = sbr.rel (%p13) target = $region8
  $region5: #{net_forward.4} parent=0 // loop_body
    %s17 = ssub.s32 %s12, 1
    %s18 = ssub.s32 %s12, 2
    %s19 = sadd.s32 %s12, 1
    %s20 = ssub.s32 %s12, %s19
    %p21 = scmp.eq.s32.totalorder %s20, 0
    %s23 = sadd.s32 %s22, 1
    %s24 = scalar_select %p21, %s22, %s23
    %p27 = pneg %p21
    %p28 = scmp.eq.s32.totalorder %s12, 3
    %p29 = por %p27, %p28
    %p30 = scmp.ne.s32.totalorder %s22, %s25
    %p31 = scmp.eq.s32.totalorder %s12, 0
    %p32 = por %p30, %p31
    %p33 = scmp.ne.s32.totalorder %s22, %s25
    %p34 = scmp.eq.s32.totalorder %s17, 3
    %p35 = por %p33, %p34
    %p36 = scmp.ne.s32.totalorder %s25, %s26
    %p37 = scmp.eq.s32.totalorder %s17, 0
    %p38 = por %p36, %p37
    %p39 = scmp.ne.s32.totalorder %s25, %s26
    %p40 = scmp.eq.s32.totalorder %s18, 3
    %p41 = por %p39, %p40
    %p43 = scmp.ne.s32.totalorder %s26, %s42
    %p44 = scmp.eq.s32.totalorder %s18, 0
    %p45 = por %p43, %p44
    %s46 = ssub.s32 %s12, %s19
    %p47 = scmp.eq.s32.totalorder %s46, 0
    %s49 = sadd.s32 %s48, 1
    %s50 = scalar_select %p47, %s48, %s49
    %p53 = pneg %p47
    %p54 = scmp.eq.s32.totalorder %s12, 3
    %p55 = por %p53, %p54
    %p56 = scmp.ne.s32.totalorder %s48, %s51
    %p57 = scmp.eq.s32.totalorder %s12, 0
    %p58 = por %p56, %p57
    %p59 = scmp.ne.s32.totalorder %s48, %s51
    %p60 = scmp.eq.s32.totalorder %s17, 3
    %p61 = por %p59, %p60
    %p62 = scmp.ne.s32.totalorder %s51, %s52
    %p63 = scmp.eq.s32.totalorder %s17, 0
    %p64 = por %p62, %p63
    %p65 = scmp.ne.s32.totalorder %s51, %s52
    %p66 = scmp.eq.s32.totalorder %s18, 3
    %p67 = por %p65, %p66
    %p69 = scmp.ne.s32.totalorder %s52, %s68
    %p70 = scmp.eq.s32.totalorder %s18, 0
    %p71 = por %p69, %p70
    %s72 = ssub.s32 %s12, %s19
    %p73 = scmp.eq.s32.totalorder %s72, 0
    %s75 = sadd.s32 %s74, 1
    %s76 = scalar_select %p73, %s74, %s75
    %p79 = pneg %p73
    %p80 = scmp.eq.s32.totalorder %s12, 3
    %p81 = por %p79, %p80
    %p82 = scmp.ne.s32.totalorder %s74, %s77
    %p83 = scmp.eq.s32.totalorder %s12, 0
    %p84 = por %p82, %p83
    %p85 = scmp.ne.s32.totalorder %s74, %s77
    %p86 = scmp.eq.s32.totalorder %s17, 3
    %p87 = por %p85, %p86
    %p88 = scmp.ne.s32.totalorder %s77, %s78
    %p89 = scmp.eq.s32.totalorder %s17, 0
    %p90 = por %p88, %p89
    %p91 = scmp.ne.s32.totalorder %s77, %s78
    %p92 = scmp.eq.s32.totalorder %s18, 3
    %p93 = por %p91, %p92
    %p95 = scmp.ne.s32.totalorder %s78, %s94
    %p96 = scmp.eq.s32.totalorder %s18, 0
    %p97 = por %p95, %p96
    %s98 = ssub.s32 %s12, %s19
    %p99 = scmp.eq.s32.totalorder %s98, 0
    %s101 = sadd.s32 %s100, 1
    %s102 = scalar_select %p99, %s100, %s101
    %p105 = pneg %p99
    %p106 = scmp.eq.s32.totalorder %s12, 3
    %p107 = por %p105, %p106
    %p108 = scmp.ne.s32.totalorder %s100, %s103
    %p109 = scmp.eq.s32.totalorder %s12, 0
    %p110 = por %p108, %p109
    %p111 = scmp.ne.s32.totalorder %s100, %s103
    %p112 = scmp.eq.s32.totalorder %s17, 3
    %p113 = por %p111, %p112
    %p114 = scmp.ne.s32.totalorder %s103, %s104
    %p115 = scmp.eq.s32.totalorder %s17, 0
    %p116 = por %p114, %p115
    %p117 = scmp.ne.s32.totalorder %s103, %s104
    %p118 = scmp.eq.s32.totalorder %s18, 3
    %p119 = por %p117, %p118
    %p121 = scmp.ne.s32.totalorder %s104, %s120
    %p122 = scmp.eq.s32.totalorder %s18, 0
    %p123 = por %p121, %p122
    %s125 = sadd.s32 %s124, 1
    %p128 = scmp.eq.s32.totalorder %s12, 3
    %p129 = scmp.ne.s32.totalorder %s124, %s126
    %p130 = scmp.eq.s32.totalorder %s12, 0
    %p131 = por %p129, %p130
    %p132 = scmp.ne.s32.totalorder %s124, %s126
    %p133 = scmp.eq.s32.totalorder %s17, 3
    %p134 = por %p132, %p133
    %p135 = scmp.ne.s32.totalorder %s126, %s127
    %p136 = scmp.eq.s32.totalorder %s17, 0
    %p137 = por %p135, %p136
    %p138 = scmp.ne.s32.totalorder %s126, %s127
    %p139 = scmp.eq.s32.totalorder %s18, 3
    %p140 = por %p138, %p139
    %p142 = scmp.ne.s32.totalorder %s127, %s141
    %p143 = scmp.eq.s32.totalorder %s18, 0
    %p144 = por %p142, %p143
    %s146 = sadd.s32 %s145, 1
    %p149 = scmp.eq.s32.totalorder %s12, 3
    %p150 = scmp.ne.s32.totalorder %s145, %s147
    %p151 = scmp.eq.s32.totalorder %s12, 0
    %p152 = por %p150, %p151
    %p153 = scmp.ne.s32.totalorder %s145, %s147
    %p154 = scmp.eq.s32.totalorder %s17, 3
    %p155 = por %p153, %p154
    %p156 = scmp.ne.s32.totalorder %s147, %s148
    %p157 = scmp.eq.s32.totalorder %s17, 0
    %p158 = por %p156, %p157
    %p159 = scmp.ne.s32.totalorder %s147, %s148
    %p160 = scmp.eq.s32.totalorder %s18, 3
    %p161 = por %p159, %p160
    %p163 = scmp.ne.s32.totalorder %s148, %s162
    %p164 = scmp.eq.s32.totalorder %s18, 0
    %p165 = por %p163, %p164
    %s166 = ssub.s32 %s12, %s19
    %p167 = scmp.eq.s32.totalorder %s166, 0
    %s169 = sadd.s32 %s168, 1
    %s170 = scalar_select %p167, %s168, %s169
    %p173 = pneg %p167
    %p174 = scmp.eq.s32.totalorder %s12, 3
    %p175 = por %p173, %p174
    %p176 = scmp.ne.s32.totalorder %s168, %s171
    %p177 = scmp.eq.s32.totalorder %s12, 0
    %p178 = por %p176, %p177
    %p179 = scmp.ne.s32.totalorder %s168, %s171
    %p180 = scmp.eq.s32.totalorder %s17, 3
    %p181 = por %p179, %p180
    %p182 = scmp.ne.s32.totalorder %s171, %s172
    %p183 = scmp.eq.s32.totalorder %s17, 0
    %p184 = por %p182, %p183
    %p185 = scmp.ne.s32.totalorder %s171, %s172
    %p186 = scmp.eq.s32.totalorder %s18, 3
    %p187 = por %p185, %p186
    %p189 = scmp.ne.s32.totalorder %s172, %s188
    %p190 = scmp.eq.s32.totalorder %s18, 0
    %p191 = por %p189, %p190
    %p192 = scmp.le.s32.totalorder 1, %s12
    %p193 = scmp.lt.s32.totalorder %s12, 5
    %p194 = pnand %p192, %p193
    %p195 = pneg %p194
    // Predicated region
    $region9: #{net_forward.4} parent=5 // pred_check
      _
    $region10: #{net_forward.4} parent=5 // pred_check_branch
      %197 = sbr.rel (%p194) target = $region12
    $region11: #{net_forward.4} parent=5 // pred_region
      %s198 = ssub.s32 %s12, 1
      // Predicated region
      $region13: #{net_forward.4} parent=11 // pred_check
        %p199 = pneg %p137
      $region14: #{net_forward.4} parent=11 // pred_check_branch
        %201 = sbr.rel (%p199) target = $region16
      $region15: #{net_forward.4} parent=11 // pred_region
        _
      $region16: #{net_forward.4} parent=11 // pred_fallthru
        _
      // Predicated region
      $region17: #{net_forward.4} parent=11 // pred_check
        %p202 = pneg %p158
      $region18: #{net_forward.4} parent=11 // pred_check_branch
        %204 = sbr.rel (%p202) target = $region20
      $region19: #{net_forward.4} parent=11 // pred_region
        _
      $region20: #{net_forward.4} parent=11 // pred_fallthru
        _
    $region12: #{net_forward.4} parent=5 // pred_fallthru
      _
    %p205 = scmp.lt.s32.totalorder %s12, 4
    // Predicated region
    $region21: #{net_forward.4} parent=5 // pred_check
      %p206 = pneg %p205
    $region22: #{net_forward.4} parent=5 // pred_check_branch
      %208 = sbr.rel (%p206) target = $region24
    $region23: #{net_forward.4} parent=5 // pred_region
      // Predicated region
      $region25: #{net_forward.4} parent=23 // pred_check
        %p209 = pneg %p32
      $region26: #{net_forward.4} parent=23 // pred_check_branch
        %211 = sbr.rel (%p209) target = $region28
      $region27: #{net_forward.4} parent=23 // pred_region
        %s212 = smul.u32 64, %s12
        %p213 = scmp.lt.s32.totalorder %s212, 255
        %s214 = scalar_select %p213, %s212, 255
        %s215 = smul.addr %s214, 4
        %s216 = scalar_lea.vmem %s0, %s215
        %s217 = smul.u32 64, %s12
      $region28: #{net_forward.4} parent=23 // pred_fallthru
        _
      // Predicated region
      $region29: #{net_forward.4} parent=23 // pred_check
        %p218 = pneg %p58
      $region30: #{net_forward.4} parent=23 // pred_check_branch
        %220 = sbr.rel (%p218) target = $region32
      $region31: #{net_forward.4} parent=23 // pred_region
        %s221 = smul.u32 64, %s12
        %p222 = scmp.lt.s32.totalorder %s221, 255
        %s223 = scalar_select %p222, %s221, 255
        %s224 = smul.addr %s223, 4
        %s225 = scalar_lea.vmem %s1, %s224
        %s226 = smul.u32 64, %s12
      $region32: #{net_forward.4} parent=23 // pred_fallthru
        _
      // Predicated region
      $region33: #{net_forward.4} parent=23 // pred_check
        %p227 = pneg %p84
      $region34: #{net_forward.4} parent=23 // pred_check_branch
        %229 = sbr.rel (%p227) target = $region36
      $region35: #{net_forward.4} parent=23 // pred_region
        %s230 = smul.u32 64, %s12
        %p231 = scmp.lt.s32.totalorder %s230, 255
        %s232 = scalar_select %p231, %s230, 255
        %s233 = smul.addr %s232, 4
        %s234 = scalar_lea.vmem %s2, %s233
        %s235 = smul.u32 64, %s12
      $region36: #{net_forward.4} parent=23 // pred_fallthru
        _
      // Predicated region
      $region37: #{net_forward.4} parent=23 // pred_check
        %p236 = pneg %p110
      $region38: #{net_forward.4} parent=23 // pred_check_branch
        %238 = sbr.rel (%p236) target = $region40
      $region39: #{net_forward.4} parent=23 // pred_region
        %s239 = smul.u32 64, %s12
        %p240 = scmp.lt.s32.totalorder %s239, 255
        %s241 = scalar_select %p240, %s239, 255
        %s242 = smul.addr %s241, 4
        %s243 = scalar_lea.vmem %s3, %s242
        %s244 = smul.u32 64, %s12
      $region40: #{net_forward.4} parent=23 // pred_fallthru
        _
    $region24: #{net_forward.4} parent=5 // pred_fallthru
      _
    %p245 = scmp.le.s32.totalorder 1, %s12
    %p246 = scmp.lt.s32.totalorder %s12, 5
    %p247 = pnand %p245, %p246
    %p248 = pneg %p247
    // Predicated region
    $region41: #{net_forward.4} parent=5 // pred_check
      _
    $region42: #{net_forward.4} parent=5 // pred_check_branch
      %250 = sbr.rel (%p247) target = $region44
    $region43: #{net_forward.4} parent=5 // pred_region
      %s251 = ssub.s32 %s12, 1
      %s252 = smul.u32 64, %s17
      %p253 = scmp.lt.s32.totalorder %s252, 255
      %s254 = scalar_select %p253, %s252, 255
      %s255 = smul.addr %s254, 4
      %s256 = scalar_lea.vmem %s0, %s255
      %p257 = pneg %p38
      %p258 = pneg %p35
      %s259 = smul.u32 64, %s17
      %p260 = scmp.lt.s32.totalorder %s259, 255
      %s261 = scalar_select %p260, %s259, 255
      %s262 = smul.addr %s261, 4
      %s263 = scalar_lea.vmem %s1, %s262
      %p264 = pneg %p64
      %p265 = pneg %p61
      %s266 = smul.u32 64, %s17
      %p267 = scmp.lt.s32.totalorder %s266, 255
      %s268 = scalar_select %p267, %s266, 255
      %s269 = smul.addr %s268, 4
      %s270 = scalar_lea.vmem %s2, %s269
      %p271 = pneg %p90
      %p272 = pneg %p87
      %s273 = smul.u32 64, %s17
      %p274 = scmp.lt.s32.totalorder %s273, 255
      %s275 = scalar_select %p274, %s273, 255
      %s276 = smul.addr %s275, 4
      %s277 = scalar_lea.vmem %s3, %s276
      %p278 = pneg %p116
      %p279 = pneg %p113
      %p280 = pneg %p137
      %p281 = pneg %p134
      %p282 = pneg %p158
      %p283 = pneg %p155
      %p284 = pneg %p184
      %p285 = pneg %p181
      %s286 = smul.u32 64, %s17
      %p287 = scmp.lt.s32.totalorder %s286, 255
      %s288 = scalar_select %p287, %s286, 255
      %s289 = smul.addr %s288, 4
      %s290 = scalar_lea.vmem %s6, %s289
      %s291 = smul.u32 64, %s17
      %p292 = scmp.lt.s32.totalorder %s291, 255
      %s293 = scalar_select %p292, %s291, 255
      %s294 = smul.addr %s293, 4
      %s295 = scalar_lea.vmem %s0, %s294
      %s296 = smul.u32 64, %s17
      %s297 = smul.u32 64, %s17
      %p298 = scmp.lt.s32.totalorder %s297, 255
      %s299 = scalar_select %p298, %s297, 255
      %s300 = smul.addr %s299, 4
      %s301 = scalar_lea.vmem %s1, %s300
      %s302 = smul.u32 64, %s17
      %s303 = smul.u32 64, %s17
      %p304 = scmp.lt.s32.totalorder %s303, 255
      %s305 = scalar_select %p304, %s303, 255
      %s306 = smul.addr %s305, 4
      %s307 = scalar_lea.vmem %s2, %s306
      %s308 = smul.u32 64, %s17
      %s309 = smul.u32 64, %s17
      %p310 = scmp.lt.s32.totalorder %s309, 255
      %s311 = scalar_select %p310, %s309, 255
      %s312 = smul.addr %s311, 4
      %s313 = scalar_lea.vmem %s3, %s312
      %s314 = smul.u32 64, %s17
      %s315 = smul.u32 64, %s17
      %p316 = scmp.lt.s32.totalorder %s315, 255
      %s317 = scalar_select %p316, %s315, 255
      %s318 = smul.addr %s317, 4
      %s319 = scalar_lea.vmem %s6, %s318
      %s320 = smul.u32 64, %s17
      %v322 = vld [vmem:[%s4] sm:$0xf]
      %v323 = vld [vmem:[%s4 + $0x4] sm:$0x1]
      %v324 = vld [vmem:[%s295] sm:$0xf]
      %v325 = vld [vmem:[%s295 + $0x4] sm:$0xf]
      %v326 = vld [vmem:[%s295 + $0x8] sm:$0xf]
      %v327 = vld [vmem:[%s295 + $0xc] sm:$0xf]
      %v328 = vld [vmem:[%s295 + $0x10] sm:$0xf]
      %v329 = vld [vmem:[%s295 + $0x14] sm:$0xf]
      %v330 = vld [vmem:[%s295 + $0x18] sm:$0xf]
      %v331 = vld [vmem:[%s295 + $0x1c] sm:$0xf]
      %v332 = vld [vmem:[%s295 + $0x20] sm:$0xf]
      %v333 = vld [vmem:[%s295 + $0x24] sm:$0xf]
      %v334 = vld [vmem:[%s295 + $0x28] sm:$0xf]
      %v335 = vld [vmem:[%s295 + $0x2c] sm:$0xf]
      %v336 = vld [vmem:[%s295 + $0x30] sm:$0xf]
      %v337 = vld [vmem:[%s295 + $0x34] sm:$0xf]
      %v338 = vld [vmem:[%s295 + $0x38] sm:$0xf]
      %v339 = vld [vmem:[%s295 + $0x3c] sm:$0xf]
      %v340 = vld [vmem:[%s295 + $0x40] sm:$0xf]
      %v341 = vld [vmem:[%s295 + $0x44] sm:$0xf]
      %v342 = vld [vmem:[%s295 + $0x48] sm:$0xf]
      %v343 = vld [vmem:[%s295 + $0x4c] sm:$0xf]
      %v344 = vld [vmem:[%s295 + $0x50] sm:$0xf]
      %v345 = vld [vmem:[%s295 + $0x54] sm:$0xf]
      %v346 = vld [vmem:[%s295 + $0x58] sm:$0xf]
      %v347 = vld [vmem:[%s295 + $0x5c] sm:$0xf]
      %v348 = vld [vmem:[%s295 + $0x60] sm:$0xf]
      %v349 = vld [vmem:[%s295 + $0x64] sm:$0xf]
      %v350 = vld [vmem:[%s295 + $0x68] sm:$0xf]
      %v351 = vld [vmem:[%s295 + $0x6c] sm:$0xf]
      %v352 = vld [vmem:[%s295 + $0x70] sm:$0xf]
      %v353 = vld [vmem:[%s295 + $0x74] sm:$0xf]
      %v354 = vld [vmem:[%s295 + $0x78] sm:$0xf]
      %v355 = vld [vmem:[%s295 + $0x7c] sm:$0xf]
      %v356 = vld [vmem:[%s295 + $0x80] sm:$0xf]
      %v357 = vld [vmem:[%s295 + $0x84] sm:$0xf]
      %v358 = vld [vmem:[%s295 + $0x88] sm:$0xf]
      %v359 = vld [vmem:[%s295 + $0x8c] sm:$0xf]
      %v360 = vld [vmem:[%s295 + $0x90] sm:$0xf]
      %v361 = vld [vmem:[%s295 + $0x94] sm:$0xf]
      %v362 = vld [vmem:[%s295 + $0x98] sm:$0xf]
      %v363 = vld [vmem:[%s295 + $0x9c] sm:$0xf]
      %v364 = vld [vmem:[%s295 + $0xa0] sm:$0xf]
      %v365 = vld [vmem:[%s295 + $0xa4] sm:$0xf]
      %v366 = vld [vmem:[%s295 + $0xa8] sm:$0xf]
      %v367 = vld [vmem:[%s295 + $0xac] sm:$0xf]
      %v368 = vld [vmem:[%s295 + $0xb0] sm:$0xf]
      %v369 = vld [vmem:[%s295 + $0xb4] sm:$0xf]
      %v370 = vld [vmem:[%s295 + $0xb8] sm:$0xf]
      %v371 = vld [vmem:[%s295 + $0xbc] sm:$0xf]
      %v372 = vld [vmem:[%s295 + $0xc0] sm:$0xf]
      %v373 = vld [vmem:[%s295 + $0xc4] sm:$0xf]
      %v374 = vld [vmem:[%s295 + $0xc8] sm:$0xf]
      %v375 = vld [vmem:[%s295 + $0xcc] sm:$0xf]
      %v376 = vld [vmem:[%s295 + $0xd0] sm:$0xf]
      %v377 = vld [vmem:[%s295 + $0xd4] sm:$0xf]
      %v378 = vld [vmem:[%s295 + $0xd8] sm:$0xf]
      %v379 = vld [vmem:[%s295 + $0xdc] sm:$0xf]
      %v380 = vld [vmem:[%s295 + $0xe0] sm:$0xf]
      %v381 = vld [vmem:[%s295 + $0xe4] sm:$0xf]
      %v382 = vld [vmem:[%s295 + $0xe8] sm:$0xf]
      %v383 = vld [vmem:[%s295 + $0xec] sm:$0xf]
      %v384 = vld [vmem:[%s295 + $0xf0] sm:$0xf]
      %v385 = vld [vmem:[%s295 + $0xf4] sm:$0xf]
      %v386 = vld [vmem:[%s295 + $0xf8] sm:$0xf]
      %v387 = vld [vmem:[%s295 + $0xfc] sm:$0xf]
      %v452 = vunpack.c.l.b16 %v324
      %v453 = vunpack.c.l.b16 %v325
      %v454 = vunpack.c.l.b16 %v326
      %v455 = vunpack.c.l.b16 %v327
      %v456 = vunpack.c.l.b16 %v328
      %v457 = vunpack.c.l.b16 %v329
      %v458 = vunpack.c.l.b16 %v330
      %v459 = vunpack.c.l.b16 %v331
      %v460 = vunpack.c.l.b16 %v332
      %v461 = vunpack.c.l.b16 %v333
      %v462 = vunpack.c.l.b16 %v334
      %v463 = vunpack.c.l.b16 %v335
      %v464 = vunpack.c.l.b16 %v336
      %v465 = vunpack.c.l.b16 %v337
      %v466 = vunpack.c.l.b16 %v338
      %v467 = vunpack.c.l.b16 %v339
      %v468 = vunpack.c.l.b16 %v340
      %v469 = vunpack.c.l.b16 %v341
      %v470 = vunpack.c.l.b16 %v342
      %v471 = vunpack.c.l.b16 %v343
      %v472 = vunpack.c.l.b16 %v344
      %v473 = vunpack.c.l.b16 %v345
      %v474 = vunpack.c.l.b16 %v346
      %v475 = vunpack.c.l.b16 %v347
      %v476 = vunpack.c.l.b16 %v348
      %v477 = vunpack.c.l.b16 %v349
      %v478 = vunpack.c.l.b16 %v350
      %v479 = vunpack.c.l.b16 %v351
      %v480 = vunpack.c.l.b16 %v352
      %v481 = vunpack.c.l.b16 %v353
      %v482 = vunpack.c.l.b16 %v354
      %v483 = vunpack.c.l.b16 %v355
      %v484 = vunpack.c.l.b16 %v356
      %v485 = vunpack.c.l.b16 %v357
      %v486 = vunpack.c.l.b16 %v358
      %v487 = vunpack.c.l.b16 %v359
      %v488 = vunpack.c.l.b16 %v360
      %v489 = vunpack.c.l.b16 %v361
      %v490 = vunpack.c.l.b16 %v362
      %v491 = vunpack.c.l.b16 %v363
      %v492 = vunpack.c.l.b16 %v364
      %v493 = vunpack.c.l.b16 %v365
      %v494 = vunpack.c.l.b16 %v366
      %v495 = vunpack.c.l.b16 %v367
      %v496 = vunpack.c.l.b16 %v368
      %v497 = vunpack.c.l.b16 %v369
      %v498 = vunpack.c.l.b16 %v370
      %v499 = vunpack.c.l.b16 %v371
      %v500 = vunpack.c.l.b16 %v372
      %v501 = vunpack.c.l.b16 %v373
      %v502 = vunpack.c.l.b16 %v374
      %v503 = vunpack.c.l.b16 %v375
      %v504 = vunpack.c.l.b16 %v376
      %v505 = vunpack.c.l.b16 %v377
      %v506 = vunpack.c.l.b16 %v378
      %v507 = vunpack.c.l.b16 %v379
      %v508 = vunpack.c.l.b16 %v380
      %v509 = vunpack.c.l.b16 %v381
      %v510 = vunpack.c.l.b16 %v382
      %v511 = vunpack.c.l.b16 %v383
      %v512 = vunpack.c.l.b16 %v384
      %v513 = vunpack.c.l.b16 %v385
      %v514 = vunpack.c.l.b16 %v386
      %v515 = vunpack.c.l.b16 %v387
      %v516 = vpack.c.b16 %v453, %v452
      %v517 = vpack.c.b16 %v455, %v454
      %v518 = vpack.c.b16 %v457, %v456
      %v519 = vpack.c.b16 %v459, %v458
      %v520 = vpack.c.b16 %v461, %v460
      %v521 = vpack.c.b16 %v463, %v462
      %v522 = vpack.c.b16 %v465, %v464
      %v523 = vpack.c.b16 %v467, %v466
      %v524 = vpack.c.b16 %v469, %v468
      %v525 = vpack.c.b16 %v471, %v470
      %v526 = vpack.c.b16 %v473, %v472
      %v527 = vpack.c.b16 %v475, %v474
      %v528 = vpack.c.b16 %v477, %v476
      %v529 = vpack.c.b16 %v479, %v478
      %v530 = vpack.c.b16 %v481, %v480
      %v531 = vpack.c.b16 %v483, %v482
      %v532 = vpack.c.b16 %v485, %v484
      %v533 = vpack.c.b16 %v487, %v486
      %v534 = vpack.c.b16 %v489, %v488
      %v535 = vpack.c.b16 %v491, %v490
      %v536 = vpack.c.b16 %v493, %v492
      %v537 = vpack.c.b16 %v495, %v494
      %v538 = vpack.c.b16 %v497, %v496
      %v539 = vpack.c.b16 %v499, %v498
      %v540 = vpack.c.b16 %v501, %v500
      %v541 = vpack.c.b16 %v503, %v502
      %v542 = vpack.c.b16 %v505, %v504
      %v543 = vpack.c.b16 %v507, %v506
      %v544 = vpack.c.b16 %v509, %v508
      %v545 = vpack.c.b16 %v511, %v510
      %v546 = vpack.c.b16 %v513, %v512
      %v547 = vpack.c.b16 %v515, %v514
      %v550 = vunpack.c.l.b16 %v322
      %v551 = vunpack.c.l.b16 %v323
      %v552 = vpack.c.b16 %v551, %v550
      %vm553 = vcmask 72704
      %v555 = vsel %vm553, %v516, 0
      %v558 = vsel %vm553, %v517, 0
      %v561 = vsel %vm553, %v518, 0
      %v564 = vsel %vm553, %v519, 0
      %v567 = vsel %vm553, %v520, 0
      %v570 = vsel %vm553, %v521, 0
      %v573 = vsel %vm553, %v522, 0
      %v576 = vsel %vm553, %v523, 0
      %v579 = vsel %vm553, %v524, 0
      %v582 = vsel %vm553, %v525, 0
      %v585 = vsel %vm553, %v526, 0
      %v588 = vsel %vm553, %v527, 0
      %v591 = vsel %vm553, %v528, 0
      %v594 = vsel %vm553, %v529, 0
      %v597 = vsel %vm553, %v530, 0
      %v600 = vsel %vm553, %v531, 0
      %v603 = vsel %vm553, %v532, 0
      %v606 = vsel %vm553, %v533, 0
      %v609 = vsel %vm553, %v534, 0
      %v612 = vsel %vm553, %v535, 0
      %v615 = vsel %vm553, %v536, 0
      %v618 = vsel %vm553, %v537, 0
      %v621 = vsel %vm553, %v538, 0
      %v624 = vsel %vm553, %v539, 0
      %v627 = vsel %vm553, %v540, 0
      %v630 = vsel %vm553, %v541, 0
      %v633 = vsel %vm553, %v542, 0
      %v636 = vsel %vm553, %v543, 0
      %v639 = vsel %vm553, %v544, 0
      %v642 = vsel %vm553, %v545, 0
      %v645 = vsel %vm553, %v546, 0
      %v648 = vsel %vm553, %v547, 0
      %vm650 = vcmask 1043456
      %vm651 = vcmask 1044480
      %v652 = vsel %vm650, 4294967295, 65535
      %v653 = vsel %vm651, %v652, 0
      %v655 = vand.u32 %v552, %v653
      %657 = vmatprep.subr.bf16.mxu0 0
      %658 = vmatpush1.bf16.msra.mxu0 0
      %659 = vmatprep.subr.bf16.mxu0 0
      %660 = vmatpush1.bf16.msra.mxu0 0
      %661 = vmatprep.subr.bf16.mxu0 0
      %662 = vmatpush1.bf16.msra.mxu0 0
      %663 = vmatprep.subr.bf16.mxu0 0
      %664 = vmatpush1.bf16.msra.mxu0 0
      %665 = vmatprep.subr.bf16.mxu0 0
      %666 = vmatpush1.bf16.msra.mxu0 0
      %667 = vmatprep.subr.bf16.mxu0 0
      %668 = vmatpush1.bf16.msra.mxu0 0
      %669 = vmatprep.subr.bf16.mxu0 0
      %670 = vmatpush1.bf16.msra.mxu0 0
      %671 = vmatprep.subr.bf16.mxu0 0
      %672 = vmatpush1.bf16.msra.mxu0 %v655
      %673 = vmatprep.subr.bf16.mxu0 0
      %674 = vmatpush2.bf16.msra.mxu0 0
      %675 = vmatprep.subr.bf16.mxu0 0
      %676 = vmatpush2.bf16.msra.mxu0 0
      %677 = vmatprep.subr.bf16.mxu0 0
      %678 = vmatpush2.bf16.msra.mxu0 0
      %679 = vmatprep.subr.bf16.mxu0 0
      %680 = vmatpush2.bf16.msra.mxu0 0
      %681 = vmatprep.subr.bf16.mxu0 0
      %682 = vmatpush2.bf16.msra.mxu0 0
      %683 = vmatprep.subr.bf16.mxu0 0
      %684 = vmatpush2.bf16.msra.mxu0 0
      %685 = vmatprep.subr.bf16.mxu0 0
      %686 = vmatpush2.bf16.msra.mxu0 0
      %687 = vmatprep.subr.bf16.mxu0 0
      %688 = vmatpush2.bf16.msra.mxu0 0
      %689 = vmatprep.mubr.bf16.mxu0 0
      %690 = vmatmul.mubr.bf16.gmra.mxu0 %v555
      %v691 = vpop.f32.mrf.mxu0
      %v692 = vadd.f32 0.0, %v691
      %v693 = vpop.f32.mrf.mxu0
      %v694 = vpop.f32.mrf.mxu0
      %v695 = vadd.f32 0.0, %v694
      %v696 = vpop.f32.mrf.mxu0
      %697 = vmatprep.mubr.bf16.mxu0 0
      %698 = vmatmul.mubr.bf16.gmra.mxu0 %v558
      %v699 = vpop.f32.mrf.mxu0
      %v700 = vadd.f32 0.0, %v699
      %v701 = vpop.f32.mrf.mxu0
      %v702 = vpop.f32.mrf.mxu0
      %v703 = vadd.f32 0.0, %v702
      %v704 = vpop.f32.mrf.mxu0
      %705 = vmatprep.mubr.bf16.mxu0 0
      %706 = vmatmul.mubr.bf16.gmra.mxu0 %v561
      %v707 = vpop.f32.mrf.mxu0
      %v708 = vadd.f32 0.0, %v707
      %v709 = vpop.f32.mrf.mxu0
      %v710 = vpop.f32.mrf.mxu0
      %v711 = vadd.f32 0.0, %v710
      %v712 = vpop.f32.mrf.mxu0
      %713 = vmatprep.mubr.bf16.mxu0 0
      %714 = vmatmul.mubr.bf16.gmra.mxu0 %v564
      %v715 = vpop.f32.mrf.mxu0
      %v716 = vadd.f32 0.0, %v715
      %v717 = vpop.f32.mrf.mxu0
      %v718 = vpop.f32.mrf.mxu0
      %v719 = vadd.f32 0.0, %v718
      %v720 = vpop.f32.mrf.mxu0
      %721 = vmatprep.mubr.bf16.mxu0 0
      %722 = vmatmul.mubr.bf16.gmra.mxu0 %v567
      %v723 = vpop.f32.mrf.mxu0
      %v724 = vadd.f32 0.0, %v723
      %v725 = vpop.f32.mrf.mxu0
      %v726 = vpop.f32.mrf.mxu0
      %v727 = vadd.f32 0.0, %v726
      %v728 = vpop.f32.mrf.mxu0
      %729 = vmatprep.mubr.bf16.mxu0 0
      %730 = vmatmul.mubr.bf16.gmra.mxu0 %v570
      %v731 = vpop.f32.mrf.mxu0
      %v732 = vadd.f32 0.0, %v731
      %v733 = vpop.f32.mrf.mxu0
      %v734 = vpop.f32.mrf.mxu0
      %v735 = vadd.f32 0.0, %v734
      %v736 = vpop.f32.mrf.mxu0
      %737 = vmatprep.mubr.bf16.mxu0 0
      %738 = vmatmul.mubr.bf16.gmra.mxu0 %v573
      %v739 = vpop.f32.mrf.mxu0
      %v740 = vadd.f32 0.0, %v739
      %v741 = vpop.f32.mrf.mxu0
      %v742 = vpop.f32.mrf.mxu0
      %v743 = vadd.f32 0.0, %v742
      %v744 = vpop.f32.mrf.mxu0
      %745 = vmatprep.mubr.bf16.mxu0 0
      %746 = vmatmul.mubr.bf16.gmra.mxu0 %v576
      %v747 = vpop.f32.mrf.mxu0
      %v748 = vadd.f32 0.0, %v747
      %v749 = vpop.f32.mrf.mxu0
      %v750 = vpop.f32.mrf.mxu0
      %v751 = vadd.f32 0.0, %v750
      %v752 = vpop.f32.mrf.mxu0
      %753 = vmatprep.mubr.bf16.mxu0 0
      %754 = vmatmul.mubr.bf16.gmra.mxu0 %v579
      %v755 = vpop.f32.mrf.mxu0
      %v756 = vadd.f32 0.0, %v755
      %v757 = vpop.f32.mrf.mxu0
      %v758 = vpop.f32.mrf.mxu0
      %v759 = vadd.f32 0.0, %v758
      %v760 = vpop.f32.mrf.mxu0
      %761 = vmatprep.mubr.bf16.mxu0 0
      %762 = vmatmul.mubr.bf16.gmra.mxu0 %v582
      %v763 = vpop.f32.mrf.mxu0
      %v764 = vadd.f32 0.0, %v763
      %v765 = vpop.f32.mrf.mxu0
      %v766 = vpop.f32.mrf.mxu0
      %v767 = vadd.f32 0.0, %v766
      %v768 = vpop.f32.mrf.mxu0
      %769 = vmatprep.mubr.bf16.mxu0 0
      %770 = vmatmul.mubr.bf16.gmra.mxu0 %v585
      %v771 = vpop.f32.mrf.mxu0
      %v772 = vadd.f32 0.0, %v771
      %v773 = vpop.f32.mrf.mxu0
      %v774 = vpop.f32.mrf.mxu0
      %v775 = vadd.f32 0.0, %v774
      %v776 = vpop.f32.mrf.mxu0
      %777 = vmatprep.mubr.bf16.mxu0 0
      %778 = vmatmul.mubr.bf16.gmra.mxu0 %v588
      %v779 = vpop.f32.mrf.mxu0
      %v780 = vadd.f32 0.0, %v779
      %v781 = vpop.f32.mrf.mxu0
      %v782 = vpop.f32.mrf.mxu0
      %v783 = vadd.f32 0.0, %v782
      %v784 = vpop.f32.mrf.mxu0
      %785 = vmatprep.mubr.bf16.mxu0 0
      %786 = vmatmul.mubr.bf16.gmra.mxu0 %v591
      %v787 = vpop.f32.mrf.mxu0
      %v788 = vadd.f32 0.0, %v787
      %v789 = vpop.f32.mrf.mxu0
      %v790 = vpop.f32.mrf.mxu0
      %v791 = vadd.f32 0.0, %v790
      %v792 = vpop.f32.mrf.mxu0
      %793 = vmatprep.mubr.bf16.mxu0 0
      %794 = vmatmul.mubr.bf16.gmra.mxu0 %v594
      %v795 = vpop.f32.mrf.mxu0
      %v796 = vadd.f32 0.0, %v795
      %v797 = vpop.f32.mrf.mxu0
      %v798 = vpop.f32.mrf.mxu0
      %v799 = vadd.f32 0.0, %v798
      %v800 = vpop.f32.mrf.mxu0
      %801 = vmatprep.mubr.bf16.mxu0 0
      %802 = vmatmul.mubr.bf16.gmra.mxu0 %v597
      %v803 = vpop.f32.mrf.mxu0
      %v804 = vadd.f32 0.0, %v803
      %v805 = vpop.f32.mrf.mxu0
      %v806 = vpop.f32.mrf.mxu0
      %v807 = vadd.f32 0.0, %v806
      %v808 = vpop.f32.mrf.mxu0
      %809 = vmatprep.mubr.bf16.mxu0 0
      %810 = vmatmul.mubr.bf16.gmra.mxu0 %v600
      %v811 = vpop.f32.mrf.mxu0
      %v812 = vadd.f32 0.0, %v811
      %v813 = vpop.f32.mrf.mxu0
      %v814 = vpop.f32.mrf.mxu0
      %v815 = vadd.f32 0.0, %v814
      %v816 = vpop.f32.mrf.mxu0
      %817 = vmatprep.mubr.bf16.mxu0 0
      %818 = vmatmul.mubr.bf16.gmra.mxu0 %v603
      %v819 = vpop.f32.mrf.mxu0
      %v820 = vadd.f32 0.0, %v819
      %v821 = vpop.f32.mrf.mxu0
      %v822 = vpop.f32.mrf.mxu0
      %v823 = vadd.f32 0.0, %v822
      %v824 = vpop.f32.mrf.mxu0
      %825 = vmatprep.mubr.bf16.mxu0 0
      %826 = vmatmul.mubr.bf16.gmra.mxu0 %v606
      %v827 = vpop.f32.mrf.mxu0
      %v828 = vadd.f32 0.0, %v827
      %v829 = vpop.f32.mrf.mxu0
      %v830 = vpop.f32.mrf.mxu0
      %v831 = vadd.f32 0.0, %v830
      %v832 = vpop.f32.mrf.mxu0
      %833 = vmatprep.mubr.bf16.mxu0 0
      %834 = vmatmul.mubr.bf16.gmra.mxu0 %v609
      %v835 = vpop.f32.mrf.mxu0
      %v836 = vadd.f32 0.0, %v835
      %v837 = vpop.f32.mrf.mxu0
      %v838 = vpop.f32.mrf.mxu0
      %v839 = vadd.f32 0.0, %v838
      %v840 = vpop.f32.mrf.mxu0
      %841 = vmatprep.mubr.bf16.mxu0 0
      %842 = vmatmul.mubr.bf16.gmra.mxu0 %v612
      %v843 = vpop.f32.mrf.mxu0
      %v844 = vadd.f32 0.0, %v843
      %v845 = vpop.f32.mrf.mxu0
      %v846 = vpop.f32.mrf.mxu0
      %v847 = vadd.f32 0.0, %v846
      %v848 = vpop.f32.mrf.mxu0
      %849 = vmatprep.mubr.bf16.mxu0 0
      %850 = vmatmul.mubr.bf16.gmra.mxu0 %v615
      %v851 = vpop.f32.mrf.mxu0
      %v852 = vadd.f32 0.0, %v851
      %v853 = vpop.f32.mrf.mxu0
      %v854 = vpop.f32.mrf.mxu0
      %v855 = vadd.f32 0.0, %v854
      %v856 = vpop.f32.mrf.mxu0
      %857 = vmatprep.mubr.bf16.mxu0 0
      %858 = vmatmul.mubr.bf16.gmra.mxu0 %v618
      %v859 = vpop.f32.mrf.mxu0
      %v860 = vadd.f32 0.0, %v859
      %v861 = vpop.f32.mrf.mxu0
      %v862 = vpop.f32.mrf.mxu0
      %v863 = vadd.f32 0.0, %v862
      %v864 = vpop.f32.mrf.mxu0
      %865 = vmatprep.mubr.bf16.mxu0 0
      %866 = vmatmul.mubr.bf16.gmra.mxu0 %v621
      %v867 = vpop.f32.mrf.mxu0
      %v868 = vadd.f32 0.0, %v867
      %v869 = vpop.f32.mrf.mxu0
      %v870 = vpop.f32.mrf.mxu0
      %v871 = vadd.f32 0.0, %v870
      %v872 = vpop.f32.mrf.mxu0
      %873 = vmatprep.mubr.bf16.mxu0 0
      %874 = vmatmul.mubr.bf16.gmra.mxu0 %v624
      %v875 = vpop.f32.mrf.mxu0
      %v876 = vadd.f32 0.0, %v875
      %v877 = vpop.f32.mrf.mxu0
      %v878 = vpop.f32.mrf.mxu0
      %v879 = vadd.f32 0.0, %v878
      %v880 = vpop.f32.mrf.mxu0
      %881 = vmatprep.mubr.bf16.mxu0 0
      %882 = vmatmul.mubr.bf16.gmra.mxu0 %v627
      %v883 = vpop.f32.mrf.mxu0
      %v884 = vadd.f32 0.0, %v883
      %v885 = vpop.f32.mrf.mxu0
      %v886 = vpop.f32.mrf.mxu0
      %v887 = vadd.f32 0.0, %v886
      %v888 = vpop.f32.mrf.mxu0
      %889 = vmatprep.mubr.bf16.mxu0 0
      %890 = vmatmul.mubr.bf16.gmra.mxu0 %v630
      %v891 = vpop.f32.mrf.mxu0
      %v892 = vadd.f32 0.0, %v891
      %v893 = vpop.f32.mrf.mxu0
      %v894 = vpop.f32.mrf.mxu0
      %v895 = vadd.f32 0.0, %v894
      %v896 = vpop.f32.mrf.mxu0
      %897 = vmatprep.mubr.bf16.mxu0 0
      %898 = vmatmul.mubr.bf16.gmra.mxu0 %v633
      %v899 = vpop.f32.mrf.mxu0
      %v900 = vadd.f32 0.0, %v899
      %v901 = vpop.f32.mrf.mxu0
      %v902 = vpop.f32.mrf.mxu0
      %v903 = vadd.f32 0.0, %v902
      %v904 = vpop.f32.mrf.mxu0
      %905 = vmatprep.mubr.bf16.mxu0 0
      %906 = vmatmul.mubr.bf16.gmra.mxu0 %v636
      %v907 = vpop.f32.mrf.mxu0
      %v908 = vadd.f32 0.0, %v907
      %v909 = vpop.f32.mrf.mxu0
      %v910 = vpop.f32.mrf.mxu0
      %v911 = vadd.f32 0.0, %v910
      %v912 = vpop.f32.mrf.mxu0
      %913 = vmatprep.mubr.bf16.mxu0 0
      %914 = vmatmul.mubr.bf16.gmra.mxu0 %v639
      %v915 = vpop.f32.mrf.mxu0
      %v916 = vadd.f32 0.0, %v915
      %v917 = vpop.f32.mrf.mxu0
      %v918 = vpop.f32.mrf.mxu0
      %v919 = vadd.f32 0.0, %v918
      %v920 = vpop.f32.mrf.mxu0
      %921 = vmatprep.mubr.bf16.mxu0 0
      %922 = vmatmul.mubr.bf16.gmra.mxu0 %v642
      %v923 = vpop.f32.mrf.mxu0
      %v924 = vadd.f32 0.0, %v923
      %v925 = vpop.f32.mrf.mxu0
      %v926 = vpop.f32.mrf.mxu0
      %v927 = vadd.f32 0.0, %v926
      %v928 = vpop.f32.mrf.mxu0
      %929 = vmatprep.mubr.bf16.mxu0 0
      %930 = vmatmul.mubr.bf16.gmra.mxu0 %v645
      %v931 = vpop.f32.mrf.mxu0
      %v932 = vadd.f32 0.0, %v931
      %v933 = vpop.f32.mrf.mxu0
      %v934 = vpop.f32.mrf.mxu0
      %v935 = vadd.f32 0.0, %v934
      %v936 = vpop.f32.mrf.mxu0
      %937 = vmatprep.mubr.bf16.mxu0 0
      %938 = vmatmul.mubr.bf16.gmra.mxu0 %v648
      %v939 = vpop.f32.mrf.mxu0
      %v940 = vadd.f32 0.0, %v939
      %v941 = vpop.f32.mrf.mxu0
      %v942 = vpop.f32.mrf.mxu0
      %v943 = vadd.f32 0.0, %v942
      %v944 = vpop.f32.mrf.mxu0
      %945 = vdwg.mxu0
      %v946 = vld [vmem:[%s301] sm:$0xf]
      %v947 = vld [vmem:[%s301 + $0x4] sm:$0xf]
      %v948 = vld [vmem:[%s301 + $0x8] sm:$0xf]
      %v949 = vld [vmem:[%s301 + $0xc] sm:$0xf]
      %v950 = vld [vmem:[%s301 + $0x10] sm:$0xf]
      %v951 = vld [vmem:[%s301 + $0x14] sm:$0xf]
      %v952 = vld [vmem:[%s301 + $0x18] sm:$0xf]
      %v953 = vld [vmem:[%s301 + $0x1c] sm:$0xf]
      %v954 = vld [vmem:[%s301 + $0x20] sm:$0xf]
      %v955 = vld [vmem:[%s301 + $0x24] sm:$0xf]
      %v956 = vld [vmem:[%s301 + $0x28] sm:$0xf]
      %v957 = vld [vmem:[%s301 + $0x2c] sm:$0xf]
      %v958 = vld [vmem:[%s301 + $0x30] sm:$0xf]
      %v959 = vld [vmem:[%s301 + $0x34] sm:$0xf]
      %v960 = vld [vmem:[%s301 + $0x38] sm:$0xf]
      %v961 = vld [vmem:[%s301 + $0x3c] sm:$0xf]
      %v962 = vld [vmem:[%s301 + $0x40] sm:$0xf]
      %v963 = vld [vmem:[%s301 + $0x44] sm:$0xf]
      %v964 = vld [vmem:[%s301 + $0x48] sm:$0xf]
      %v965 = vld [vmem:[%s301 + $0x4c] sm:$0xf]
      %v966 = vld [vmem:[%s301 + $0x50] sm:$0xf]
      %v967 = vld [vmem:[%s301 + $0x54] sm:$0xf]
      %v968 = vld [vmem:[%s301 + $0x58] sm:$0xf]
      %v969 = vld [vmem:[%s301 + $0x5c] sm:$0xf]
      %v970 = vld [vmem:[%s301 + $0x60] sm:$0xf]
      %v971 = vld [vmem:[%s301 + $0x64] sm:$0xf]
      %v972 = vld [vmem:[%s301 + $0x68] sm:$0xf]
      %v973 = vld [vmem:[%s301 + $0x6c] sm:$0xf]
      %v974 = vld [vmem:[%s301 + $0x70] sm:$0xf]
      %v975 = vld [vmem:[%s301 + $0x74] sm:$0xf]
      %v976 = vld [vmem:[%s301 + $0x78] sm:$0xf]
      %v977 = vld [vmem:[%s301 + $0x7c] sm:$0xf]
      %v978 = vld [vmem:[%s301 + $0x80] sm:$0xf]
      %v979 = vld [vmem:[%s301 + $0x84] sm:$0xf]
      %v980 = vld [vmem:[%s301 + $0x88] sm:$0xf]
      %v981 = vld [vmem:[%s301 + $0x8c] sm:$0xf]
      %v982 = vld [vmem:[%s301 + $0x90] sm:$0xf]
      %v983 = vld [vmem:[%s301 + $0x94] sm:$0xf]
      %v984 = vld [vmem:[%s301 + $0x98] sm:$0xf]
      %v985 = vld [vmem:[%s301 + $0x9c] sm:$0xf]
      %v986 = vld [vmem:[%s301 + $0xa0] sm:$0xf]
      %v987 = vld [vmem:[%s301 + $0xa4] sm:$0xf]
      %v988 = vld [vmem:[%s301 + $0xa8] sm:$0xf]
      %v989 = vld [vmem:[%s301 + $0xac] sm:$0xf]
      %v990 = vld [vmem:[%s301 + $0xb0] sm:$0xf]
      %v991 = vld [vmem:[%s301 + $0xb4] sm:$0xf]
      %v992 = vld [vmem:[%s301 + $0xb8] sm:$0xf]
      %v993 = vld [vmem:[%s301 + $0xbc] sm:$0xf]
      %v994 = vld [vmem:[%s301 + $0xc0] sm:$0xf]
      %v995 = vld [vmem:[%s301 + $0xc4] sm:$0xf]
      %v996 = vld [vmem:[%s301 + $0xc8] sm:$0xf]
      %v997 = vld [vmem:[%s301 + $0xcc] sm:$0xf]
      %v998 = vld [vmem:[%s301 + $0xd0] sm:$0xf]
      %v999 = vld [vmem:[%s301 + $0xd4] sm:$0xf]
      %v1000 = vld [vmem:[%s301 + $0xd8] sm:$0xf]
      %v1001 = vld [vmem:[%s301 + $0xdc] sm:$0xf]
      %v1002 = vld [vmem:[%s301 + $0xe0] sm:$0xf]
      %v1003 = vld [vmem:[%s301 + $0xe4] sm:$0xf]
      %v1004 = vld [vmem:[%s301 + $0xe8] sm:$0xf]
      %v1005 = vld [vmem:[%s301 + $0xec] sm:$0xf]
      %v1006 = vld [vmem:[%s301 + $0xf0] sm:$0xf]
      %v1007 = vld [vmem:[%s301 + $0xf4] sm:$0xf]
      %v1008 = vld [vmem:[%s301 + $0xf8] sm:$0xf]
      %v1009 = vld [vmem:[%s301 + $0xfc] sm:$0xf]
      %v1074 = vunpack.c.l.b16 %v946
      %v1075 = vunpack.c.l.b16 %v947
      %v1076 = vunpack.c.l.b16 %v948
      %v1077 = vunpack.c.l.b16 %v949
      %v1078 = vunpack.c.l.b16 %v950
      %v1079 = vunpack.c.l.b16 %v951
      %v1080 = vunpack.c.l.b16 %v952
      %v1081 = vunpack.c.l.b16 %v953
      %v1082 = vunpack.c.l.b16 %v954
      %v1083 = vunpack.c.l.b16 %v955
      %v1084 = vunpack.c.l.b16 %v956
      %v1085 = vunpack.c.l.b16 %v957
      %v1086 = vunpack.c.l.b16 %v958
      %v1087 = vunpack.c.l.b16 %v959
      %v1088 = vunpack.c.l.b16 %v960
      %v1089 = vunpack.c.l.b16 %v961
      %v1090 = vunpack.c.l.b16 %v962
      %v1091 = vunpack.c.l.b16 %v963
      %v1092 = vunpack.c.l.b16 %v964
      %v1093 = vunpack.c.l.b16 %v965
      %v1094 = vunpack.c.l.b16 %v966
      %v1095 = vunpack.c.l.b16 %v967
      %v1096 = vunpack.c.l.b16 %v968
      %v1097 = vunpack.c.l.b16 %v969
      %v1098 = vunpack.c.l.b16 %v970
      %v1099 = vunpack.c.l.b16 %v971
      %v1100 = vunpack.c.l.b16 %v972
      %v1101 = vunpack.c.l.b16 %v973
      %v1102 = vunpack.c.l.b16 %v974
      %v1103 = vunpack.c.l.b16 %v975
      %v1104 = vunpack.c.l.b16 %v976
      %v1105 = vunpack.c.l.b16 %v977
      %v1106 = vunpack.c.l.b16 %v978
      %v1107 = vunpack.c.l.b16 %v979
      %v1108 = vunpack.c.l.b16 %v980
      %v1109 = vunpack.c.l.b16 %v981
      %v1110 = vunpack.c.l.b16 %v982
      %v1111 = vunpack.c.l.b16 %v983
      %v1112 = vunpack.c.l.b16 %v984
      %v1113 = vunpack.c.l.b16 %v985
      %v1114 = vunpack.c.l.b16 %v986
      %v1115 = vunpack.c.l.b16 %v987
      %v1116 = vunpack.c.l.b16 %v988
      %v1117 = vunpack.c.l.b16 %v989
      %v1118 = vunpack.c.l.b16 %v990
      %v1119 = vunpack.c.l.b16 %v991
      %v1120 = vunpack.c.l.b16 %v992
      %v1121 = vunpack.c.l.b16 %v993
      %v1122 = vunpack.c.l.b16 %v994
      %v1123 = vunpack.c.l.b16 %v995
      %v1124 = vunpack.c.l.b16 %v996
      %v1125 = vunpack.c.l.b16 %v997
      %v1126 = vunpack.c.l.b16 %v998
      %v1127 = vunpack.c.l.b16 %v999
      %v1128 = vunpack.c.l.b16 %v1000
      %v1129 = vunpack.c.l.b16 %v1001
      %v1130 = vunpack.c.l.b16 %v1002
      %v1131 = vunpack.c.l.b16 %v1003
      %v1132 = vunpack.c.l.b16 %v1004
      %v1133 = vunpack.c.l.b16 %v1005
      %v1134 = vunpack.c.l.b16 %v1006
      %v1135 = vunpack.c.l.b16 %v1007
      %v1136 = vunpack.c.l.b16 %v1008
      %v1137 = vunpack.c.l.b16 %v1009
      %v1138 = vpack.c.b16 %v1075, %v1074
      %v1139 = vpack.c.b16 %v1077, %v1076
      %v1140 = vpack.c.b16 %v1079, %v1078
      %v1141 = vpack.c.b16 %v1081, %v1080
      %v1142 = vpack.c.b16 %v1083, %v1082
      %v1143 = vpack.c.b16 %v1085, %v1084
      %v1144 = vpack.c.b16 %v1087, %v1086
      %v1145 = vpack.c.b16 %v1089, %v1088
      %v1146 = vpack.c.b16 %v1091, %v1090
      %v1147 = vpack.c.b16 %v1093, %v1092
      %v1148 = vpack.c.b16 %v1095, %v1094
      %v1149 = vpack.c.b16 %v1097, %v1096
      %v1150 = vpack.c.b16 %v1099, %v1098
      %v1151 = vpack.c.b16 %v1101, %v1100
      %v1152 = vpack.c.b16 %v1103, %v1102
      %v1153 = vpack.c.b16 %v1105, %v1104
      %v1154 = vpack.c.b16 %v1107, %v1106
      %v1155 = vpack.c.b16 %v1109, %v1108
      %v1156 = vpack.c.b16 %v1111, %v1110
      %v1157 = vpack.c.b16 %v1113, %v1112
      %v1158 = vpack.c.b16 %v1115, %v1114
      %v1159 = vpack.c.b16 %v1117, %v1116
      %v1160 = vpack.c.b16 %v1119, %v1118
      %v1161 = vpack.c.b16 %v1121, %v1120
      %v1162 = vpack.c.b16 %v1123, %v1122
      %v1163 = vpack.c.b16 %v1125, %v1124
      %v1164 = vpack.c.b16 %v1127, %v1126
      %v1165 = vpack.c.b16 %v1129, %v1128
      %v1166 = vpack.c.b16 %v1131, %v1130
      %v1167 = vpack.c.b16 %v1133, %v1132
      %v1168 = vpack.c.b16 %v1135, %v1134
      %v1169 = vpack.c.b16 %v1137, %v1136
      %v1171 = vsel %vm553, %v1138, 0
      %v1174 = vsel %vm553, %v1139, 0
      %v1177 = vsel %vm553, %v1140, 0
      %v1180 = vsel %vm553, %v1141, 0
      %v1183 = vsel %vm553, %v1142, 0
      %v1186 = vsel %vm553, %v1143, 0
      %v1189 = vsel %vm553, %v1144, 0
      %v1192 = vsel %vm553, %v1145, 0
      %v1195 = vsel %vm553, %v1146, 0
      %v1198 = vsel %vm553, %v1147, 0
      %v1201 = vsel %vm553, %v1148, 0
      %v1204 = vsel %vm553, %v1149, 0
      %v1207 = vsel %vm553, %v1150, 0
      %v1210 = vsel %vm553, %v1151, 0
      %v1213 = vsel %vm553, %v1152, 0
      %v1216 = vsel %vm553, %v1153, 0
      %v1219 = vsel %vm553, %v1154, 0
      %v1222 = vsel %vm553, %v1155, 0
      %v1225 = vsel %vm553, %v1156, 0
      %v1228 = vsel %vm553, %v1157, 0
      %v1231 = vsel %vm553, %v1158, 0
      %v1234 = vsel %vm553, %v1159, 0
      %v1237 = vsel %vm553, %v1160, 0
      %v1240 = vsel %vm553, %v1161, 0
      %v1243 = vsel %vm553, %v1162, 0
      %v1246 = vsel %vm553, %v1163, 0
      %v1249 = vsel %vm553, %v1164, 0
      %v1252 = vsel %vm553, %v1165, 0
      %v1255 = vsel %vm553, %v1166, 0
      %v1258 = vsel %vm553, %v1167, 0
      %v1261 = vsel %vm553, %v1168, 0
      %v1264 = vsel %vm553, %v1169, 0
      %1266 = vmatprep.subr.bf16.mxu0 0
      %1267 = vmatpush1.bf16.msra.mxu0 0
      %1268 = vmatprep.subr.bf16.mxu0 0
      %1269 = vmatpush1.bf16.msra.mxu0 0
      %1270 = vmatprep.subr.bf16.mxu0 0
      %1271 = vmatpush1.bf16.msra.mxu0 0
      %1272 = vmatprep.subr.bf16.mxu0 0
      %1273 = vmatpush1.bf16.msra.mxu0 0
      %1274 = vmatprep.subr.bf16.mxu0 0
      %1275 = vmatpush1.bf16.msra.mxu0 0
      %1276 = vmatprep.subr.bf16.mxu0 0
      %1277 = vmatpush1.bf16.msra.mxu0 0
      %1278 = vmatprep.subr.bf16.mxu0 0
      %1279 = vmatpush1.bf16.msra.mxu0 0
      %1280 = vmatprep.subr.bf16.mxu0 0
      %1281 = vmatpush1.bf16.msra.mxu0 %v655
      %1282 = vmatprep.subr.bf16.mxu0 0
      %1283 = vmatpush2.bf16.msra.mxu0 0
      %1284 = vmatprep.subr.bf16.mxu0 0
      %1285 = vmatpush2.bf16.msra.mxu0 0
      %1286 = vmatprep.subr.bf16.mxu0 0
      %1287 = vmatpush2.bf16.msra.mxu0 0
      %1288 = vmatprep.subr.bf16.mxu0 0
      %1289 = vmatpush2.bf16.msra.mxu0 0
      %1290 = vmatprep.subr.bf16.mxu0 0
      %1291 = vmatpush2.bf16.msra.mxu0 0
      %1292 = vmatprep.subr.bf16.mxu0 0
      %1293 = vmatpush2.bf16.msra.mxu0 0
      %1294 = vmatprep.subr.bf16.mxu0 0
      %1295 = vmatpush2.bf16.msra.mxu0 0
      %1296 = vmatprep.subr.bf16.mxu0 0
      %1297 = vmatpush2.bf16.msra.mxu0 0
      %1298 = vmatprep.mubr.bf16.mxu0 0
      %1299 = vmatmul.mubr.bf16.gmra.mxu0 %v1171
      %v1300 = vpop.f32.mrf.mxu0
      %v1301 = vadd.f32 0.0, %v1300
      %v1302 = vpop.f32.mrf.mxu0
      %v1303 = vpop.f32.mrf.mxu0
      %v1304 = vadd.f32 0.0, %v1303
      %v1305 = vpop.f32.mrf.mxu0
      %1306 = vmatprep.mubr.bf16.mxu0 0
      %1307 = vmatmul.mubr.bf16.gmra.mxu0 %v1174
      %v1308 = vpop.f32.mrf.mxu0
      %v1309 = vadd.f32 0.0, %v1308
      %v1310 = vpop.f32.mrf.mxu0
      %v1311 = vpop.f32.mrf.mxu0
      %v1312 = vadd.f32 0.0, %v1311
      %v1313 = vpop.f32.mrf.mxu0
      %1314 = vmatprep.mubr.bf16.mxu0 0
      %1315 = vmatmul.mubr.bf16.gmra.mxu0 %v1177
      %v1316 = vpop.f32.mrf.mxu0
      %v1317 = vadd.f32 0.0, %v1316
      %v1318 = vpop.f32.mrf.mxu0
      %v1319 = vpop.f32.mrf.mxu0
      %v1320 = vadd.f32 0.0, %v1319
      %v1321 = vpop.f32.mrf.mxu0
      %1322 = vmatprep.mubr.bf16.mxu0 0
      %1323 = vmatmul.mubr.bf16.gmra.mxu0 %v1180
      %v1324 = vpop.f32.mrf.mxu0
      %v1325 = vadd.f32 0.0, %v1324
      %v1326 = vpop.f32.mrf.mxu0
      %v1327 = vpop.f32.mrf.mxu0
      %v1328 = vadd.f32 0.0, %v1327
      %v1329 = vpop.f32.mrf.mxu0
      %1330 = vmatprep.mubr.bf16.mxu0 0
      %1331 = vmatmul.mubr.bf16.gmra.mxu0 %v1183
      %v1332 = vpop.f32.mrf.mxu0
      %v1333 = vadd.f32 0.0, %v1332
      %v1334 = vpop.f32.mrf.mxu0
      %v1335 = vpop.f32.mrf.mxu0
      %v1336 = vadd.f32 0.0, %v1335
      %v1337 = vpop.f32.mrf.mxu0
      %1338 = vmatprep.mubr.bf16.mxu0 0
      %1339 = vmatmul.mubr.bf16.gmra.mxu0 %v1186
      %v1340 = vpop.f32.mrf.mxu0
      %v1341 = vadd.f32 0.0, %v1340
      %v1342 = vpop.f32.mrf.mxu0
      %v1343 = vpop.f32.mrf.mxu0
      %v1344 = vadd.f32 0.0, %v1343
      %v1345 = vpop.f32.mrf.mxu0
      %1346 = vmatprep.mubr.bf16.mxu0 0
      %1347 = vmatmul.mubr.bf16.gmra.mxu0 %v1189
      %v1348 = vpop.f32.mrf.mxu0
      %v1349 = vadd.f32 0.0, %v1348
      %v1350 = vpop.f32.mrf.mxu0
      %v1351 = vpop.f32.mrf.mxu0
      %v1352 = vadd.f32 0.0, %v1351
      %v1353 = vpop.f32.mrf.mxu0
      %1354 = vmatprep.mubr.bf16.mxu0 0
      %1355 = vmatmul.mubr.bf16.gmra.mxu0 %v1192
      %v1356 = vpop.f32.mrf.mxu0
      %v1357 = vadd.f32 0.0, %v1356
      %v1358 = vpop.f32.mrf.mxu0
      %v1359 = vpop.f32.mrf.mxu0
      %v1360 = vadd.f32 0.0, %v1359
      %v1361 = vpop.f32.mrf.mxu0
      %1362 = vmatprep.mubr.bf16.mxu0 0
      %1363 = vmatmul.mubr.bf16.gmra.mxu0 %v1195
      %v1364 = vpop.f32.mrf.mxu0
      %v1365 = vadd.f32 0.0, %v1364
      %v1366 = vpop.f32.mrf.mxu0
      %v1367 = vpop.f32.mrf.mxu0
      %v1368 = vadd.f32 0.0, %v1367
      %v1369 = vpop.f32.mrf.mxu0
      %1370 = vmatprep.mubr.bf16.mxu0 0
      %1371 = vmatmul.mubr.bf16.gmra.mxu0 %v1198
      %v1372 = vpop.f32.mrf.mxu0
      %v1373 = vadd.f32 0.0, %v1372
      %v1374 = vpop.f32.mrf.mxu0
      %v1375 = vpop.f32.mrf.mxu0
      %v1376 = vadd.f32 0.0, %v1375
      %v1377 = vpop.f32.mrf.mxu0
      %1378 = vmatprep.mubr.bf16.mxu0 0
      %1379 = vmatmul.mubr.bf16.gmra.mxu0 %v1201
      %v1380 = vpop.f32.mrf.mxu0
      %v1381 = vadd.f32 0.0, %v1380
      %v1382 = vpop.f32.mrf.mxu0
      %v1383 = vpop.f32.mrf.mxu0
      %v1384 = vadd.f32 0.0, %v1383
      %v1385 = vpop.f32.mrf.mxu0
      %1386 = vmatprep.mubr.bf16.mxu0 0
      %1387 = vmatmul.mubr.bf16.gmra.mxu0 %v1204
      %v1388 = vpop.f32.mrf.mxu0
      %v1389 = vadd.f32 0.0, %v1388
      %v1390 = vpop.f32.mrf.mxu0
      %v1391 = vpop.f32.mrf.mxu0
      %v1392 = vadd.f32 0.0, %v1391
      %v1393 = vpop.f32.mrf.mxu0
      %1394 = vmatprep.mubr.bf16.mxu0 0
      %1395 = vmatmul.mubr.bf16.gmra.mxu0 %v1207
      %v1396 = vpop.f32.mrf.mxu0
      %v1397 = vadd.f32 0.0, %v1396
      %v1398 = vpop.f32.mrf.mxu0
      %v1399 = vpop.f32.mrf.mxu0
      %v1400 = vadd.f32 0.0, %v1399
      %v1401 = vpop.f32.mrf.mxu0
      %1402 = vmatprep.mubr.bf16.mxu0 0
      %1403 = vmatmul.mubr.bf16.gmra.mxu0 %v1210
      %v1404 = vpop.f32.mrf.mxu0
      %v1405 = vadd.f32 0.0, %v1404
      %v1406 = vpop.f32.mrf.mxu0
      %v1407 = vpop.f32.mrf.mxu0
      %v1408 = vadd.f32 0.0, %v1407
      %v1409 = vpop.f32.mrf.mxu0
      %1410 = vmatprep.mubr.bf16.mxu0 0
      %1411 = vmatmul.mubr.bf16.gmra.mxu0 %v1213
      %v1412 = vpop.f32.mrf.mxu0
      %v1413 = vadd.f32 0.0, %v1412
      %v1414 = vpop.f32.mrf.mxu0
      %v1415 = vpop.f32.mrf.mxu0
      %v1416 = vadd.f32 0.0, %v1415
      %v1417 = vpop.f32.mrf.mxu0
      %1418 = vmatprep.mubr.bf16.mxu0 0
      %1419 = vmatmul.mubr.bf16.gmra.mxu0 %v1216
      %v1420 = vpop.f32.mrf.mxu0
      %v1421 = vadd.f32 0.0, %v1420
      %v1422 = vpop.f32.mrf.mxu0
      %v1423 = vpop.f32.mrf.mxu0
      %v1424 = vadd.f32 0.0, %v1423
      %v1425 = vpop.f32.mrf.mxu0
      %1426 = vmatprep.mubr.bf16.mxu0 0
      %1427 = vmatmul.mubr.bf16.gmra.mxu0 %v1219
      %v1428 = vpop.f32.mrf.mxu0
      %v1429 = vadd.f32 0.0, %v1428
      %v1430 = vpop.f32.mrf.mxu0
      %v1431 = vpop.f32.mrf.mxu0
      %v1432 = vadd.f32 0.0, %v1431
      %v1433 = vpop.f32.mrf.mxu0
      %1434 = vmatprep.mubr.bf16.mxu0 0
      %1435 = vmatmul.mubr.bf16.gmra.mxu0 %v1222
      %v1436 = vpop.f32.mrf.mxu0
      %v1437 = vadd.f32 0.0, %v1436
      %v1438 = vpop.f32.mrf.mxu0
      %v1439 = vpop.f32.mrf.mxu0
      %v1440 = vadd.f32 0.0, %v1439
      %v1441 = vpop.f32.mrf.mxu0
      %1442 = vmatprep.mubr.bf16.mxu0 0
      %1443 = vmatmul.mubr.bf16.gmra.mxu0 %v1225
      %v1444 = vpop.f32.mrf.mxu0
      %v1445 = vadd.f32 0.0, %v1444
      %v1446 = vpop.f32.mrf.mxu0
      %v1447 = vpop.f32.mrf.mxu0
      %v1448 = vadd.f32 0.0, %v1447
      %v1449 = vpop.f32.mrf.mxu0
      %1450 = vmatprep.mubr.bf16.mxu0 0
      %1451 = vmatmul.mubr.bf16.gmra.mxu0 %v1228
      %v1452 = vpop.f32.mrf.mxu0
      %v1453 = vadd.f32 0.0, %v1452
      %v1454 = vpop.f32.mrf.mxu0
      %v1455 = vpop.f32.mrf.mxu0
      %v1456 = vadd.f32 0.0, %v1455
      %v1457 = vpop.f32.mrf.mxu0
      %1458 = vmatprep.mubr.bf16.mxu0 0
      %1459 = vmatmul.mubr.bf16.gmra.mxu0 %v1231
      %v1460 = vpop.f32.mrf.mxu0
      %v1461 = vadd.f32 0.0, %v1460
      %v1462 = vpop.f32.mrf.mxu0
      %v1463 = vpop.f32.mrf.mxu0
      %v1464 = vadd.f32 0.0, %v1463
      %v1465 = vpop.f32.mrf.mxu0
      %1466 = vmatprep.mubr.bf16.mxu0 0
      %1467 = vmatmul.mubr.bf16.gmra.mxu0 %v1234
      %v1468 = vpop.f32.mrf.mxu0
      %v1469 = vadd.f32 0.0, %v1468
      %v1470 = vpop.f32.mrf.mxu0
      %v1471 = vpop.f32.mrf.mxu0
      %v1472 = vadd.f32 0.0, %v1471
      %v1473 = vpop.f32.mrf.mxu0
      %1474 = vmatprep.mubr.bf16.mxu0 0
      %1475 = vmatmul.mubr.bf16.gmra.mxu0 %v1237
      %v1476 = vpop.f32.mrf.mxu0
      %v1477 = vadd.f32 0.0, %v1476
      %v1478 = vpop.f32.mrf.mxu0
      %v1479 = vpop.f32.mrf.mxu0
      %v1480 = vadd.f32 0.0, %v1479
      %v1481 = vpop.f32.mrf.mxu0
      %1482 = vmatprep.mubr.bf16.mxu0 0
      %1483 = vmatmul.mubr.bf16.gmra.mxu0 %v1240
      %v1484 = vpop.f32.mrf.mxu0
      %v1485 = vadd.f32 0.0, %v1484
      %v1486 = vpop.f32.mrf.mxu0
      %v1487 = vpop.f32.mrf.mxu0
      %v1488 = vadd.f32 0.0, %v1487
      %v1489 = vpop.f32.mrf.mxu0
      %1490 = vmatprep.mubr.bf16.mxu0 0
      %1491 = vmatmul.mubr.bf16.gmra.mxu0 %v1243
      %v1492 = vpop.f32.mrf.mxu0
      %v1493 = vadd.f32 0.0, %v1492
      %v1494 = vpop.f32.mrf.mxu0
      %v1495 = vpop.f32.mrf.mxu0
      %v1496 = vadd.f32 0.0, %v1495
      %v1497 = vpop.f32.mrf.mxu0
      %1498 = vmatprep.mubr.bf16.mxu0 0
      %1499 = vmatmul.mubr.bf16.gmra.mxu0 %v1246
      %v1500 = vpop.f32.mrf.mxu0
      %v1501 = vadd.f32 0.0, %v1500
      %v1502 = vpop.f32.mrf.mxu0
      %v1503 = vpop.f32.mrf.mxu0
      %v1504 = vadd.f32 0.0, %v1503
      %v1505 = vpop.f32.mrf.mxu0
      %1506 = vmatprep.mubr.bf16.mxu0 0
      %1507 = vmatmul.mubr.bf16.gmra.mxu0 %v1249
      %v1508 = vpop.f32.mrf.mxu0
      %v1509 = vadd.f32 0.0, %v1508
      %v1510 = vpop.f32.mrf.mxu0
      %v1511 = vpop.f32.mrf.mxu0
      %v1512 = vadd.f32 0.0, %v1511
      %v1513 = vpop.f32.mrf.mxu0
      %1514 = vmatprep.mubr.bf16.mxu0 0
      %1515 = vmatmul.mubr.bf16.gmra.mxu0 %v1252
      %v1516 = vpop.f32.mrf.mxu0
      %v1517 = vadd.f32 0.0, %v1516
      %v1518 = vpop.f32.mrf.mxu0
      %v1519 = vpop.f32.mrf.mxu0
      %v1520 = vadd.f32 0.0, %v1519
      %v1521 = vpop.f32.mrf.mxu0
      %1522 = vmatprep.mubr.bf16.mxu0 0
      %1523 = vmatmul.mubr.bf16.gmra.mxu0 %v1255
      %v1524 = vpop.f32.mrf.mxu0
      %v1525 = vadd.f32 0.0, %v1524
      %v1526 = vpop.f32.mrf.mxu0
      %v1527 = vpop.f32.mrf.mxu0
      %v1528 = vadd.f32 0.0, %v1527
      %v1529 = vpop.f32.mrf.mxu0
      %1530 = vmatprep.mubr.bf16.mxu0 0
      %1531 = vmatmul.mubr.bf16.gmra.mxu0 %v1258
      %v1532 = vpop.f32.mrf.mxu0
      %v1533 = vadd.f32 0.0, %v1532
      %v1534 = vpop.f32.mrf.mxu0
      %v1535 = vpop.f32.mrf.mxu0
      %v1536 = vadd.f32 0.0, %v1535
      %v1537 = vpop.f32.mrf.mxu0
      %1538 = vmatprep.mubr.bf16.mxu0 0
      %1539 = vmatmul.mubr.bf16.gmra.mxu0 %v1261
      %v1540 = vpop.f32.mrf.mxu0
      %v1541 = vadd.f32 0.0, %v1540
      %v1542 = vpop.f32.mrf.mxu0
      %v1543 = vpop.f32.mrf.mxu0
      %v1544 = vadd.f32 0.0, %v1543
      %v1545 = vpop.f32.mrf.mxu0
      %1546 = vmatprep.mubr.bf16.mxu0 0
      %1547 = vmatmul.mubr.bf16.gmra.mxu0 %v1264
      %v1548 = vpop.f32.mrf.mxu0
      %v1549 = vadd.f32 0.0, %v1548
      %v1550 = vpop.f32.mrf.mxu0
      %v1551 = vpop.f32.mrf.mxu0
      %v1552 = vadd.f32 0.0, %v1551
      %v1553 = vpop.f32.mrf.mxu0
      %1554 = vdwg.mxu0
      %v1555 = vmax.f32 %v692, %v1301
      %v1556 = vmax.f32 %v695, %v1304
      %v1557 = vmax.f32 %v700, %v1309
      %v1558 = vmax.f32 %v703, %v1312
      %v1559 = vmax.f32 %v708, %v1317
      %v1560 = vmax.f32 %v711, %v1320
      %v1561 = vmax.f32 %v716, %v1325
      %v1562 = vmax.f32 %v719, %v1328
      %v1563 = vmax.f32 %v724, %v1333
      %v1564 = vmax.f32 %v727, %v1336
      %v1565 = vmax.f32 %v732, %v1341
      %v1566 = vmax.f32 %v735, %v1344
      %v1567 = vmax.f32 %v740, %v1349
      %v1568 = vmax.f32 %v743, %v1352
      %v1569 = vmax.f32 %v748, %v1357
      %v1570 = vmax.f32 %v751, %v1360
      %v1571 = vmax.f32 %v756, %v1365
      %v1572 = vmax.f32 %v759, %v1368
      %v1573 = vmax.f32 %v764, %v1373
      %v1574 = vmax.f32 %v767, %v1376
      %v1575 = vmax.f32 %v772, %v1381
      %v1576 = vmax.f32 %v775, %v1384
      %v1577 = vmax.f32 %v780, %v1389
      %v1578 = vmax.f32 %v783, %v1392
      %v1579 = vmax.f32 %v788, %v1397
      %v1580 = vmax.f32 %v791, %v1400
      %v1581 = vmax.f32 %v796, %v1405
      %v1582 = vmax.f32 %v799, %v1408
      %v1583 = vmax.f32 %v804, %v1413
      %v1584 = vmax.f32 %v807, %v1416
      %v1585 = vmax.f32 %v812, %v1421
      %v1586 = vmax.f32 %v815, %v1424
      %v1587 = vmax.f32 %v820, %v1429
      %v1588 = vmax.f32 %v823, %v1432
      %v1589 = vmax.f32 %v828, %v1437
      %v1590 = vmax.f32 %v831, %v1440
      %v1591 = vmax.f32 %v836, %v1445
      %v1592 = vmax.f32 %v839, %v1448
      %v1593 = vmax.f32 %v844, %v1453
      %v1594 = vmax.f32 %v847, %v1456
      %v1595 = vmax.f32 %v852, %v1461
      %v1596 = vmax.f32 %v855, %v1464
      %v1597 = vmax.f32 %v860, %v1469
      %v1598 = vmax.f32 %v863, %v1472
      %v1599 = vmax.f32 %v868, %v1477
      %v1600 = vmax.f32 %v871, %v1480
      %v1601 = vmax.f32 %v876, %v1485
      %v1602 = vmax.f32 %v879, %v1488
      %v1603 = vmax.f32 %v884, %v1493
      %v1604 = vmax.f32 %v887, %v1496
      %v1605 = vmax.f32 %v892, %v1501
      %v1606 = vmax.f32 %v895, %v1504
      %v1607 = vmax.f32 %v900, %v1509
      %v1608 = vmax.f32 %v903, %v1512
      %v1609 = vmax.f32 %v908, %v1517
      %v1610 = vmax.f32 %v911, %v1520
      %v1611 = vmax.f32 %v916, %v1525
      %v1612 = vmax.f32 %v919, %v1528
      %v1613 = vmax.f32 %v924, %v1533
      %v1614 = vmax.f32 %v927, %v1536
      %v1615 = vmax.f32 %v932, %v1541
      %v1616 = vmax.f32 %v935, %v1544
      %v1617 = vmax.f32 %v940, %v1549
      %v1618 = vmax.f32 %v943, %v1552
      %v1619 = vld [vmem:[%s307] sm:$0xf]
      %v1620 = vld [vmem:[%s307 + $0x4] sm:$0xf]
      %v1621 = vld [vmem:[%s307 + $0x8] sm:$0xf]
      %v1622 = vld [vmem:[%s307 + $0xc] sm:$0xf]
      %v1623 = vld [vmem:[%s307 + $0x10] sm:$0xf]
      %v1624 = vld [vmem:[%s307 + $0x14] sm:$0xf]
      %v1625 = vld [vmem:[%s307 + $0x18] sm:$0xf]
      %v1626 = vld [vmem:[%s307 + $0x1c] sm:$0xf]
      %v1627 = vld [vmem:[%s307 + $0x20] sm:$0xf]
      %v1628 = vld [vmem:[%s307 + $0x24] sm:$0xf]
      %v1629 = vld [vmem:[%s307 + $0x28] sm:$0xf]
      %v1630 = vld [vmem:[%s307 + $0x2c] sm:$0xf]
      %v1631 = vld [vmem:[%s307 + $0x30] sm:$0xf]
      %v1632 = vld [vmem:[%s307 + $0x34] sm:$0xf]
      %v1633 = vld [vmem:[%s307 + $0x38] sm:$0xf]
      %v1634 = vld [vmem:[%s307 + $0x3c] sm:$0xf]
      %v1635 = vld [vmem:[%s307 + $0x40] sm:$0xf]
      %v1636 = vld [vmem:[%s307 + $0x44] sm:$0xf]
      %v1637 = vld [vmem:[%s307 + $0x48] sm:$0xf]
      %v1638 = vld [vmem:[%s307 + $0x4c] sm:$0xf]
      %v1639 = vld [vmem:[%s307 + $0x50] sm:$0xf]
      %v1640 = vld [vmem:[%s307 + $0x54] sm:$0xf]
      %v1641 = vld [vmem:[%s307 + $0x58] sm:$0xf]
      %v1642 = vld [vmem:[%s307 + $0x5c] sm:$0xf]
      %v1643 = vld [vmem:[%s307 + $0x60] sm:$0xf]
      %v1644 = vld [vmem:[%s307 + $0x64] sm:$0xf]
      %v1645 = vld [vmem:[%s307 + $0x68] sm:$0xf]
      %v1646 = vld [vmem:[%s307 + $0x6c] sm:$0xf]
      %v1647 = vld [vmem:[%s307 + $0x70] sm:$0xf]
      %v1648 = vld [vmem:[%s307 + $0x74] sm:$0xf]
      %v1649 = vld [vmem:[%s307 + $0x78] sm:$0xf]
      %v1650 = vld [vmem:[%s307 + $0x7c] sm:$0xf]
      %v1651 = vld [vmem:[%s307 + $0x80] sm:$0xf]
      %v1652 = vld [vmem:[%s307 + $0x84] sm:$0xf]
      %v1653 = vld [vmem:[%s307 + $0x88] sm:$0xf]
      %v1654 = vld [vmem:[%s307 + $0x8c] sm:$0xf]
      %v1655 = vld [vmem:[%s307 + $0x90] sm:$0xf]
      %v1656 = vld [vmem:[%s307 + $0x94] sm:$0xf]
      %v1657 = vld [vmem:[%s307 + $0x98] sm:$0xf]
      %v1658 = vld [vmem:[%s307 + $0x9c] sm:$0xf]
      %v1659 = vld [vmem:[%s307 + $0xa0] sm:$0xf]
      %v1660 = vld [vmem:[%s307 + $0xa4] sm:$0xf]
      %v1661 = vld [vmem:[%s307 + $0xa8] sm:$0xf]
      %v1662 = vld [vmem:[%s307 + $0xac] sm:$0xf]
      %v1663 = vld [vmem:[%s307 + $0xb0] sm:$0xf]
      %v1664 = vld [vmem:[%s307 + $0xb4] sm:$0xf]
      %v1665 = vld [vmem:[%s307 + $0xb8] sm:$0xf]
      %v1666 = vld [vmem:[%s307 + $0xbc] sm:$0xf]
      %v1667 = vld [vmem:[%s307 + $0xc0] sm:$0xf]
      %v1668 = vld [vmem:[%s307 + $0xc4] sm:$0xf]
      %v1669 = vld [vmem:[%s307 + $0xc8] sm:$0xf]
      %v1670 = vld [vmem:[%s307 + $0xcc] sm:$0xf]
      %v1671 = vld [vmem:[%s307 + $0xd0] sm:$0xf]
      %v1672 = vld [vmem:[%s307 + $0xd4] sm:$0xf]
      %v1673 = vld [vmem:[%s307 + $0xd8] sm:$0xf]
      %v1674 = vld [vmem:[%s307 + $0xdc] sm:$0xf]
      %v1675 = vld [vmem:[%s307 + $0xe0] sm:$0xf]
      %v1676 = vld [vmem:[%s307 + $0xe4] sm:$0xf]
      %v1677 = vld [vmem:[%s307 + $0xe8] sm:$0xf]
      %v1678 = vld [vmem:[%s307 + $0xec] sm:$0xf]
      %v1679 = vld [vmem:[%s307 + $0xf0] sm:$0xf]
      %v1680 = vld [vmem:[%s307 + $0xf4] sm:$0xf]
      %v1681 = vld [vmem:[%s307 + $0xf8] sm:$0xf]
      %v1682 = vld [vmem:[%s307 + $0xfc] sm:$0xf]
      %v1747 = vunpack.c.l.b16 %v1619
      %v1748 = vunpack.c.l.b16 %v1620
      %v1749 = vunpack.c.l.b16 %v1621
      %v1750 = vunpack.c.l.b16 %v1622
      %v1751 = vunpack.c.l.b16 %v1623
      %v1752 = vunpack.c.l.b16 %v1624
      %v1753 = vunpack.c.l.b16 %v1625
      %v1754 = vunpack.c.l.b16 %v1626
      %v1755 = vunpack.c.l.b16 %v1627
      %v1756 = vunpack.c.l.b16 %v1628
      %v1757 = vunpack.c.l.b16 %v1629
      %v1758 = vunpack.c.l.b16 %v1630
      %v1759 = vunpack.c.l.b16 %v1631
      %v1760 = vunpack.c.l.b16 %v1632
      %v1761 = vunpack.c.l.b16 %v1633
      %v1762 = vunpack.c.l.b16 %v1634
      %v1763 = vunpack.c.l.b16 %v1635
      %v1764 = vunpack.c.l.b16 %v1636
      %v1765 = vunpack.c.l.b16 %v1637
      %v1766 = vunpack.c.l.b16 %v1638
      %v1767 = vunpack.c.l.b16 %v1639
      %v1768 = vunpack.c.l.b16 %v1640
      %v1769 = vunpack.c.l.b16 %v1641
      %v1770 = vunpack.c.l.b16 %v1642
      %v1771 = vunpack.c.l.b16 %v1643
      %v1772 = vunpack.c.l.b16 %v1644
      %v1773 = vunpack.c.l.b16 %v1645
      %v1774 = vunpack.c.l.b16 %v1646
      %v1775 = vunpack.c.l.b16 %v1647
      %v1776 = vunpack.c.l.b16 %v1648
      %v1777 = vunpack.c.l.b16 %v1649
      %v1778 = vunpack.c.l.b16 %v1650
      %v1779 = vunpack.c.l.b16 %v1651
      %v1780 = vunpack.c.l.b16 %v1652
      %v1781 = vunpack.c.l.b16 %v1653
      %v1782 = vunpack.c.l.b16 %v1654
      %v1783 = vunpack.c.l.b16 %v1655
      %v1784 = vunpack.c.l.b16 %v1656
      %v1785 = vunpack.c.l.b16 %v1657
      %v1786 = vunpack.c.l.b16 %v1658
      %v1787 = vunpack.c.l.b16 %v1659
      %v1788 = vunpack.c.l.b16 %v1660
      %v1789 = vunpack.c.l.b16 %v1661
      %v1790 = vunpack.c.l.b16 %v1662
      %v1791 = vunpack.c.l.b16 %v1663
      %v1792 = vunpack.c.l.b16 %v1664
      %v1793 = vunpack.c.l.b16 %v1665
      %v1794 = vunpack.c.l.b16 %v1666
      %v1795 = vunpack.c.l.b16 %v1667
      %v1796 = vunpack.c.l.b16 %v1668
      %v1797 = vunpack.c.l.b16 %v1669
      %v1798 = vunpack.c.l.b16 %v1670
      %v1799 = vunpack.c.l.b16 %v1671
      %v1800 = vunpack.c.l.b16 %v1672
      %v1801 = vunpack.c.l.b16 %v1673
      %v1802 = vunpack.c.l.b16 %v1674
      %v1803 = vunpack.c.l.b16 %v1675
      %v1804 = vunpack.c.l.b16 %v1676
      %v1805 = vunpack.c.l.b16 %v1677
      %v1806 = vunpack.c.l.b16 %v1678
      %v1807 = vunpack.c.l.b16 %v1679
      %v1808 = vunpack.c.l.b16 %v1680
      %v1809 = vunpack.c.l.b16 %v1681
      %v1810 = vunpack.c.l.b16 %v1682
      %v1811 = vpack.c.b16 %v1748, %v1747
      %v1812 = vpack.c.b16 %v1750, %v1749
      %v1813 = vpack.c.b16 %v1752, %v1751
      %v1814 = vpack.c.b16 %v1754, %v1753
      %v1815 = vpack.c.b16 %v1756, %v1755
      %v1816 = vpack.c.b16 %v1758, %v1757
      %v1817 = vpack.c.b16 %v1760, %v1759
      %v1818 = vpack.c.b16 %v1762, %v1761
      %v1819 = vpack.c.b16 %v1764, %v1763
      %v1820 = vpack.c.b16 %v1766, %v1765
      %v1821 = vpack.c.b16 %v1768, %v1767
      %v1822 = vpack.c.b16 %v1770, %v1769
      %v1823 = vpack.c.b16 %v1772, %v1771
      %v1824 = vpack.c.b16 %v1774, %v1773
      %v1825 = vpack.c.b16 %v1776, %v1775
      %v1826 = vpack.c.b16 %v1778, %v1777
      %v1827 = vpack.c.b16 %v1780, %v1779
      %v1828 = vpack.c.b16 %v1782, %v1781
      %v1829 = vpack.c.b16 %v1784, %v1783
      %v1830 = vpack.c.b16 %v1786, %v1785
      %v1831 = vpack.c.b16 %v1788, %v1787
      %v1832 = vpack.c.b16 %v1790, %v1789
      %v1833 = vpack.c.b16 %v1792, %v1791
      %v1834 = vpack.c.b16 %v1794, %v1793
      %v1835 = vpack.c.b16 %v1796, %v1795
      %v1836 = vpack.c.b16 %v1798, %v1797
      %v1837 = vpack.c.b16 %v1800, %v1799
      %v1838 = vpack.c.b16 %v1802, %v1801
      %v1839 = vpack.c.b16 %v1804, %v1803
      %v1840 = vpack.c.b16 %v1806, %v1805
      %v1841 = vpack.c.b16 %v1808, %v1807
      %v1842 = vpack.c.b16 %v1810, %v1809
      %v1844 = vsel %vm553, %v1811, 0
      %v1847 = vsel %vm553, %v1812, 0
      %v1850 = vsel %vm553, %v1813, 0
      %v1853 = vsel %vm553, %v1814, 0
      %v1856 = vsel %vm553, %v1815, 0
      %v1859 = vsel %vm553, %v1816, 0
      %v1862 = vsel %vm553, %v1817, 0
      %v1865 = vsel %vm553, %v1818, 0
      %v1868 = vsel %vm553, %v1819, 0
      %v1871 = vsel %vm553, %v1820, 0
      %v1874 = vsel %vm553, %v1821, 0
      %v1877 = vsel %vm553, %v1822, 0
      %v1880 = vsel %vm553, %v1823, 0
      %v1883 = vsel %vm553, %v1824, 0
      %v1886 = vsel %vm553, %v1825, 0
      %v1889 = vsel %vm553, %v1826, 0
      %v1892 = vsel %vm553, %v1827, 0
      %v1895 = vsel %vm553, %v1828, 0
      %v1898 = vsel %vm553, %v1829, 0
      %v1901 = vsel %vm553, %v1830, 0
      %v1904 = vsel %vm553, %v1831, 0
      %v1907 = vsel %vm553, %v1832, 0
      %v1910 = vsel %vm553, %v1833, 0
      %v1913 = vsel %vm553, %v1834, 0
      %v1916 = vsel %vm553, %v1835, 0
      %v1919 = vsel %vm553, %v1836, 0
      %v1922 = vsel %vm553, %v1837, 0
      %v1925 = vsel %vm553, %v1838, 0
      %v1928 = vsel %vm553, %v1839, 0
      %v1931 = vsel %vm553, %v1840, 0
      %v1934 = vsel %vm553, %v1841, 0
      %v1937 = vsel %vm553, %v1842, 0
      %1939 = vmatprep.subr.bf16.mxu0 0
      %1940 = vmatpush1.bf16.msra.mxu0 0
      %1941 = vmatprep.subr.bf16.mxu0 0
      %1942 = vmatpush1.bf16.msra.mxu0 0
      %1943 = vmatprep.subr.bf16.mxu0 0
      %1944 = vmatpush1.bf16.msra.mxu0 0
      %1945 = vmatprep.subr.bf16.mxu0 0
      %1946 = vmatpush1.bf16.msra.mxu0 0
      %1947 = vmatprep.subr.bf16.mxu0 0
      %1948 = vmatpush1.bf16.msra.mxu0 0
      %1949 = vmatprep.subr.bf16.mxu0 0
      %1950 = vmatpush1.bf16.msra.mxu0 0
      %1951 = vmatprep.subr.bf16.mxu0 0
      %1952 = vmatpush1.bf16.msra.mxu0 0
      %1953 = vmatprep.subr.bf16.mxu0 0
      %1954 = vmatpush1.bf16.msra.mxu0 %v655
      %1955 = vmatprep.subr.bf16.mxu0 0
      %1956 = vmatpush2.bf16.msra.mxu0 0
      %1957 = vmatprep.subr.bf16.mxu0 0
      %1958 = vmatpush2.bf16.msra.mxu0 0
      %1959 = vmatprep.subr.bf16.mxu0 0
      %1960 = vmatpush2.bf16.msra.mxu0 0
      %1961 = vmatprep.subr.bf16.mxu0 0
      %1962 = vmatpush2.bf16.msra.mxu0 0
      %1963 = vmatprep.subr.bf16.mxu0 0
      %1964 = vmatpush2.bf16.msra.mxu0 0
      %1965 = vmatprep.subr.bf16.mxu0 0
      %1966 = vmatpush2.bf16.msra.mxu0 0
      %1967 = vmatprep.subr.bf16.mxu0 0
      %1968 = vmatpush2.bf16.msra.mxu0 0
      %1969 = vmatprep.subr.bf16.mxu0 0
      %1970 = vmatpush2.bf16.msra.mxu0 0
      %1971 = vmatprep.mubr.bf16.mxu0 0
      %1972 = vmatmul.mubr.bf16.gmra.mxu0 %v1844
      %v1973 = vpop.f32.mrf.mxu0
      %v1974 = vadd.f32 0.0, %v1973
      %v1975 = vpop.f32.mrf.mxu0
      %v1976 = vpop.f32.mrf.mxu0
      %v1977 = vadd.f32 0.0, %v1976
      %v1978 = vpop.f32.mrf.mxu0
      %1979 = vmatprep.mubr.bf16.mxu0 0
      %1980 = vmatmul.mubr.bf16.gmra.mxu0 %v1847
      %v1981 = vpop.f32.mrf.mxu0
      %v1982 = vadd.f32 0.0, %v1981
      %v1983 = vpop.f32.mrf.mxu0
      %v1984 = vpop.f32.mrf.mxu0
      %v1985 = vadd.f32 0.0, %v1984
      %v1986 = vpop.f32.mrf.mxu0
      %1987 = vmatprep.mubr.bf16.mxu0 0
      %1988 = vmatmul.mubr.bf16.gmra.mxu0 %v1850
      %v1989 = vpop.f32.mrf.mxu0
      %v1990 = vadd.f32 0.0, %v1989
      %v1991 = vpop.f32.mrf.mxu0
      %v1992 = vpop.f32.mrf.mxu0
      %v1993 = vadd.f32 0.0, %v1992
      %v1994 = vpop.f32.mrf.mxu0
      %1995 = vmatprep.mubr.bf16.mxu0 0
      %1996 = vmatmul.mubr.bf16.gmra.mxu0 %v1853
      %v1997 = vpop.f32.mrf.mxu0
      %v1998 = vadd.f32 0.0, %v1997
      %v1999 = vpop.f32.mrf.mxu0
      %v2000 = vpop.f32.mrf.mxu0
      %v2001 = vadd.f32 0.0, %v2000
      %v2002 = vpop.f32.mrf.mxu0
      %2003 = vmatprep.mubr.bf16.mxu0 0
      %2004 = vmatmul.mubr.bf16.gmra.mxu0 %v1856
      %v2005 = vpop.f32.mrf.mxu0
      %v2006 = vadd.f32 0.0, %v2005
      %v2007 = vpop.f32.mrf.mxu0
      %v2008 = vpop.f32.mrf.mxu0
      %v2009 = vadd.f32 0.0, %v2008
      %v2010 = vpop.f32.mrf.mxu0
      %2011 = vmatprep.mubr.bf16.mxu0 0
      %2012 = vmatmul.mubr.bf16.gmra.mxu0 %v1859
      %v2013 = vpop.f32.mrf.mxu0
      %v2014 = vadd.f32 0.0, %v2013
      %v2015 = vpop.f32.mrf.mxu0
      %v2016 = vpop.f32.mrf.mxu0
      %v2017 = vadd.f32 0.0, %v2016
      %v2018 = vpop.f32.mrf.mxu0
      %2019 = vmatprep.mubr.bf16.mxu0 0
      %2020 = vmatmul.mubr.bf16.gmra.mxu0 %v1862
      %v2021 = vpop.f32.mrf.mxu0
      %v2022 = vadd.f32 0.0, %v2021
      %v2023 = vpop.f32.mrf.mxu0
      %v2024 = vpop.f32.mrf.mxu0
      %v2025 = vadd.f32 0.0, %v2024
      %v2026 = vpop.f32.mrf.mxu0
      %2027 = vmatprep.mubr.bf16.mxu0 0
      %2028 = vmatmul.mubr.bf16.gmra.mxu0 %v1865
      %v2029 = vpop.f32.mrf.mxu0
      %v2030 = vadd.f32 0.0, %v2029
      %v2031 = vpop.f32.mrf.mxu0
      %v2032 = vpop.f32.mrf.mxu0
      %v2033 = vadd.f32 0.0, %v2032
      %v2034 = vpop.f32.mrf.mxu0
      %2035 = vmatprep.mubr.bf16.mxu0 0
      %2036 = vmatmul.mubr.bf16.gmra.mxu0 %v1868
      %v2037 = vpop.f32.mrf.mxu0
      %v2038 = vadd.f32 0.0, %v2037
      %v2039 = vpop.f32.mrf.mxu0
      %v2040 = vpop.f32.mrf.mxu0
      %v2041 = vadd.f32 0.0, %v2040
      %v2042 = vpop.f32.mrf.mxu0
      %2043 = vmatprep.mubr.bf16.mxu0 0
      %2044 = vmatmul.mubr.bf16.gmra.mxu0 %v1871
      %v2045 = vpop.f32.mrf.mxu0
      %v2046 = vadd.f32 0.0, %v2045
      %v2047 = vpop.f32.mrf.mxu0
      %v2048 = vpop.f32.mrf.mxu0
      %v2049 = vadd.f32 0.0, %v2048
      %v2050 = vpop.f32.mrf.mxu0
      %2051 = vmatprep.mubr.bf16.mxu0 0
      %2052 = vmatmul.mubr.bf16.gmra.mxu0 %v1874
      %v2053 = vpop.f32.mrf.mxu0
      %v2054 = vadd.f32 0.0, %v2053
      %v2055 = vpop.f32.mrf.mxu0
      %v2056 = vpop.f32.mrf.mxu0
      %v2057 = vadd.f32 0.0, %v2056
      %v2058 = vpop.f32.mrf.mxu0
      %2059 = vmatprep.mubr.bf16.mxu0 0
      %2060 = vmatmul.mubr.bf16.gmra.mxu0 %v1877
      %v2061 = vpop.f32.mrf.mxu0
      %v2062 = vadd.f32 0.0, %v2061
      %v2063 = vpop.f32.mrf.mxu0
      %v2064 = vpop.f32.mrf.mxu0
      %v2065 = vadd.f32 0.0, %v2064
      %v2066 = vpop.f32.mrf.mxu0
      %2067 = vmatprep.mubr.bf16.mxu0 0
      %2068 = vmatmul.mubr.bf16.gmra.mxu0 %v1880
      %v2069 = vpop.f32.mrf.mxu0
      %v2070 = vadd.f32 0.0, %v2069
      %v2071 = vpop.f32.mrf.mxu0
      %v2072 = vpop.f32.mrf.mxu0
      %v2073 = vadd.f32 0.0, %v2072
      %v2074 = vpop.f32.mrf.mxu0
      %2075 = vmatprep.mubr.bf16.mxu0 0
      %2076 = vmatmul.mubr.bf16.gmra.mxu0 %v1883
      %v2077 = vpop.f32.mrf.mxu0
      %v2078 = vadd.f32 0.0, %v2077
      %v2079 = vpop.f32.mrf.mxu0
      %v2080 = vpop.f32.mrf.mxu0
      %v2081 = vadd.f32 0.0, %v2080
      %v2082 = vpop.f32.mrf.mxu0
      %2083 = vmatprep.mubr.bf16.mxu0 0
      %2084 = vmatmul.mubr.bf16.gmra.mxu0 %v1886
      %v2085 = vpop.f32.mrf.mxu0
      %v2086 = vadd.f32 0.0, %v2085
      %v2087 = vpop.f32.mrf.mxu0
      %v2088 = vpop.f32.mrf.mxu0
      %v2089 = vadd.f32 0.0, %v2088
      %v2090 = vpop.f32.mrf.mxu0
      %2091 = vmatprep.mubr.bf16.mxu0 0
      %2092 = vmatmul.mubr.bf16.gmra.mxu0 %v1889
      %v2093 = vpop.f32.mrf.mxu0
      %v2094 = vadd.f32 0.0, %v2093
      %v2095 = vpop.f32.mrf.mxu0
      %v2096 = vpop.f32.mrf.mxu0
      %v2097 = vadd.f32 0.0, %v2096
      %v2098 = vpop.f32.mrf.mxu0
      %2099 = vmatprep.mubr.bf16.mxu0 0
      %2100 = vmatmul.mubr.bf16.gmra.mxu0 %v1892
      %v2101 = vpop.f32.mrf.mxu0
      %v2102 = vadd.f32 0.0, %v2101
      %v2103 = vpop.f32.mrf.mxu0
      %v2104 = vpop.f32.mrf.mxu0
      %v2105 = vadd.f32 0.0, %v2104
      %v2106 = vpop.f32.mrf.mxu0
      %2107 = vmatprep.mubr.bf16.mxu0 0
      %2108 = vmatmul.mubr.bf16.gmra.mxu0 %v1895
      %v2109 = vpop.f32.mrf.mxu0
      %v2110 = vadd.f32 0.0, %v2109
      %v2111 = vpop.f32.mrf.mxu0
      %v2112 = vpop.f32.mrf.mxu0
      %v2113 = vadd.f32 0.0, %v2112
      %v2114 = vpop.f32.mrf.mxu0
      %2115 = vmatprep.mubr.bf16.mxu0 0
      %2116 = vmatmul.mubr.bf16.gmra.mxu0 %v1898
      %v2117 = vpop.f32.mrf.mxu0
      %v2118 = vadd.f32 0.0, %v2117
      %v2119 = vpop.f32.mrf.mxu0
      %v2120 = vpop.f32.mrf.mxu0
      %v2121 = vadd.f32 0.0, %v2120
      %v2122 = vpop.f32.mrf.mxu0
      %2123 = vmatprep.mubr.bf16.mxu0 0
      %2124 = vmatmul.mubr.bf16.gmra.mxu0 %v1901
      %v2125 = vpop.f32.mrf.mxu0
      %v2126 = vadd.f32 0.0, %v2125
      %v2127 = vpop.f32.mrf.mxu0
      %v2128 = vpop.f32.mrf.mxu0
      %v2129 = vadd.f32 0.0, %v2128
      %v2130 = vpop.f32.mrf.mxu0
      %2131 = vmatprep.mubr.bf16.mxu0 0
      %2132 = vmatmul.mubr.bf16.gmra.mxu0 %v1904
      %v2133 = vpop.f32.mrf.mxu0
      %v2134 = vadd.f32 0.0, %v2133
      %v2135 = vpop.f32.mrf.mxu0
      %v2136 = vpop.f32.mrf.mxu0
      %v2137 = vadd.f32 0.0, %v2136
      %v2138 = vpop.f32.mrf.mxu0
      %2139 = vmatprep.mubr.bf16.mxu0 0
      %2140 = vmatmul.mubr.bf16.gmra.mxu0 %v1907
      %v2141 = vpop.f32.mrf.mxu0
      %v2142 = vadd.f32 0.0, %v2141
      %v2143 = vpop.f32.mrf.mxu0
      %v2144 = vpop.f32.mrf.mxu0
      %v2145 = vadd.f32 0.0, %v2144
      %v2146 = vpop.f32.mrf.mxu0
      %2147 = vmatprep.mubr.bf16.mxu0 0
      %2148 = vmatmul.mubr.bf16.gmra.mxu0 %v1910
      %v2149 = vpop.f32.mrf.mxu0
      %v2150 = vadd.f32 0.0, %v2149
      %v2151 = vpop.f32.mrf.mxu0
      %v2152 = vpop.f32.mrf.mxu0
      %v2153 = vadd.f32 0.0, %v2152
      %v2154 = vpop.f32.mrf.mxu0
      %2155 = vmatprep.mubr.bf16.mxu0 0
      %2156 = vmatmul.mubr.bf16.gmra.mxu0 %v1913
      %v2157 = vpop.f32.mrf.mxu0
      %v2158 = vadd.f32 0.0, %v2157
      %v2159 = vpop.f32.mrf.mxu0
      %v2160 = vpop.f32.mrf.mxu0
      %v2161 = vadd.f32 0.0, %v2160
      %v2162 = vpop.f32.mrf.mxu0
      %2163 = vmatprep.mubr.bf16.mxu0 0
      %2164 = vmatmul.mubr.bf16.gmra.mxu0 %v1916
      %v2165 = vpop.f32.mrf.mxu0
      %v2166 = vadd.f32 0.0, %v2165
      %v2167 = vpop.f32.mrf.mxu0
      %v2168 = vpop.f32.mrf.mxu0
      %v2169 = vadd.f32 0.0, %v2168
      %v2170 = vpop.f32.mrf.mxu0
      %2171 = vmatprep.mubr.bf16.mxu0 0
      %2172 = vmatmul.mubr.bf16.gmra.mxu0 %v1919
      %v2173 = vpop.f32.mrf.mxu0
      %v2174 = vadd.f32 0.0, %v2173
      %v2175 = vpop.f32.mrf.mxu0
      %v2176 = vpop.f32.mrf.mxu0
      %v2177 = vadd.f32 0.0, %v2176
      %v2178 = vpop.f32.mrf.mxu0
      %2179 = vmatprep.mubr.bf16.mxu0 0
      %2180 = vmatmul.mubr.bf16.gmra.mxu0 %v1922
      %v2181 = vpop.f32.mrf.mxu0
      %v2182 = vadd.f32 0.0, %v2181
      %v2183 = vpop.f32.mrf.mxu0
      %v2184 = vpop.f32.mrf.mxu0
      %v2185 = vadd.f32 0.0, %v2184
      %v2186 = vpop.f32.mrf.mxu0
      %2187 = vmatprep.mubr.bf16.mxu0 0
      %2188 = vmatmul.mubr.bf16.gmra.mxu0 %v1925
      %v2189 = vpop.f32.mrf.mxu0
      %v2190 = vadd.f32 0.0, %v2189
      %v2191 = vpop.f32.mrf.mxu0
      %v2192 = vpop.f32.mrf.mxu0
      %v2193 = vadd.f32 0.0, %v2192
      %v2194 = vpop.f32.mrf.mxu0
      %2195 = vmatprep.mubr.bf16.mxu0 0
      %2196 = vmatmul.mubr.bf16.gmra.mxu0 %v1928
      %v2197 = vpop.f32.mrf.mxu0
      %v2198 = vadd.f32 0.0, %v2197
      %v2199 = vpop.f32.mrf.mxu0
      %v2200 = vpop.f32.mrf.mxu0
      %v2201 = vadd.f32 0.0, %v2200
      %v2202 = vpop.f32.mrf.mxu0
      %2203 = vmatprep.mubr.bf16.mxu0 0
      %2204 = vmatmul.mubr.bf16.gmra.mxu0 %v1931
      %v2205 = vpop.f32.mrf.mxu0
      %v2206 = vadd.f32 0.0, %v2205
      %v2207 = vpop.f32.mrf.mxu0
      %v2208 = vpop.f32.mrf.mxu0
      %v2209 = vadd.f32 0.0, %v2208
      %v2210 = vpop.f32.mrf.mxu0
      %2211 = vmatprep.mubr.bf16.mxu0 0
      %2212 = vmatmul.mubr.bf16.gmra.mxu0 %v1934
      %v2213 = vpop.f32.mrf.mxu0
      %v2214 = vadd.f32 0.0, %v2213
      %v2215 = vpop.f32.mrf.mxu0
      %v2216 = vpop.f32.mrf.mxu0
      %v2217 = vadd.f32 0.0, %v2216
      %v2218 = vpop.f32.mrf.mxu0
      %2219 = vmatprep.mubr.bf16.mxu0 0
      %2220 = vmatmul.mubr.bf16.gmra.mxu0 %v1937
      %v2221 = vpop.f32.mrf.mxu0
      %v2222 = vadd.f32 0.0, %v2221
      %v2223 = vpop.f32.mrf.mxu0
      %v2224 = vpop.f32.mrf.mxu0
      %v2225 = vadd.f32 0.0, %v2224
      %v2226 = vpop.f32.mrf.mxu0
      %2227 = vdwg.mxu0
      %v2228 = vld [vmem:[%s313] sm:$0xf]
      %v2229 = vld [vmem:[%s313 + $0x4] sm:$0xf]
      %v2230 = vld [vmem:[%s313 + $0x8] sm:$0xf]
      %v2231 = vld [vmem:[%s313 + $0xc] sm:$0xf]
      %v2232 = vld [vmem:[%s313 + $0x10] sm:$0xf]
      %v2233 = vld [vmem:[%s313 + $0x14] sm:$0xf]
      %v2234 = vld [vmem:[%s313 + $0x18] sm:$0xf]
      %v2235 = vld [vmem:[%s313 + $0x1c] sm:$0xf]
      %v2236 = vld [vmem:[%s313 + $0x20] sm:$0xf]
      %v2237 = vld [vmem:[%s313 + $0x24] sm:$0xf]
      %v2238 = vld [vmem:[%s313 + $0x28] sm:$0xf]
      %v2239 = vld [vmem:[%s313 + $0x2c] sm:$0xf]
      %v2240 = vld [vmem:[%s313 + $0x30] sm:$0xf]
      %v2241 = vld [vmem:[%s313 + $0x34] sm:$0xf]
      %v2242 = vld [vmem:[%s313 + $0x38] sm:$0xf]
      %v2243 = vld [vmem:[%s313 + $0x3c] sm:$0xf]
      %v2244 = vld [vmem:[%s313 + $0x40] sm:$0xf]
      %v2245 = vld [vmem:[%s313 + $0x44] sm:$0xf]
      %v2246 = vld [vmem:[%s313 + $0x48] sm:$0xf]
      %v2247 = vld [vmem:[%s313 + $0x4c] sm:$0xf]
      %v2248 = vld [vmem:[%s313 + $0x50] sm:$0xf]
      %v2249 = vld [vmem:[%s313 + $0x54] sm:$0xf]
      %v2250 = vld [vmem:[%s313 + $0x58] sm:$0xf]
      %v2251 = vld [vmem:[%s313 + $0x5c] sm:$0xf]
      %v2252 = vld [vmem:[%s313 + $0x60] sm:$0xf]
      %v2253 = vld [vmem:[%s313 + $0x64] sm:$0xf]
      %v2254 = vld [vmem:[%s313 + $0x68] sm:$0xf]
      %v2255 = vld [vmem:[%s313 + $0x6c] sm:$0xf]
      %v2256 = vld [vmem:[%s313 + $0x70] sm:$0xf]
      %v2257 = vld [vmem:[%s313 + $0x74] sm:$0xf]
      %v2258 = vld [vmem:[%s313 + $0x78] sm:$0xf]
      %v2259 = vld [vmem:[%s313 + $0x7c] sm:$0xf]
      %v2260 = vld [vmem:[%s313 + $0x80] sm:$0xf]
      %v2261 = vld [vmem:[%s313 + $0x84] sm:$0xf]
      %v2262 = vld [vmem:[%s313 + $0x88] sm:$0xf]
      %v2263 = vld [vmem:[%s313 + $0x8c] sm:$0xf]
      %v2264 = vld [vmem:[%s313 + $0x90] sm:$0xf]
      %v2265 = vld [vmem:[%s313 + $0x94] sm:$0xf]
      %v2266 = vld [vmem:[%s313 + $0x98] sm:$0xf]
      %v2267 = vld [vmem:[%s313 + $0x9c] sm:$0xf]
      %v2268 = vld [vmem:[%s313 + $0xa0] sm:$0xf]
      %v2269 = vld [vmem:[%s313 + $0xa4] sm:$0xf]
      %v2270 = vld [vmem:[%s313 + $0xa8] sm:$0xf]
      %v2271 = vld [vmem:[%s313 + $0xac] sm:$0xf]
      %v2272 = vld [vmem:[%s313 + $0xb0] sm:$0xf]
      %v2273 = vld [vmem:[%s313 + $0xb4] sm:$0xf]
      %v2274 = vld [vmem:[%s313 + $0xb8] sm:$0xf]
      %v2275 = vld [vmem:[%s313 + $0xbc] sm:$0xf]
      %v2276 = vld [vmem:[%s313 + $0xc0] sm:$0xf]
      %v2277 = vld [vmem:[%s313 + $0xc4] sm:$0xf]
      %v2278 = vld [vmem:[%s313 + $0xc8] sm:$0xf]
      %v2279 = vld [vmem:[%s313 + $0xcc] sm:$0xf]
      %v2280 = vld [vmem:[%s313 + $0xd0] sm:$0xf]
      %v2281 = vld [vmem:[%s313 + $0xd4] sm:$0xf]
      %v2282 = vld [vmem:[%s313 + $0xd8] sm:$0xf]
      %v2283 = vld [vmem:[%s313 + $0xdc] sm:$0xf]
      %v2284 = vld [vmem:[%s313 + $0xe0] sm:$0xf]
      %v2285 = vld [vmem:[%s313 + $0xe4] sm:$0xf]
      %v2286 = vld [vmem:[%s313 + $0xe8] sm:$0xf]
      %v2287 = vld [vmem:[%s313 + $0xec] sm:$0xf]
      %v2288 = vld [vmem:[%s313 + $0xf0] sm:$0xf]
      %v2289 = vld [vmem:[%s313 + $0xf4] sm:$0xf]
      %v2290 = vld [vmem:[%s313 + $0xf8] sm:$0xf]
      %v2291 = vld [vmem:[%s313 + $0xfc] sm:$0xf]
      %v2356 = vunpack.c.l.b16 %v2228
      %v2357 = vunpack.c.l.b16 %v2229
      %v2358 = vunpack.c.l.b16 %v2230
      %v2359 = vunpack.c.l.b16 %v2231
      %v2360 = vunpack.c.l.b16 %v2232
      %v2361 = vunpack.c.l.b16 %v2233
      %v2362 = vunpack.c.l.b16 %v2234
      %v2363 = vunpack.c.l.b16 %v2235
      %v2364 = vunpack.c.l.b16 %v2236
      %v2365 = vunpack.c.l.b16 %v2237
      %v2366 = vunpack.c.l.b16 %v2238
      %v2367 = vunpack.c.l.b16 %v2239
      %v2368 = vunpack.c.l.b16 %v2240
      %v2369 = vunpack.c.l.b16 %v2241
      %v2370 = vunpack.c.l.b16 %v2242
      %v2371 = vunpack.c.l.b16 %v2243
      %v2372 = vunpack.c.l.b16 %v2244
      %v2373 = vunpack.c.l.b16 %v2245
      %v2374 = vunpack.c.l.b16 %v2246
      %v2375 = vunpack.c.l.b16 %v2247
      %v2376 = vunpack.c.l.b16 %v2248
      %v2377 = vunpack.c.l.b16 %v2249
      %v2378 = vunpack.c.l.b16 %v2250
      %v2379 = vunpack.c.l.b16 %v2251
      %v2380 = vunpack.c.l.b16 %v2252
      %v2381 = vunpack.c.l.b16 %v2253
      %v2382 = vunpack.c.l.b16 %v2254
      %v2383 = vunpack.c.l.b16 %v2255
      %v2384 = vunpack.c.l.b16 %v2256
      %v2385 = vunpack.c.l.b16 %v2257
      %v2386 = vunpack.c.l.b16 %v2258
      %v2387 = vunpack.c.l.b16 %v2259
      %v2388 = vunpack.c.l.b16 %v2260
      %v2389 = vunpack.c.l.b16 %v2261
      %v2390 = vunpack.c.l.b16 %v2262
      %v2391 = vunpack.c.l.b16 %v2263
      %v2392 = vunpack.c.l.b16 %v2264
      %v2393 = vunpack.c.l.b16 %v2265
      %v2394 = vunpack.c.l.b16 %v2266
      %v2395 = vunpack.c.l.b16 %v2267
      %v2396 = vunpack.c.l.b16 %v2268
      %v2397 = vunpack.c.l.b16 %v2269
      %v2398 = vunpack.c.l.b16 %v2270
      %v2399 = vunpack.c.l.b16 %v2271
      %v2400 = vunpack.c.l.b16 %v2272
      %v2401 = vunpack.c.l.b16 %v2273
      %v2402 = vunpack.c.l.b16 %v2274
      %v2403 = vunpack.c.l.b16 %v2275
      %v2404 = vunpack.c.l.b16 %v2276
      %v2405 = vunpack.c.l.b16 %v2277
      %v2406 = vunpack.c.l.b16 %v2278
      %v2407 = vunpack.c.l.b16 %v2279
      %v2408 = vunpack.c.l.b16 %v2280
      %v2409 = vunpack.c.l.b16 %v2281
      %v2410 = vunpack.c.l.b16 %v2282
      %v2411 = vunpack.c.l.b16 %v2283
      %v2412 = vunpack.c.l.b16 %v2284
      %v2413 = vunpack.c.l.b16 %v2285
      %v2414 = vunpack.c.l.b16 %v2286
      %v2415 = vunpack.c.l.b16 %v2287
      %v2416 = vunpack.c.l.b16 %v2288
      %v2417 = vunpack.c.l.b16 %v2289
      %v2418 = vunpack.c.l.b16 %v2290
      %v2419 = vunpack.c.l.b16 %v2291
      %v2420 = vpack.c.b16 %v2357, %v2356
      %v2421 = vpack.c.b16 %v2359, %v2358
      %v2422 = vpack.c.b16 %v2361, %v2360
      %v2423 = vpack.c.b16 %v2363, %v2362
      %v2424 = vpack.c.b16 %v2365, %v2364
      %v2425 = vpack.c.b16 %v2367, %v2366
      %v2426 = vpack.c.b16 %v2369, %v2368
      %v2427 = vpack.c.b16 %v2371, %v2370
      %v2428 = vpack.c.b16 %v2373, %v2372
      %v2429 = vpack.c.b16 %v2375, %v2374
      %v2430 = vpack.c.b16 %v2377, %v2376
      %v2431 = vpack.c.b16 %v2379, %v2378
      %v2432 = vpack.c.b16 %v2381, %v2380
      %v2433 = vpack.c.b16 %v2383, %v2382
      %v2434 = vpack.c.b16 %v2385, %v2384
      %v2435 = vpack.c.b16 %v2387, %v2386
      %v2436 = vpack.c.b16 %v2389, %v2388
      %v2437 = vpack.c.b16 %v2391, %v2390
      %v2438 = vpack.c.b16 %v2393, %v2392
      %v2439 = vpack.c.b16 %v2395, %v2394
      %v2440 = vpack.c.b16 %v2397, %v2396
      %v2441 = vpack.c.b16 %v2399, %v2398
      %v2442 = vpack.c.b16 %v2401, %v2400
      %v2443 = vpack.c.b16 %v2403, %v2402
      %v2444 = vpack.c.b16 %v2405, %v2404
      %v2445 = vpack.c.b16 %v2407, %v2406
      %v2446 = vpack.c.b16 %v2409, %v2408
      %v2447 = vpack.c.b16 %v2411, %v2410
      %v2448 = vpack.c.b16 %v2413, %v2412
      %v2449 = vpack.c.b16 %v2415, %v2414
      %v2450 = vpack.c.b16 %v2417, %v2416
      %v2451 = vpack.c.b16 %v2419, %v2418
      %v2453 = vsel %vm553, %v2420, 0
      %v2456 = vsel %vm553, %v2421, 0
      %v2459 = vsel %vm553, %v2422, 0
      %v2462 = vsel %vm553, %v2423, 0
      %v2465 = vsel %vm553, %v2424, 0
      %v2468 = vsel %vm553, %v2425, 0
      %v2471 = vsel %vm553, %v2426, 0
      %v2474 = vsel %vm553, %v2427, 0
      %v2477 = vsel %vm553, %v2428, 0
      %v2480 = vsel %vm553, %v2429, 0
      %v2483 = vsel %vm553, %v2430, 0
      %v2486 = vsel %vm553, %v2431, 0
      %v2489 = vsel %vm553, %v2432, 0
      %v2492 = vsel %vm553, %v2433, 0
      %v2495 = vsel %vm553, %v2434, 0
      %v2498 = vsel %vm553, %v2435, 0
      %v2501 = vsel %vm553, %v2436, 0
      %v2504 = vsel %vm553, %v2437, 0
      %v2507 = vsel %vm553, %v2438, 0
      %v2510 = vsel %vm553, %v2439, 0
      %v2513 = vsel %vm553, %v2440, 0
      %v2516 = vsel %vm553, %v2441, 0
      %v2519 = vsel %vm553, %v2442, 0
      %v2522 = vsel %vm553, %v2443, 0
      %v2525 = vsel %vm553, %v2444, 0
      %v2528 = vsel %vm553, %v2445, 0
      %v2531 = vsel %vm553, %v2446, 0
      %v2534 = vsel %vm553, %v2447, 0
      %v2537 = vsel %vm553, %v2448, 0
      %v2540 = vsel %vm553, %v2449, 0
      %v2543 = vsel %vm553, %v2450, 0
      %v2546 = vsel %vm553, %v2451, 0
      %2548 = vmatprep.subr.bf16.mxu0 0
      %2549 = vmatpush1.bf16.msra.mxu0 0
      %2550 = vmatprep.subr.bf16.mxu0 0
      %2551 = vmatpush1.bf16.msra.mxu0 0
      %2552 = vmatprep.subr.bf16.mxu0 0
      %2553 = vmatpush1.bf16.msra.mxu0 0
      %2554 = vmatprep.subr.bf16.mxu0 0
      %2555 = vmatpush1.bf16.msra.mxu0 0
      %2556 = vmatprep.subr.bf16.mxu0 0
      %2557 = vmatpush1.bf16.msra.mxu0 0
      %2558 = vmatprep.subr.bf16.mxu0 0
      %2559 = vmatpush1.bf16.msra.mxu0 0
      %2560 = vmatprep.subr.bf16.mxu0 0
      %2561 = vmatpush1.bf16.msra.mxu0 0
      %2562 = vmatprep.subr.bf16.mxu0 0
      %2563 = vmatpush1.bf16.msra.mxu0 %v655
      %2564 = vmatprep.subr.bf16.mxu0 0
      %2565 = vmatpush2.bf16.msra.mxu0 0
      %2566 = vmatprep.subr.bf16.mxu0 0
      %2567 = vmatpush2.bf16.msra.mxu0 0
      %2568 = vmatprep.subr.bf16.mxu0 0
      %2569 = vmatpush2.bf16.msra.mxu0 0
      %2570 = vmatprep.subr.bf16.mxu0 0
      %2571 = vmatpush2.bf16.msra.mxu0 0
      %2572 = vmatprep.subr.bf16.mxu0 0
      %2573 = vmatpush2.bf16.msra.mxu0 0
      %2574 = vmatprep.subr.bf16.mxu0 0
      %2575 = vmatpush2.bf16.msra.mxu0 0
      %2576 = vmatprep.subr.bf16.mxu0 0
      %2577 = vmatpush2.bf16.msra.mxu0 0
      %2578 = vmatprep.subr.bf16.mxu0 0
      %2579 = vmatpush2.bf16.msra.mxu0 0
      %2580 = vmatprep.mubr.bf16.mxu0 0
      %2581 = vmatmul.mubr.bf16.gmra.mxu0 %v2453
      %v2582 = vpop.f32.mrf.mxu0
      %v2583 = vadd.f32 0.0, %v2582
      %v2584 = vpop.f32.mrf.mxu0
      %v2585 = vpop.f32.mrf.mxu0
      %v2586 = vadd.f32 0.0, %v2585
      %v2587 = vpop.f32.mrf.mxu0
      %2588 = vmatprep.mubr.bf16.mxu0 0
      %2589 = vmatmul.mubr.bf16.gmra.mxu0 %v2456
      %v2590 = vpop.f32.mrf.mxu0
      %v2591 = vadd.f32 0.0, %v2590
      %v2592 = vpop.f32.mrf.mxu0
      %v2593 = vpop.f32.mrf.mxu0
      %v2594 = vadd.f32 0.0, %v2593
      %v2595 = vpop.f32.mrf.mxu0
      %2596 = vmatprep.mubr.bf16.mxu0 0
      %2597 = vmatmul.mubr.bf16.gmra.mxu0 %v2459
      %v2598 = vpop.f32.mrf.mxu0
      %v2599 = vadd.f32 0.0, %v2598
      %v2600 = vpop.f32.mrf.mxu0
      %v2601 = vpop.f32.mrf.mxu0
      %v2602 = vadd.f32 0.0, %v2601
      %v2603 = vpop.f32.mrf.mxu0
      %2604 = vmatprep.mubr.bf16.mxu0 0
      %2605 = vmatmul.mubr.bf16.gmra.mxu0 %v2462
      %v2606 = vpop.f32.mrf.mxu0
      %v2607 = vadd.f32 0.0, %v2606
      %v2608 = vpop.f32.mrf.mxu0
      %v2609 = vpop.f32.mrf.mxu0
      %v2610 = vadd.f32 0.0, %v2609
      %v2611 = vpop.f32.mrf.mxu0
      %2612 = vmatprep.mubr.bf16.mxu0 0
      %2613 = vmatmul.mubr.bf16.gmra.mxu0 %v2465
      %v2614 = vpop.f32.mrf.mxu0
      %v2615 = vadd.f32 0.0, %v2614
      %v2616 = vpop.f32.mrf.mxu0
      %v2617 = vpop.f32.mrf.mxu0
      %v2618 = vadd.f32 0.0, %v2617
      %v2619 = vpop.f32.mrf.mxu0
      %2620 = vmatprep.mubr.bf16.mxu0 0
      %2621 = vmatmul.mubr.bf16.gmra.mxu0 %v2468
      %v2622 = vpop.f32.mrf.mxu0
      %v2623 = vadd.f32 0.0, %v2622
      %v2624 = vpop.f32.mrf.mxu0
      %v2625 = vpop.f32.mrf.mxu0
      %v2626 = vadd.f32 0.0, %v2625
      %v2627 = vpop.f32.mrf.mxu0
      %2628 = vmatprep.mubr.bf16.mxu0 0
      %2629 = vmatmul.mubr.bf16.gmra.mxu0 %v2471
      %v2630 = vpop.f32.mrf.mxu0
      %v2631 = vadd.f32 0.0, %v2630
      %v2632 = vpop.f32.mrf.mxu0
      %v2633 = vpop.f32.mrf.mxu0
      %v2634 = vadd.f32 0.0, %v2633
      %v2635 = vpop.f32.mrf.mxu0
      %2636 = vmatprep.mubr.bf16.mxu0 0
      %2637 = vmatmul.mubr.bf16.gmra.mxu0 %v2474
      %v2638 = vpop.f32.mrf.mxu0
      %v2639 = vadd.f32 0.0, %v2638
      %v2640 = vpop.f32.mrf.mxu0
      %v2641 = vpop.f32.mrf.mxu0
      %v2642 = vadd.f32 0.0, %v2641
      %v2643 = vpop.f32.mrf.mxu0
      %2644 = vmatprep.mubr.bf16.mxu0 0
      %2645 = vmatmul.mubr.bf16.gmra.mxu0 %v2477
      %v2646 = vpop.f32.mrf.mxu0
      %v2647 = vadd.f32 0.0, %v2646
      %v2648 = vpop.f32.mrf.mxu0
      %v2649 = vpop.f32.mrf.mxu0
      %v2650 = vadd.f32 0.0, %v2649
      %v2651 = vpop.f32.mrf.mxu0
      %2652 = vmatprep.mubr.bf16.mxu0 0
      %2653 = vmatmul.mubr.bf16.gmra.mxu0 %v2480
      %v2654 = vpop.f32.mrf.mxu0
      %v2655 = vadd.f32 0.0, %v2654
      %v2656 = vpop.f32.mrf.mxu0
      %v2657 = vpop.f32.mrf.mxu0
      %v2658 = vadd.f32 0.0, %v2657
      %v2659 = vpop.f32.mrf.mxu0
      %2660 = vmatprep.mubr.bf16.mxu0 0
      %2661 = vmatmul.mubr.bf16.gmra.mxu0 %v2483
      %v2662 = vpop.f32.mrf.mxu0
      %v2663 = vadd.f32 0.0, %v2662
      %v2664 = vpop.f32.mrf.mxu0
      %v2665 = vpop.f32.mrf.mxu0
      %v2666 = vadd.f32 0.0, %v2665
      %v2667 = vpop.f32.mrf.mxu0
      %2668 = vmatprep.mubr.bf16.mxu0 0
      %2669 = vmatmul.mubr.bf16.gmra.mxu0 %v2486
      %v2670 = vpop.f32.mrf.mxu0
      %v2671 = vadd.f32 0.0, %v2670
      %v2672 = vpop.f32.mrf.mxu0
      %v2673 = vpop.f32.mrf.mxu0
      %v2674 = vadd.f32 0.0, %v2673
      %v2675 = vpop.f32.mrf.mxu0
      %2676 = vmatprep.mubr.bf16.mxu0 0
      %2677 = vmatmul.mubr.bf16.gmra.mxu0 %v2489
      %v2678 = vpop.f32.mrf.mxu0
      %v2679 = vadd.f32 0.0, %v2678
      %v2680 = vpop.f32.mrf.mxu0
      %v2681 = vpop.f32.mrf.mxu0
      %v2682 = vadd.f32 0.0, %v2681
      %v2683 = vpop.f32.mrf.mxu0
      %2684 = vmatprep.mubr.bf16.mxu0 0
      %2685 = vmatmul.mubr.bf16.gmra.mxu0 %v2492
      %v2686 = vpop.f32.mrf.mxu0
      %v2687 = vadd.f32 0.0, %v2686
      %v2688 = vpop.f32.mrf.mxu0
      %v2689 = vpop.f32.mrf.mxu0
      %v2690 = vadd.f32 0.0, %v2689
      %v2691 = vpop.f32.mrf.mxu0
      %2692 = vmatprep.mubr.bf16.mxu0 0
      %2693 = vmatmul.mubr.bf16.gmra.mxu0 %v2495
      %v2694 = vpop.f32.mrf.mxu0
      %v2695 = vadd.f32 0.0, %v2694
      %v2696 = vpop.f32.mrf.mxu0
      %v2697 = vpop.f32.mrf.mxu0
      %v2698 = vadd.f32 0.0, %v2697
      %v2699 = vpop.f32.mrf.mxu0
      %2700 = vmatprep.mubr.bf16.mxu0 0
      %2701 = vmatmul.mubr.bf16.gmra.mxu0 %v2498
      %v2702 = vpop.f32.mrf.mxu0
      %v2703 = vadd.f32 0.0, %v2702
      %v2704 = vpop.f32.mrf.mxu0
      %v2705 = vpop.f32.mrf.mxu0
      %v2706 = vadd.f32 0.0, %v2705
      %v2707 = vpop.f32.mrf.mxu0
      %2708 = vmatprep.mubr.bf16.mxu0 0
      %2709 = vmatmul.mubr.bf16.gmra.mxu0 %v2501
      %v2710 = vpop.f32.mrf.mxu0
      %v2711 = vadd.f32 0.0, %v2710
      %v2712 = vpop.f32.mrf.mxu0
      %v2713 = vpop.f32.mrf.mxu0
      %v2714 = vadd.f32 0.0, %v2713
      %v2715 = vpop.f32.mrf.mxu0
      %2716 = vmatprep.mubr.bf16.mxu0 0
      %2717 = vmatmul.mubr.bf16.gmra.mxu0 %v2504
      %v2718 = vpop.f32.mrf.mxu0
      %v2719 = vadd.f32 0.0, %v2718
      %v2720 = vpop.f32.mrf.mxu0
      %v2721 = vpop.f32.mrf.mxu0
      %v2722 = vadd.f32 0.0, %v2721
      %v2723 = vpop.f32.mrf.mxu0
      %2724 = vmatprep.mubr.bf16.mxu0 0
      %2725 = vmatmul.mubr.bf16.gmra.mxu0 %v2507
      %v2726 = vpop.f32.mrf.mxu0
      %v2727 = vadd.f32 0.0, %v2726
      %v2728 = vpop.f32.mrf.mxu0
      %v2729 = vpop.f32.mrf.mxu0
      %v2730 = vadd.f32 0.0, %v2729
      %v2731 = vpop.f32.mrf.mxu0
      %2732 = vmatprep.mubr.bf16.mxu0 0
      %2733 = vmatmul.mubr.bf16.gmra.mxu0 %v2510
      %v2734 = vpop.f32.mrf.mxu0
      %v2735 = vadd.f32 0.0, %v2734
      %v2736 = vpop.f32.mrf.mxu0
      %v2737 = vpop.f32.mrf.mxu0
      %v2738 = vadd.f32 0.0, %v2737
      %v2739 = vpop.f32.mrf.mxu0
      %2740 = vmatprep.mubr.bf16.mxu0 0
      %2741 = vmatmul.mubr.bf16.gmra.mxu0 %v2513
      %v2742 = vpop.f32.mrf.mxu0
      %v2743 = vadd.f32 0.0, %v2742
      %v2744 = vpop.f32.mrf.mxu0
      %v2745 = vpop.f32.mrf.mxu0
      %v2746 = vadd.f32 0.0, %v2745
      %v2747 = vpop.f32.mrf.mxu0
      %2748 = vmatprep.mubr.bf16.mxu0 0
      %2749 = vmatmul.mubr.bf16.gmra.mxu0 %v2516
      %v2750 = vpop.f32.mrf.mxu0
      %v2751 = vadd.f32 0.0, %v2750
      %v2752 = vpop.f32.mrf.mxu0
      %v2753 = vpop.f32.mrf.mxu0
      %v2754 = vadd.f32 0.0, %v2753
      %v2755 = vpop.f32.mrf.mxu0
      %2756 = vmatprep.mubr.bf16.mxu0 0
      %2757 = vmatmul.mubr.bf16.gmra.mxu0 %v2519
      %v2758 = vpop.f32.mrf.mxu0
      %v2759 = vadd.f32 0.0, %v2758
      %v2760 = vpop.f32.mrf.mxu0
      %v2761 = vpop.f32.mrf.mxu0
      %v2762 = vadd.f32 0.0, %v2761
      %v2763 = vpop.f32.mrf.mxu0
      %2764 = vmatprep.mubr.bf16.mxu0 0
      %2765 = vmatmul.mubr.bf16.gmra.mxu0 %v2522
      %v2766 = vpop.f32.mrf.mxu0
      %v2767 = vadd.f32 0.0, %v2766
      %v2768 = vpop.f32.mrf.mxu0
      %v2769 = vpop.f32.mrf.mxu0
      %v2770 = vadd.f32 0.0, %v2769
      %v2771 = vpop.f32.mrf.mxu0
      %2772 = vmatprep.mubr.bf16.mxu0 0
      %2773 = vmatmul.mubr.bf16.gmra.mxu0 %v2525
      %v2774 = vpop.f32.mrf.mxu0
      %v2775 = vadd.f32 0.0, %v2774
      %v2776 = vpop.f32.mrf.mxu0
      %v2777 = vpop.f32.mrf.mxu0
      %v2778 = vadd.f32 0.0, %v2777
      %v2779 = vpop.f32.mrf.mxu0
      %2780 = vmatprep.mubr.bf16.mxu0 0
      %2781 = vmatmul.mubr.bf16.gmra.mxu0 %v2528
      %v2782 = vpop.f32.mrf.mxu0
      %v2783 = vadd.f32 0.0, %v2782
      %v2784 = vpop.f32.mrf.mxu0
      %v2785 = vpop.f32.mrf.mxu0
      %v2786 = vadd.f32 0.0, %v2785
      %v2787 = vpop.f32.mrf.mxu0
      %2788 = vmatprep.mubr.bf16.mxu0 0
      %2789 = vmatmul.mubr.bf16.gmra.mxu0 %v2531
      %v2790 = vpop.f32.mrf.mxu0
      %v2791 = vadd.f32 0.0, %v2790
      %v2792 = vpop.f32.mrf.mxu0
      %v2793 = vpop.f32.mrf.mxu0
      %v2794 = vadd.f32 0.0, %v2793
      %v2795 = vpop.f32.mrf.mxu0
      %2796 = vmatprep.mubr.bf16.mxu0 0
      %2797 = vmatmul.mubr.bf16.gmra.mxu0 %v2534
      %v2798 = vpop.f32.mrf.mxu0
      %v2799 = vadd.f32 0.0, %v2798
      %v2800 = vpop.f32.mrf.mxu0
      %v2801 = vpop.f32.mrf.mxu0
      %v2802 = vadd.f32 0.0, %v2801
      %v2803 = vpop.f32.mrf.mxu0
      %2804 = vmatprep.mubr.bf16.mxu0 0
      %2805 = vmatmul.mubr.bf16.gmra.mxu0 %v2537
      %v2806 = vpop.f32.mrf.mxu0
      %v2807 = vadd.f32 0.0, %v2806
      %v2808 = vpop.f32.mrf.mxu0
      %v2809 = vpop.f32.mrf.mxu0
      %v2810 = vadd.f32 0.0, %v2809
      %v2811 = vpop.f32.mrf.mxu0
      %2812 = vmatprep.mubr.bf16.mxu0 0
      %2813 = vmatmul.mubr.bf16.gmra.mxu0 %v2540
      %v2814 = vpop.f32.mrf.mxu0
      %v2815 = vadd.f32 0.0, %v2814
      %v2816 = vpop.f32.mrf.mxu0
      %v2817 = vpop.f32.mrf.mxu0
      %v2818 = vadd.f32 0.0, %v2817
      %v2819 = vpop.f32.mrf.mxu0
      %2820 = vmatprep.mubr.bf16.mxu0 0
      %2821 = vmatmul.mubr.bf16.gmra.mxu0 %v2543
      %v2822 = vpop.f32.mrf.mxu0
      %v2823 = vadd.f32 0.0, %v2822
      %v2824 = vpop.f32.mrf.mxu0
      %v2825 = vpop.f32.mrf.mxu0
      %v2826 = vadd.f32 0.0, %v2825
      %v2827 = vpop.f32.mrf.mxu0
      %2828 = vmatprep.mubr.bf16.mxu0 0
      %2829 = vmatmul.mubr.bf16.gmra.mxu0 %v2546
      %v2830 = vpop.f32.mrf.mxu0
      %v2831 = vadd.f32 0.0, %v2830
      %v2832 = vpop.f32.mrf.mxu0
      %v2833 = vpop.f32.mrf.mxu0
      %v2834 = vadd.f32 0.0, %v2833
      %v2835 = vpop.f32.mrf.mxu0
      %2836 = vdwg.mxu0
      %v2837 = vmax.f32 %v1974, %v2583
      %v2838 = vmax.f32 %v1977, %v2586
      %v2839 = vmax.f32 %v1982, %v2591
      %v2840 = vmax.f32 %v1985, %v2594
      %v2841 = vmax.f32 %v1990, %v2599
      %v2842 = vmax.f32 %v1993, %v2602
      %v2843 = vmax.f32 %v1998, %v2607
      %v2844 = vmax.f32 %v2001, %v2610
      %v2845 = vmax.f32 %v2006, %v2615
      %v2846 = vmax.f32 %v2009, %v2618
      %v2847 = vmax.f32 %v2014, %v2623
      %v2848 = vmax.f32 %v2017, %v2626
      %v2849 = vmax.f32 %v2022, %v2631
      %v2850 = vmax.f32 %v2025, %v2634
      %v2851 = vmax.f32 %v2030, %v2639
      %v2852 = vmax.f32 %v2033, %v2642
      %v2853 = vmax.f32 %v2038, %v2647
      %v2854 = vmax.f32 %v2041, %v2650
      %v2855 = vmax.f32 %v2046, %v2655
      %v2856 = vmax.f32 %v2049, %v2658
      %v2857 = vmax.f32 %v2054, %v2663
      %v2858 = vmax.f32 %v2057, %v2666
      %v2859 = vmax.f32 %v2062, %v2671
      %v2860 = vmax.f32 %v2065, %v2674
      %v2861 = vmax.f32 %v2070, %v2679
      %v2862 = vmax.f32 %v2073, %v2682
      %v2863 = vmax.f32 %v2078, %v2687
      %v2864 = vmax.f32 %v2081, %v2690
      %v2865 = vmax.f32 %v2086, %v2695
      %v2866 = vmax.f32 %v2089, %v2698
      %v2867 = vmax.f32 %v2094, %v2703
      %v2868 = vmax.f32 %v2097, %v2706
      %v2869 = vmax.f32 %v2102, %v2711
      %v2870 = vmax.f32 %v2105, %v2714
      %v2871 = vmax.f32 %v2110, %v2719
      %v2872 = vmax.f32 %v2113, %v2722
      %v2873 = vmax.f32 %v2118, %v2727
      %v2874 = vmax.f32 %v2121, %v2730
      %v2875 = vmax.f32 %v2126, %v2735
      %v2876 = vmax.f32 %v2129, %v2738
      %v2877 = vmax.f32 %v2134, %v2743
      %v2878 = vmax.f32 %v2137, %v2746
      %v2879 = vmax.f32 %v2142, %v2751
      %v2880 = vmax.f32 %v2145, %v2754
      %v2881 = vmax.f32 %v2150, %v2759
      %v2882 = vmax.f32 %v2153, %v2762
      %v2883 = vmax.f32 %v2158, %v2767
      %v2884 = vmax.f32 %v2161, %v2770
      %v2885 = vmax.f32 %v2166, %v2775
      %v2886 = vmax.f32 %v2169, %v2778
      %v2887 = vmax.f32 %v2174, %v2783
      %v2888 = vmax.f32 %v2177, %v2786
      %v2889 = vmax.f32 %v2182, %v2791
      %v2890 = vmax.f32 %v2185, %v2794
      %v2891 = vmax.f32 %v2190, %v2799
      %v2892 = vmax.f32 %v2193, %v2802
      %v2893 = vmax.f32 %v2198, %v2807
      %v2894 = vmax.f32 %v2201, %v2810
      %v2895 = vmax.f32 %v2206, %v2815
      %v2896 = vmax.f32 %v2209, %v2818
      %v2897 = vmax.f32 %v2214, %v2823
      %v2898 = vmax.f32 %v2217, %v2826
      %v2899 = vmax.f32 %v2222, %v2831
      %v2900 = vmax.f32 %v2225, %v2834
      %v2901 = vmax.f32 %v1555, %v2837
      %v2902 = vmax.f32 %v1556, %v2838
      %v2903 = vmax.f32 %v1557, %v2839
      %v2904 = vmax.f32 %v1558, %v2840
      %v2905 = vmax.f32 %v1559, %v2841
      %v2906 = vmax.f32 %v1560, %v2842
      %v2907 = vmax.f32 %v1561, %v2843
      %v2908 = vmax.f32 %v1562, %v2844
      %v2909 = vmax.f32 %v1563, %v2845
      %v2910 = vmax.f32 %v1564, %v2846
      %v2911 = vmax.f32 %v1565, %v2847
      %v2912 = vmax.f32 %v1566, %v2848
      %v2913 = vmax.f32 %v1567, %v2849
      %v2914 = vmax.f32 %v1568, %v2850
      %v2915 = vmax.f32 %v1569, %v2851
      %v2916 = vmax.f32 %v1570, %v2852
      %v2917 = vmax.f32 %v1571, %v2853
      %v2918 = vmax.f32 %v1572, %v2854
      %v2919 = vmax.f32 %v1573, %v2855
      %v2920 = vmax.f32 %v1574, %v2856
      %v2921 = vmax.f32 %v1575, %v2857
      %v2922 = vmax.f32 %v1576, %v2858
      %v2923 = vmax.f32 %v1577, %v2859
      %v2924 = vmax.f32 %v1578, %v2860
      %v2925 = vmax.f32 %v1579, %v2861
      %v2926 = vmax.f32 %v1580, %v2862
      %v2927 = vmax.f32 %v1581, %v2863
      %v2928 = vmax.f32 %v1582, %v2864
      %v2929 = vmax.f32 %v1583, %v2865
      %v2930 = vmax.f32 %v1584, %v2866
      %v2931 = vmax.f32 %v1585, %v2867
      %v2932 = vmax.f32 %v1586, %v2868
      %v2933 = vmax.f32 %v1587, %v2869
      %v2934 = vmax.f32 %v1588, %v2870
      %v2935 = vmax.f32 %v1589, %v2871
      %v2936 = vmax.f32 %v1590, %v2872
      %v2937 = vmax.f32 %v1591, %v2873
      %v2938 = vmax.f32 %v1592, %v2874
      %v2939 = vmax.f32 %v1593, %v2875
      %v2940 = vmax.f32 %v1594, %v2876
      %v2941 = vmax.f32 %v1595, %v2877
      %v2942 = vmax.f32 %v1596, %v2878
      %v2943 = vmax.f32 %v1597, %v2879
      %v2944 = vmax.f32 %v1598, %v2880
      %v2945 = vmax.f32 %v1599, %v2881
      %v2946 = vmax.f32 %v1600, %v2882
      %v2947 = vmax.f32 %v1601, %v2883
      %v2948 = vmax.f32 %v1602, %v2884
      %v2949 = vmax.f32 %v1603, %v2885
      %v2950 = vmax.f32 %v1604, %v2886
      %v2951 = vmax.f32 %v1605, %v2887
      %v2952 = vmax.f32 %v1606, %v2888
      %v2953 = vmax.f32 %v1607, %v2889
      %v2954 = vmax.f32 %v1608, %v2890
      %v2955 = vmax.f32 %v1609, %v2891
      %v2956 = vmax.f32 %v1610, %v2892
      %v2957 = vmax.f32 %v1611, %v2893
      %v2958 = vmax.f32 %v1612, %v2894
      %v2959 = vmax.f32 %v1613, %v2895
      %v2960 = vmax.f32 %v1614, %v2896
      %v2961 = vmax.f32 %v1615, %v2897
      %v2962 = vmax.f32 %v1616, %v2898
      %v2963 = vmax.f32 %v1617, %v2899
      %v2964 = vmax.f32 %v1618, %v2900
      %v2965 = vld [vmem:[%s5] sm:$0x1]
      %v2967 = vlaneseq
      %v2968 = vshrl.u32 %v2967, 7
      %v2969 = vsub.s32 0, %v2968
      %v2970 = vrot.slane %v2965, %v2969
      %v2972 = vadd.f32 %v2901, %v2970
      %v2973 = vadd.f32 %v2902, %v2970
      %v2974 = vadd.f32 %v2903, %v2970
      %v2975 = vadd.f32 %v2904, %v2970
      %v2976 = vadd.f32 %v2905, %v2970
      %v2977 = vadd.f32 %v2906, %v2970
      %v2978 = vadd.f32 %v2907, %v2970
      %v2979 = vadd.f32 %v2908, %v2970
      %v2980 = vadd.f32 %v2909, %v2970
      %v2981 = vadd.f32 %v2910, %v2970
      %v2982 = vadd.f32 %v2911, %v2970
      %v2983 = vadd.f32 %v2912, %v2970
      %v2984 = vadd.f32 %v2913, %v2970
      %v2985 = vadd.f32 %v2914, %v2970
      %v2986 = vadd.f32 %v2915, %v2970
      %v2987 = vadd.f32 %v2916, %v2970
      %v2988 = vadd.f32 %v2917, %v2970
      %v2989 = vadd.f32 %v2918, %v2970
      %v2990 = vadd.f32 %v2919, %v2970
      %v2991 = vadd.f32 %v2920, %v2970
      %v2992 = vadd.f32 %v2921, %v2970
      %v2993 = vadd.f32 %v2922, %v2970
      %v2994 = vadd.f32 %v2923, %v2970
      %v2995 = vadd.f32 %v2924, %v2970
      %v2996 = vadd.f32 %v2925, %v2970
      %v2997 = vadd.f32 %v2926, %v2970
      %v2998 = vadd.f32 %v2927, %v2970
      %v2999 = vadd.f32 %v2928, %v2970
      %v3000 = vadd.f32 %v2929, %v2970
      %v3001 = vadd.f32 %v2930, %v2970
      %v3002 = vadd.f32 %v2931, %v2970
      %v3003 = vadd.f32 %v2932, %v2970
      %v3004 = vadd.f32 %v2933, %v2970
      %v3005 = vadd.f32 %v2934, %v2970
      %v3006 = vadd.f32 %v2935, %v2970
      %v3007 = vadd.f32 %v2936, %v2970
      %v3008 = vadd.f32 %v2937, %v2970
      %v3009 = vadd.f32 %v2938, %v2970
      %v3010 = vadd.f32 %v2939, %v2970
      %v3011 = vadd.f32 %v2940, %v2970
      %v3012 = vadd.f32 %v2941, %v2970
      %v3013 = vadd.f32 %v2942, %v2970
      %v3014 = vadd.f32 %v2943, %v2970
      %v3015 = vadd.f32 %v2944, %v2970
      %v3016 = vadd.f32 %v2945, %v2970
      %v3017 = vadd.f32 %v2946, %v2970
      %v3018 = vadd.f32 %v2947, %v2970
      %v3019 = vadd.f32 %v2948, %v2970
      %v3020 = vadd.f32 %v2949, %v2970
      %v3021 = vadd.f32 %v2950, %v2970
      %v3022 = vadd.f32 %v2951, %v2970
      %v3023 = vadd.f32 %v2952, %v2970
      %v3024 = vadd.f32 %v2953, %v2970
      %v3025 = vadd.f32 %v2954, %v2970
      %v3026 = vadd.f32 %v2955, %v2970
      %v3027 = vadd.f32 %v2956, %v2970
      %v3028 = vadd.f32 %v2957, %v2970
      %v3029 = vadd.f32 %v2958, %v2970
      %v3030 = vadd.f32 %v2959, %v2970
      %v3031 = vadd.f32 %v2960, %v2970
      %v3032 = vadd.f32 %v2961, %v2970
      %v3033 = vadd.f32 %v2962, %v2970
      %v3034 = vadd.f32 %v2963, %v2970
      %v3035 = vadd.f32 %v2964, %v2970
      %v3036 = vmax.f32 %v2972, 0.0
      %v3037 = vmax.f32 %v2973, 0.0
      %v3038 = vmax.f32 %v2974, 0.0
      %v3039 = vmax.f32 %v2975, 0.0
      %v3040 = vmax.f32 %v2976, 0.0
      %v3041 = vmax.f32 %v2977, 0.0
      %v3042 = vmax.f32 %v2978, 0.0
      %v3043 = vmax.f32 %v2979, 0.0
      %v3044 = vmax.f32 %v2980, 0.0
      %v3045 = vmax.f32 %v2981, 0.0
      %v3046 = vmax.f32 %v2982, 0.0
      %v3047 = vmax.f32 %v2983, 0.0
      %v3048 = vmax.f32 %v2984, 0.0
      %v3049 = vmax.f32 %v2985, 0.0
      %v3050 = vmax.f32 %v2986, 0.0
      %v3051 = vmax.f32 %v2987, 0.0
      %v3052 = vmax.f32 %v2988, 0.0
      %v3053 = vmax.f32 %v2989, 0.0
      %v3054 = vmax.f32 %v2990, 0.0
      %v3055 = vmax.f32 %v2991, 0.0
      %v3056 = vmax.f32 %v2992, 0.0
      %v3057 = vmax.f32 %v2993, 0.0
      %v3058 = vmax.f32 %v2994, 0.0
      %v3059 = vmax.f32 %v2995, 0.0
      %v3060 = vmax.f32 %v2996, 0.0
      %v3061 = vmax.f32 %v2997, 0.0
      %v3062 = vmax.f32 %v2998, 0.0
      %v3063 = vmax.f32 %v2999, 0.0
      %v3064 = vmax.f32 %v3000, 0.0
      %v3065 = vmax.f32 %v3001, 0.0
      %v3066 = vmax.f32 %v3002, 0.0
      %v3067 = vmax.f32 %v3003, 0.0
      %v3068 = vmax.f32 %v3004, 0.0
      %v3069 = vmax.f32 %v3005, 0.0
      %v3070 = vmax.f32 %v3006, 0.0
      %v3071 = vmax.f32 %v3007, 0.0
      %v3072 = vmax.f32 %v3008, 0.0
      %v3073 = vmax.f32 %v3009, 0.0
      %v3074 = vmax.f32 %v3010, 0.0
      %v3075 = vmax.f32 %v3011, 0.0
      %v3076 = vmax.f32 %v3012, 0.0
      %v3077 = vmax.f32 %v3013, 0.0
      %v3078 = vmax.f32 %v3014, 0.0
      %v3079 = vmax.f32 %v3015, 0.0
      %v3080 = vmax.f32 %v3016, 0.0
      %v3081 = vmax.f32 %v3017, 0.0
      %v3082 = vmax.f32 %v3018, 0.0
      %v3083 = vmax.f32 %v3019, 0.0
      %v3084 = vmax.f32 %v3020, 0.0
      %v3085 = vmax.f32 %v3021, 0.0
      %v3086 = vmax.f32 %v3022, 0.0
      %v3087 = vmax.f32 %v3023, 0.0
      %v3088 = vmax.f32 %v3024, 0.0
      %v3089 = vmax.f32 %v3025, 0.0
      %v3090 = vmax.f32 %v3026, 0.0
      %v3091 = vmax.f32 %v3027, 0.0
      %v3092 = vmax.f32 %v3028, 0.0
      %v3093 = vmax.f32 %v3029, 0.0
      %v3094 = vmax.f32 %v3030, 0.0
      %v3095 = vmax.f32 %v3031, 0.0
      %v3096 = vmax.f32 %v3032, 0.0
      %v3097 = vmax.f32 %v3033, 0.0
      %v3098 = vmax.f32 %v3034, 0.0
      %v3099 = vmax.f32 %v3035, 0.0
      %v3100 = vpack.c.bf16 %v3037, %v3036
      %v3101 = vpack.c.bf16 %v3039, %v3038
      %v3102 = vpack.c.bf16 %v3041, %v3040
      %v3103 = vpack.c.bf16 %v3043, %v3042
      %v3104 = vpack.c.bf16 %v3045, %v3044
      %v3105 = vpack.c.bf16 %v3047, %v3046
      %v3106 = vpack.c.bf16 %v3049, %v3048
      %v3107 = vpack.c.bf16 %v3051, %v3050
      %v3108 = vpack.c.bf16 %v3053, %v3052
      %v3109 = vpack.c.bf16 %v3055, %v3054
      %v3110 = vpack.c.bf16 %v3057, %v3056
      %v3111 = vpack.c.bf16 %v3059, %v3058
      %v3112 = vpack.c.bf16 %v3061, %v3060
      %v3113 = vpack.c.bf16 %v3063, %v3062
      %v3114 = vpack.c.bf16 %v3065, %v3064
      %v3115 = vpack.c.bf16 %v3067, %v3066
      %v3116 = vpack.c.bf16 %v3069, %v3068
      %v3117 = vpack.c.bf16 %v3071, %v3070
      %v3118 = vpack.c.bf16 %v3073, %v3072
      %v3119 = vpack.c.bf16 %v3075, %v3074
      %v3120 = vpack.c.bf16 %v3077, %v3076
      %v3121 = vpack.c.bf16 %v3079, %v3078
      %v3122 = vpack.c.bf16 %v3081, %v3080
      %v3123 = vpack.c.bf16 %v3083, %v3082
      %v3124 = vpack.c.bf16 %v3085, %v3084
      %v3125 = vpack.c.bf16 %v3087, %v3086
      %v3126 = vpack.c.bf16 %v3089, %v3088
      %v3127 = vpack.c.bf16 %v3091, %v3090
      %v3128 = vpack.c.bf16 %v3093, %v3092
      %v3129 = vpack.c.bf16 %v3095, %v3094
      %v3130 = vpack.c.bf16 %v3097, %v3096
      %v3131 = vpack.c.bf16 %v3099, %v3098
      %v3164 = vunpack.c.l.b16 %v3100
      %v3165 = vunpack.c.h.b16 %v3100
      %v3166 = vunpack.c.l.b16 %v3101
      %v3167 = vunpack.c.h.b16 %v3101
      %v3168 = vunpack.c.l.b16 %v3102
      %v3169 = vunpack.c.h.b16 %v3102
      %v3170 = vunpack.c.l.b16 %v3103
      %v3171 = vunpack.c.h.b16 %v3103
      %v3172 = vunpack.c.l.b16 %v3104
      %v3173 = vunpack.c.h.b16 %v3104
      %v3174 = vunpack.c.l.b16 %v3105
      %v3175 = vunpack.c.h.b16 %v3105
      %v3176 = vunpack.c.l.b16 %v3106
      %v3177 = vunpack.c.h.b16 %v3106
      %v3178 = vunpack.c.l.b16 %v3107
      %v3179 = vunpack.c.h.b16 %v3107
      %v3180 = vunpack.c.l.b16 %v3108
      %v3181 = vunpack.c.h.b16 %v3108
      %v3182 = vunpack.c.l.b16 %v3109
      %v3183 = vunpack.c.h.b16 %v3109
      %v3184 = vunpack.c.l.b16 %v3110
      %v3185 = vunpack.c.h.b16 %v3110
      %v3186 = vunpack.c.l.b16 %v3111
      %v3187 = vunpack.c.h.b16 %v3111
      %v3188 = vunpack.c.l.b16 %v3112
      %v3189 = vunpack.c.h.b16 %v3112
      %v3190 = vunpack.c.l.b16 %v3113
      %v3191 = vunpack.c.h.b16 %v3113
      %v3192 = vunpack.c.l.b16 %v3114
      %v3193 = vunpack.c.h.b16 %v3114
      %v3194 = vunpack.c.l.b16 %v3115
      %v3195 = vunpack.c.h.b16 %v3115
      %v3196 = vunpack.c.l.b16 %v3116
      %v3197 = vunpack.c.h.b16 %v3116
      %v3198 = vunpack.c.l.b16 %v3117
      %v3199 = vunpack.c.h.b16 %v3117
      %v3200 = vunpack.c.l.b16 %v3118
      %v3201 = vunpack.c.h.b16 %v3118
      %v3202 = vunpack.c.l.b16 %v3119
      %v3203 = vunpack.c.h.b16 %v3119
      %v3204 = vunpack.c.l.b16 %v3120
      %v3205 = vunpack.c.h.b16 %v3120
      %v3206 = vunpack.c.l.b16 %v3121
      %v3207 = vunpack.c.h.b16 %v3121
      %v3208 = vunpack.c.l.b16 %v3122
      %v3209 = vunpack.c.h.b16 %v3122
      %v3210 = vunpack.c.l.b16 %v3123
      %v3211 = vunpack.c.h.b16 %v3123
      %v3212 = vunpack.c.l.b16 %v3124
      %v3213 = vunpack.c.h.b16 %v3124
      %v3214 = vunpack.c.l.b16 %v3125
      %v3215 = vunpack.c.h.b16 %v3125
      %v3216 = vunpack.c.l.b16 %v3126
      %v3217 = vunpack.c.h.b16 %v3126
      %v3218 = vunpack.c.l.b16 %v3127
      %v3219 = vunpack.c.h.b16 %v3127
      %v3220 = vunpack.c.l.b16 %v3128
      %v3221 = vunpack.c.h.b16 %v3128
      %v3222 = vunpack.c.l.b16 %v3129
      %v3223 = vunpack.c.h.b16 %v3129
      %v3224 = vunpack.c.l.b16 %v3130
      %v3225 = vunpack.c.h.b16 %v3130
      %v3226 = vunpack.c.l.b16 %v3131
      %v3227 = vunpack.c.h.b16 %v3131
      %v3228 = vpack.c.b16 %v3164, %v3164
      %v3229 = vpack.c.b16 %v3165, %v3165
      %v3230 = vpack.c.b16 %v3166, %v3166
      %v3231 = vpack.c.b16 %v3167, %v3167
      %v3232 = vpack.c.b16 %v3168, %v3168
      %v3233 = vpack.c.b16 %v3169, %v3169
      %v3234 = vpack.c.b16 %v3170, %v3170
      %v3235 = vpack.c.b16 %v3171, %v3171
      %v3236 = vpack.c.b16 %v3172, %v3172
      %v3237 = vpack.c.b16 %v3173, %v3173
      %v3238 = vpack.c.b16 %v3174, %v3174
      %v3239 = vpack.c.b16 %v3175, %v3175
      %v3240 = vpack.c.b16 %v3176, %v3176
      %v3241 = vpack.c.b16 %v3177, %v3177
      %v3242 = vpack.c.b16 %v3178, %v3178
      %v3243 = vpack.c.b16 %v3179, %v3179
      %v3244 = vpack.c.b16 %v3180, %v3180
      %v3245 = vpack.c.b16 %v3181, %v3181
      %v3246 = vpack.c.b16 %v3182, %v3182
      %v3247 = vpack.c.b16 %v3183, %v3183
      %v3248 = vpack.c.b16 %v3184, %v3184
      %v3249 = vpack.c.b16 %v3185, %v3185
      %v3250 = vpack.c.b16 %v3186, %v3186
      %v3251 = vpack.c.b16 %v3187, %v3187
      %v3252 = vpack.c.b16 %v3188, %v3188
      %v3253 = vpack.c.b16 %v3189, %v3189
      %v3254 = vpack.c.b16 %v3190, %v3190
      %v3255 = vpack.c.b16 %v3191, %v3191
      %v3256 = vpack.c.b16 %v3192, %v3192
      %v3257 = vpack.c.b16 %v3193, %v3193
      %v3258 = vpack.c.b16 %v3194, %v3194
      %v3259 = vpack.c.b16 %v3195, %v3195
      %v3260 = vpack.c.b16 %v3196, %v3196
      %v3261 = vpack.c.b16 %v3197, %v3197
      %v3262 = vpack.c.b16 %v3198, %v3198
      %v3263 = vpack.c.b16 %v3199, %v3199
      %v3264 = vpack.c.b16 %v3200, %v3200
      %v3265 = vpack.c.b16 %v3201, %v3201
      %v3266 = vpack.c.b16 %v3202, %v3202
      %v3267 = vpack.c.b16 %v3203, %v3203
      %v3268 = vpack.c.b16 %v3204, %v3204
      %v3269 = vpack.c.b16 %v3205, %v3205
      %v3270 = vpack.c.b16 %v3206, %v3206
      %v3271 = vpack.c.b16 %v3207, %v3207
      %v3272 = vpack.c.b16 %v3208, %v3208
      %v3273 = vpack.c.b16 %v3209, %v3209
      %v3274 = vpack.c.b16 %v3210, %v3210
      %v3275 = vpack.c.b16 %v3211, %v3211
      %v3276 = vpack.c.b16 %v3212, %v3212
      %v3277 = vpack.c.b16 %v3213, %v3213
      %v3278 = vpack.c.b16 %v3214, %v3214
      %v3279 = vpack.c.b16 %v3215, %v3215
      %v3280 = vpack.c.b16 %v3216, %v3216
      %v3281 = vpack.c.b16 %v3217, %v3217
      %v3282 = vpack.c.b16 %v3218, %v3218
      %v3283 = vpack.c.b16 %v3219, %v3219
      %v3284 = vpack.c.b16 %v3220, %v3220
      %v3285 = vpack.c.b16 %v3221, %v3221
      %v3286 = vpack.c.b16 %v3222, %v3222
      %v3287 = vpack.c.b16 %v3223, %v3223
      %v3288 = vpack.c.b16 %v3224, %v3224
      %v3289 = vpack.c.b16 %v3225, %v3225
      %v3290 = vpack.c.b16 %v3226, %v3226
      %v3291 = vpack.c.b16 %v3227, %v3227
      %vm3356 = vcmask 125952
      %3357 = vst.msk [vmem:[%s319] sm:$0xf] %vm3356, %v3228
      %3358 = vst.msk [vmem:[%s319 + $0x4] sm:$0xf] %vm3356, %v3229
      %3359 = vst.msk [vmem:[%s319 + $0x8] sm:$0xf] %vm3356, %v3230
      %3360 = vst.msk [vmem:[%s319 + $0xc] sm:$0xf] %vm3356, %v3231
      %3361 = vst.msk [vmem:[%s319 + $0x10] sm:$0xf] %vm3356, %v3232
      %3362 = vst.msk [vmem:[%s319 + $0x14] sm:$0xf] %vm3356, %v3233
      %3363 = vst.msk [vmem:[%s319 + $0x18] sm:$0xf] %vm3356, %v3234
      %3364 = vst.msk [vmem:[%s319 + $0x1c] sm:$0xf] %vm3356, %v3235
      %3365 = vst.msk [vmem:[%s319 + $0x20] sm:$0xf] %vm3356, %v3236
      %3366 = vst.msk [vmem:[%s319 + $0x24] sm:$0xf] %vm3356, %v3237
      %3367 = vst.msk [vmem:[%s319 + $0x28] sm:$0xf] %vm3356, %v3238
      %3368 = vst.msk [vmem:[%s319 + $0x2c] sm:$0xf] %vm3356, %v3239
      %3369 = vst.msk [vmem:[%s319 + $0x30] sm:$0xf] %vm3356, %v3240
      %3370 = vst.msk [vmem:[%s319 + $0x34] sm:$0xf] %vm3356, %v3241
      %3371 = vst.msk [vmem:[%s319 + $0x38] sm:$0xf] %vm3356, %v3242
      %3372 = vst.msk [vmem:[%s319 + $0x3c] sm:$0xf] %vm3356, %v3243
      %3373 = vst.msk [vmem:[%s319 + $0x40] sm:$0xf] %vm3356, %v3244
      %3374 = vst.msk [vmem:[%s319 + $0x44] sm:$0xf] %vm3356, %v3245
      %3375 = vst.msk [vmem:[%s319 + $0x48] sm:$0xf] %vm3356, %v3246
      %3376 = vst.msk [vmem:[%s319 + $0x4c] sm:$0xf] %vm3356, %v3247
      %3377 = vst.msk [vmem:[%s319 + $0x50] sm:$0xf] %vm3356, %v3248
      %3378 = vst.msk [vmem:[%s319 + $0x54] sm:$0xf] %vm3356, %v3249
      %3379 = vst.msk [vmem:[%s319 + $0x58] sm:$0xf] %vm3356, %v3250
      %3380 = vst.msk [vmem:[%s319 + $0x5c] sm:$0xf] %vm3356, %v3251
      %3381 = vst.msk [vmem:[%s319 + $0x60] sm:$0xf] %vm3356, %v3252
      %3382 = vst.msk [vmem:[%s319 + $0x64] sm:$0xf] %vm3356, %v3253
      %3383 = vst.msk [vmem:[%s319 + $0x68] sm:$0xf] %vm3356, %v3254
      %3384 = vst.msk [vmem:[%s319 + $0x6c] sm:$0xf] %vm3356, %v3255
      %3385 = vst.msk [vmem:[%s319 + $0x70] sm:$0xf] %vm3356, %v3256
      %3386 = vst.msk [vmem:[%s319 + $0x74] sm:$0xf] %vm3356, %v3257
      %3387 = vst.msk [vmem:[%s319 + $0x78] sm:$0xf] %vm3356, %v3258
      %3388 = vst.msk [vmem:[%s319 + $0x7c] sm:$0xf] %vm3356, %v3259
      %3389 = vst.msk [vmem:[%s319 + $0x80] sm:$0xf] %vm3356, %v3260
      %3390 = vst.msk [vmem:[%s319 + $0x84] sm:$0xf] %vm3356, %v3261
      %3391 = vst.msk [vmem:[%s319 + $0x88] sm:$0xf] %vm3356, %v3262
      %3392 = vst.msk [vmem:[%s319 + $0x8c] sm:$0xf] %vm3356, %v3263
      %3393 = vst.msk [vmem:[%s319 + $0x90] sm:$0xf] %vm3356, %v3264
      %3394 = vst.msk [vmem:[%s319 + $0x94] sm:$0xf] %vm3356, %v3265
      %3395 = vst.msk [vmem:[%s319 + $0x98] sm:$0xf] %vm3356, %v3266
      %3396 = vst.msk [vmem:[%s319 + $0x9c] sm:$0xf] %vm3356, %v3267
      %3397 = vst.msk [vmem:[%s319 + $0xa0] sm:$0xf] %vm3356, %v3268
      %3398 = vst.msk [vmem:[%s319 + $0xa4] sm:$0xf] %vm3356, %v3269
      %3399 = vst.msk [vmem:[%s319 + $0xa8] sm:$0xf] %vm3356, %v3270
      %3400 = vst.msk [vmem:[%s319 + $0xac] sm:$0xf] %vm3356, %v3271
      %3401 = vst.msk [vmem:[%s319 + $0xb0] sm:$0xf] %vm3356, %v3272
      %3402 = vst.msk [vmem:[%s319 + $0xb4] sm:$0xf] %vm3356, %v3273
      %3403 = vst.msk [vmem:[%s319 + $0xb8] sm:$0xf] %vm3356, %v3274
      %3404 = vst.msk [vmem:[%s319 + $0xbc] sm:$0xf] %vm3356, %v3275
      %3405 = vst.msk [vmem:[%s319 + $0xc0] sm:$0xf] %vm3356, %v3276
      %3406 = vst.msk [vmem:[%s319 + $0xc4] sm:$0xf] %vm3356, %v3277
      %3407 = vst.msk [vmem:[%s319 + $0xc8] sm:$0xf] %vm3356, %v3278
      %3408 = vst.msk [vmem:[%s319 + $0xcc] sm:$0xf] %vm3356, %v3279
      %3409 = vst.msk [vmem:[%s319 + $0xd0] sm:$0xf] %vm3356, %v3280
      %3410 = vst.msk [vmem:[%s319 + $0xd4] sm:$0xf] %vm3356, %v3281
      %3411 = vst.msk [vmem:[%s319 + $0xd8] sm:$0xf] %vm3356, %v3282
      %3412 = vst.msk [vmem:[%s319 + $0xdc] sm:$0xf] %vm3356, %v3283
      %3413 = vst.msk [vmem:[%s319 + $0xe0] sm:$0xf] %vm3356, %v3284
      %3414 = vst.msk [vmem:[%s319 + $0xe4] sm:$0xf] %vm3356, %v3285
      %3415 = vst.msk [vmem:[%s319 + $0xe8] sm:$0xf] %vm3356, %v3286
      %3416 = vst.msk [vmem:[%s319 + $0xec] sm:$0xf] %vm3356, %v3287
      %3417 = vst.msk [vmem:[%s319 + $0xf0] sm:$0xf] %vm3356, %v3288
      %3418 = vst.msk [vmem:[%s319 + $0xf4] sm:$0xf] %vm3356, %v3289
      %3419 = vst.msk [vmem:[%s319 + $0xf8] sm:$0xf] %vm3356, %v3290
      %3420 = vst.msk [vmem:[%s319 + $0xfc] sm:$0xf] %vm3356, %v3291
      %s3421 = smul.u32 64, %s17
      %p3422 = scmp.lt.s32.totalorder %s3421, 255
      %s3423 = scalar_select %p3422, %s3421, 255
      %s3424 = smul.addr %s3423, 4
      %s3425 = scalar_lea.vmem %s6, %s3424
      // Predicated region
      $region45: #{net_forward.4} parent=43 // pred_check
        %p3426 = pneg %p181
      $region46: #{net_forward.4} parent=43 // pred_check_branch
        %3428 = sbr.rel (%p3426) target = $region48
      $region47: #{net_forward.4} parent=43 // pred_region
        %s3429 = smul.u32 64, %s17
      $region48: #{net_forward.4} parent=43 // pred_fallthru
        _
    $region44: #{net_forward.4} parent=5 // pred_fallthru
      _
    %p3430 = scmp.le.s32.totalorder 2, %s12
    // Predicated region
    $region49: #{net_forward.4} parent=5 // pred_check
      %p3431 = pneg %p3430
    $region50: #{net_forward.4} parent=5 // pred_check_branch
      %3433 = sbr.rel (%p3431) target = $region52
    $region51: #{net_forward.4} parent=5 // pred_region
      %s3434 = ssub.s32 %s12, 2
      // Predicated region
      $region53: #{net_forward.4} parent=51 // pred_check
        %p3435 = pneg %p187
      $region54: #{net_forward.4} parent=51 // pred_check_branch
        %3437 = sbr.rel (%p3435) target = $region56
      $region55: #{net_forward.4} parent=51 // pred_region
        %s3438 = smul.u32 64, %s18
        %p3439 = scmp.lt.s32.totalorder %s3438, 255
        %s3440 = scalar_select %p3439, %s3438, 255
        %s3441 = smul.addr %s3440, 4
        %s3442 = scalar_lea.vmem %s6, %s3441
      $region56: #{net_forward.4} parent=51 // pred_fallthru
        _
    $region52: #{net_forward.4} parent=5 // pred_fallthru
      _
  $region6: #{net_forward.4} parent=0 // loop_footer
    %s16 = sadd.s32 1, %s12
  $region7: #{net_forward.4} parent=0 // loop_footer_branch
    %11 = sbr.rel target = $region3
  $region8: #{net_forward.4} parent=0 // loop_exit
    _

// kernel: net_forward.5
$region0: #{net_forward.5}
  #allocation0 [shape = 'u32[]', space=smem, size = 0x4, offset = 0x4, fixed_abs, tag = 'smem constant byte address 0x4 - core index']
  #allocation1 [shape = 'u32[144,128]{1,0:T(1,128)}', space=vmem, size = 0x12000, scoped, tag = 'internal scratch']
  %s0 = inlined_call_operand.vmem [shape: bf16[392,144], index: 0, kind: input, shape index: {}]
  %s1 = inlined_call_operand.vmem [shape: bf16[392,144], index: 1, kind: input, shape index: {}]
  %s2 = inlined_call_operand.vmem [shape: bf16[392,144], index: 2, kind: input, shape index: {}]
  %s3 = inlined_call_operand.vmem [shape: bf16[392,144], index: 3, kind: input, shape index: {}]
  %s4 = inlined_call_operand.vmem [shape: bf16[144,32], index: 4, kind: input, shape index: {}]
  %s5 = inlined_call_operand.vmem [shape: f32[1,32], index: 5, kind: input, shape index: {}]
  %s6 = inlined_call_operand.vmem [shape: bf16[392,32], index: 6, kind: output, shape index: {}]
  %s7 = sld [smem:[#allocation0]]
  $region34: #{net_forward.5} parent=0
    _
  %s9 = ssub.s32 1, %s7
  %s10 = scalar_select 0, %s9, %s7
  // Predicated region
  $region2: #{net_forward.5} parent=0 // pred_check
    _
  $region3: #{net_forward.5} parent=0 // pred_check_branch
    %12 = sbr.rel (0) target = $region5
  $region4: #{net_forward.5} parent=0 // pred_region
    _
  $region5: #{net_forward.5} parent=0 // pred_fallthru
    _
  // Predicated region
  $region6: #{net_forward.5} parent=0 // pred_check
    _
  $region7: #{net_forward.5} parent=0 // pred_check_branch
    %14 = sbr.rel (0) target = $region9
  $region8: #{net_forward.5} parent=0 // pred_region
    _
  $region9: #{net_forward.5} parent=0 // pred_fallthru
    _
  // Predicated region
  $region10: #{net_forward.5} parent=0 // pred_check
    _
  $region11: #{net_forward.5} parent=0 // pred_check_branch
    %16 = sbr.rel (0) target = $region13
  $region12: #{net_forward.5} parent=0 // pred_region
    _
  $region13: #{net_forward.5} parent=0 // pred_fallthru
    _
  // Predicated region
  $region14: #{net_forward.5} parent=0 // pred_check
    _
  $region15: #{net_forward.5} parent=0 // pred_check_branch
    %18 = sbr.rel (0) target = $region17
  $region16: #{net_forward.5} parent=0 // pred_region
    _
  $region17: #{net_forward.5} parent=0 // pred_fallthru
    _
  // Predicated region
  $region18: #{net_forward.5} parent=0 // pred_check
    _
  $region19: #{net_forward.5} parent=0 // pred_check_branch
    %20 = sbr.rel (0) target = $region21
  $region20: #{net_forward.5} parent=0 // pred_region
    _
  $region21: #{net_forward.5} parent=0 // pred_fallthru
    _
  // Predicated region
  $region22: #{net_forward.5} parent=0 // pred_check
    _
  $region23: #{net_forward.5} parent=0 // pred_check_branch
    %22 = sbr.rel (0) target = $region25
  $region24: #{net_forward.5} parent=0 // pred_region
    _
  $region25: #{net_forward.5} parent=0 // pred_fallthru
    _
  %v24 = vld [vmem:[%s4] sm:$0xf]
  %v25 = vld [vmem:[%s4 + $0x4] sm:$0xf]
  %v26 = vld [vmem:[%s4 + $0x8] sm:$0xf]
  %v27 = vld [vmem:[%s4 + $0xc] sm:$0xf]
  %v28 = vld [vmem:[%s4 + $0x10] sm:$0xf]
  %v29 = vld [vmem:[%s4 + $0x14] sm:$0xf]
  %v30 = vld [vmem:[%s4 + $0x18] sm:$0xf]
  %v31 = vld [vmem:[%s4 + $0x1c] sm:$0xf]
  %v32 = vld [vmem:[%s4 + $0x20] sm:$0xf]
  %v33 = vld [vmem:[%s4 + $0x24] sm:$0xf]
  %v34 = vld [vmem:[%s4 + $0x28] sm:$0xf]
  %v35 = vld [vmem:[%s4 + $0x2c] sm:$0xf]
  %v36 = vld [vmem:[%s4 + $0x30] sm:$0xf]
  %v37 = vld [vmem:[%s4 + $0x34] sm:$0xf]
  %v38 = vld [vmem:[%s4 + $0x38] sm:$0xf]
  %v39 = vld [vmem:[%s4 + $0x3c] sm:$0xf]
  %v40 = vld [vmem:[%s4 + $0x40] sm:$0xf]
  %v41 = vld [vmem:[%s4 + $0x44] sm:$0xf]
  %v42 = vld [vmem:[%s0] sm:$0xff]
  %v43 = vld [vmem:[%s0 + $0x8] sm:$0xff]
  %v44 = vld [vmem:[%s0 + $0x10] sm:$0xff]
  %v45 = vld [vmem:[%s0 + $0x18] sm:$0xff]
  %v46 = vld [vmem:[%s0 + $0x20] sm:$0xff]
  %v47 = vld [vmem:[%s0 + $0x28] sm:$0xff]
  %v48 = vld [vmem:[%s0 + $0x30] sm:$0xff]
  %v49 = vld [vmem:[%s0 + $0x38] sm:$0xff]
  %v50 = vld [vmem:[%s0 + $0x40] sm:$0xff]
  %v51 = vld [vmem:[%s0 + $0x48] sm:$0xff]
  %v52 = vld [vmem:[%s0 + $0x50] sm:$0xff]
  %v53 = vld [vmem:[%s0 + $0x58] sm:$0xff]
  %v54 = vld [vmem:[%s0 + $0x60] sm:$0xff]
  %v55 = vld [vmem:[%s0 + $0x68] sm:$0xff]
  %v56 = vld [vmem:[%s0 + $0x70] sm:$0xff]
  %v57 = vld [vmem:[%s0 + $0x78] sm:$0xff]
  %v58 = vld [vmem:[%s0 + $0x80] sm:$0xff]
  %v59 = vld [vmem:[%s0 + $0x88] sm:$0xff]
  %v60 = vld [vmem:[%s0 + $0x90] sm:$0xff]
  %v61 = vld [vmem:[%s0 + $0x98] sm:$0xff]
  %v62 = vld [vmem:[%s0 + $0xa0] sm:$0xff]
  %v63 = vld [vmem:[%s0 + $0xa8] sm:$0xff]
  %v64 = vld [vmem:[%s0 + $0xb0] sm:$0xff]
  %v65 = vld [vmem:[%s0 + $0xb8] sm:$0xff]
  %v66 = vld [vmem:[%s0 + $0xc0] sm:$0xff]
  %v67 = vld [vmem:[%s0 + $0xc8] sm:$0xff]
  %v68 = vld [vmem:[%s0 + $0xd0] sm:$0xff]
  %v69 = vld [vmem:[%s0 + $0xd8] sm:$0xff]
  %v70 = vld [vmem:[%s0 + $0xe0] sm:$0xff]
  %v71 = vld [vmem:[%s0 + $0xe8] sm:$0xff]
  %v72 = vld [vmem:[%s0 + $0xf0] sm:$0xff]
  %v73 = vld [vmem:[%s0 + $0xf8] sm:$0xff]
  %v74 = vld [vmem:[%s0 + $0x100] sm:$0xff]
  %v75 = vld [vmem:[%s0 + $0x108] sm:$0xff]
  %v76 = vld [vmem:[%s0 + $0x110] sm:$0xff]
  %v77 = vld [vmem:[%s0 + $0x118] sm:$0xff]
  %v78 = vld [vmem:[%s0 + $0x120] sm:$0xff]
  %v79 = vld [vmem:[%s0 + $0x128] sm:$0xff]
  %v80 = vld [vmem:[%s0 + $0x130] sm:$0xff]
  %v81 = vld [vmem:[%s0 + $0x138] sm:$0xff]
  %v82 = vld [vmem:[%s0 + $0x140] sm:$0xff]
  %v83 = vld [vmem:[%s0 + $0x148] sm:$0xff]
  %v84 = vld [vmem:[%s0 + $0x150] sm:$0xff]
  %v85 = vld [vmem:[%s0 + $0x158] sm:$0xff]
  %v86 = vld [vmem:[%s0 + $0x160] sm:$0xff]
  %v87 = vld [vmem:[%s0 + $0x168] sm:$0xff]
  %v88 = vld [vmem:[%s0 + $0x170] sm:$0xff]
  %v89 = vld [vmem:[%s0 + $0x178] sm:$0xff]
  %v90 = vld [vmem:[%s0 + $0x180] sm:$0xff]
  %v140 = vunpack.c.l.b16 %v42
  %v141 = vunpack.c.h.b16 %v42
  %v142 = vunpack.c.l.b16 %v43
  %v143 = vunpack.c.h.b16 %v43
  %v144 = vunpack.c.l.b16 %v44
  %v145 = vunpack.c.h.b16 %v44
  %v146 = vunpack.c.l.b16 %v45
  %v147 = vunpack.c.h.b16 %v45
  %v148 = vunpack.c.l.b16 %v46
  %v149 = vunpack.c.h.b16 %v46
  %v150 = vunpack.c.l.b16 %v47
  %v151 = vunpack.c.h.b16 %v47
  %v152 = vunpack.c.l.b16 %v48
  %v153 = vunpack.c.h.b16 %v48
  %v154 = vunpack.c.l.b16 %v49
  %v155 = vunpack.c.h.b16 %v49
  %v156 = vunpack.c.l.b16 %v50
  %v157 = vunpack.c.h.b16 %v50
  %v158 = vunpack.c.l.b16 %v51
  %v159 = vunpack.c.h.b16 %v51
  %v160 = vunpack.c.l.b16 %v52
  %v161 = vunpack.c.h.b16 %v52
  %v162 = vunpack.c.l.b16 %v53
  %v163 = vunpack.c.h.b16 %v53
  %v164 = vunpack.c.l.b16 %v54
  %v165 = vunpack.c.h.b16 %v54
  %v166 = vunpack.c.l.b16 %v55
  %v167 = vunpack.c.h.b16 %v55
  %v168 = vunpack.c.l.b16 %v56
  %v169 = vunpack.c.h.b16 %v56
  %v170 = vunpack.c.l.b16 %v57
  %v171 = vunpack.c.h.b16 %v57
  %v172 = vunpack.c.l.b16 %v58
  %v173 = vunpack.c.h.b16 %v58
  %v174 = vunpack.c.l.b16 %v59
  %v175 = vunpack.c.h.b16 %v59
  %v176 = vunpack.c.l.b16 %v60
  %v177 = vunpack.c.h.b16 %v60
  %v178 = vunpack.c.l.b16 %v61
  %v179 = vunpack.c.h.b16 %v61
  %v180 = vunpack.c.l.b16 %v62
  %v181 = vunpack.c.h.b16 %v62
  %v182 = vunpack.c.l.b16 %v63
  %v183 = vunpack.c.h.b16 %v63
  %v184 = vunpack.c.l.b16 %v64
  %v185 = vunpack.c.h.b16 %v64
  %v186 = vunpack.c.l.b16 %v65
  %v187 = vunpack.c.h.b16 %v65
  %v188 = vunpack.c.l.b16 %v66
  %v189 = vunpack.c.h.b16 %v66
  %v190 = vunpack.c.l.b16 %v67
  %v191 = vunpack.c.h.b16 %v67
  %v192 = vunpack.c.l.b16 %v68
  %v193 = vunpack.c.h.b16 %v68
  %v194 = vunpack.c.l.b16 %v69
  %v195 = vunpack.c.h.b16 %v69
  %v196 = vunpack.c.l.b16 %v70
  %v197 = vunpack.c.h.b16 %v70
  %v198 = vunpack.c.l.b16 %v71
  %v199 = vunpack.c.h.b16 %v71
  %v200 = vunpack.c.l.b16 %v72
  %v201 = vunpack.c.h.b16 %v72
  %v202 = vunpack.c.l.b16 %v73
  %v203 = vunpack.c.h.b16 %v73
  %v204 = vunpack.c.l.b16 %v74
  %v205 = vunpack.c.h.b16 %v74
  %v206 = vunpack.c.l.b16 %v75
  %v207 = vunpack.c.h.b16 %v75
  %v208 = vunpack.c.l.b16 %v76
  %v209 = vunpack.c.h.b16 %v76
  %v210 = vunpack.c.l.b16 %v77
  %v211 = vunpack.c.h.b16 %v77
  %v212 = vunpack.c.l.b16 %v78
  %v213 = vunpack.c.h.b16 %v78
  %v214 = vunpack.c.l.b16 %v79
  %v215 = vunpack.c.h.b16 %v79
  %v216 = vunpack.c.l.b16 %v80
  %v217 = vunpack.c.h.b16 %v80
  %v218 = vunpack.c.l.b16 %v81
  %v219 = vunpack.c.h.b16 %v81
  %v220 = vunpack.c.l.b16 %v82
  %v221 = vunpack.c.h.b16 %v82
  %v222 = vunpack.c.l.b16 %v83
  %v223 = vunpack.c.h.b16 %v83
  %v224 = vunpack.c.l.b16 %v84
  %v225 = vunpack.c.h.b16 %v84
  %v226 = vunpack.c.l.b16 %v85
  %v227 = vunpack.c.h.b16 %v85
  %v228 = vunpack.c.l.b16 %v86
  %v229 = vunpack.c.h.b16 %v86
  %v230 = vunpack.c.l.b16 %v87
  %v231 = vunpack.c.h.b16 %v87
  %v232 = vunpack.c.l.b16 %v88
  %v233 = vunpack.c.h.b16 %v88
  %v234 = vunpack.c.l.b16 %v89
  %v235 = vunpack.c.h.b16 %v89
  %v236 = vunpack.c.l.b16 %v90
  %v237 = vunpack.c.h.b16 %v90
  %v238 = vpack.c.b16 %v142, %v140
  %v239 = vpack.c.b16 %v143, %v141
  %v240 = vpack.c.b16 %v146, %v144
  %v241 = vpack.c.b16 %v147, %v145
  %v242 = vpack.c.b16 %v150, %v148
  %v243 = vpack.c.b16 %v151, %v149
  %v244 = vpack.c.b16 %v154, %v152
  %v245 = vpack.c.b16 %v155, %v153
  %v246 = vpack.c.b16 %v158, %v156
  %v247 = vpack.c.b16 %v159, %v157
  %v248 = vpack.c.b16 %v162, %v160
  %v249 = vpack.c.b16 %v163, %v161
  %v250 = vpack.c.b16 %v166, %v164
  %v251 = vpack.c.b16 %v167, %v165
  %v252 = vpack.c.b16 %v170, %v168
  %v253 = vpack.c.b16 %v171, %v169
  %v254 = vpack.c.b16 %v174, %v172
  %v255 = vpack.c.b16 %v175, %v173
  %v256 = vpack.c.b16 %v178, %v176
  %v257 = vpack.c.b16 %v179, %v177
  %v258 = vpack.c.b16 %v182, %v180
  %v259 = vpack.c.b16 %v183, %v181
  %v260 = vpack.c.b16 %v186, %v184
  %v261 = vpack.c.b16 %v187, %v185
  %v262 = vpack.c.b16 %v190, %v188
  %v263 = vpack.c.b16 %v191, %v189
  %v264 = vpack.c.b16 %v194, %v192
  %v265 = vpack.c.b16 %v195, %v193
  %v266 = vpack.c.b16 %v198, %v196
  %v267 = vpack.c.b16 %v199, %v197
  %v268 = vpack.c.b16 %v202, %v200
  %v269 = vpack.c.b16 %v203, %v201
  %v270 = vpack.c.b16 %v206, %v204
  %v271 = vpack.c.b16 %v207, %v205
  %v272 = vpack.c.b16 %v210, %v208
  %v273 = vpack.c.b16 %v211, %v209
  %v274 = vpack.c.b16 %v214, %v212
  %v275 = vpack.c.b16 %v215, %v213
  %v276 = vpack.c.b16 %v218, %v216
  %v277 = vpack.c.b16 %v219, %v217
  %v278 = vpack.c.b16 %v222, %v220
  %v279 = vpack.c.b16 %v223, %v221
  %v280 = vpack.c.b16 %v226, %v224
  %v281 = vpack.c.b16 %v227, %v225
  %v282 = vpack.c.b16 %v230, %v228
  %v283 = vpack.c.b16 %v231, %v229
  %v284 = vpack.c.b16 %v234, %v232
  %v285 = vpack.c.b16 %v235, %v233
  %v286 = vpack.c.b16 %v236, %v236
  %v287 = vpack.c.b16 %v237, %v237
  %v331 = vunpack.c.l.b16 %v24
  %v332 = vunpack.c.l.b16 %v25
  %v333 = vunpack.c.l.b16 %v26
  %v334 = vunpack.c.l.b16 %v27
  %v335 = vunpack.c.l.b16 %v28
  %v336 = vunpack.c.l.b16 %v29
  %v337 = vunpack.c.l.b16 %v30
  %v338 = vunpack.c.l.b16 %v31
  %v339 = vunpack.c.l.b16 %v32
  %v340 = vunpack.c.l.b16 %v33
  %v341 = vunpack.c.l.b16 %v34
  %v342 = vunpack.c.l.b16 %v35
  %v343 = vunpack.c.l.b16 %v36
  %v344 = vunpack.c.l.b16 %v37
  %v345 = vunpack.c.l.b16 %v38
  %v346 = vunpack.c.l.b16 %v39
  %v347 = vunpack.c.l.b16 %v40
  %v348 = vunpack.c.l.b16 %v41
  %v349 = vpack.c.b16 %v332, %v331
  %v350 = vpack.c.b16 %v334, %v333
  %v351 = vpack.c.b16 %v336, %v335
  %v352 = vpack.c.b16 %v338, %v337
  %v353 = vpack.c.b16 %v340, %v339
  %v354 = vpack.c.b16 %v342, %v341
  %v355 = vpack.c.b16 %v344, %v343
  %v356 = vpack.c.b16 %v346, %v345
  %v357 = vpack.c.b16 %v348, %v347
  %vm367 = vcmask 130048
  %v369 = vsel %vm367, %v239, 0
  %v372 = vsel %vm367, %v241, 0
  %v375 = vsel %vm367, %v243, 0
  %v378 = vsel %vm367, %v245, 0
  %v381 = vsel %vm367, %v247, 0
  %v384 = vsel %vm367, %v249, 0
  %v387 = vsel %vm367, %v251, 0
  %v390 = vsel %vm367, %v253, 0
  %v393 = vsel %vm367, %v255, 0
  %v396 = vsel %vm367, %v257, 0
  %v399 = vsel %vm367, %v259, 0
  %v402 = vsel %vm367, %v261, 0
  %v405 = vsel %vm367, %v263, 0
  %v408 = vsel %vm367, %v265, 0
  %v411 = vsel %vm367, %v267, 0
  %v414 = vsel %vm367, %v269, 0
  %v417 = vsel %vm367, %v271, 0
  %v420 = vsel %vm367, %v273, 0
  %v423 = vsel %vm367, %v275, 0
  %v426 = vsel %vm367, %v277, 0
  %v429 = vsel %vm367, %v279, 0
  %v432 = vsel %vm367, %v281, 0
  %v435 = vsel %vm367, %v283, 0
  %v438 = vsel %vm367, %v285, 0
  %v441 = vsel %vm367, %v287, 0
  %443 = vmatprep.subr.bf16.mxu0 0
  %444 = vmatpush1.bf16.msra.mxu0 %v356
  %445 = vmatprep.subr.bf16.mxu0 0
  %446 = vmatpush1.bf16.msra.mxu0 %v355
  %447 = vmatprep.subr.bf16.mxu0 0
  %448 = vmatpush1.bf16.msra.mxu0 %v354
  %449 = vmatprep.subr.bf16.mxu0 0
  %450 = vmatpush1.bf16.msra.mxu0 %v353
  %451 = vmatprep.subr.bf16.mxu0 0
  %452 = vmatpush1.bf16.msra.mxu0 %v352
  %453 = vmatprep.subr.bf16.mxu0 0
  %454 = vmatpush1.bf16.msra.mxu0 %v351
  %455 = vmatprep.subr.bf16.mxu0 0
  %456 = vmatpush1.bf16.msra.mxu0 %v350
  %457 = vmatprep.subr.bf16.mxu0 0
  %458 = vmatpush1.bf16.msra.mxu0 %v349
  %459 = vmatprep.subr.bf16.mxu0 0
  %460 = vmatpush2.bf16.msra.mxu0 0
  %461 = vmatprep.subr.bf16.mxu0 0
  %462 = vmatpush2.bf16.msra.mxu0 0
  %463 = vmatprep.subr.bf16.mxu0 0
  %464 = vmatpush2.bf16.msra.mxu0 0
  %465 = vmatprep.subr.bf16.mxu0 0
  %466 = vmatpush2.bf16.msra.mxu0 0
  %467 = vmatprep.subr.bf16.mxu0 0
  %468 = vmatpush2.bf16.msra.mxu0 0
  %469 = vmatprep.subr.bf16.mxu0 0
  %470 = vmatpush2.bf16.msra.mxu0 0
  %471 = vmatprep.subr.bf16.mxu0 0
  %472 = vmatpush2.bf16.msra.mxu0 0
  %473 = vmatprep.subr.bf16.mxu0 0
  %474 = vmatpush2.bf16.msra.mxu0 %v357
  %475 = vmatprep.mubr.bf16.mxu0 %v369
  %476 = vmatmul.mubr.bf16.gmra.mxu0 %v238
  %v477 = vpop.f32.mrf.mxu0
  %v478 = vadd.f32 0.0, %v477
  %v479 = vpop.f32.mrf.mxu0
  %v480 = vpop.f32.mrf.mxu0
  %v481 = vadd.f32 0.0, %v480
  %v482 = vpop.f32.mrf.mxu0
  %483 = vmatprep.mubr.bf16.mxu0 %v372
  %484 = vmatmul.mubr.bf16.gmra.mxu0 %v240
  %v485 = vpop.f32.mrf.mxu0
  %v486 = vadd.f32 0.0, %v485
  %v487 = vpop.f32.mrf.mxu0
  %v488 = vpop.f32.mrf.mxu0
  %v489 = vadd.f32 0.0, %v488
  %v490 = vpop.f32.mrf.mxu0
  %491 = vmatprep.mubr.bf16.mxu0 %v375
  %492 = vmatmul.mubr.bf16.gmra.mxu0 %v242
  %v493 = vpop.f32.mrf.mxu0
  %v494 = vadd.f32 0.0, %v493
  %v495 = vpop.f32.mrf.mxu0
  %v496 = vpop.f32.mrf.mxu0
  %v497 = vadd.f32 0.0, %v496
  %v498 = vpop.f32.mrf.mxu0
  %499 = vmatprep.mubr.bf16.mxu0 %v378
  %500 = vmatmul.mubr.bf16.gmra.mxu0 %v244
  %v501 = vpop.f32.mrf.mxu0
  %v502 = vadd.f32 0.0, %v501
  %v503 = vpop.f32.mrf.mxu0
  %v504 = vpop.f32.mrf.mxu0
  %v505 = vadd.f32 0.0, %v504
  %v506 = vpop.f32.mrf.mxu0
  %507 = vmatprep.mubr.bf16.mxu0 %v381
  %508 = vmatmul.mubr.bf16.gmra.mxu0 %v246
  %v509 = vpop.f32.mrf.mxu0
  %v510 = vadd.f32 0.0, %v509
  %v511 = vpop.f32.mrf.mxu0
  %v512 = vpop.f32.mrf.mxu0
  %v513 = vadd.f32 0.0, %v512
  %v514 = vpop.f32.mrf.mxu0
  %515 = vmatprep.mubr.bf16.mxu0 %v384
  %516 = vmatmul.mubr.bf16.gmra.mxu0 %v248
  %v517 = vpop.f32.mrf.mxu0
  %v518 = vadd.f32 0.0, %v517
  %v519 = vpop.f32.mrf.mxu0
  %v520 = vpop.f32.mrf.mxu0
  %v521 = vadd.f32 0.0, %v520
  %v522 = vpop.f32.mrf.mxu0
  %523 = vmatprep.mubr.bf16.mxu0 %v387
  %524 = vmatmul.mubr.bf16.gmra.mxu0 %v250
  %v525 = vpop.f32.mrf.mxu0
  %v526 = vadd.f32 0.0, %v525
  %v527 = vpop.f32.mrf.mxu0
  %v528 = vpop.f32.mrf.mxu0
  %v529 = vadd.f32 0.0, %v528
  %v530 = vpop.f32.mrf.mxu0
  %531 = vmatprep.mubr.bf16.mxu0 %v390
  %532 = vmatmul.mubr.bf16.gmra.mxu0 %v252
  %v533 = vpop.f32.mrf.mxu0
  %v534 = vadd.f32 0.0, %v533
  %v535 = vpop.f32.mrf.mxu0
  %v536 = vpop.f32.mrf.mxu0
  %v537 = vadd.f32 0.0, %v536
  %v538 = vpop.f32.mrf.mxu0
  %539 = vmatprep.mubr.bf16.mxu0 %v393
  %540 = vmatmul.mubr.bf16.gmra.mxu0 %v254
  %v541 = vpop.f32.mrf.mxu0
  %v542 = vadd.f32 0.0, %v541
  %v543 = vpop.f32.mrf.mxu0
  %v544 = vpop.f32.mrf.mxu0
  %v545 = vadd.f32 0.0, %v544
  %v546 = vpop.f32.mrf.mxu0
  %547 = vmatprep.mubr.bf16.mxu0 %v396
  %548 = vmatmul.mubr.bf16.gmra.mxu0 %v256
  %v549 = vpop.f32.mrf.mxu0
  %v550 = vadd.f32 0.0, %v549
  %v551 = vpop.f32.mrf.mxu0
  %v552 = vpop.f32.mrf.mxu0
  %v553 = vadd.f32 0.0, %v552
  %v554 = vpop.f32.mrf.mxu0
  %555 = vmatprep.mubr.bf16.mxu0 %v399
  %556 = vmatmul.mubr.bf16.gmra.mxu0 %v258
  %v557 = vpop.f32.mrf.mxu0
  %v558 = vadd.f32 0.0, %v557
  %v559 = vpop.f32.mrf.mxu0
  %v560 = vpop.f32.mrf.mxu0
  %v561 = vadd.f32 0.0, %v560
  %v562 = vpop.f32.mrf.mxu0
  %563 = vmatprep.mubr.bf16.mxu0 %v402
  %564 = vmatmul.mubr.bf16.gmra.mxu0 %v260
  %v565 = vpop.f32.mrf.mxu0
  %v566 = vadd.f32 0.0, %v565
  %v567 = vpop.f32.mrf.mxu0
  %v568 = vpop.f32.mrf.mxu0
  %v569 = vadd.f32 0.0, %v568
  %v570 = vpop.f32.mrf.mxu0
  %571 = vmatprep.mubr.bf16.mxu0 %v405
  %572 = vmatmul.mubr.bf16.gmra.mxu0 %v262
  %v573 = vpop.f32.mrf.mxu0
  %v574 = vadd.f32 0.0, %v573
  %v575 = vpop.f32.mrf.mxu0
  %v576 = vpop.f32.mrf.mxu0
  %v577 = vadd.f32 0.0, %v576
  %v578 = vpop.f32.mrf.mxu0
  %579 = vmatprep.mubr.bf16.mxu0 %v408
  %580 = vmatmul.mubr.bf16.gmra.mxu0 %v264
  %v581 = vpop.f32.mrf.mxu0
  %v582 = vadd.f32 0.0, %v581
  %v583 = vpop.f32.mrf.mxu0
  %v584 = vpop.f32.mrf.mxu0
  %v585 = vadd.f32 0.0, %v584
  %v586 = vpop.f32.mrf.mxu0
  %587 = vmatprep.mubr.bf16.mxu0 %v411
  %588 = vmatmul.mubr.bf16.gmra.mxu0 %v266
  %v589 = vpop.f32.mrf.mxu0
  %v590 = vadd.f32 0.0, %v589
  %v591 = vpop.f32.mrf.mxu0
  %v592 = vpop.f32.mrf.mxu0
  %v593 = vadd.f32 0.0, %v592
  %v594 = vpop.f32.mrf.mxu0
  %595 = vmatprep.mubr.bf16.mxu0 %v414
  %596 = vmatmul.mubr.bf16.gmra.mxu0 %v268
  %v597 = vpop.f32.mrf.mxu0
  %v598 = vadd.f32 0.0, %v597
  %v599 = vpop.f32.mrf.mxu0
  %v600 = vpop.f32.mrf.mxu0
  %v601 = vadd.f32 0.0, %v600
  %v602 = vpop.f32.mrf.mxu0
  %603 = vmatprep.mubr.bf16.mxu0 %v417
  %604 = vmatmul.mubr.bf16.gmra.mxu0 %v270
  %v605 = vpop.f32.mrf.mxu0
  %v606 = vadd.f32 0.0, %v605
  %v607 = vpop.f32.mrf.mxu0
  %v608 = vpop.f32.mrf.mxu0
  %v609 = vadd.f32 0.0, %v608
  %v610 = vpop.f32.mrf.mxu0
  %611 = vmatprep.mubr.bf16.mxu0 %v420
  %612 = vmatmul.mubr.bf16.gmra.mxu0 %v272
  %v613 = vpop.f32.mrf.mxu0
  %v614 = vadd.f32 0.0, %v613
  %v615 = vpop.f32.mrf.mxu0
  %v616 = vpop.f32.mrf.mxu0
  %v617 = vadd.f32 0.0, %v616
  %v618 = vpop.f32.mrf.mxu0
  %619 = vmatprep.mubr.bf16.mxu0 %v423
  %620 = vmatmul.mubr.bf16.gmra.mxu0 %v274
  %v621 = vpop.f32.mrf.mxu0
  %v622 = vadd.f32 0.0, %v621
  %v623 = vpop.f32.mrf.mxu0
  %v624 = vpop.f32.mrf.mxu0
  %v625 = vadd.f32 0.0, %v624
  %v626 = vpop.f32.mrf.mxu0
  %627 = vmatprep.mubr.bf16.mxu0 %v426
  %628 = vmatmul.mubr.bf16.gmra.mxu0 %v276
  %v629 = vpop.f32.mrf.mxu0
  %v630 = vadd.f32 0.0, %v629
  %v631 = vpop.f32.mrf.mxu0
  %v632 = vpop.f32.mrf.mxu0
  %v633 = vadd.f32 0.0, %v632
  %v634 = vpop.f32.mrf.mxu0
  %635 = vmatprep.mubr.bf16.mxu0 %v429
  %636 = vmatmul.mubr.bf16.gmra.mxu0 %v278
  %v637 = vpop.f32.mrf.mxu0
  %v638 = vadd.f32 0.0, %v637
  %v639 = vpop.f32.mrf.mxu0
  %v640 = vpop.f32.mrf.mxu0
  %v641 = vadd.f32 0.0, %v640
  %v642 = vpop.f32.mrf.mxu0
  %643 = vmatprep.mubr.bf16.mxu0 %v432
  %644 = vmatmul.mubr.bf16.gmra.mxu0 %v280
  %v645 = vpop.f32.mrf.mxu0
  %v646 = vadd.f32 0.0, %v645
  %v647 = vpop.f32.mrf.mxu0
  %v648 = vpop.f32.mrf.mxu0
  %v649 = vadd.f32 0.0, %v648
  %v650 = vpop.f32.mrf.mxu0
  %651 = vmatprep.mubr.bf16.mxu0 %v435
  %652 = vmatmul.mubr.bf16.gmra.mxu0 %v282
  %v653 = vpop.f32.mrf.mxu0
  %v654 = vadd.f32 0.0, %v653
  %v655 = vpop.f32.mrf.mxu0
  %v656 = vpop.f32.mrf.mxu0
  %v657 = vadd.f32 0.0, %v656
  %v658 = vpop.f32.mrf.mxu0
  %659 = vmatprep.mubr.bf16.mxu0 %v438
  %660 = vmatmul.mubr.bf16.gmra.mxu0 %v284
  %v661 = vpop.f32.mrf.mxu0
  %v662 = vadd.f32 0.0, %v661
  %v663 = vpop.f32.mrf.mxu0
  %v664 = vpop.f32.mrf.mxu0
  %v665 = vadd.f32 0.0, %v664
  %v666 = vpop.f32.mrf.mxu0
  %667 = vmatprep.mubr.bf16.mxu0 %v441
  %668 = vmatmul.mubr.bf16.gmra.mxu0 %v286
  %v669 = vpop.f32.mrf.mxu0
  %v670 = vadd.f32 0.0, %v669
  %v671 = vpop.f32.mrf.mxu0
  %v672 = vpop.f32.mrf.mxu0
  %v673 = vpop.f32.mrf.mxu0
  %674 = vdwg.mxu0
  %v675 = vld [vmem:[%s1] sm:$0xff]
  %v676 = vld [vmem:[%s1 + $0x8] sm:$0xff]
  %v677 = vld [vmem:[%s1 + $0x10] sm:$0xff]
  %v678 = vld [vmem:[%s1 + $0x18] sm:$0xff]
  %v679 = vld [vmem:[%s1 + $0x20] sm:$0xff]
  %v680 = vld [vmem:[%s1 + $0x28] sm:$0xff]
  %v681 = vld [vmem:[%s1 + $0x30] sm:$0xff]
  %v682 = vld [vmem:[%s1 + $0x38] sm:$0xff]
  %v683 = vld [vmem:[%s1 + $0x40] sm:$0xff]
  %v684 = vld [vmem:[%s1 + $0x48] sm:$0xff]
  %v685 = vld [vmem:[%s1 + $0x50] sm:$0xff]
  %v686 = vld [vmem:[%s1 + $0x58] sm:$0xff]
  %v687 = vld [vmem:[%s1 + $0x60] sm:$0xff]
  %v688 = vld [vmem:[%s1 + $0x68] sm:$0xff]
  %v689 = vld [vmem:[%s1 + $0x70] sm:$0xff]
  %v690 = vld [vmem:[%s1 + $0x78] sm:$0xff]
  %v691 = vld [vmem:[%s1 + $0x80] sm:$0xff]
  %v692 = vld [vmem:[%s1 + $0x88] sm:$0xff]
  %v693 = vld [vmem:[%s1 + $0x90] sm:$0xff]
  %v694 = vld [vmem:[%s1 + $0x98] sm:$0xff]
  %v695 = vld [vmem:[%s1 + $0xa0] sm:$0xff]
  %v696 = vld [vmem:[%s1 + $0xa8] sm:$0xff]
  %v697 = vld [vmem:[%s1 + $0xb0] sm:$0xff]
  %v698 = vld [vmem:[%s1 + $0xb8] sm:$0xff]
  %v699 = vld [vmem:[%s1 + $0xc0] sm:$0xff]
  %v700 = vld [vmem:[%s1 + $0xc8] sm:$0xff]
  %v701 = vld [vmem:[%s1 + $0xd0] sm:$0xff]
  %v702 = vld [vmem:[%s1 + $0xd8] sm:$0xff]
  %v703 = vld [vmem:[%s1 + $0xe0] sm:$0xff]
  %v704 = vld [vmem:[%s1 + $0xe8] sm:$0xff]
  %v705 = vld [vmem:[%s1 + $0xf0] sm:$0xff]
  %v706 = vld [vmem:[%s1 + $0xf8] sm:$0xff]
  %v707 = vld [vmem:[%s1 + $0x100] sm:$0xff]
  %v708 = vld [vmem:[%s1 + $0x108] sm:$0xff]
  %v709 = vld [vmem:[%s1 + $0x110] sm:$0xff]
  %v710 = vld [vmem:[%s1 + $0x118] sm:$0xff]
  %v711 = vld [vmem:[%s1 + $0x120] sm:$0xff]
  %v712 = vld [vmem:[%s1 + $0x128] sm:$0xff]
  %v713 = vld [vmem:[%s1 + $0x130] sm:$0xff]
  %v714 = vld [vmem:[%s1 + $0x138] sm:$0xff]
  %v715 = vld [vmem:[%s1 + $0x140] sm:$0xff]
  %v716 = vld [vmem:[%s1 + $0x148] sm:$0xff]
  %v717 = vld [vmem:[%s1 + $0x150] sm:$0xff]
  %v718 = vld [vmem:[%s1 + $0x158] sm:$0xff]
  %v719 = vld [vmem:[%s1 + $0x160] sm:$0xff]
  %v720 = vld [vmem:[%s1 + $0x168] sm:$0xff]
  %v721 = vld [vmem:[%s1 + $0x170] sm:$0xff]
  %v722 = vld [vmem:[%s1 + $0x178] sm:$0xff]
  %v723 = vld [vmem:[%s1 + $0x180] sm:$0xff]
  %v773 = vunpack.c.l.b16 %v675
  %v774 = vunpack.c.h.b16 %v675
  %v775 = vunpack.c.l.b16 %v676
  %v776 = vunpack.c.h.b16 %v676
  %v777 = vunpack.c.l.b16 %v677
  %v778 = vunpack.c.h.b16 %v677
  %v779 = vunpack.c.l.b16 %v678
  %v780 = vunpack.c.h.b16 %v678
  %v781 = vunpack.c.l.b16 %v679
  %v782 = vunpack.c.h.b16 %v679
  %v783 = vunpack.c.l.b16 %v680
  %v784 = vunpack.c.h.b16 %v680
  %v785 = vunpack.c.l.b16 %v681
  %v786 = vunpack.c.h.b16 %v681
  %v787 = vunpack.c.l.b16 %v682
  %v788 = vunpack.c.h.b16 %v682
  %v789 = vunpack.c.l.b16 %v683
  %v790 = vunpack.c.h.b16 %v683
  %v791 = vunpack.c.l.b16 %v684
  %v792 = vunpack.c.h.b16 %v684
  %v793 = vunpack.c.l.b16 %v685
  %v794 = vunpack.c.h.b16 %v685
  %v795 = vunpack.c.l.b16 %v686
  %v796 = vunpack.c.h.b16 %v686
  %v797 = vunpack.c.l.b16 %v687
  %v798 = vunpack.c.h.b16 %v687
  %v799 = vunpack.c.l.b16 %v688
  %v800 = vunpack.c.h.b16 %v688
  %v801 = vunpack.c.l.b16 %v689
  %v802 = vunpack.c.h.b16 %v689
  %v803 = vunpack.c.l.b16 %v690
  %v804 = vunpack.c.h.b16 %v690
  %v805 = vunpack.c.l.b16 %v691
  %v806 = vunpack.c.h.b16 %v691
  %v807 = vunpack.c.l.b16 %v692
  %v808 = vunpack.c.h.b16 %v692
  %v809 = vunpack.c.l.b16 %v693
  %v810 = vunpack.c.h.b16 %v693
  %v811 = vunpack.c.l.b16 %v694
  %v812 = vunpack.c.h.b16 %v694
  %v813 = vunpack.c.l.b16 %v695
  %v814 = vunpack.c.h.b16 %v695
  %v815 = vunpack.c.l.b16 %v696
  %v816 = vunpack.c.h.b16 %v696
  %v817 = vunpack.c.l.b16 %v697
  %v818 = vunpack.c.h.b16 %v697
  %v819 = vunpack.c.l.b16 %v698
  %v820 = vunpack.c.h.b16 %v698
  %v821 = vunpack.c.l.b16 %v699
  %v822 = vunpack.c.h.b16 %v699
  %v823 = vunpack.c.l.b16 %v700
  %v824 = vunpack.c.h.b16 %v700
  %v825 = vunpack.c.l.b16 %v701
  %v826 = vunpack.c.h.b16 %v701
  %v827 = vunpack.c.l.b16 %v702
  %v828 = vunpack.c.h.b16 %v702
  %v829 = vunpack.c.l.b16 %v703
  %v830 = vunpack.c.h.b16 %v703
  %v831 = vunpack.c.l.b16 %v704
  %v832 = vunpack.c.h.b16 %v704
  %v833 = vunpack.c.l.b16 %v705
  %v834 = vunpack.c.h.b16 %v705
  %v835 = vunpack.c.l.b16 %v706
  %v836 = vunpack.c.h.b16 %v706
  %v837 = vunpack.c.l.b16 %v707
  %v838 = vunpack.c.h.b16 %v707
  %v839 = vunpack.c.l.b16 %v708
  %v840 = vunpack.c.h.b16 %v708
  %v841 = vunpack.c.l.b16 %v709
  %v842 = vunpack.c.h.b16 %v709
  %v843 = vunpack.c.l.b16 %v710
  %v844 = vunpack.c.h.b16 %v710
  %v845 = vunpack.c.l.b16 %v711
  %v846 = vunpack.c.h.b16 %v711
  %v847 = vunpack.c.l.b16 %v712
  %v848 = vunpack.c.h.b16 %v712
  %v849 = vunpack.c.l.b16 %v713
  %v850 = vunpack.c.h.b16 %v713
  %v851 = vunpack.c.l.b16 %v714
  %v852 = vunpack.c.h.b16 %v714
  %v853 = vunpack.c.l.b16 %v715
  %v854 = vunpack.c.h.b16 %v715
  %v855 = vunpack.c.l.b16 %v716
  %v856 = vunpack.c.h.b16 %v716
  %v857 = vunpack.c.l.b16 %v717
  %v858 = vunpack.c.h.b16 %v717
  %v859 = vunpack.c.l.b16 %v718
  %v860 = vunpack.c.h.b16 %v718
  %v861 = vunpack.c.l.b16 %v719
  %v862 = vunpack.c.h.b16 %v719
  %v863 = vunpack.c.l.b16 %v720
  %v864 = vunpack.c.h.b16 %v720
  %v865 = vunpack.c.l.b16 %v721
  %v866 = vunpack.c.h.b16 %v721
  %v867 = vunpack.c.l.b16 %v722
  %v868 = vunpack.c.h.b16 %v722
  %v869 = vunpack.c.l.b16 %v723
  %v870 = vunpack.c.h.b16 %v723
  %v871 = vpack.c.b16 %v775, %v773
  %v872 = vpack.c.b16 %v776, %v774
  %v873 = vpack.c.b16 %v779, %v777
  %v874 = vpack.c.b16 %v780, %v778
  %v875 = vpack.c.b16 %v783, %v781
  %v876 = vpack.c.b16 %v784, %v782
  %v877 = vpack.c.b16 %v787, %v785
  %v878 = vpack.c.b16 %v788, %v786
  %v879 = vpack.c.b16 %v791, %v789
  %v880 = vpack.c.b16 %v792, %v790
  %v881 = vpack.c.b16 %v795, %v793
  %v882 = vpack.c.b16 %v796, %v794
  %v883 = vpack.c.b16 %v799, %v797
  %v884 = vpack.c.b16 %v800, %v798
  %v885 = vpack.c.b16 %v803, %v801
  %v886 = vpack.c.b16 %v804, %v802
  %v887 = vpack.c.b16 %v807, %v805
  %v888 = vpack.c.b16 %v808, %v806
  %v889 = vpack.c.b16 %v811, %v809
  %v890 = vpack.c.b16 %v812, %v810
  %v891 = vpack.c.b16 %v815, %v813
  %v892 = vpack.c.b16 %v816, %v814
  %v893 = vpack.c.b16 %v819, %v817
  %v894 = vpack.c.b16 %v820, %v818
  %v895 = vpack.c.b16 %v823, %v821
  %v896 = vpack.c.b16 %v824, %v822
  %v897 = vpack.c.b16 %v827, %v825
  %v898 = vpack.c.b16 %v828, %v826
  %v899 = vpack.c.b16 %v831, %v829
  %v900 = vpack.c.b16 %v832, %v830
  %v901 = vpack.c.b16 %v835, %v833
  %v902 = vpack.c.b16 %v836, %v834
  %v903 = vpack.c.b16 %v839, %v837
  %v904 = vpack.c.b16 %v840, %v838
  %v905 = vpack.c.b16 %v843, %v841
  %v906 = vpack.c.b16 %v844, %v842
  %v907 = vpack.c.b16 %v847, %v845
  %v908 = vpack.c.b16 %v848, %v846
  %v909 = vpack.c.b16 %v851, %v849
  %v910 = vpack.c.b16 %v852, %v850
  %v911 = vpack.c.b16 %v855, %v853
  %v912 = vpack.c.b16 %v856, %v854
  %v913 = vpack.c.b16 %v859, %v857
  %v914 = vpack.c.b16 %v860, %v858
  %v915 = vpack.c.b16 %v863, %v861
  %v916 = vpack.c.b16 %v864, %v862
  %v917 = vpack.c.b16 %v867, %v865
  %v918 = vpack.c.b16 %v868, %v866
  %v919 = vpack.c.b16 %v869, %v869
  %v920 = vpack.c.b16 %v870, %v870
  %v947 = vsel %vm367, %v872, 0
  %v950 = vsel %vm367, %v874, 0
  %v953 = vsel %vm367, %v876, 0
  %v956 = vsel %vm367, %v878, 0
  %v959 = vsel %vm367, %v880, 0
  %v962 = vsel %vm367, %v882, 0
  %v965 = vsel %vm367, %v884, 0
  %v968 = vsel %vm367, %v886, 0
  %v971 = vsel %vm367, %v888, 0
  %v974 = vsel %vm367, %v890, 0
  %v977 = vsel %vm367, %v892, 0
  %v980 = vsel %vm367, %v894, 0
  %v983 = vsel %vm367, %v896, 0
  %v986 = vsel %vm367, %v898, 0
  %v989 = vsel %vm367, %v900, 0
  %v992 = vsel %vm367, %v902, 0
  %v995 = vsel %vm367, %v904, 0
  %v998 = vsel %vm367, %v906, 0
  %v1001 = vsel %vm367, %v908, 0
  %v1004 = vsel %vm367, %v910, 0
  %v1007 = vsel %vm367, %v912, 0
  %v1010 = vsel %vm367, %v914, 0
  %v1013 = vsel %vm367, %v916, 0
  %v1016 = vsel %vm367, %v918, 0
  %v1019 = vsel %vm367, %v920, 0
  %1021 = vmatprep.subr.bf16.mxu0 0
  %1022 = vmatpush1.bf16.msra.mxu0 %v356
  %1023 = vmatprep.subr.bf16.mxu0 0
  %1024 = vmatpush1.bf16.msra.mxu0 %v355
  %1025 = vmatprep.subr.bf16.mxu0 0
  %1026 = vmatpush1.bf16.msra.mxu0 %v354
  %1027 = vmatprep.subr.bf16.mxu0 0
  %1028 = vmatpush1.bf16.msra.mxu0 %v353
  %1029 = vmatprep.subr.bf16.mxu0 0
  %1030 = vmatpush1.bf16.msra.mxu0 %v352
  %1031 = vmatprep.subr.bf16.mxu0 0
  %1032 = vmatpush1.bf16.msra.mxu0 %v351
  %1033 = vmatprep.subr.bf16.mxu0 0
  %1034 = vmatpush1.bf16.msra.mxu0 %v350
  %1035 = vmatprep.subr.bf16.mxu0 0
  %1036 = vmatpush1.bf16.msra.mxu0 %v349
  %1037 = vmatprep.subr.bf16.mxu0 0
  %1038 = vmatpush2.bf16.msra.mxu0 0
  %1039 = vmatprep.subr.bf16.mxu0 0
  %1040 = vmatpush2.bf16.msra.mxu0 0
  %1041 = vmatprep.subr.bf16.mxu0 0
  %1042 = vmatpush2.bf16.msra.mxu0 0
  %1043 = vmatprep.subr.bf16.mxu0 0
  %1044 = vmatpush2.bf16.msra.mxu0 0
  %1045 = vmatprep.subr.bf16.mxu0 0
  %1046 = vmatpush2.bf16.msra.mxu0 0
  %1047 = vmatprep.subr.bf16.mxu0 0
  %1048 = vmatpush2.bf16.msra.mxu0 0
  %1049 = vmatprep.subr.bf16.mxu0 0
  %1050 = vmatpush2.bf16.msra.mxu0 0
  %1051 = vmatprep.subr.bf16.mxu0 0
  %1052 = vmatpush2.bf16.msra.mxu0 %v357
  %1053 = vmatprep.mubr.bf16.mxu0 %v947
  %1054 = vmatmul.mubr.bf16.gmra.mxu0 %v871
  %v1055 = vpop.f32.mrf.mxu0
  %v1056 = vadd.f32 0.0, %v1055
  %v1057 = vpop.f32.mrf.mxu0
  %v1058 = vpop.f32.mrf.mxu0
  %v1059 = vadd.f32 0.0, %v1058
  %v1060 = vpop.f32.mrf.mxu0
  %1061 = vmatprep.mubr.bf16.mxu0 %v950
  %1062 = vmatmul.mubr.bf16.gmra.mxu0 %v873
  %v1063 = vpop.f32.mrf.mxu0
  %v1064 = vadd.f32 0.0, %v1063
  %v1065 = vpop.f32.mrf.mxu0
  %v1066 = vpop.f32.mrf.mxu0
  %v1067 = vadd.f32 0.0, %v1066
  %v1068 = vpop.f32.mrf.mxu0
  %1069 = vmatprep.mubr.bf16.mxu0 %v953
  %1070 = vmatmul.mubr.bf16.gmra.mxu0 %v875
  %v1071 = vpop.f32.mrf.mxu0
  %v1072 = vadd.f32 0.0, %v1071
  %v1073 = vpop.f32.mrf.mxu0
  %v1074 = vpop.f32.mrf.mxu0
  %v1075 = vadd.f32 0.0, %v1074
  %v1076 = vpop.f32.mrf.mxu0
  %1077 = vmatprep.mubr.bf16.mxu0 %v956
  %1078 = vmatmul.mubr.bf16.gmra.mxu0 %v877
  %v1079 = vpop.f32.mrf.mxu0
  %v1080 = vadd.f32 0.0, %v1079
  %v1081 = vpop.f32.mrf.mxu0
  %v1082 = vpop.f32.mrf.mxu0
  %v1083 = vadd.f32 0.0, %v1082
  %v1084 = vpop.f32.mrf.mxu0
  %1085 = vmatprep.mubr.bf16.mxu0 %v959
  %1086 = vmatmul.mubr.bf16.gmra.mxu0 %v879
  %v1087 = vpop.f32.mrf.mxu0
  %v1088 = vadd.f32 0.0, %v1087
  %v1089 = vpop.f32.mrf.mxu0
  %v1090 = vpop.f32.mrf.mxu0
  %v1091 = vadd.f32 0.0, %v1090
  %v1092 = vpop.f32.mrf.mxu0
  %1093 = vmatprep.mubr.bf16.mxu0 %v962
  %1094 = vmatmul.mubr.bf16.gmra.mxu0 %v881
  %v1095 = vpop.f32.mrf.mxu0
  %v1096 = vadd.f32 0.0, %v1095
  %v1097 = vpop.f32.mrf.mxu0
  %v1098 = vpop.f32.mrf.mxu0
  %v1099 = vadd.f32 0.0, %v1098
  %v1100 = vpop.f32.mrf.mxu0
  %1101 = vmatprep.mubr.bf16.mxu0 %v965
  %1102 = vmatmul.mubr.bf16.gmra.mxu0 %v883
  %v1103 = vpop.f32.mrf.mxu0
  %v1104 = vadd.f32 0.0, %v1103
  %v1105 = vpop.f32.mrf.mxu0
  %v1106 = vpop.f32.mrf.mxu0
  %v1107 = vadd.f32 0.0, %v1106
  %v1108 = vpop.f32.mrf.mxu0
  %1109 = vmatprep.mubr.bf16.mxu0 %v968
  %1110 = vmatmul.mubr.bf16.gmra.mxu0 %v885
  %v1111 = vpop.f32.mrf.mxu0
  %v1112 = vadd.f32 0.0, %v1111
  %v1113 = vpop.f32.mrf.mxu0
  %v1114 = vpop.f32.mrf.mxu0
  %v1115 = vadd.f32 0.0, %v1114
  %v1116 = vpop.f32.mrf.mxu0
  %1117 = vmatprep.mubr.bf16.mxu0 %v971
  %1118 = vmatmul.mubr.bf16.gmra.mxu0 %v887
  %v1119 = vpop.f32.mrf.mxu0
  %v1120 = vadd.f32 0.0, %v1119
  %v1121 = vpop.f32.mrf.mxu0
  %v1122 = vpop.f32.mrf.mxu0
  %v1123 = vadd.f32 0.0, %v1122
  %v1124 = vpop.f32.mrf.mxu0
  %1125 = vmatprep.mubr.bf16.mxu0 %v974
  %1126 = vmatmul.mubr.bf16.gmra.mxu0 %v889
  %v1127 = vpop.f32.mrf.mxu0
  %v1128 = vadd.f32 0.0, %v1127
  %v1129 = vpop.f32.mrf.mxu0
  %v1130 = vpop.f32.mrf.mxu0
  %v1131 = vadd.f32 0.0, %v1130
  %v1132 = vpop.f32.mrf.mxu0
  %1133 = vmatprep.mubr.bf16.mxu0 %v977
  %1134 = vmatmul.mubr.bf16.gmra.mxu0 %v891
  %v1135 = vpop.f32.mrf.mxu0
  %v1136 = vadd.f32 0.0, %v1135
  %v1137 = vpop.f32.mrf.mxu0
  %v1138 = vpop.f32.mrf.mxu0
  %v1139 = vadd.f32 0.0, %v1138
  %v1140 = vpop.f32.mrf.mxu0
  %1141 = vmatprep.mubr.bf16.mxu0 %v980
  %1142 = vmatmul.mubr.bf16.gmra.mxu0 %v893
  %v1143 = vpop.f32.mrf.mxu0
  %v1144 = vadd.f32 0.0, %v1143
  %v1145 = vpop.f32.mrf.mxu0
  %v1146 = vpop.f32.mrf.mxu0
  %v1147 = vadd.f32 0.0, %v1146
  %v1148 = vpop.f32.mrf.mxu0
  %1149 = vmatprep.mubr.bf16.mxu0 %v983
  %1150 = vmatmul.mubr.bf16.gmra.mxu0 %v895
  %v1151 = vpop.f32.mrf.mxu0
  %v1152 = vadd.f32 0.0, %v1151
  %v1153 = vpop.f32.mrf.mxu0
  %v1154 = vpop.f32.mrf.mxu0
  %v1155 = vadd.f32 0.0, %v1154
  %v1156 = vpop.f32.mrf.mxu0
  %1157 = vmatprep.mubr.bf16.mxu0 %v986
  %1158 = vmatmul.mubr.bf16.gmra.mxu0 %v897
  %v1159 = vpop.f32.mrf.mxu0
  %v1160 = vadd.f32 0.0, %v1159
  %v1161 = vpop.f32.mrf.mxu0
  %v1162 = vpop.f32.mrf.mxu0
  %v1163 = vadd.f32 0.0, %v1162
  %v1164 = vpop.f32.mrf.mxu0
  %1165 = vmatprep.mubr.bf16.mxu0 %v989
  %1166 = vmatmul.mubr.bf16.gmra.mxu0 %v899
  %v1167 = vpop.f32.mrf.mxu0
  %v1168 = vadd.f32 0.0, %v1167
  %v1169 = vpop.f32.mrf.mxu0
  %v1170 = vpop.f32.mrf.mxu0
  %v1171 = vadd.f32 0.0, %v1170
  %v1172 = vpop.f32.mrf.mxu0
  %1173 = vmatprep.mubr.bf16.mxu0 %v992
  %1174 = vmatmul.mubr.bf16.gmra.mxu0 %v901
  %v1175 = vpop.f32.mrf.mxu0
  %v1176 = vadd.f32 0.0, %v1175
  %v1177 = vpop.f32.mrf.mxu0
  %v1178 = vpop.f32.mrf.mxu0
  %v1179 = vadd.f32 0.0, %v1178
  %v1180 = vpop.f32.mrf.mxu0
  %1181 = vmatprep.mubr.bf16.mxu0 %v995
  %1182 = vmatmul.mubr.bf16.gmra.mxu0 %v903
  %v1183 = vpop.f32.mrf.mxu0
  %v1184 = vadd.f32 0.0, %v1183
  %v1185 = vpop.f32.mrf.mxu0
  %v1186 = vpop.f32.mrf.mxu0
  %v1187 = vadd.f32 0.0, %v1186
  %v1188 = vpop.f32.mrf.mxu0
  %1189 = vmatprep.mubr.bf16.mxu0 %v998
  %1190 = vmatmul.mubr.bf16.gmra.mxu0 %v905
  %v1191 = vpop.f32.mrf.mxu0
  %v1192 = vadd.f32 0.0, %v1191
  %v1193 = vpop.f32.mrf.mxu0
  %v1194 = vpop.f32.mrf.mxu0
  %v1195 = vadd.f32 0.0, %v1194
  %v1196 = vpop.f32.mrf.mxu0
  %1197 = vmatprep.mubr.bf16.mxu0 %v1001
  %1198 = vmatmul.mubr.bf16.gmra.mxu0 %v907
  %v1199 = vpop.f32.mrf.mxu0
  %v1200 = vadd.f32 0.0, %v1199
  %v1201 = vpop.f32.mrf.mxu0
  %v1202 = vpop.f32.mrf.mxu0
  %v1203 = vadd.f32 0.0, %v1202
  %v1204 = vpop.f32.mrf.mxu0
  %1205 = vmatprep.mubr.bf16.mxu0 %v1004
  %1206 = vmatmul.mubr.bf16.gmra.mxu0 %v909
  %v1207 = vpop.f32.mrf.mxu0
  %v1208 = vadd.f32 0.0, %v1207
  %v1209 = vpop.f32.mrf.mxu0
  %v1210 = vpop.f32.mrf.mxu0
  %v1211 = vadd.f32 0.0, %v1210
  %v1212 = vpop.f32.mrf.mxu0
  %1213 = vmatprep.mubr.bf16.mxu0 %v1007
  %1214 = vmatmul.mubr.bf16.gmra.mxu0 %v911
  %v1215 = vpop.f32.mrf.mxu0
  %v1216 = vadd.f32 0.0, %v1215
  %v1217 = vpop.f32.mrf.mxu0
  %v1218 = vpop.f32.mrf.mxu0
  %v1219 = vadd.f32 0.0, %v1218
  %v1220 = vpop.f32.mrf.mxu0
  %1221 = vmatprep.mubr.bf16.mxu0 %v1010
  %1222 = vmatmul.mubr.bf16.gmra.mxu0 %v913
  %v1223 = vpop.f32.mrf.mxu0
  %v1224 = vadd.f32 0.0, %v1223
  %v1225 = vpop.f32.mrf.mxu0
  %v1226 = vpop.f32.mrf.mxu0
  %v1227 = vadd.f32 0.0, %v1226
  %v1228 = vpop.f32.mrf.mxu0
  %1229 = vmatprep.mubr.bf16.mxu0 %v1013
  %1230 = vmatmul.mubr.bf16.gmra.mxu0 %v915
  %v1231 = vpop.f32.mrf.mxu0
  %v1232 = vadd.f32 0.0, %v1231
  %v1233 = vpop.f32.mrf.mxu0
  %v1234 = vpop.f32.mrf.mxu0
  %v1235 = vadd.f32 0.0, %v1234
  %v1236 = vpop.f32.mrf.mxu0
  %1237 = vmatprep.mubr.bf16.mxu0 %v1016
  %1238 = vmatmul.mubr.bf16.gmra.mxu0 %v917
  %v1239 = vpop.f32.mrf.mxu0
  %v1240 = vadd.f32 0.0, %v1239
  %v1241 = vpop.f32.mrf.mxu0
  %v1242 = vpop.f32.mrf.mxu0
  %v1243 = vadd.f32 0.0, %v1242
  %v1244 = vpop.f32.mrf.mxu0
  %1245 = vmatprep.mubr.bf16.mxu0 %v1019
  %1246 = vmatmul.mubr.bf16.gmra.mxu0 %v919
  %v1247 = vpop.f32.mrf.mxu0
  %v1248 = vadd.f32 0.0, %v1247
  %v1249 = vpop.f32.mrf.mxu0
  %v1250 = vpop.f32.mrf.mxu0
  %v1251 = vpop.f32.mrf.mxu0
  %1252 = vdwg.mxu0
  %v1253 = vmax.f32 %v478, %v1056
  %v1254 = vmax.f32 %v481, %v1059
  %v1255 = vmax.f32 %v486, %v1064
  %v1256 = vmax.f32 %v489, %v1067
  %v1257 = vmax.f32 %v494, %v1072
  %v1258 = vmax.f32 %v497, %v1075
  %v1259 = vmax.f32 %v502, %v1080
  %v1260 = vmax.f32 %v505, %v1083
  %v1261 = vmax.f32 %v510, %v1088
  %v1262 = vmax.f32 %v513, %v1091
  %v1263 = vmax.f32 %v518, %v1096
  %v1264 = vmax.f32 %v521, %v1099
  %v1265 = vmax.f32 %v526, %v1104
  %v1266 = vmax.f32 %v529, %v1107
  %v1267 = vmax.f32 %v534, %v1112
  %v1268 = vmax.f32 %v537, %v1115
  %v1269 = vmax.f32 %v542, %v1120
  %v1270 = vmax.f32 %v545, %v1123
  %v1271 = vmax.f32 %v550, %v1128
  %v1272 = vmax.f32 %v553, %v1131
  %v1273 = vmax.f32 %v558, %v1136
  %v1274 = vmax.f32 %v561, %v1139
  %v1275 = vmax.f32 %v566, %v1144
  %v1276 = vmax.f32 %v569, %v1147
  %v1277 = vmax.f32 %v574, %v1152
  %v1278 = vmax.f32 %v577, %v1155
  %v1279 = vmax.f32 %v582, %v1160
  %v1280 = vmax.f32 %v585, %v1163
  %v1281 = vmax.f32 %v590, %v1168
  %v1282 = vmax.f32 %v593, %v1171
  %v1283 = vmax.f32 %v598, %v1176
  %v1284 = vmax.f32 %v601, %v1179
  %v1285 = vmax.f32 %v606, %v1184
  %v1286 = vmax.f32 %v609, %v1187
  %v1287 = vmax.f32 %v614, %v1192
  %v1288 = vmax.f32 %v617, %v1195
  %v1289 = vmax.f32 %v622, %v1200
  %v1290 = vmax.f32 %v625, %v1203
  %v1291 = vmax.f32 %v630, %v1208
  %v1292 = vmax.f32 %v633, %v1211
  %v1293 = vmax.f32 %v638, %v1216
  %v1294 = vmax.f32 %v641, %v1219
  %v1295 = vmax.f32 %v646, %v1224
  %v1296 = vmax.f32 %v649, %v1227
  %v1297 = vmax.f32 %v654, %v1232
  %v1298 = vmax.f32 %v657, %v1235
  %v1299 = vmax.f32 %v662, %v1240
  %v1300 = vmax.f32 %v665, %v1243
  %v1301 = vmax.f32 %v670, %v1248
  %v1302 = vld [vmem:[%s2] sm:$0xff]
  %v1303 = vld [vmem:[%s2 + $0x8] sm:$0xff]
  %v1304 = vld [vmem:[%s2 + $0x10] sm:$0xff]
  %v1305 = vld [vmem:[%s2 + $0x18] sm:$0xff]
  %v1306 = vld [vmem:[%s2 + $0x20] sm:$0xff]
  %v1307 = vld [vmem:[%s2 + $0x28] sm:$0xff]
  %v1308 = vld [vmem:[%s2 + $0x30] sm:$0xff]
  %v1309 = vld [vmem:[%s2 + $0x38] sm:$0xff]
  %v1310 = vld [vmem:[%s2 + $0x40] sm:$0xff]
  %v1311 = vld [vmem:[%s2 + $0x48] sm:$0xff]
  %v1312 = vld [vmem:[%s2 + $0x50] sm:$0xff]
  %v1313 = vld [vmem:[%s2 + $0x58] sm:$0xff]
  %v1314 = vld [vmem:[%s2 + $0x60] sm:$0xff]
  %v1315 = vld [vmem:[%s2 + $0x68] sm:$0xff]
  %v1316 = vld [vmem:[%s2 + $0x70] sm:$0xff]
  %v1317 = vld [vmem:[%s2 + $0x78] sm:$0xff]
  %v1318 = vld [vmem:[%s2 + $0x80] sm:$0xff]
  %v1319 = vld [vmem:[%s2 + $0x88] sm:$0xff]
  %v1320 = vld [vmem:[%s2 + $0x90] sm:$0xff]
  %v1321 = vld [vmem:[%s2 + $0x98] sm:$0xff]
  %v1322 = vld [vmem:[%s2 + $0xa0] sm:$0xff]
  %v1323 = vld [vmem:[%s2 + $0xa8] sm:$0xff]
  %v1324 = vld [vmem:[%s2 + $0xb0] sm:$0xff]
  %v1325 = vld [vmem:[%s2 + $0xb8] sm:$0xff]
  %v1326 = vld [vmem:[%s2 + $0xc0] sm:$0xff]
  %v1327 = vld [vmem:[%s2 + $0xc8] sm:$0xff]
  %v1328 = vld [vmem:[%s2 + $0xd0] sm:$0xff]
  %v1329 = vld [vmem:[%s2 + $0xd8] sm:$0xff]
  %v1330 = vld [vmem:[%s2 + $0xe0] sm:$0xff]
  %v1331 = vld [vmem:[%s2 + $0xe8] sm:$0xff]
  %v1332 = vld [vmem:[%s2 + $0xf0] sm:$0xff]
  %v1333 = vld [vmem:[%s2 + $0xf8] sm:$0xff]
  %v1334 = vld [vmem:[%s2 + $0x100] sm:$0xff]
  %v1335 = vld [vmem:[%s2 + $0x108] sm:$0xff]
  %v1336 = vld [vmem:[%s2 + $0x110] sm:$0xff]
  %v1337 = vld [vmem:[%s2 + $0x118] sm:$0xff]
  %v1338 = vld [vmem:[%s2 + $0x120] sm:$0xff]
  %v1339 = vld [vmem:[%s2 + $0x128] sm:$0xff]
  %v1340 = vld [vmem:[%s2 + $0x130] sm:$0xff]
  %v1341 = vld [vmem:[%s2 + $0x138] sm:$0xff]
  %v1342 = vld [vmem:[%s2 + $0x140] sm:$0xff]
  %v1343 = vld [vmem:[%s2 + $0x148] sm:$0xff]
  %v1344 = vld [vmem:[%s2 + $0x150] sm:$0xff]
  %v1345 = vld [vmem:[%s2 + $0x158] sm:$0xff]
  %v1346 = vld [vmem:[%s2 + $0x160] sm:$0xff]
  %v1347 = vld [vmem:[%s2 + $0x168] sm:$0xff]
  %v1348 = vld [vmem:[%s2 + $0x170] sm:$0xff]
  %v1349 = vld [vmem:[%s2 + $0x178] sm:$0xff]
  %v1350 = vld [vmem:[%s2 + $0x180] sm:$0xff]
  %v1400 = vunpack.c.l.b16 %v1302
  %v1401 = vunpack.c.h.b16 %v1302
  %v1402 = vunpack.c.l.b16 %v1303
  %v1403 = vunpack.c.h.b16 %v1303
  %v1404 = vunpack.c.l.b16 %v1304
  %v1405 = vunpack.c.h.b16 %v1304
  %v1406 = vunpack.c.l.b16 %v1305
  %v1407 = vunpack.c.h.b16 %v1305
  %v1408 = vunpack.c.l.b16 %v1306
  %v1409 = vunpack.c.h.b16 %v1306
  %v1410 = vunpack.c.l.b16 %v1307
  %v1411 = vunpack.c.h.b16 %v1307
  %v1412 = vunpack.c.l.b16 %v1308
  %v1413 = vunpack.c.h.b16 %v1308
  %v1414 = vunpack.c.l.b16 %v1309
  %v1415 = vunpack.c.h.b16 %v1309
  %v1416 = vunpack.c.l.b16 %v1310
  %v1417 = vunpack.c.h.b16 %v1310
  %v1418 = vunpack.c.l.b16 %v1311
  %v1419 = vunpack.c.h.b16 %v1311
  %v1420 = vunpack.c.l.b16 %v1312
  %v1421 = vunpack.c.h.b16 %v1312
  %v1422 = vunpack.c.l.b16 %v1313
  %v1423 = vunpack.c.h.b16 %v1313
  %v1424 = vunpack.c.l.b16 %v1314
  %v1425 = vunpack.c.h.b16 %v1314
  %v1426 = vunpack.c.l.b16 %v1315
  %v1427 = vunpack.c.h.b16 %v1315
  %v1428 = vunpack.c.l.b16 %v1316
  %v1429 = vunpack.c.h.b16 %v1316
  %v1430 = vunpack.c.l.b16 %v1317
  %v1431 = vunpack.c.h.b16 %v1317
  %v1432 = vunpack.c.l.b16 %v1318
  %v1433 = vunpack.c.h.b16 %v1318
  %v1434 = vunpack.c.l.b16 %v1319
  %v1435 = vunpack.c.h.b16 %v1319
  %v1436 = vunpack.c.l.b16 %v1320
  %v1437 = vunpack.c.h.b16 %v1320
  %v1438 = vunpack.c.l.b16 %v1321
  %v1439 = vunpack.c.h.b16 %v1321
  %v1440 = vunpack.c.l.b16 %v1322
  %v1441 = vunpack.c.h.b16 %v1322
  %v1442 = vunpack.c.l.b16 %v1323
  %v1443 = vunpack.c.h.b16 %v1323
  %v1444 = vunpack.c.l.b16 %v1324
  %v1445 = vunpack.c.h.b16 %v1324
  %v1446 = vunpack.c.l.b16 %v1325
  %v1447 = vunpack.c.h.b16 %v1325
  %v1448 = vunpack.c.l.b16 %v1326
  %v1449 = vunpack.c.h.b16 %v1326
  %v1450 = vunpack.c.l.b16 %v1327
  %v1451 = vunpack.c.h.b16 %v1327
  %v1452 = vunpack.c.l.b16 %v1328
  %v1453 = vunpack.c.h.b16 %v1328
  %v1454 = vunpack.c.l.b16 %v1329
  %v1455 = vunpack.c.h.b16 %v1329
  %v1456 = vunpack.c.l.b16 %v1330
  %v1457 = vunpack.c.h.b16 %v1330
  %v1458 = vunpack.c.l.b16 %v1331
  %v1459 = vunpack.c.h.b16 %v1331
  %v1460 = vunpack.c.l.b16 %v1332
  %v1461 = vunpack.c.h.b16 %v1332
  %v1462 = vunpack.c.l.b16 %v1333
  %v1463 = vunpack.c.h.b16 %v1333
  %v1464 = vunpack.c.l.b16 %v1334
  %v1465 = vunpack.c.h.b16 %v1334
  %v1466 = vunpack.c.l.b16 %v1335
  %v1467 = vunpack.c.h.b16 %v1335
  %v1468 = vunpack.c.l.b16 %v1336
  %v1469 = vunpack.c.h.b16 %v1336
  %v1470 = vunpack.c.l.b16 %v1337
  %v1471 = vunpack.c.h.b16 %v1337
  %v1472 = vunpack.c.l.b16 %v1338
  %v1473 = vunpack.c.h.b16 %v1338
  %v1474 = vunpack.c.l.b16 %v1339
  %v1475 = vunpack.c.h.b16 %v1339
  %v1476 = vunpack.c.l.b16 %v1340
  %v1477 = vunpack.c.h.b16 %v1340
  %v1478 = vunpack.c.l.b16 %v1341
  %v1479 = vunpack.c.h.b16 %v1341
  %v1480 = vunpack.c.l.b16 %v1342
  %v1481 = vunpack.c.h.b16 %v1342
  %v1482 = vunpack.c.l.b16 %v1343
  %v1483 = vunpack.c.h.b16 %v1343
  %v1484 = vunpack.c.l.b16 %v1344
  %v1485 = vunpack.c.h.b16 %v1344
  %v1486 = vunpack.c.l.b16 %v1345
  %v1487 = vunpack.c.h.b16 %v1345
  %v1488 = vunpack.c.l.b16 %v1346
  %v1489 = vunpack.c.h.b16 %v1346
  %v1490 = vunpack.c.l.b16 %v1347
  %v1491 = vunpack.c.h.b16 %v1347
  %v1492 = vunpack.c.l.b16 %v1348
  %v1493 = vunpack.c.h.b16 %v1348
  %v1494 = vunpack.c.l.b16 %v1349
  %v1495 = vunpack.c.h.b16 %v1349
  %v1496 = vunpack.c.l.b16 %v1350
  %v1497 = vunpack.c.h.b16 %v1350
  %v1498 = vpack.c.b16 %v1402, %v1400
  %v1499 = vpack.c.b16 %v1403, %v1401
  %v1500 = vpack.c.b16 %v1406, %v1404
  %v1501 = vpack.c.b16 %v1407, %v1405
  %v1502 = vpack.c.b16 %v1410, %v1408
  %v1503 = vpack.c.b16 %v1411, %v1409
  %v1504 = vpack.c.b16 %v1414, %v1412
  %v1505 = vpack.c.b16 %v1415, %v1413
  %v1506 = vpack.c.b16 %v1418, %v1416
  %v1507 = vpack.c.b16 %v1419, %v1417
  %v1508 = vpack.c.b16 %v1422, %v1420
  %v1509 = vpack.c.b16 %v1423, %v1421
  %v1510 = vpack.c.b16 %v1426, %v1424
  %v1511 = vpack.c.b16 %v1427, %v1425
  %v1512 = vpack.c.b16 %v1430, %v1428
  %v1513 = vpack.c.b16 %v1431, %v1429
  %v1514 = vpack.c.b16 %v1434, %v1432
  %v1515 = vpack.c.b16 %v1435, %v1433
  %v1516 = vpack.c.b16 %v1438, %v1436
  %v1517 = vpack.c.b16 %v1439, %v1437
  %v1518 = vpack.c.b16 %v1442, %v1440
  %v1519 = vpack.c.b16 %v1443, %v1441
  %v1520 = vpack.c.b16 %v1446, %v1444
  %v1521 = vpack.c.b16 %v1447, %v1445
  %v1522 = vpack.c.b16 %v1450, %v1448
  %v1523 = vpack.c.b16 %v1451, %v1449
  %v1524 = vpack.c.b16 %v1454, %v1452
  %v1525 = vpack.c.b16 %v1455, %v1453
  %v1526 = vpack.c.b16 %v1458, %v1456
  %v1527 = vpack.c.b16 %v1459, %v1457
  %v1528 = vpack.c.b16 %v1462, %v1460
  %v1529 = vpack.c.b16 %v1463, %v1461
  %v1530 = vpack.c.b16 %v1466, %v1464
  %v1531 = vpack.c.b16 %v1467, %v1465
  %v1532 = vpack.c.b16 %v1470, %v1468
  %v1533 = vpack.c.b16 %v1471, %v1469
  %v1534 = vpack.c.b16 %v1474, %v1472
  %v1535 = vpack.c.b16 %v1475, %v1473
  %v1536 = vpack.c.b16 %v1478, %v1476
  %v1537 = vpack.c.b16 %v1479, %v1477
  %v1538 = vpack.c.b16 %v1482, %v1480
  %v1539 = vpack.c.b16 %v1483, %v1481
  %v1540 = vpack.c.b16 %v1486, %v1484
  %v1541 = vpack.c.b16 %v1487, %v1485
  %v1542 = vpack.c.b16 %v1490, %v1488
  %v1543 = vpack.c.b16 %v1491, %v1489
  %v1544 = vpack.c.b16 %v1494, %v1492
  %v1545 = vpack.c.b16 %v1495, %v1493
  %v1546 = vpack.c.b16 %v1496, %v1496
  %v1547 = vpack.c.b16 %v1497, %v1497
  %v1574 = vsel %vm367, %v1499, 0
  %v1577 = vsel %vm367, %v1501, 0
  %v1580 = vsel %vm367, %v1503, 0
  %v1583 = vsel %vm367, %v1505, 0
  %v1586 = vsel %vm367, %v1507, 0
  %v1589 = vsel %vm367, %v1509, 0
  %v1592 = vsel %vm367, %v1511, 0
  %v1595 = vsel %vm367, %v1513, 0
  %v1598 = vsel %vm367, %v1515, 0
  %v1601 = vsel %vm367, %v1517, 0
  %v1604 = vsel %vm367, %v1519, 0
  %v1607 = vsel %vm367, %v1521, 0
  %v1610 = vsel %vm367, %v1523, 0
  %v1613 = vsel %vm367, %v1525, 0
  %v1616 = vsel %vm367, %v1527, 0
  %v1619 = vsel %vm367, %v1529, 0
  %v1622 = vsel %vm367, %v1531, 0
  %v1625 = vsel %vm367, %v1533, 0
  %v1628 = vsel %vm367, %v1535, 0
  %v1631 = vsel %vm367, %v1537, 0
  %v1634 = vsel %vm367, %v1539, 0
  %v1637 = vsel %vm367, %v1541, 0
  %v1640 = vsel %vm367, %v1543, 0
  %v1643 = vsel %vm367, %v1545, 0
  %v1646 = vsel %vm367, %v1547, 0
  %1648 = vmatprep.subr.bf16.mxu0 0
  %1649 = vmatpush1.bf16.msra.mxu0 %v356
  %1650 = vmatprep.subr.bf16.mxu0 0
  %1651 = vmatpush1.bf16.msra.mxu0 %v355
  %1652 = vmatprep.subr.bf16.mxu0 0
  %1653 = vmatpush1.bf16.msra.mxu0 %v354
  %1654 = vmatprep.subr.bf16.mxu0 0
  %1655 = vmatpush1.bf16.msra.mxu0 %v353
  %1656 = vmatprep.subr.bf16.mxu0 0
  %1657 = vmatpush1.bf16.msra.mxu0 %v352
  %1658 = vmatprep.subr.bf16.mxu0 0
  %1659 = vmatpush1.bf16.msra.mxu0 %v351
  %1660 = vmatprep.subr.bf16.mxu0 0
  %1661 = vmatpush1.bf16.msra.mxu0 %v350
  %1662 = vmatprep.subr.bf16.mxu0 0
  %1663 = vmatpush1.bf16.msra.mxu0 %v349
  %1664 = vmatprep.subr.bf16.mxu0 0
  %1665 = vmatpush2.bf16.msra.mxu0 0
  %1666 = vmatprep.subr.bf16.mxu0 0
  %1667 = vmatpush2.bf16.msra.mxu0 0
  %1668 = vmatprep.subr.bf16.mxu0 0
  %1669 = vmatpush2.bf16.msra.mxu0 0
  %1670 = vmatprep.subr.bf16.mxu0 0
  %1671 = vmatpush2.bf16.msra.mxu0 0
  %1672 = vmatprep.subr.bf16.mxu0 0
  %1673 = vmatpush2.bf16.msra.mxu0 0
  %1674 = vmatprep.subr.bf16.mxu0 0
  %1675 = vmatpush2.bf16.msra.mxu0 0
  %1676 = vmatprep.subr.bf16.mxu0 0
  %1677 = vmatpush2.bf16.msra.mxu0 0
  %1678 = vmatprep.subr.bf16.mxu0 0
  %1679 = vmatpush2.bf16.msra.mxu0 %v357
  %1680 = vmatprep.mubr.bf16.mxu0 %v1574
  %1681 = vmatmul.mubr.bf16.gmra.mxu0 %v1498
  %v1682 = vpop.f32.mrf.mxu0
  %v1683 = vadd.f32 0.0, %v1682
  %v1684 = vpop.f32.mrf.mxu0
  %v1685 = vpop.f32.mrf.mxu0
  %v1686 = vadd.f32 0.0, %v1685
  %v1687 = vpop.f32.mrf.mxu0
  %1688 = vmatprep.mubr.bf16.mxu0 %v1577
  %1689 = vmatmul.mubr.bf16.gmra.mxu0 %v1500
  %v1690 = vpop.f32.mrf.mxu0
  %v1691 = vadd.f32 0.0, %v1690
  %v1692 = vpop.f32.mrf.mxu0
  %v1693 = vpop.f32.mrf.mxu0
  %v1694 = vadd.f32 0.0, %v1693
  %v1695 = vpop.f32.mrf.mxu0
  %1696 = vmatprep.mubr.bf16.mxu0 %v1580
  %1697 = vmatmul.mubr.bf16.gmra.mxu0 %v1502
  %v1698 = vpop.f32.mrf.mxu0
  %v1699 = vadd.f32 0.0, %v1698
  %v1700 = vpop.f32.mrf.mxu0
  %v1701 = vpop.f32.mrf.mxu0
  %v1702 = vadd.f32 0.0, %v1701
  %v1703 = vpop.f32.mrf.mxu0
  %1704 = vmatprep.mubr.bf16.mxu0 %v1583
  %1705 = vmatmul.mubr.bf16.gmra.mxu0 %v1504
  %v1706 = vpop.f32.mrf.mxu0
  %v1707 = vadd.f32 0.0, %v1706
  %v1708 = vpop.f32.mrf.mxu0
  %v1709 = vpop.f32.mrf.mxu0
  %v1710 = vadd.f32 0.0, %v1709
  %v1711 = vpop.f32.mrf.mxu0
  %1712 = vmatprep.mubr.bf16.mxu0 %v1586
  %1713 = vmatmul.mubr.bf16.gmra.mxu0 %v1506
  %v1714 = vpop.f32.mrf.mxu0
  %v1715 = vadd.f32 0.0, %v1714
  %v1716 = vpop.f32.mrf.mxu0
  %v1717 = vpop.f32.mrf.mxu0
  %v1718 = vadd.f32 0.0, %v1717
  %v1719 = vpop.f32.mrf.mxu0
  %1720 = vmatprep.mubr.bf16.mxu0 %v1589
  %1721 = vmatmul.mubr.bf16.gmra.mxu0 %v1508
  %v1722 = vpop.f32.mrf.mxu0
  %v1723 = vadd.f32 0.0, %v1722
  %v1724 = vpop.f32.mrf.mxu0
  %v1725 = vpop.f32.mrf.mxu0
  %v1726 = vadd.f32 0.0, %v1725
  %v1727 = vpop.f32.mrf.mxu0
  %1728 = vmatprep.mubr.bf16.mxu0 %v1592
  %1729 = vmatmul.mubr.bf16.gmra.mxu0 %v1510
  %v1730 = vpop.f32.mrf.mxu0
  %v1731 = vadd.f32 0.0, %v1730
  %v1732 = vpop.f32.mrf.mxu0
  %v1733 = vpop.f32.mrf.mxu0
  %v1734 = vadd.f32 0.0, %v1733
  %v1735 = vpop.f32.mrf.mxu0
  %1736 = vmatprep.mubr.bf16.mxu0 %v1595
  %1737 = vmatmul.mubr.bf16.gmra.mxu0 %v1512
  %v1738 = vpop.f32.mrf.mxu0
  %v1739 = vadd.f32 0.0, %v1738
  %v1740 = vpop.f32.mrf.mxu0
  %v1741 = vpop.f32.mrf.mxu0
  %v1742 = vadd.f32 0.0, %v1741
  %v1743 = vpop.f32.mrf.mxu0
  %1744 = vmatprep.mubr.bf16.mxu0 %v1598
  %1745 = vmatmul.mubr.bf16.gmra.mxu0 %v1514
  %v1746 = vpop.f32.mrf.mxu0
  %v1747 = vadd.f32 0.0, %v1746
  %v1748 = vpop.f32.mrf.mxu0
  %v1749 = vpop.f32.mrf.mxu0
  %v1750 = vadd.f32 0.0, %v1749
  %v1751 = vpop.f32.mrf.mxu0
  %1752 = vmatprep.mubr.bf16.mxu0 %v1601
  %1753 = vmatmul.mubr.bf16.gmra.mxu0 %v1516
  %v1754 = vpop.f32.mrf.mxu0
  %v1755 = vadd.f32 0.0, %v1754
  %v1756 = vpop.f32.mrf.mxu0
  %v1757 = vpop.f32.mrf.mxu0
  %v1758 = vadd.f32 0.0, %v1757
  %v1759 = vpop.f32.mrf.mxu0
  %1760 = vmatprep.mubr.bf16.mxu0 %v1604
  %1761 = vmatmul.mubr.bf16.gmra.mxu0 %v1518
  %v1762 = vpop.f32.mrf.mxu0
  %v1763 = vadd.f32 0.0, %v1762
  %v1764 = vpop.f32.mrf.mxu0
  %v1765 = vpop.f32.mrf.mxu0
  %v1766 = vadd.f32 0.0, %v1765
  %v1767 = vpop.f32.mrf.mxu0
  %1768 = vmatprep.mubr.bf16.mxu0 %v1607
  %1769 = vmatmul.mubr.bf16.gmra.mxu0 %v1520
  %v1770 = vpop.f32.mrf.mxu0
  %v1771 = vadd.f32 0.0, %v1770
  %v1772 = vpop.f32.mrf.mxu0
  %v1773 = vpop.f32.mrf.mxu0
  %v1774 = vadd.f32 0.0, %v1773
  %v1775 = vpop.f32.mrf.mxu0
  %1776 = vmatprep.mubr.bf16.mxu0 %v1610
  %1777 = vmatmul.mubr.bf16.gmra.mxu0 %v1522
  %v1778 = vpop.f32.mrf.mxu0
  %v1779 = vadd.f32 0.0, %v1778
  %v1780 = vpop.f32.mrf.mxu0
  %v1781 = vpop.f32.mrf.mxu0
  %v1782 = vadd.f32 0.0, %v1781
  %v1783 = vpop.f32.mrf.mxu0
  %1784 = vmatprep.mubr.bf16.mxu0 %v1613
  %1785 = vmatmul.mubr.bf16.gmra.mxu0 %v1524
  %v1786 = vpop.f32.mrf.mxu0
  %v1787 = vadd.f32 0.0, %v1786
  %v1788 = vpop.f32.mrf.mxu0
  %v1789 = vpop.f32.mrf.mxu0
  %v1790 = vadd.f32 0.0, %v1789
  %v1791 = vpop.f32.mrf.mxu0
  %1792 = vmatprep.mubr.bf16.mxu0 %v1616
  %1793 = vmatmul.mubr.bf16.gmra.mxu0 %v1526
  %v1794 = vpop.f32.mrf.mxu0
  %v1795 = vadd.f32 0.0, %v1794
  %v1796 = vpop.f32.mrf.mxu0
  %v1797 = vpop.f32.mrf.mxu0
  %v1798 = vadd.f32 0.0, %v1797
  %v1799 = vpop.f32.mrf.mxu0
  %1800 = vmatprep.mubr.bf16.mxu0 %v1619
  %1801 = vmatmul.mubr.bf16.gmra.mxu0 %v1528
  %v1802 = vpop.f32.mrf.mxu0
  %v1803 = vadd.f32 0.0, %v1802
  %v1804 = vpop.f32.mrf.mxu0
  %v1805 = vpop.f32.mrf.mxu0
  %v1806 = vadd.f32 0.0, %v1805
  %v1807 = vpop.f32.mrf.mxu0
  %1808 = vmatprep.mubr.bf16.mxu0 %v1622
  %1809 = vmatmul.mubr.bf16.gmra.mxu0 %v1530
  %v1810 = vpop.f32.mrf.mxu0
  %v1811 = vadd.f32 0.0, %v1810
  %v1812 = vpop.f32.mrf.mxu0
  %v1813 = vpop.f32.mrf.mxu0
  %v1814 = vadd.f32 0.0, %v1813
  %v1815 = vpop.f32.mrf.mxu0
  %1816 = vmatprep.mubr.bf16.mxu0 %v1625
  %1817 = vmatmul.mubr.bf16.gmra.mxu0 %v1532
  %v1818 = vpop.f32.mrf.mxu0
  %v1819 = vadd.f32 0.0, %v1818
  %v1820 = vpop.f32.mrf.mxu0
  %v1821 = vpop.f32.mrf.mxu0
  %v1822 = vadd.f32 0.0, %v1821
  %v1823 = vpop.f32.mrf.mxu0
  %1824 = vmatprep.mubr.bf16.mxu0 %v1628
  %1825 = vmatmul.mubr.bf16.gmra.mxu0 %v1534
  %v1826 = vpop.f32.mrf.mxu0
  %v1827 = vadd.f32 0.0, %v1826
  %v1828 = vpop.f32.mrf.mxu0
  %v1829 = vpop.f32.mrf.mxu0
  %v1830 = vadd.f32 0.0, %v1829
  %v1831 = vpop.f32.mrf.mxu0
  %1832 = vmatprep.mubr.bf16.mxu0 %v1631
  %1833 = vmatmul.mubr.bf16.gmra.mxu0 %v1536
  %v1834 = vpop.f32.mrf.mxu0
  %v1835 = vadd.f32 0.0, %v1834
  %v1836 = vpop.f32.mrf.mxu0
  %v1837 = vpop.f32.mrf.mxu0
  %v1838 = vadd.f32 0.0, %v1837
  %v1839 = vpop.f32.mrf.mxu0
  %1840 = vmatprep.mubr.bf16.mxu0 %v1634
  %1841 = vmatmul.mubr.bf16.gmra.mxu0 %v1538
  %v1842 = vpop.f32.mrf.mxu0
  %v1843 = vadd.f32 0.0, %v1842
  %v1844 = vpop.f32.mrf.mxu0
  %v1845 = vpop.f32.mrf.mxu0
  %v1846 = vadd.f32 0.0, %v1845
  %v1847 = vpop.f32.mrf.mxu0
  %1848 = vmatprep.mubr.bf16.mxu0 %v1637
  %1849 = vmatmul.mubr.bf16.gmra.mxu0 %v1540
  %v1850 = vpop.f32.mrf.mxu0
  %v1851 = vadd.f32 0.0, %v1850
  %v1852 = vpop.f32.mrf.mxu0
  %v1853 = vpop.f32.mrf.mxu0
  %v1854 = vadd.f32 0.0, %v1853
  %v1855 = vpop.f32.mrf.mxu0
  %1856 = vmatprep.mubr.bf16.mxu0 %v1640
  %1857 = vmatmul.mubr.bf16.gmra.mxu0 %v1542
  %v1858 = vpop.f32.mrf.mxu0
  %v1859 = vadd.f32 0.0, %v1858
  %v1860 = vpop.f32.mrf.mxu0
  %v1861 = vpop.f32.mrf.mxu0
  %v1862 = vadd.f32 0.0, %v1861
  %v1863 = vpop.f32.mrf.mxu0
  %1864 = vmatprep.mubr.bf16.mxu0 %v1643
  %1865 = vmatmul.mubr.bf16.gmra.mxu0 %v1544
  %v1866 = vpop.f32.mrf.mxu0
  %v1867 = vadd.f32 0.0, %v1866
  %v1868 = vpop.f32.mrf.mxu0
  %v1869 = vpop.f32.mrf.mxu0
  %v1870 = vadd.f32 0.0, %v1869
  %v1871 = vpop.f32.mrf.mxu0
  %1872 = vmatprep.mubr.bf16.mxu0 %v1646
  %1873 = vmatmul.mubr.bf16.gmra.mxu0 %v1546
  %v1874 = vpop.f32.mrf.mxu0
  %v1875 = vadd.f32 0.0, %v1874
  %v1876 = vpop.f32.mrf.mxu0
  %v1877 = vpop.f32.mrf.mxu0
  %v1878 = vpop.f32.mrf.mxu0
  %1879 = vdwg.mxu0
  %v1880 = vld [vmem:[%s3] sm:$0xff]
  %v1881 = vld [vmem:[%s3 + $0x8] sm:$0xff]
  %v1882 = vld [vmem:[%s3 + $0x10] sm:$0xff]
  %v1883 = vld [vmem:[%s3 + $0x18] sm:$0xff]
  %v1884 = vld [vmem:[%s3 + $0x20] sm:$0xff]
  %v1885 = vld [vmem:[%s3 + $0x28] sm:$0xff]
  %v1886 = vld [vmem:[%s3 + $0x30] sm:$0xff]
  %v1887 = vld [vmem:[%s3 + $0x38] sm:$0xff]
  %v1888 = vld [vmem:[%s3 + $0x40] sm:$0xff]
  %v1889 = vld [vmem:[%s3 + $0x48] sm:$0xff]
  %v1890 = vld [vmem:[%s3 + $0x50] sm:$0xff]
  %v1891 = vld [vmem:[%s3 + $0x58] sm:$0xff]
  %v1892 = vld [vmem:[%s3 + $0x60] sm:$0xff]
  %v1893 = vld [vmem:[%s3 + $0x68] sm:$0xff]
  %v1894 = vld [vmem:[%s3 + $0x70] sm:$0xff]
  %v1895 = vld [vmem:[%s3 + $0x78] sm:$0xff]
  %v1896 = vld [vmem:[%s3 + $0x80] sm:$0xff]
  %v1897 = vld [vmem:[%s3 + $0x88] sm:$0xff]
  %v1898 = vld [vmem:[%s3 + $0x90] sm:$0xff]
  %v1899 = vld [vmem:[%s3 + $0x98] sm:$0xff]
  %v1900 = vld [vmem:[%s3 + $0xa0] sm:$0xff]
  %v1901 = vld [vmem:[%s3 + $0xa8] sm:$0xff]
  %v1902 = vld [vmem:[%s3 + $0xb0] sm:$0xff]
  %v1903 = vld [vmem:[%s3 + $0xb8] sm:$0xff]
  %v1904 = vld [vmem:[%s3 + $0xc0] sm:$0xff]
  %v1905 = vld [vmem:[%s3 + $0xc8] sm:$0xff]
  %v1906 = vld [vmem:[%s3 + $0xd0] sm:$0xff]
  %v1907 = vld [vmem:[%s3 + $0xd8] sm:$0xff]
  %v1908 = vld [vmem:[%s3 + $0xe0] sm:$0xff]
  %v1909 = vld [vmem:[%s3 + $0xe8] sm:$0xff]
  %v1910 = vld [vmem:[%s3 + $0xf0] sm:$0xff]
  %v1911 = vld [vmem:[%s3 + $0xf8] sm:$0xff]
  %v1912 = vld [vmem:[%s3 + $0x100] sm:$0xff]
  %v1913 = vld [vmem:[%s3 + $0x108] sm:$0xff]
  %v1914 = vld [vmem:[%s3 + $0x110] sm:$0xff]
  %v1915 = vld [vmem:[%s3 + $0x118] sm:$0xff]
  %v1916 = vld [vmem:[%s3 + $0x120] sm:$0xff]
  %v1917 = vld [vmem:[%s3 + $0x128] sm:$0xff]
  %v1918 = vld [vmem:[%s3 + $0x130] sm:$0xff]
  %v1919 = vld [vmem:[%s3 + $0x138] sm:$0xff]
  %v1920 = vld [vmem:[%s3 + $0x140] sm:$0xff]
  %v1921 = vld [vmem:[%s3 + $0x148] sm:$0xff]
  %v1922 = vld [vmem:[%s3 + $0x150] sm:$0xff]
  %v1923 = vld [vmem:[%s3 + $0x158] sm:$0xff]
  %v1924 = vld [vmem:[%s3 + $0x160] sm:$0xff]
  %v1925 = vld [vmem:[%s3 + $0x168] sm:$0xff]
  %v1926 = vld [vmem:[%s3 + $0x170] sm:$0xff]
  %v1927 = vld [vmem:[%s3 + $0x178] sm:$0xff]
  %v1928 = vld [vmem:[%s3 + $0x180] sm:$0xff]
  %v1978 = vunpack.c.l.b16 %v1880
  %v1979 = vunpack.c.h.b16 %v1880
  %v1980 = vunpack.c.l.b16 %v1881
  %v1981 = vunpack.c.h.b16 %v1881
  %v1982 = vunpack.c.l.b16 %v1882
  %v1983 = vunpack.c.h.b16 %v1882
  %v1984 = vunpack.c.l.b16 %v1883
  %v1985 = vunpack.c.h.b16 %v1883
  %v1986 = vunpack.c.l.b16 %v1884
  %v1987 = vunpack.c.h.b16 %v1884
  %v1988 = vunpack.c.l.b16 %v1885
  %v1989 = vunpack.c.h.b16 %v1885
  %v1990 = vunpack.c.l.b16 %v1886
  %v1991 = vunpack.c.h.b16 %v1886
  %v1992 = vunpack.c.l.b16 %v1887
  %v1993 = vunpack.c.h.b16 %v1887
  %v1994 = vunpack.c.l.b16 %v1888
  %v1995 = vunpack.c.h.b16 %v1888
  %v1996 = vunpack.c.l.b16 %v1889
  %v1997 = vunpack.c.h.b16 %v1889
  %v1998 = vunpack.c.l.b16 %v1890
  %v1999 = vunpack.c.h.b16 %v1890
  %v2000 = vunpack.c.l.b16 %v1891
  %v2001 = vunpack.c.h.b16 %v1891
  %v2002 = vunpack.c.l.b16 %v1892
  %v2003 = vunpack.c.h.b16 %v1892
  %v2004 = vunpack.c.l.b16 %v1893
  %v2005 = vunpack.c.h.b16 %v1893
  %v2006 = vunpack.c.l.b16 %v1894
  %v2007 = vunpack.c.h.b16 %v1894
  %v2008 = vunpack.c.l.b16 %v1895
  %v2009 = vunpack.c.h.b16 %v1895
  %v2010 = vunpack.c.l.b16 %v1896
  %v2011 = vunpack.c.h.b16 %v1896
  %v2012 = vunpack.c.l.b16 %v1897
  %v2013 = vunpack.c.h.b16 %v1897
  %v2014 = vunpack.c.l.b16 %v1898
  %v2015 = vunpack.c.h.b16 %v1898
  %v2016 = vunpack.c.l.b16 %v1899
  %v2017 = vunpack.c.h.b16 %v1899
  %v2018 = vunpack.c.l.b16 %v1900
  %v2019 = vunpack.c.h.b16 %v1900
  %v2020 = vunpack.c.l.b16 %v1901
  %v2021 = vunpack.c.h.b16 %v1901
  %v2022 = vunpack.c.l.b16 %v1902
  %v2023 = vunpack.c.h.b16 %v1902
  %v2024 = vunpack.c.l.b16 %v1903
  %v2025 = vunpack.c.h.b16 %v1903
  %v2026 = vunpack.c.l.b16 %v1904
  %v2027 = vunpack.c.h.b16 %v1904
  %v2028 = vunpack.c.l.b16 %v1905
  %v2029 = vunpack.c.h.b16 %v1905
  %v2030 = vunpack.c.l.b16 %v1906
  %v2031 = vunpack.c.h.b16 %v1906
  %v2032 = vunpack.c.l.b16 %v1907
  %v2033 = vunpack.c.h.b16 %v1907
  %v2034 = vunpack.c.l.b16 %v1908
  %v2035 = vunpack.c.h.b16 %v1908
  %v2036 = vunpack.c.l.b16 %v1909
  %v2037 = vunpack.c.h.b16 %v1909
  %v2038 = vunpack.c.l.b16 %v1910
  %v2039 = vunpack.c.h.b16 %v1910
  %v2040 = vunpack.c.l.b16 %v1911
  %v2041 = vunpack.c.h.b16 %v1911
  %v2042 = vunpack.c.l.b16 %v1912
  %v2043 = vunpack.c.h.b16 %v1912
  %v2044 = vunpack.c.l.b16 %v1913
  %v2045 = vunpack.c.h.b16 %v1913
  %v2046 = vunpack.c.l.b16 %v1914
  %v2047 = vunpack.c.h.b16 %v1914
  %v2048 = vunpack.c.l.b16 %v1915
  %v2049 = vunpack.c.h.b16 %v1915
  %v2050 = vunpack.c.l.b16 %v1916
  %v2051 = vunpack.c.h.b16 %v1916
  %v2052 = vunpack.c.l.b16 %v1917
  %v2053 = vunpack.c.h.b16 %v1917
  %v2054 = vunpack.c.l.b16 %v1918
  %v2055 = vunpack.c.h.b16 %v1918
  %v2056 = vunpack.c.l.b16 %v1919
  %v2057 = vunpack.c.h.b16 %v1919
  %v2058 = vunpack.c.l.b16 %v1920
  %v2059 = vunpack.c.h.b16 %v1920
  %v2060 = vunpack.c.l.b16 %v1921
  %v2061 = vunpack.c.h.b16 %v1921
  %v2062 = vunpack.c.l.b16 %v1922
  %v2063 = vunpack.c.h.b16 %v1922
  %v2064 = vunpack.c.l.b16 %v1923
  %v2065 = vunpack.c.h.b16 %v1923
  %v2066 = vunpack.c.l.b16 %v1924
  %v2067 = vunpack.c.h.b16 %v1924
  %v2068 = vunpack.c.l.b16 %v1925
  %v2069 = vunpack.c.h.b16 %v1925
  %v2070 = vunpack.c.l.b16 %v1926
  %v2071 = vunpack.c.h.b16 %v1926
  %v2072 = vunpack.c.l.b16 %v1927
  %v2073 = vunpack.c.h.b16 %v1927
  %v2074 = vunpack.c.l.b16 %v1928
  %v2075 = vunpack.c.h.b16 %v1928
  %v2076 = vpack.c.b16 %v1980, %v1978
  %v2077 = vpack.c.b16 %v1981, %v1979
  %v2078 = vpack.c.b16 %v1984, %v1982
  %v2079 = vpack.c.b16 %v1985, %v1983
  %v2080 = vpack.c.b16 %v1988, %v1986
  %v2081 = vpack.c.b16 %v1989, %v1987
  %v2082 = vpack.c.b16 %v1992, %v1990
  %v2083 = vpack.c.b16 %v1993, %v1991
  %v2084 = vpack.c.b16 %v1996, %v1994
  %v2085 = vpack.c.b16 %v1997, %v1995
  %v2086 = vpack.c.b16 %v2000, %v1998
  %v2087 = vpack.c.b16 %v2001, %v1999
  %v2088 = vpack.c.b16 %v2004, %v2002
  %v2089 = vpack.c.b16 %v2005, %v2003
  %v2090 = vpack.c.b16 %v2008, %v2006
  %v2091 = vpack.c.b16 %v2009, %v2007
  %v2092 = vpack.c.b16 %v2012, %v2010
  %v2093 = vpack.c.b16 %v2013, %v2011
  %v2094 = vpack.c.b16 %v2016, %v2014
  %v2095 = vpack.c.b16 %v2017, %v2015
  %v2096 = vpack.c.b16 %v2020, %v2018
  %v2097 = vpack.c.b16 %v2021, %v2019
  %v2098 = vpack.c.b16 %v2024, %v2022
  %v2099 = vpack.c.b16 %v2025, %v2023
  %v2100 = vpack.c.b16 %v2028, %v2026
  %v2101 = vpack.c.b16 %v2029, %v2027
  %v2102 = vpack.c.b16 %v2032, %v2030
  %v2103 = vpack.c.b16 %v2033, %v2031
  %v2104 = vpack.c.b16 %v2036, %v2034
  %v2105 = vpack.c.b16 %v2037, %v2035
  %v2106 = vpack.c.b16 %v2040, %v2038
  %v2107 = vpack.c.b16 %v2041, %v2039
  %v2108 = vpack.c.b16 %v2044, %v2042
  %v2109 = vpack.c.b16 %v2045, %v2043
  %v2110 = vpack.c.b16 %v2048, %v2046
  %v2111 = vpack.c.b16 %v2049, %v2047
  %v2112 = vpack.c.b16 %v2052, %v2050
  %v2113 = vpack.c.b16 %v2053, %v2051
  %v2114 = vpack.c.b16 %v2056, %v2054
  %v2115 = vpack.c.b16 %v2057, %v2055
  %v2116 = vpack.c.b16 %v2060, %v2058
  %v2117 = vpack.c.b16 %v2061, %v2059
  %v2118 = vpack.c.b16 %v2064, %v2062
  %v2119 = vpack.c.b16 %v2065, %v2063
  %v2120 = vpack.c.b16 %v2068, %v2066
  %v2121 = vpack.c.b16 %v2069, %v2067
  %v2122 = vpack.c.b16 %v2072, %v2070
  %v2123 = vpack.c.b16 %v2073, %v2071
  %v2124 = vpack.c.b16 %v2074, %v2074
  %v2125 = vpack.c.b16 %v2075, %v2075
  %v2152 = vsel %vm367, %v2077, 0
  %v2155 = vsel %vm367, %v2079, 0
  %v2158 = vsel %vm367, %v2081, 0
  %v2161 = vsel %vm367, %v2083, 0
  %v2164 = vsel %vm367, %v2085, 0
  %v2167 = vsel %vm367, %v2087, 0
  %v2170 = vsel %vm367, %v2089, 0
  %v2173 = vsel %vm367, %v2091, 0
  %v2176 = vsel %vm367, %v2093, 0
  %v2179 = vsel %vm367, %v2095, 0
  %v2182 = vsel %vm367, %v2097, 0
  %v2185 = vsel %vm367, %v2099, 0
  %v2188 = vsel %vm367, %v2101, 0
  %v2191 = vsel %vm367, %v2103, 0
  %v2194 = vsel %vm367, %v2105, 0
  %v2197 = vsel %vm367, %v2107, 0
  %v2200 = vsel %vm367, %v2109, 0
  %v2203 = vsel %vm367, %v2111, 0
  %v2206 = vsel %vm367, %v2113, 0
  %v2209 = vsel %vm367, %v2115, 0
  %v2212 = vsel %vm367, %v2117, 0
  %v2215 = vsel %vm367, %v2119, 0
  %v2218 = vsel %vm367, %v2121, 0
  %v2221 = vsel %vm367, %v2123, 0
  %v2224 = vsel %vm367, %v2125, 0
  %2226 = vmatprep.subr.bf16.mxu0 0
  %2227 = vmatpush1.bf16.msra.mxu0 %v356
  %2228 = vmatprep.subr.bf16.mxu0 0
  %2229 = vmatpush1.bf16.msra.mxu0 %v355
  %2230 = vmatprep.subr.bf16.mxu0 0
  %2231 = vmatpush1.bf16.msra.mxu0 %v354
  %2232 = vmatprep.subr.bf16.mxu0 0
  %2233 = vmatpush1.bf16.msra.mxu0 %v353
  %2234 = vmatprep.subr.bf16.mxu0 0
  %2235 = vmatpush1.bf16.msra.mxu0 %v352
  %2236 = vmatprep.subr.bf16.mxu0 0
  %2237 = vmatpush1.bf16.msra.mxu0 %v351
  %2238 = vmatprep.subr.bf16.mxu0 0
  %2239 = vmatpush1.bf16.msra.mxu0 %v350
  %2240 = vmatprep.subr.bf16.mxu0 0
  %2241 = vmatpush1.bf16.msra.mxu0 %v349
  %2242 = vmatprep.subr.bf16.mxu0 0
  %2243 = vmatpush2.bf16.msra.mxu0 0
  %2244 = vmatprep.subr.bf16.mxu0 0
  %2245 = vmatpush2.bf16.msra.mxu0 0
  %2246 = vmatprep.subr.bf16.mxu0 0
  %2247 = vmatpush2.bf16.msra.mxu0 0
  %2248 = vmatprep.subr.bf16.mxu0 0
  %2249 = vmatpush2.bf16.msra.mxu0 0
  %2250 = vmatprep.subr.bf16.mxu0 0
  %2251 = vmatpush2.bf16.msra.mxu0 0
  %2252 = vmatprep.subr.bf16.mxu0 0
  %2253 = vmatpush2.bf16.msra.mxu0 0
  %2254 = vmatprep.subr.bf16.mxu0 0
  %2255 = vmatpush2.bf16.msra.mxu0 0
  %2256 = vmatprep.subr.bf16.mxu0 0
  %2257 = vmatpush2.bf16.msra.mxu0 %v357
  %2258 = vmatprep.mubr.bf16.mxu0 %v2152
  %2259 = vmatmul.mubr.bf16.gmra.mxu0 %v2076
  %v2260 = vpop.f32.mrf.mxu0
  %v2261 = vadd.f32 0.0, %v2260
  %v2262 = vpop.f32.mrf.mxu0
  %v2263 = vpop.f32.mrf.mxu0
  %v2264 = vadd.f32 0.0, %v2263
  %v2265 = vpop.f32.mrf.mxu0
  %2266 = vmatprep.mubr.bf16.mxu0 %v2155
  %2267 = vmatmul.mubr.bf16.gmra.mxu0 %v2078
  %v2268 = vpop.f32.mrf.mxu0
  %v2269 = vadd.f32 0.0, %v2268
  %v2270 = vpop.f32.mrf.mxu0
  %v2271 = vpop.f32.mrf.mxu0
  %v2272 = vadd.f32 0.0, %v2271
  %v2273 = vpop.f32.mrf.mxu0
  %2274 = vmatprep.mubr.bf16.mxu0 %v2158
  %2275 = vmatmul.mubr.bf16.gmra.mxu0 %v2080
  %v2276 = vpop.f32.mrf.mxu0
  %v2277 = vadd.f32 0.0, %v2276
  %v2278 = vpop.f32.mrf.mxu0
  %v2279 = vpop.f32.mrf.mxu0
  %v2280 = vadd.f32 0.0, %v2279
  %v2281 = vpop.f32.mrf.mxu0
  %2282 = vmatprep.mubr.bf16.mxu0 %v2161
  %2283 = vmatmul.mubr.bf16.gmra.mxu0 %v2082
  %v2284 = vpop.f32.mrf.mxu0
  %v2285 = vadd.f32 0.0, %v2284
  %v2286 = vpop.f32.mrf.mxu0
  %v2287 = vpop.f32.mrf.mxu0
  %v2288 = vadd.f32 0.0, %v2287
  %v2289 = vpop.f32.mrf.mxu0
  %2290 = vmatprep.mubr.bf16.mxu0 %v2164
  %2291 = vmatmul.mubr.bf16.gmra.mxu0 %v2084
  %v2292 = vpop.f32.mrf.mxu0
  %v2293 = vadd.f32 0.0, %v2292
  %v2294 = vpop.f32.mrf.mxu0
  %v2295 = vpop.f32.mrf.mxu0
  %v2296 = vadd.f32 0.0, %v2295
  %v2297 = vpop.f32.mrf.mxu0
  %2298 = vmatprep.mubr.bf16.mxu0 %v2167
  %2299 = vmatmul.mubr.bf16.gmra.mxu0 %v2086
  %v2300 = vpop.f32.mrf.mxu0
  %v2301 = vadd.f32 0.0, %v2300
  %v2302 = vpop.f32.mrf.mxu0
  %v2303 = vpop.f32.mrf.mxu0
  %v2304 = vadd.f32 0.0, %v2303
  %v2305 = vpop.f32.mrf.mxu0
  %2306 = vmatprep.mubr.bf16.mxu0 %v2170
  %2307 = vmatmul.mubr.bf16.gmra.mxu0 %v2088
  %v2308 = vpop.f32.mrf.mxu0
  %v2309 = vadd.f32 0.0, %v2308
  %v2310 = vpop.f32.mrf.mxu0
  %v2311 = vpop.f32.mrf.mxu0
  %v2312 = vadd.f32 0.0, %v2311
  %v2313 = vpop.f32.mrf.mxu0
  %2314 = vmatprep.mubr.bf16.mxu0 %v2173
  %2315 = vmatmul.mubr.bf16.gmra.mxu0 %v2090
  %v2316 = vpop.f32.mrf.mxu0
  %v2317 = vadd.f32 0.0, %v2316
  %v2318 = vpop.f32.mrf.mxu0
  %v2319 = vpop.f32.mrf.mxu0
  %v2320 = vadd.f32 0.0, %v2319
  %v2321 = vpop.f32.mrf.mxu0
  %2322 = vmatprep.mubr.bf16.mxu0 %v2176
  %2323 = vmatmul.mubr.bf16.gmra.mxu0 %v2092
  %v2324 = vpop.f32.mrf.mxu0
  %v2325 = vadd.f32 0.0, %v2324
  %v2326 = vpop.f32.mrf.mxu0
  %v2327 = vpop.f32.mrf.mxu0
  %v2328 = vadd.f32 0.0, %v2327
  %v2329 = vpop.f32.mrf.mxu0
  %2330 = vmatprep.mubr.bf16.mxu0 %v2179
  %2331 = vmatmul.mubr.bf16.gmra.mxu0 %v2094
  %v2332 = vpop.f32.mrf.mxu0
  %v2333 = vadd.f32 0.0, %v2332
  %v2334 = vpop.f32.mrf.mxu0
  %v2335 = vpop.f32.mrf.mxu0
  %v2336 = vadd.f32 0.0, %v2335
  %v2337 = vpop.f32.mrf.mxu0
  %2338 = vmatprep.mubr.bf16.mxu0 %v2182
  %2339 = vmatmul.mubr.bf16.gmra.mxu0 %v2096
  %v2340 = vpop.f32.mrf.mxu0
  %v2341 = vadd.f32 0.0, %v2340
  %v2342 = vpop.f32.mrf.mxu0
  %v2343 = vpop.f32.mrf.mxu0
  %v2344 = vadd.f32 0.0, %v2343
  %v2345 = vpop.f32.mrf.mxu0
  %2346 = vmatprep.mubr.bf16.mxu0 %v2185
  %2347 = vmatmul.mubr.bf16.gmra.mxu0 %v2098
  %v2348 = vpop.f32.mrf.mxu0
  %v2349 = vadd.f32 0.0, %v2348
  %v2350 = vpop.f32.mrf.mxu0
  %v2351 = vpop.f32.mrf.mxu0
  %v2352 = vadd.f32 0.0, %v2351
  %v2353 = vpop.f32.mrf.mxu0
  %2354 = vmatprep.mubr.bf16.mxu0 %v2188
  %2355 = vmatmul.mubr.bf16.gmra.mxu0 %v2100
  %v2356 = vpop.f32.mrf.mxu0
  %v2357 = vadd.f32 0.0, %v2356
  %v2358 = vpop.f32.mrf.mxu0
  %v2359 = vpop.f32.mrf.mxu0
  %v2360 = vadd.f32 0.0, %v2359
  %v2361 = vpop.f32.mrf.mxu0
  %2362 = vmatprep.mubr.bf16.mxu0 %v2191
  %2363 = vmatmul.mubr.bf16.gmra.mxu0 %v2102
  %v2364 = vpop.f32.mrf.mxu0
  %v2365 = vadd.f32 0.0, %v2364
  %v2366 = vpop.f32.mrf.mxu0
  %v2367 = vpop.f32.mrf.mxu0
  %v2368 = vadd.f32 0.0, %v2367
  %v2369 = vpop.f32.mrf.mxu0
  %2370 = vmatprep.mubr.bf16.mxu0 %v2194
  %2371 = vmatmul.mubr.bf16.gmra.mxu0 %v2104
  %v2372 = vpop.f32.mrf.mxu0
  %v2373 = vadd.f32 0.0, %v2372
  %v2374 = vpop.f32.mrf.mxu0
  %v2375 = vpop.f32.mrf.mxu0
  %v2376 = vadd.f32 0.0, %v2375
  %v2377 = vpop.f32.mrf.mxu0
  %2378 = vmatprep.mubr.bf16.mxu0 %v2197
  %2379 = vmatmul.mubr.bf16.gmra.mxu0 %v2106
  %v2380 = vpop.f32.mrf.mxu0
  %v2381 = vadd.f32 0.0, %v2380
  %v2382 = vpop.f32.mrf.mxu0
  %v2383 = vpop.f32.mrf.mxu0
  %v2384 = vadd.f32 0.0, %v2383
  %v2385 = vpop.f32.mrf.mxu0
  %2386 = vmatprep.mubr.bf16.mxu0 %v2200
  %2387 = vmatmul.mubr.bf16.gmra.mxu0 %v2108
  %v2388 = vpop.f32.mrf.mxu0
  %v2389 = vadd.f32 0.0, %v2388
  %v2390 = vpop.f32.mrf.mxu0
  %v2391 = vpop.f32.mrf.mxu0
  %v2392 = vadd.f32 0.0, %v2391
  %v2393 = vpop.f32.mrf.mxu0
  %2394 = vmatprep.mubr.bf16.mxu0 %v2203
  %2395 = vmatmul.mubr.bf16.gmra.mxu0 %v2110
  %v2396 = vpop.f32.mrf.mxu0
  %v2397 = vadd.f32 0.0, %v2396
  %v2398 = vpop.f32.mrf.mxu0
  %v2399 = vpop.f32.mrf.mxu0
  %v2400 = vadd.f32 0.0, %v2399
  %v2401 = vpop.f32.mrf.mxu0
  %2402 = vmatprep.mubr.bf16.mxu0 %v2206
  %2403 = vmatmul.mubr.bf16.gmra.mxu0 %v2112
  %v2404 = vpop.f32.mrf.mxu0
  %v2405 = vadd.f32 0.0, %v2404
  %v2406 = vpop.f32.mrf.mxu0
  %v2407 = vpop.f32.mrf.mxu0
  %v2408 = vadd.f32 0.0, %v2407
  %v2409 = vpop.f32.mrf.mxu0
  %2410 = vmatprep.mubr.bf16.mxu0 %v2209
  %2411 = vmatmul.mubr.bf16.gmra.mxu0 %v2114
  %v2412 = vpop.f32.mrf.mxu0
  %v2413 = vadd.f32 0.0, %v2412
  %v2414 = vpop.f32.mrf.mxu0
  %v2415 = vpop.f32.mrf.mxu0
  %v2416 = vadd.f32 0.0, %v2415
  %v2417 = vpop.f32.mrf.mxu0
  %2418 = vmatprep.mubr.bf16.mxu0 %v2212
  %2419 = vmatmul.mubr.bf16.gmra.mxu0 %v2116
  %v2420 = vpop.f32.mrf.mxu0
  %v2421 = vadd.f32 0.0, %v2420
  %v2422 = vpop.f32.mrf.mxu0
  %v2423 = vpop.f32.mrf.mxu0
  %v2424 = vadd.f32 0.0, %v2423
  %v2425 = vpop.f32.mrf.mxu0
  %2426 = vmatprep.mubr.bf16.mxu0 %v2215
  %2427 = vmatmul.mubr.bf16.gmra.mxu0 %v2118
  %v2428 = vpop.f32.mrf.mxu0
  %v2429 = vadd.f32 0.0, %v2428
  %v2430 = vpop.f32.mrf.mxu0
  %v2431 = vpop.f32.mrf.mxu0
  %v2432 = vadd.f32 0.0, %v2431
  %v2433 = vpop.f32.mrf.mxu0
  %2434 = vmatprep.mubr.bf16.mxu0 %v2218
  %2435 = vmatmul.mubr.bf16.gmra.mxu0 %v2120
  %v2436 = vpop.f32.mrf.mxu0
  %v2437 = vadd.f32 0.0, %v2436
  %v2438 = vpop.f32.mrf.mxu0
  %v2439 = vpop.f32.mrf.mxu0
  %v2440 = vadd.f32 0.0, %v2439
  %v2441 = vpop.f32.mrf.mxu0
  %2442 = vmatprep.mubr.bf16.mxu0 %v2221
  %2443 = vmatmul.mubr.bf16.gmra.mxu0 %v2122
  %v2444 = vpop.f32.mrf.mxu0
  %v2445 = vadd.f32 0.0, %v2444
  %v2446 = vpop.f32.mrf.mxu0
  %v2447 = vpop.f32.mrf.mxu0
  %v2448 = vadd.f32 0.0, %v2447
  %v2449 = vpop.f32.mrf.mxu0
  %2450 = vmatprep.mubr.bf16.mxu0 %v2224
  %2451 = vmatmul.mubr.bf16.gmra.mxu0 %v2124
  %v2452 = vpop.f32.mrf.mxu0
  %v2453 = vadd.f32 0.0, %v2452
  %v2454 = vpop.f32.mrf.mxu0
  %v2455 = vpop.f32.mrf.mxu0
  %v2456 = vpop.f32.mrf.mxu0
  %2457 = vdwg.mxu0
  %v2458 = vmax.f32 %v1683, %v2261
  %v2459 = vmax.f32 %v1686, %v2264
  %v2460 = vmax.f32 %v1691, %v2269
  %v2461 = vmax.f32 %v1694, %v2272
  %v2462 = vmax.f32 %v1699, %v2277
  %v2463 = vmax.f32 %v1702, %v2280
  %v2464 = vmax.f32 %v1707, %v2285
  %v2465 = vmax.f32 %v1710, %v2288
  %v2466 = vmax.f32 %v1715, %v2293
  %v2467 = vmax.f32 %v1718, %v2296
  %v2468 = vmax.f32 %v1723, %v2301
  %v2469 = vmax.f32 %v1726, %v2304
  %v2470 = vmax.f32 %v1731, %v2309
  %v2471 = vmax.f32 %v1734, %v2312
  %v2472 = vmax.f32 %v1739, %v2317
  %v2473 = vmax.f32 %v1742, %v2320
  %v2474 = vmax.f32 %v1747, %v2325
  %v2475 = vmax.f32 %v1750, %v2328
  %v2476 = vmax.f32 %v1755, %v2333
  %v2477 = vmax.f32 %v1758, %v2336
  %v2478 = vmax.f32 %v1763, %v2341
  %v2479 = vmax.f32 %v1766, %v2344
  %v2480 = vmax.f32 %v1771, %v2349
  %v2481 = vmax.f32 %v1774, %v2352
  %v2482 = vmax.f32 %v1779, %v2357
  %v2483 = vmax.f32 %v1782, %v2360
  %v2484 = vmax.f32 %v1787, %v2365
  %v2485 = vmax.f32 %v1790, %v2368
  %v2486 = vmax.f32 %v1795, %v2373
  %v2487 = vmax.f32 %v1798, %v2376
  %v2488 = vmax.f32 %v1803, %v2381
  %v2489 = vmax.f32 %v1806, %v2384
  %v2490 = vmax.f32 %v1811, %v2389
  %v2491 = vmax.f32 %v1814, %v2392
  %v2492 = vmax.f32 %v1819, %v2397
  %v2493 = vmax.f32 %v1822, %v2400
  %v2494 = vmax.f32 %v1827, %v2405
  %v2495 = vmax.f32 %v1830, %v2408
  %v2496 = vmax.f32 %v1835, %v2413
  %v2497 = vmax.f32 %v1838, %v2416
  %v2498 = vmax.f32 %v1843, %v2421
  %v2499 = vmax.f32 %v1846, %v2424
  %v2500 = vmax.f32 %v1851, %v2429
  %v2501 = vmax.f32 %v1854, %v2432
  %v2502 = vmax.f32 %v1859, %v2437
  %v2503 = vmax.f32 %v1862, %v2440
  %v2504 = vmax.f32 %v1867, %v2445
  %v2505 = vmax.f32 %v1870, %v2448
  %v2506 = vmax.f32 %v1875, %v2453
  %v2507 = vmax.f32 %v1253, %v2458
  %v2508 = vmax.f32 %v1254, %v2459
  %v2509 = vmax.f32 %v1255, %v2460
  %v2510 = vmax.f32 %v1256, %v2461
  %v2511 = vmax.f32 %v1257, %v2462
  %v2512 = vmax.f32 %v1258, %v2463
  %v2513 = vmax.f32 %v1259, %v2464
  %v2514 = vmax.f32 %v1260, %v2465
  %v2515 = vmax.f32 %v1261, %v2466
  %v2516 = vmax.f32 %v1262, %v2467
  %v2517 = vmax.f32 %v1263, %v2468
  %v2518 = vmax.f32 %v1264, %v2469
  %v2519 = vmax.f32 %v1265, %v2470
  %v2520 = vmax.f32 %v1266, %v2471
  %v2521 = vmax.f32 %v1267, %v2472
  %v2522 = vmax.f32 %v1268, %v2473
  %v2523 = vmax.f32 %v1269, %v2474
  %v2524 = vmax.f32 %v1270, %v2475
  %v2525 = vmax.f32 %v1271, %v2476
  %v2526 = vmax.f32 %v1272, %v2477
  %v2527 = vmax.f32 %v1273, %v2478
  %v2528 = vmax.f32 %v1274, %v2479
  %v2529 = vmax.f32 %v1275, %v2480
  %v2530 = vmax.f32 %v1276, %v2481
  %v2531 = vmax.f32 %v1277, %v2482
  %v2532 = vmax.f32 %v1278, %v2483
  %v2533 = vmax.f32 %v1279, %v2484
  %v2534 = vmax.f32 %v1280, %v2485
  %v2535 = vmax.f32 %v1281, %v2486
  %v2536 = vmax.f32 %v1282, %v2487
  %v2537 = vmax.f32 %v1283, %v2488
  %v2538 = vmax.f32 %v1284, %v2489
  %v2539 = vmax.f32 %v1285, %v2490
  %v2540 = vmax.f32 %v1286, %v2491
  %v2541 = vmax.f32 %v1287, %v2492
  %v2542 = vmax.f32 %v1288, %v2493
  %v2543 = vmax.f32 %v1289, %v2494
  %v2544 = vmax.f32 %v1290, %v2495
  %v2545 = vmax.f32 %v1291, %v2496
  %v2546 = vmax.f32 %v1292, %v2497
  %v2547 = vmax.f32 %v1293, %v2498
  %v2548 = vmax.f32 %v1294, %v2499
  %v2549 = vmax.f32 %v1295, %v2500
  %v2550 = vmax.f32 %v1296, %v2501
  %v2551 = vmax.f32 %v1297, %v2502
  %v2552 = vmax.f32 %v1298, %v2503
  %v2553 = vmax.f32 %v1299, %v2504
  %v2554 = vmax.f32 %v1300, %v2505
  %v2555 = vmax.f32 %v1301, %v2506
  %v2556 = vld [vmem:[%s5] sm:$0x1]
  %v2558 = vlaneseq
  %v2559 = vshrl.u32 %v2558, 7
  %v2560 = vsub.s32 0, %v2559
  %v2561 = vrot.slane %v2556, %v2560
  %v2563 = vadd.f32 %v2507, %v2561
  %v2564 = vadd.f32 %v2508, %v2561
  %v2565 = vadd.f32 %v2509, %v2561
  %v2566 = vadd.f32 %v2510, %v2561
  %v2567 = vadd.f32 %v2511, %v2561
  %v2568 = vadd.f32 %v2512, %v2561
  %v2569 = vadd.f32 %v2513, %v2561
  %v2570 = vadd.f32 %v2514, %v2561
  %v2571 = vadd.f32 %v2515, %v2561
  %v2572 = vadd.f32 %v2516, %v2561
  %v2573 = vadd.f32 %v2517, %v2561
  %v2574 = vadd.f32 %v2518, %v2561
  %v2575 = vadd.f32 %v2519, %v2561
  %v2576 = vadd.f32 %v2520, %v2561
  %v2577 = vadd.f32 %v2521, %v2561
  %v2578 = vadd.f32 %v2522, %v2561
  %v2579 = vadd.f32 %v2523, %v2561
  %v2580 = vadd.f32 %v2524, %v2561
  %v2581 = vadd.f32 %v2525, %v2561
  %v2582 = vadd.f32 %v2526, %v2561
  %v2583 = vadd.f32 %v2527, %v2561
  %v2584 = vadd.f32 %v2528, %v2561
  %v2585 = vadd.f32 %v2529, %v2561
  %v2586 = vadd.f32 %v2530, %v2561
  %v2587 = vadd.f32 %v2531, %v2561
  %v2588 = vadd.f32 %v2532, %v2561
  %v2589 = vadd.f32 %v2533, %v2561
  %v2590 = vadd.f32 %v2534, %v2561
  %v2591 = vadd.f32 %v2535, %v2561
  %v2592 = vadd.f32 %v2536, %v2561
  %v2593 = vadd.f32 %v2537, %v2561
  %v2594 = vadd.f32 %v2538, %v2561
  %v2595 = vadd.f32 %v2539, %v2561
  %v2596 = vadd.f32 %v2540, %v2561
  %v2597 = vadd.f32 %v2541, %v2561
  %v2598 = vadd.f32 %v2542, %v2561
  %v2599 = vadd.f32 %v2543, %v2561
  %v2600 = vadd.f32 %v2544, %v2561
  %v2601 = vadd.f32 %v2545, %v2561
  %v2602 = vadd.f32 %v2546, %v2561
  %v2603 = vadd.f32 %v2547, %v2561
  %v2604 = vadd.f32 %v2548, %v2561
  %v2605 = vadd.f32 %v2549, %v2561
  %v2606 = vadd.f32 %v2550, %v2561
  %v2607 = vadd.f32 %v2551, %v2561
  %v2608 = vadd.f32 %v2552, %v2561
  %v2609 = vadd.f32 %v2553, %v2561
  %v2610 = vadd.f32 %v2554, %v2561
  %v2611 = vadd.f32 %v2555, %v2561
  %v2612 = vmax.f32 %v2563, 0.0
  %v2613 = vmax.f32 %v2564, 0.0
  %v2614 = vmax.f32 %v2565, 0.0
  %v2615 = vmax.f32 %v2566, 0.0
  %v2616 = vmax.f32 %v2567, 0.0
  %v2617 = vmax.f32 %v2568, 0.0
  %v2618 = vmax.f32 %v2569, 0.0
  %v2619 = vmax.f32 %v2570, 0.0
  %v2620 = vmax.f32 %v2571, 0.0
  %v2621 = vmax.f32 %v2572, 0.0
  %v2622 = vmax.f32 %v2573, 0.0
  %v2623 = vmax.f32 %v2574, 0.0
  %v2624 = vmax.f32 %v2575, 0.0
  %v2625 = vmax.f32 %v2576, 0.0
  %v2626 = vmax.f32 %v2577, 0.0
  %v2627 = vmax.f32 %v2578, 0.0
  %v2628 = vmax.f32 %v2579, 0.0
  %v2629 = vmax.f32 %v2580, 0.0
  %v2630 = vmax.f32 %v2581, 0.0
  %v2631 = vmax.f32 %v2582, 0.0
  %v2632 = vmax.f32 %v2583, 0.0
  %v2633 = vmax.f32 %v2584, 0.0
  %v2634 = vmax.f32 %v2585, 0.0
  %v2635 = vmax.f32 %v2586, 0.0
  %v2636 = vmax.f32 %v2587, 0.0
  %v2637 = vmax.f32 %v2588, 0.0
  %v2638 = vmax.f32 %v2589, 0.0
  %v2639 = vmax.f32 %v2590, 0.0
  %v2640 = vmax.f32 %v2591, 0.0
  %v2641 = vmax.f32 %v2592, 0.0
  %v2642 = vmax.f32 %v2593, 0.0
  %v2643 = vmax.f32 %v2594, 0.0
  %v2644 = vmax.f32 %v2595, 0.0
  %v2645 = vmax.f32 %v2596, 0.0
  %v2646 = vmax.f32 %v2597, 0.0
  %v2647 = vmax.f32 %v2598, 0.0
  %v2648 = vmax.f32 %v2599, 0.0
  %v2649 = vmax.f32 %v2600, 0.0
  %v2650 = vmax.f32 %v2601, 0.0
  %v2651 = vmax.f32 %v2602, 0.0
  %v2652 = vmax.f32 %v2603, 0.0
  %v2653 = vmax.f32 %v2604, 0.0
  %v2654 = vmax.f32 %v2605, 0.0
  %v2655 = vmax.f32 %v2606, 0.0
  %v2656 = vmax.f32 %v2607, 0.0
  %v2657 = vmax.f32 %v2608, 0.0
  %v2658 = vmax.f32 %v2609, 0.0
  %v2659 = vmax.f32 %v2610, 0.0
  %v2660 = vmax.f32 %v2611, 0.0
  %v2661 = vpack.c.bf16 %v2613, %v2612
  %v2662 = vpack.c.bf16 %v2615, %v2614
  %v2663 = vpack.c.bf16 %v2617, %v2616
  %v2664 = vpack.c.bf16 %v2619, %v2618
  %v2665 = vpack.c.bf16 %v2621, %v2620
  %v2666 = vpack.c.bf16 %v2623, %v2622
  %v2667 = vpack.c.bf16 %v2625, %v2624
  %v2668 = vpack.c.bf16 %v2627, %v2626
  %v2669 = vpack.c.bf16 %v2629, %v2628
  %v2670 = vpack.c.bf16 %v2631, %v2630
  %v2671 = vpack.c.bf16 %v2633, %v2632
  %v2672 = vpack.c.bf16 %v2635, %v2634
  %v2673 = vpack.c.bf16 %v2637, %v2636
  %v2674 = vpack.c.bf16 %v2639, %v2638
  %v2675 = vpack.c.bf16 %v2641, %v2640
  %v2676 = vpack.c.bf16 %v2643, %v2642
  %v2677 = vpack.c.bf16 %v2645, %v2644
  %v2678 = vpack.c.bf16 %v2647, %v2646
  %v2679 = vpack.c.bf16 %v2649, %v2648
  %v2680 = vpack.c.bf16 %v2651, %v2650
  %v2681 = vpack.c.bf16 %v2653, %v2652
  %v2682 = vpack.c.bf16 %v2655, %v2654
  %v2683 = vpack.c.bf16 %v2657, %v2656
  %v2684 = vpack.c.bf16 %v2659, %v2658
  %v2685 = vpack.c.bf16 %v2660, %v2660
  %v2711 = vunpack.c.l.b16 %v2661
  %v2712 = vunpack.c.h.b16 %v2661
  %v2713 = vunpack.c.l.b16 %v2662
  %v2714 = vunpack.c.h.b16 %v2662
  %v2715 = vunpack.c.l.b16 %v2663
  %v2716 = vunpack.c.h.b16 %v2663
  %v2717 = vunpack.c.l.b16 %v2664
  %v2718 = vunpack.c.h.b16 %v2664
  %v2719 = vunpack.c.l.b16 %v2665
  %v2720 = vunpack.c.h.b16 %v2665
  %v2721 = vunpack.c.l.b16 %v2666
  %v2722 = vunpack.c.h.b16 %v2666
  %v2723 = vunpack.c.l.b16 %v2667
  %v2724 = vunpack.c.h.b16 %v2667
  %v2725 = vunpack.c.l.b16 %v2668
  %v2726 = vunpack.c.h.b16 %v2668
  %v2727 = vunpack.c.l.b16 %v2669
  %v2728 = vunpack.c.h.b16 %v2669
  %v2729 = vunpack.c.l.b16 %v2670
  %v2730 = vunpack.c.h.b16 %v2670
  %v2731 = vunpack.c.l.b16 %v2671
  %v2732 = vunpack.c.h.b16 %v2671
  %v2733 = vunpack.c.l.b16 %v2672
  %v2734 = vunpack.c.h.b16 %v2672
  %v2735 = vunpack.c.l.b16 %v2673
  %v2736 = vunpack.c.h.b16 %v2673
  %v2737 = vunpack.c.l.b16 %v2674
  %v2738 = vunpack.c.h.b16 %v2674
  %v2739 = vunpack.c.l.b16 %v2675
  %v2740 = vunpack.c.h.b16 %v2675
  %v2741 = vunpack.c.l.b16 %v2676
  %v2742 = vunpack.c.h.b16 %v2676
  %v2743 = vunpack.c.l.b16 %v2677
  %v2744 = vunpack.c.h.b16 %v2677
  %v2745 = vunpack.c.l.b16 %v2678
  %v2746 = vunpack.c.h.b16 %v2678
  %v2747 = vunpack.c.l.b16 %v2679
  %v2748 = vunpack.c.h.b16 %v2679
  %v2749 = vunpack.c.l.b16 %v2680
  %v2750 = vunpack.c.h.b16 %v2680
  %v2751 = vunpack.c.l.b16 %v2681
  %v2752 = vunpack.c.h.b16 %v2681
  %v2753 = vunpack.c.l.b16 %v2682
  %v2754 = vunpack.c.h.b16 %v2682
  %v2755 = vunpack.c.l.b16 %v2683
  %v2756 = vunpack.c.h.b16 %v2683
  %v2757 = vunpack.c.l.b16 %v2684
  %v2758 = vunpack.c.h.b16 %v2684
  %v2759 = vunpack.c.l.b16 %v2685
  %v2760 = vpack.c.b16 %v2711, %v2711
  %v2761 = vpack.c.b16 %v2712, %v2712
  %v2762 = vpack.c.b16 %v2713, %v2713
  %v2763 = vpack.c.b16 %v2714, %v2714
  %v2764 = vpack.c.b16 %v2715, %v2715
  %v2765 = vpack.c.b16 %v2716, %v2716
  %v2766 = vpack.c.b16 %v2717, %v2717
  %v2767 = vpack.c.b16 %v2718, %v2718
  %v2768 = vpack.c.b16 %v2719, %v2719
  %v2769 = vpack.c.b16 %v2720, %v2720
  %v2770 = vpack.c.b16 %v2721, %v2721
  %v2771 = vpack.c.b16 %v2722, %v2722
  %v2772 = vpack.c.b16 %v2723, %v2723
  %v2773 = vpack.c.b16 %v2724, %v2724
  %v2774 = vpack.c.b16 %v2725, %v2725
  %v2775 = vpack.c.b16 %v2726, %v2726
  %v2776 = vpack.c.b16 %v2727, %v2727
  %v2777 = vpack.c.b16 %v2728, %v2728
  %v2778 = vpack.c.b16 %v2729, %v2729
  %v2779 = vpack.c.b16 %v2730, %v2730
  %v2780 = vpack.c.b16 %v2731, %v2731
  %v2781 = vpack.c.b16 %v2732, %v2732
  %v2782 = vpack.c.b16 %v2733, %v2733
  %v2783 = vpack.c.b16 %v2734, %v2734
  %v2784 = vpack.c.b16 %v2735, %v2735
  %v2785 = vpack.c.b16 %v2736, %v2736
  %v2786 = vpack.c.b16 %v2737, %v2737
  %v2787 = vpack.c.b16 %v2738, %v2738
  %v2788 = vpack.c.b16 %v2739, %v2739
  %v2789 = vpack.c.b16 %v2740, %v2740
  %v2790 = vpack.c.b16 %v2741, %v2741
  %v2791 = vpack.c.b16 %v2742, %v2742
  %v2792 = vpack.c.b16 %v2743, %v2743
  %v2793 = vpack.c.b16 %v2744, %v2744
  %v2794 = vpack.c.b16 %v2745, %v2745
  %v2795 = vpack.c.b16 %v2746, %v2746
  %v2796 = vpack.c.b16 %v2747, %v2747
  %v2797 = vpack.c.b16 %v2748, %v2748
  %v2798 = vpack.c.b16 %v2749, %v2749
  %v2799 = vpack.c.b16 %v2750, %v2750
  %v2800 = vpack.c.b16 %v2751, %v2751
  %v2801 = vpack.c.b16 %v2752, %v2752
  %v2802 = vpack.c.b16 %v2753, %v2753
  %v2803 = vpack.c.b16 %v2754, %v2754
  %v2804 = vpack.c.b16 %v2755, %v2755
  %v2805 = vpack.c.b16 %v2756, %v2756
  %v2806 = vpack.c.b16 %v2757, %v2757
  %v2807 = vpack.c.b16 %v2758, %v2758
  %v2808 = vpack.c.b16 %v2759, %v2759
  %vm2858 = vcmask 257024
  %2859 = vst.msk [vmem:[%s6] sm:$0xf] %vm2858, %v2760
  %2860 = vst.msk [vmem:[%s6 + $0x4] sm:$0xf] %vm2858, %v2761
  %2861 = vst.msk [vmem:[%s6 + $0x8] sm:$0xf] %vm2858, %v2762
  %2862 = vst.msk [vmem:[%s6 + $0xc] sm:$0xf] %vm2858, %v2763
  %2863 = vst.msk [vmem:[%s6 + $0x10] sm:$0xf] %vm2858, %v2764
  %2864 = vst.msk [vmem:[%s6 + $0x14] sm:$0xf] %vm2858, %v2765
  %2865 = vst.msk [vmem:[%s6 + $0x18] sm:$0xf] %vm2858, %v2766
  %2866 = vst.msk [vmem:[%s6 + $0x1c] sm:$0xf] %vm2858, %v2767
  %2867 = vst.msk [vmem:[%s6 + $0x20] sm:$0xf] %vm2858, %v2768
  %2868 = vst.msk [vmem:[%s6 + $0x24] sm:$0xf] %vm2858, %v2769
  %2869 = vst.msk [vmem:[%s6 + $0x28] sm:$0xf] %vm2858, %v2770
  %2870 = vst.msk [vmem:[%s6 + $0x2c] sm:$0xf] %vm2858, %v2771
  %2871 = vst.msk [vmem:[%s6 + $0x30] sm:$0xf] %vm2858, %v2772
  %2872 = vst.msk [vmem:[%s6 + $0x34] sm:$0xf] %vm2858, %v2773
  %2873 = vst.msk [vmem:[%s6 + $0x38] sm:$0xf] %vm2858, %v2774
  %2874 = vst.msk [vmem:[%s6 + $0x3c] sm:$0xf] %vm2858, %v2775
  %2875 = vst.msk [vmem:[%s6 + $0x40] sm:$0xf] %vm2858, %v2776
  %2876 = vst.msk [vmem:[%s6 + $0x44] sm:$0xf] %vm2858, %v2777
  %2877 = vst.msk [vmem:[%s6 + $0x48] sm:$0xf] %vm2858, %v2778
  %2878 = vst.msk [vmem:[%s6 + $0x4c] sm:$0xf] %vm2858, %v2779
  %2879 = vst.msk [vmem:[%s6 + $0x50] sm:$0xf] %vm2858, %v2780
  %2880 = vst.msk [vmem:[%s6 + $0x54] sm:$0xf] %vm2858, %v2781
  %2881 = vst.msk [vmem:[%s6 + $0x58] sm:$0xf] %vm2858, %v2782
  %2882 = vst.msk [vmem:[%s6 + $0x5c] sm:$0xf] %vm2858, %v2783
  %2883 = vst.msk [vmem:[%s6 + $0x60] sm:$0xf] %vm2858, %v2784
  %2884 = vst.msk [vmem:[%s6 + $0x64] sm:$0xf] %vm2858, %v2785
  %2885 = vst.msk [vmem:[%s6 + $0x68] sm:$0xf] %vm2858, %v2786
  %2886 = vst.msk [vmem:[%s6 + $0x6c] sm:$0xf] %vm2858, %v2787
  %2887 = vst.msk [vmem:[%s6 + $0x70] sm:$0xf] %vm2858, %v2788
  %2888 = vst.msk [vmem:[%s6 + $0x74] sm:$0xf] %vm2858, %v2789
  %2889 = vst.msk [vmem:[%s6 + $0x78] sm:$0xf] %vm2858, %v2790
  %2890 = vst.msk [vmem:[%s6 + $0x7c] sm:$0xf] %vm2858, %v2791
  %2891 = vst.msk [vmem:[%s6 + $0x80] sm:$0xf] %vm2858, %v2792
  %2892 = vst.msk [vmem:[%s6 + $0x84] sm:$0xf] %vm2858, %v2793
  %2893 = vst.msk [vmem:[%s6 + $0x88] sm:$0xf] %vm2858, %v2794
  %2894 = vst.msk [vmem:[%s6 + $0x8c] sm:$0xf] %vm2858, %v2795
  %2895 = vst.msk [vmem:[%s6 + $0x90] sm:$0xf] %vm2858, %v2796
  %2896 = vst.msk [vmem:[%s6 + $0x94] sm:$0xf] %vm2858, %v2797
  %2897 = vst.msk [vmem:[%s6 + $0x98] sm:$0xf] %vm2858, %v2798
  %2898 = vst.msk [vmem:[%s6 + $0x9c] sm:$0xf] %vm2858, %v2799
  %2899 = vst.msk [vmem:[%s6 + $0xa0] sm:$0xf] %vm2858, %v2800
  %2900 = vst.msk [vmem:[%s6 + $0xa4] sm:$0xf] %vm2858, %v2801
  %2901 = vst.msk [vmem:[%s6 + $0xa8] sm:$0xf] %vm2858, %v2802
  %2902 = vst.msk [vmem:[%s6 + $0xac] sm:$0xf] %vm2858, %v2803
  %2903 = vst.msk [vmem:[%s6 + $0xb0] sm:$0xf] %vm2858, %v2804
  %2904 = vst.msk [vmem:[%s6 + $0xb4] sm:$0xf] %vm2858, %v2805
  %2905 = vst.msk [vmem:[%s6 + $0xb8] sm:$0xf] %vm2858, %v2806
  %2906 = vst.msk [vmem:[%s6 + $0xbc] sm:$0xf] %vm2858, %v2807
  %2907 = vst.msk [vmem:[%s6 + $0xc0] sm:$0xf] %vm2858, %v2808
  // Predicated region
  $region26: #{net_forward.5} parent=0 // pred_check
    _
  $region27: #{net_forward.5} parent=0 // pred_check_branch
    %2909 = sbr.rel (0) target = $region29
  $region28: #{net_forward.5} parent=0 // pred_region
    _
  $region29: #{net_forward.5} parent=0 // pred_fallthru
    _
  // Predicated region
  $region30: #{net_forward.5} parent=0 // pred_check
    _
  $region31: #{net_forward.5} parent=0 // pred_check_branch
    %2911 = sbr.rel (0) target = $region33
  $region32: #{net_forward.5} parent=0 // pred_region
    _
  $region33: #{net_forward.5} parent=0 // pred_fallthru
    _

// kernel: net_forward.6
$region0: #{net_forward.6}
  #allocation0 [shape = 'u32[]', space=smem, size = 0x4, offset = 0x4, fixed_abs, tag = 'smem constant byte address 0x4 - core index']
  #allocation1 [shape = 'u32[144,128]{1,0:T(1,128)}', space=vmem, size = 0x12000, scoped, tag = 'internal scratch']
  %s0 = inlined_call_operand.vmem [shape: bf16[72,288], index: 0, kind: input, shape index: {}]
  %s1 = inlined_call_operand.vmem [shape: bf16[72,288], index: 1, kind: input, shape index: {}]
  %s2 = inlined_call_operand.vmem [shape: bf16[72,288], index: 2, kind: input, shape index: {}]
  %s3 = inlined_call_operand.vmem [shape: bf16[72,288], index: 3, kind: input, shape index: {}]
  %s4 = inlined_call_operand.vmem [shape: bf16[288,64], index: 4, kind: input, shape index: {}]
  %s5 = inlined_call_operand.vmem [shape: f32[1,64], index: 5, kind: input, shape index: {}]
  %s6 = inlined_call_operand.vmem [shape: bf16[72,64], index: 6, kind: output, shape index: {}]
  %s7 = sld [smem:[#allocation0]]
  $region34: #{net_forward.6} parent=0
    _
  %s9 = ssub.s32 1, %s7
  %s10 = scalar_select 0, %s9, %s7
  // Predicated region
  $region2: #{net_forward.6} parent=0 // pred_check
    _
  $region3: #{net_forward.6} parent=0 // pred_check_branch
    %12 = sbr.rel (0) target = $region5
  $region4: #{net_forward.6} parent=0 // pred_region
    _
  $region5: #{net_forward.6} parent=0 // pred_fallthru
    _
  // Predicated region
  $region6: #{net_forward.6} parent=0 // pred_check
    _
  $region7: #{net_forward.6} parent=0 // pred_check_branch
    %14 = sbr.rel (0) target = $region9
  $region8: #{net_forward.6} parent=0 // pred_region
    _
  $region9: #{net_forward.6} parent=0 // pred_fallthru
    _
  // Predicated region
  $region10: #{net_forward.6} parent=0 // pred_check
    _
  $region11: #{net_forward.6} parent=0 // pred_check_branch
    %16 = sbr.rel (0) target = $region13
  $region12: #{net_forward.6} parent=0 // pred_region
    _
  $region13: #{net_forward.6} parent=0 // pred_fallthru
    _
  // Predicated region
  $region14: #{net_forward.6} parent=0 // pred_check
    _
  $region15: #{net_forward.6} parent=0 // pred_check_branch
    %18 = sbr.rel (0) target = $region17
  $region16: #{net_forward.6} parent=0 // pred_region
    _
  $region17: #{net_forward.6} parent=0 // pred_fallthru
    _
  // Predicated region
  $region18: #{net_forward.6} parent=0 // pred_check
    _
  $region19: #{net_forward.6} parent=0 // pred_check_branch
    %20 = sbr.rel (0) target = $region21
  $region20: #{net_forward.6} parent=0 // pred_region
    _
  $region21: #{net_forward.6} parent=0 // pred_fallthru
    _
  // Predicated region
  $region22: #{net_forward.6} parent=0 // pred_check
    _
  $region23: #{net_forward.6} parent=0 // pred_check_branch
    %22 = sbr.rel (0) target = $region25
  $region24: #{net_forward.6} parent=0 // pred_region
    _
  $region25: #{net_forward.6} parent=0 // pred_fallthru
    _
  %v24 = vld [vmem:[%s4] sm:$0xf]
  %v25 = vld [vmem:[%s4 + $0x4] sm:$0xf]
  %v26 = vld [vmem:[%s4 + $0x8] sm:$0xf]
  %v27 = vld [vmem:[%s4 + $0xc] sm:$0xf]
  %v28 = vld [vmem:[%s4 + $0x10] sm:$0xf]
  %v29 = vld [vmem:[%s4 + $0x14] sm:$0xf]
  %v30 = vld [vmem:[%s4 + $0x18] sm:$0xf]
  %v31 = vld [vmem:[%s4 + $0x1c] sm:$0xf]
  %v32 = vld [vmem:[%s4 + $0x20] sm:$0xf]
  %v33 = vld [vmem:[%s4 + $0x24] sm:$0xf]
  %v34 = vld [vmem:[%s4 + $0x28] sm:$0xf]
  %v35 = vld [vmem:[%s4 + $0x2c] sm:$0xf]
  %v36 = vld [vmem:[%s4 + $0x30] sm:$0xf]
  %v37 = vld [vmem:[%s4 + $0x34] sm:$0xf]
  %v38 = vld [vmem:[%s4 + $0x38] sm:$0xf]
  %v39 = vld [vmem:[%s4 + $0x3c] sm:$0xf]
  %v40 = vld [vmem:[%s4 + $0x40] sm:$0xf]
  %v41 = vld [vmem:[%s4 + $0x44] sm:$0xf]
  %v42 = vld [vmem:[%s4 + $0x48] sm:$0xf]
  %v43 = vld [vmem:[%s4 + $0x4c] sm:$0xf]
  %v44 = vld [vmem:[%s4 + $0x50] sm:$0xf]
  %v45 = vld [vmem:[%s4 + $0x54] sm:$0xf]
  %v46 = vld [vmem:[%s4 + $0x58] sm:$0xf]
  %v47 = vld [vmem:[%s4 + $0x5c] sm:$0xf]
  %v48 = vld [vmem:[%s4 + $0x60] sm:$0xf]
  %v49 = vld [vmem:[%s4 + $0x64] sm:$0xf]
  %v50 = vld [vmem:[%s4 + $0x68] sm:$0xf]
  %v51 = vld [vmem:[%s4 + $0x6c] sm:$0xf]
  %v52 = vld [vmem:[%s4 + $0x70] sm:$0xf]
  %v53 = vld [vmem:[%s4 + $0x74] sm:$0xf]
  %v54 = vld [vmem:[%s4 + $0x78] sm:$0xf]
  %v55 = vld [vmem:[%s4 + $0x7c] sm:$0xf]
  %v56 = vld [vmem:[%s4 + $0x80] sm:$0xf]
  %v57 = vld [vmem:[%s4 + $0x84] sm:$0xf]
  %v58 = vld [vmem:[%s4 + $0x88] sm:$0xf]
  %v59 = vld [vmem:[%s4 + $0x8c] sm:$0xf]
  %v60 = vld [vmem:[%s0] sm:$0xff]
  %v61 = vld [vmem:[%s0 + $0x8] sm:$0xf]
  %v62 = vld [vmem:[%s0 + $0xc] sm:$0xff]
  %v63 = vld [vmem:[%s0 + $0x14] sm:$0xf]
  %v64 = vld [vmem:[%s0 + $0x18] sm:$0xff]
  %v65 = vld [vmem:[%s0 + $0x20] sm:$0xf]
  %v66 = vld [vmem:[%s0 + $0x24] sm:$0xff]
  %v67 = vld [vmem:[%s0 + $0x2c] sm:$0xf]
  %v68 = vld [vmem:[%s0 + $0x30] sm:$0xff]
  %v69 = vld [vmem:[%s0 + $0x38] sm:$0xf]
  %v70 = vld [vmem:[%s0 + $0x3c] sm:$0xff]
  %v71 = vld [vmem:[%s0 + $0x44] sm:$0xf]
  %v72 = vld [vmem:[%s0 + $0x48] sm:$0xff]
  %v73 = vld [vmem:[%s0 + $0x50] sm:$0xf]
  %v74 = vld [vmem:[%s0 + $0x54] sm:$0xff]
  %v75 = vld [vmem:[%s0 + $0x5c] sm:$0xf]
  %v76 = vld [vmem:[%s0 + $0x60] sm:$0xff]
  %v77 = vld [vmem:[%s0 + $0x68] sm:$0xf]
  %v96 = vunpack.c.l.b16 %v60
  %v97 = vunpack.c.h.b16 %v60
  %v98 = vunpack.c.l.b16 %v61
  %v99 = vunpack.c.l.b16 %v62
  %v100 = vunpack.c.h.b16 %v62
  %v101 = vunpack.c.l.b16 %v63
  %v102 = vunpack.c.l.b16 %v64
  %v103 = vunpack.c.h.b16 %v64
  %v104 = vunpack.c.l.b16 %v65
  %v105 = vunpack.c.l.b16 %v66
  %v106 = vunpack.c.h.b16 %v66
  %v107 = vunpack.c.l.b16 %v67
  %v108 = vunpack.c.l.b16 %v68
  %v109 = vunpack.c.h.b16 %v68
  %v110 = vunpack.c.l.b16 %v69
  %v111 = vunpack.c.l.b16 %v70
  %v112 = vunpack.c.h.b16 %v70
  %v113 = vunpack.c.l.b16 %v71
  %v114 = vunpack.c.l.b16 %v72
  %v115 = vunpack.c.h.b16 %v72
  %v116 = vunpack.c.l.b16 %v73
  %v117 = vunpack.c.l.b16 %v74
  %v118 = vunpack.c.h.b16 %v74
  %v119 = vunpack.c.l.b16 %v75
  %v120 = vunpack.c.l.b16 %v76
  %v121 = vunpack.c.h.b16 %v76
  %v122 = vunpack.c.l.b16 %v77
  %v123 = vpack.c.b16 %v99, %v96
  %v124 = vpack.c.b16 %v100, %v97
  %v125 = vpack.c.b16 %v101, %v98
  %v126 = vpack.c.b16 %v105, %v102
  %v127 = vpack.c.b16 %v106, %v103
  %v128 = vpack.c.b16 %v107, %v104
  %v129 = vpack.c.b16 %v111, %v108
  %v130 = vpack.c.b16 %v112, %v109
  %v131 = vpack.c.b16 %v113, %v110
  %v132 = vpack.c.b16 %v117, %v114
  %v133 = vpack.c.b16 %v118, %v115
  %v134 = vpack.c.b16 %v119, %v116
  %v135 = vpack.c.b16 %v120, %v120
  %v136 = vpack.c.b16 %v121, %v121
  %v137 = vpack.c.b16 %v122, %v122
  %v184 = vunpack.c.l.b16 %v24
  %v185 = vunpack.c.l.b16 %v25
  %v186 = vunpack.c.l.b16 %v26
  %v187 = vunpack.c.l.b16 %v27
  %v188 = vunpack.c.l.b16 %v28
  %v189 = vunpack.c.l.b16 %v29
  %v190 = vunpack.c.l.b16 %v30
  %v191 = vunpack.c.l.b16 %v31
  %v192 = vunpack.c.l.b16 %v32
  %v193 = vunpack.c.l.b16 %v33
  %v194 = vunpack.c.l.b16 %v34
  %v195 = vunpack.c.l.b16 %v35
  %v196 = vunpack.c.l.b16 %v36
  %v197 = vunpack.c.l.b16 %v37
  %v198 = vunpack.c.l.b16 %v38
  %v199 = vunpack.c.l.b16 %v39
  %v200 = vunpack.c.l.b16 %v40
  %v201 = vunpack.c.l.b16 %v41
  %v202 = vunpack.c.l.b16 %v42
  %v203 = vunpack.c.l.b16 %v43
  %v204 = vunpack.c.l.b16 %v44
  %v205 = vunpack.c.l.b16 %v45
  %v206 = vunpack.c.l.b16 %v46
  %v207 = vunpack.c.l.b16 %v47
  %v208 = vunpack.c.l.b16 %v48
  %v209 = vunpack.c.l.b16 %v49
  %v210 = vunpack.c.l.b16 %v50
  %v211 = vunpack.c.l.b16 %v51
  %v212 = vunpack.c.l.b16 %v52
  %v213 = vunpack.c.l.b16 %v53
  %v214 = vunpack.c.l.b16 %v54
  %v215 = vunpack.c.l.b16 %v55
  %v216 = vunpack.c.l.b16 %v56
  %v217 = vunpack.c.l.b16 %v57
  %v218 = vunpack.c.l.b16 %v58
  %v219 = vunpack.c.l.b16 %v59
  %v220 = vpack.c.b16 %v185, %v184
  %v221 = vpack.c.b16 %v187, %v186
  %v222 = vpack.c.b16 %v189, %v188
  %v223 = vpack.c.b16 %v191, %v190
  %v224 = vpack.c.b16 %v193, %v192
  %v225 = vpack.c.b16 %v195, %v194
  %v226 = vpack.c.b16 %v197, %v196
  %v227 = vpack.c.b16 %v199, %v198
  %v228 = vpack.c.b16 %v201, %v200
  %v229 = vpack.c.b16 %v203, %v202
  %v230 = vpack.c.b16 %v205, %v204
  %v231 = vpack.c.b16 %v207, %v206
  %v232 = vpack.c.b16 %v209, %v208
  %v233 = vpack.c.b16 %v211, %v210
  %v234 = vpack.c.b16 %v213, %v212
  %v235 = vpack.c.b16 %v215, %v214
  %v236 = vpack.c.b16 %v217, %v216
  %v237 = vpack.c.b16 %v219, %v218
  %vm256 = vcmask 261120
  %v258 = vsel %vm256, %v125, 0
  %v261 = vsel %vm256, %v128, 0
  %v264 = vsel %vm256, %v131, 0
  %v267 = vsel %vm256, %v134, 0
  %v270 = vsel %vm256, %v137, 0
  %272 = vmatprep.subr.bf16.mxu0 0
  %273 = vmatpush1.bf16.msra.mxu0 %v227
  %274 = vmatprep.subr.bf16.mxu0 0
  %275 = vmatpush1.bf16.msra.mxu0 %v226
  %276 = vmatprep.subr.bf16.mxu0 0
  %277 = vmatpush1.bf16.msra.mxu0 %v225
  %278 = vmatprep.subr.bf16.mxu0 0
  %279 = vmatpush1.bf16.msra.mxu0 %v224
  %280 = vmatprep.subr.bf16.mxu0 0
  %281 = vmatpush1.bf16.msra.mxu0 %v223
  %282 = vmatprep.subr.bf16.mxu0 0
  %283 = vmatpush1.bf16.msra.mxu0 %v222
  %284 = vmatprep.subr.bf16.mxu0 0
  %285 = vmatpush1.bf16.msra.mxu0 %v221
  %286 = vmatprep.subr.bf16.mxu0 0
  %287 = vmatpush1.bf16.msra.mxu0 %v220
  %288 = vmatprep.subr.bf16.mxu0 0
  %289 = vmatpush2.bf16.msra.mxu0 %v235
  %290 = vmatprep.subr.bf16.mxu0 0
  %291 = vmatpush2.bf16.msra.mxu0 %v234
  %292 = vmatprep.subr.bf16.mxu0 0
  %293 = vmatpush2.bf16.msra.mxu0 %v233
  %294 = vmatprep.subr.bf16.mxu0 0
  %295 = vmatpush2.bf16.msra.mxu0 %v232
  %296 = vmatprep.subr.bf16.mxu0 0
  %297 = vmatpush2.bf16.msra.mxu0 %v231
  %298 = vmatprep.subr.bf16.mxu0 0
  %299 = vmatpush2.bf16.msra.mxu0 %v230
  %300 = vmatprep.subr.bf16.mxu0 0
  %301 = vmatpush2.bf16.msra.mxu0 %v229
  %302 = vmatprep.subr.bf16.mxu0 0
  %303 = vmatpush2.bf16.msra.mxu0 %v228
  %304 = vmatprep.mubr.bf16.mxu0 %v124
  %305 = vmatmul.mubr.bf16.gmra.mxu0 %v123
  %v306 = vpop.f32.mrf.mxu0
  %v307 = vadd.f32 0.0, %v306
  %v308 = vpop.f32.mrf.mxu0
  %v309 = vpop.f32.mrf.mxu0
  %v310 = vadd.f32 0.0, %v309
  %v311 = vpop.f32.mrf.mxu0
  %312 = vmatprep.mubr.bf16.mxu0 %v127
  %313 = vmatmul.mubr.bf16.gmra.mxu0 %v126
  %v314 = vpop.f32.mrf.mxu0
  %v315 = vadd.f32 0.0, %v314
  %v316 = vpop.f32.mrf.mxu0
  %v317 = vpop.f32.mrf.mxu0
  %v318 = vadd.f32 0.0, %v317
  %v319 = vpop.f32.mrf.mxu0
  %320 = vmatprep.mubr.bf16.mxu0 %v130
  %321 = vmatmul.mubr.bf16.gmra.mxu0 %v129
  %v322 = vpop.f32.mrf.mxu0
  %v323 = vadd.f32 0.0, %v322
  %v324 = vpop.f32.mrf.mxu0
  %v325 = vpop.f32.mrf.mxu0
  %v326 = vadd.f32 0.0, %v325
  %v327 = vpop.f32.mrf.mxu0
  %328 = vmatprep.mubr.bf16.mxu0 %v133
  %329 = vmatmul.mubr.bf16.gmra.mxu0 %v132
  %v330 = vpop.f32.mrf.mxu0
  %v331 = vadd.f32 0.0, %v330
  %v332 = vpop.f32.mrf.mxu0
  %v333 = vpop.f32.mrf.mxu0
  %v334 = vadd.f32 0.0, %v333
  %v335 = vpop.f32.mrf.mxu0
  %336 = vmatprep.mubr.bf16.mxu0 %v136
  %337 = vmatmul.mubr.bf16.gmra.mxu0 %v135
  %v338 = vpop.f32.mrf.mxu0
  %v339 = vadd.f32 0.0, %v338
  %v340 = vpop.f32.mrf.mxu0
  %v341 = vpop.f32.mrf.mxu0
  %v342 = vpop.f32.mrf.mxu0
  %343 = vdwg.mxu0
  %344 = vmatprep.subr.bf16.mxu0 0
  %345 = vmatpush1.bf16.msra.mxu0 0
  %346 = vmatprep.subr.bf16.mxu0 0
  %347 = vmatpush1.bf16.msra.mxu0 0
  %348 = vmatprep.subr.bf16.mxu0 0
  %349 = vmatpush1.bf16.msra.mxu0 0
  %350 = vmatprep.subr.bf16.mxu0 0
  %351 = vmatpush1.bf16.msra.mxu0 0
  %352 = vmatprep.subr.bf16.mxu0 0
  %353 = vmatpush1.bf16.msra.mxu0 0
  %354 = vmatprep.subr.bf16.mxu0 0
  %355 = vmatpush1.bf16.msra.mxu0 0
  %356 = vmatprep.subr.bf16.mxu0 0
  %357 = vmatpush1.bf16.msra.mxu0 %v237
  %358 = vmatprep.subr.bf16.mxu0 0
  %359 = vmatpush1.bf16.msra.mxu0 %v236
  %360 = vmatprep.subr.bf16.mxu0 0
  %361 = vmatpush2.bf16.msra.mxu0 0
  %362 = vmatprep.subr.bf16.mxu0 0
  %363 = vmatpush2.bf16.msra.mxu0 0
  %364 = vmatprep.subr.bf16.mxu0 0
  %365 = vmatpush2.bf16.msra.mxu0 0
  %366 = vmatprep.subr.bf16.mxu0 0
  %367 = vmatpush2.bf16.msra.mxu0 0
  %368 = vmatprep.subr.bf16.mxu0 0
  %369 = vmatpush2.bf16.msra.mxu0 0
  %370 = vmatprep.subr.bf16.mxu0 0
  %371 = vmatpush2.bf16.msra.mxu0 0
  %372 = vmatprep.subr.bf16.mxu0 0
  %373 = vmatpush2.bf16.msra.mxu0 0
  %374 = vmatprep.subr.bf16.mxu0 0
  %375 = vmatpush2.bf16.msra.mxu0 0
  %376 = vmatprep.mubr.bf16.mxu0 0
  %377 = vmatmul.mubr.bf16.gmra.mxu0 %v258
  %v378 = vpop.f32.mrf.mxu0
  %v379 = vadd.f32 %v307, %v378
  %v380 = vpop.f32.mrf.mxu0
  %v381 = vpop.f32.mrf.mxu0
  %v382 = vadd.f32 %v310, %v381
  %v383 = vpop.f32.mrf.mxu0
  %384 = vmatprep.mubr.bf16.mxu0 0
  %385 = vmatmul.mubr.bf16.gmra.mxu0 %v261
  %v386 = vpop.f32.mrf.mxu0
  %v387 = vadd.f32 %v315, %v386
  %v388 = vpop.f32.mrf.mxu0
  %v389 = vpop.f32.mrf.mxu0
  %v390 = vadd.f32 %v318, %v389
  %v391 = vpop.f32.mrf.mxu0
  %392 = vmatprep.mubr.bf16.mxu0 0
  %393 = vmatmul.mubr.bf16.gmra.mxu0 %v264
  %v394 = vpop.f32.mrf.mxu0
  %v395 = vadd.f32 %v323, %v394
  %v396 = vpop.f32.mrf.mxu0
  %v397 = vpop.f32.mrf.mxu0
  %v398 = vadd.f32 %v326, %v397
  %v399 = vpop.f32.mrf.mxu0
  %400 = vmatprep.mubr.bf16.mxu0 0
  %401 = vmatmul.mubr.bf16.gmra.mxu0 %v267
  %v402 = vpop.f32.mrf.mxu0
  %v403 = vadd.f32 %v331, %v402
  %v404 = vpop.f32.mrf.mxu0
  %v405 = vpop.f32.mrf.mxu0
  %v406 = vadd.f32 %v334, %v405
  %v407 = vpop.f32.mrf.mxu0
  %408 = vmatprep.mubr.bf16.mxu0 0
  %409 = vmatmul.mubr.bf16.gmra.mxu0 %v270
  %v410 = vpop.f32.mrf.mxu0
  %v411 = vadd.f32 %v339, %v410
  %v412 = vpop.f32.mrf.mxu0
  %v413 = vpop.f32.mrf.mxu0
  %v414 = vpop.f32.mrf.mxu0
  %415 = vdwg.mxu0
  %v416 = vld [vmem:[%s1] sm:$0xff]
  %v417 = vld [vmem:[%s1 + $0x8] sm:$0xf]
  %v418 = vld [vmem:[%s1 + $0xc] sm:$0xff]
  %v419 = vld [vmem:[%s1 + $0x14] sm:$0xf]
  %v420 = vld [vmem:[%s1 + $0x18] sm:$0xff]
  %v421 = vld [vmem:[%s1 + $0x20] sm:$0xf]
  %v422 = vld [vmem:[%s1 + $0x24] sm:$0xff]
  %v423 = vld [vmem:[%s1 + $0x2c] sm:$0xf]
  %v424 = vld [vmem:[%s1 + $0x30] sm:$0xff]
  %v425 = vld [vmem:[%s1 + $0x38] sm:$0xf]
  %v426 = vld [vmem:[%s1 + $0x3c] sm:$0xff]
  %v427 = vld [vmem:[%s1 + $0x44] sm:$0xf]
  %v428 = vld [vmem:[%s1 + $0x48] sm:$0xff]
  %v429 = vld [vmem:[%s1 + $0x50] sm:$0xf]
  %v430 = vld [vmem:[%s1 + $0x54] sm:$0xff]
  %v431 = vld [vmem:[%s1 + $0x5c] sm:$0xf]
  %v432 = vld [vmem:[%s1 + $0x60] sm:$0xff]
  %v433 = vld [vmem:[%s1 + $0x68] sm:$0xf]
  %v452 = vunpack.c.l.b16 %v416
  %v453 = vunpack.c.h.b16 %v416
  %v454 = vunpack.c.l.b16 %v417
  %v455 = vunpack.c.l.b16 %v418
  %v456 = vunpack.c.h.b16 %v418
  %v457 = vunpack.c.l.b16 %v419
  %v458 = vunpack.c.l.b16 %v420
  %v459 = vunpack.c.h.b16 %v420
  %v460 = vunpack.c.l.b16 %v421
  %v461 = vunpack.c.l.b16 %v422
  %v462 = vunpack.c.h.b16 %v422
  %v463 = vunpack.c.l.b16 %v423
  %v464 = vunpack.c.l.b16 %v424
  %v465 = vunpack.c.h.b16 %v424
  %v466 = vunpack.c.l.b16 %v425
  %v467 = vunpack.c.l.b16 %v426
  %v468 = vunpack.c.h.b16 %v426
  %v469 = vunpack.c.l.b16 %v427
  %v470 = vunpack.c.l.b16 %v428
  %v471 = vunpack.c.h.b16 %v428
  %v472 = vunpack.c.l.b16 %v429
  %v473 = vunpack.c.l.b16 %v430
  %v474 = vunpack.c.h.b16 %v430
  %v475 = vunpack.c.l.b16 %v431
  %v476 = vunpack.c.l.b16 %v432
  %v477 = vunpack.c.h.b16 %v432
  %v478 = vunpack.c.l.b16 %v433
  %v479 = vpack.c.b16 %v455, %v452
  %v480 = vpack.c.b16 %v456, %v453
  %v481 = vpack.c.b16 %v457, %v454
  %v482 = vpack.c.b16 %v461, %v458
  %v483 = vpack.c.b16 %v462, %v459
  %v484 = vpack.c.b16 %v463, %v460
  %v485 = vpack.c.b16 %v467, %v464
  %v486 = vpack.c.b16 %v468, %v465
  %v487 = vpack.c.b16 %v469, %v466
  %v488 = vpack.c.b16 %v473, %v470
  %v489 = vpack.c.b16 %v474, %v471
  %v490 = vpack.c.b16 %v475, %v472
  %v491 = vpack.c.b16 %v476, %v476
  %v492 = vpack.c.b16 %v477, %v477
  %v493 = vpack.c.b16 %v478, %v478
  %v505 = vsel %vm256, %v481, 0
  %v508 = vsel %vm256, %v484, 0
  %v511 = vsel %vm256, %v487, 0
  %v514 = vsel %vm256, %v490, 0
  %v517 = vsel %vm256, %v493, 0
  %519 = vmatprep.subr.bf16.mxu0 0
  %520 = vmatpush1.bf16.msra.mxu0 %v227
  %521 = vmatprep.subr.bf16.mxu0 0
  %522 = vmatpush1.bf16.msra.mxu0 %v226
  %523 = vmatprep.subr.bf16.mxu0 0
  %524 = vmatpush1.bf16.msra.mxu0 %v225
  %525 = vmatprep.subr.bf16.mxu0 0
  %526 = vmatpush1.bf16.msra.mxu0 %v224
  %527 = vmatprep.subr.bf16.mxu0 0
  %528 = vmatpush1.bf16.msra.mxu0 %v223
  %529 = vmatprep.subr.bf16.mxu0 0
  %530 = vmatpush1.bf16.msra.mxu0 %v222
  %531 = vmatprep.subr.bf16.mxu0 0
  %532 = vmatpush1.bf16.msra.mxu0 %v221
  %533 = vmatprep.subr.bf16.mxu0 0
  %534 = vmatpush1.bf16.msra.mxu0 %v220
  %535 = vmatprep.subr.bf16.mxu0 0
  %536 = vmatpush2.bf16.msra.mxu0 %v235
  %537 = vmatprep.subr.bf16.mxu0 0
  %538 = vmatpush2.bf16.msra.mxu0 %v234
  %539 = vmatprep.subr.bf16.mxu0 0
  %540 = vmatpush2.bf16.msra.mxu0 %v233
  %541 = vmatprep.subr.bf16.mxu0 0
  %542 = vmatpush2.bf16.msra.mxu0 %v232
  %543 = vmatprep.subr.bf16.mxu0 0
  %544 = vmatpush2.bf16.msra.mxu0 %v231
  %545 = vmatprep.subr.bf16.mxu0 0
  %546 = vmatpush2.bf16.msra.mxu0 %v230
  %547 = vmatprep.subr.bf16.mxu0 0
  %548 = vmatpush2.bf16.msra.mxu0 %v229
  %549 = vmatprep.subr.bf16.mxu0 0
  %550 = vmatpush2.bf16.msra.mxu0 %v228
  %551 = vmatprep.mubr.bf16.mxu0 %v480
  %552 = vmatmul.mubr.bf16.gmra.mxu0 %v479
  %v553 = vpop.f32.mrf.mxu0
  %v554 = vadd.f32 0.0, %v553
  %v555 = vpop.f32.mrf.mxu0
  %v556 = vpop.f32.mrf.mxu0
  %v557 = vadd.f32 0.0, %v556
  %v558 = vpop.f32.mrf.mxu0
  %559 = vmatprep.mubr.bf16.mxu0 %v483
  %560 = vmatmul.mubr.bf16.gmra.mxu0 %v482
  %v561 = vpop.f32.mrf.mxu0
  %v562 = vadd.f32 0.0, %v561
  %v563 = vpop.f32.mrf.mxu0
  %v564 = vpop.f32.mrf.mxu0
  %v565 = vadd.f32 0.0, %v564
  %v566 = vpop.f32.mrf.mxu0
  %567 = vmatprep.mubr.bf16.mxu0 %v486
  %568 = vmatmul.mubr.bf16.gmra.mxu0 %v485
  %v569 = vpop.f32.mrf.mxu0
  %v570 = vadd.f32 0.0, %v569
  %v571 = vpop.f32.mrf.mxu0
  %v572 = vpop.f32.mrf.mxu0
  %v573 = vadd.f32 0.0, %v572
  %v574 = vpop.f32.mrf.mxu0
  %575 = vmatprep.mubr.bf16.mxu0 %v489
  %576 = vmatmul.mubr.bf16.gmra.mxu0 %v488
  %v577 = vpop.f32.mrf.mxu0
  %v578 = vadd.f32 0.0, %v577
  %v579 = vpop.f32.mrf.mxu0
  %v580 = vpop.f32.mrf.mxu0
  %v581 = vadd.f32 0.0, %v580
  %v582 = vpop.f32.mrf.mxu0
  %583 = vmatprep.mubr.bf16.mxu0 %v492
  %584 = vmatmul.mubr.bf16.gmra.mxu0 %v491
  %v585 = vpop.f32.mrf.mxu0
  %v586 = vadd.f32 0.0, %v585
  %v587 = vpop.f32.mrf.mxu0
  %v588 = vpop.f32.mrf.mxu0
  %v589 = vpop.f32.mrf.mxu0
  %590 = vdwg.mxu0
  %591 = vmatprep.subr.bf16.mxu0 0
  %592 = vmatpush1.bf16.msra.mxu0 0
  %593 = vmatprep.subr.bf16.mxu0 0
  %594 = vmatpush1.bf16.msra.mxu0 0
  %595 = vmatprep.subr.bf16.mxu0 0
  %596 = vmatpush1.bf16.msra.mxu0 0
  %597 = vmatprep.subr.bf16.mxu0 0
  %598 = vmatpush1.bf16.msra.mxu0 0
  %599 = vmatprep.subr.bf16.mxu0 0
  %600 = vmatpush1.bf16.msra.mxu0 0
  %601 = vmatprep.subr.bf16.mxu0 0
  %602 = vmatpush1.bf16.msra.mxu0 0
  %603 = vmatprep.subr.bf16.mxu0 0
  %604 = vmatpush1.bf16.msra.mxu0 %v237
  %605 = vmatprep.subr.bf16.mxu0 0
  %606 = vmatpush1.bf16.msra.mxu0 %v236
  %607 = vmatprep.subr.bf16.mxu0 0
  %608 = vmatpush2.bf16.msra.mxu0 0
  %609 = vmatprep.subr.bf16.mxu0 0
  %610 = vmatpush2.bf16.msra.mxu0 0
  %611 = vmatprep.subr.bf16.mxu0 0
  %612 = vmatpush2.bf16.msra.mxu0 0
  %613 = vmatprep.subr.bf16.mxu0 0
  %614 = vmatpush2.bf16.msra.mxu0 0
  %615 = vmatprep.subr.bf16.mxu0 0
  %616 = vmatpush2.bf16.msra.mxu0 0
  %617 = vmatprep.subr.bf16.mxu0 0
  %618 = vmatpush2.bf16.msra.mxu0 0
  %619 = vmatprep.subr.bf16.mxu0 0
  %620 = vmatpush2.bf16.msra.mxu0 0
  %621 = vmatprep.subr.bf16.mxu0 0
  %622 = vmatpush2.bf16.msra.mxu0 0
  %623 = vmatprep.mubr.bf16.mxu0 0
  %624 = vmatmul.mubr.bf16.gmra.mxu0 %v505
  %v625 = vpop.f32.mrf.mxu0
  %v626 = vadd.f32 %v554, %v625
  %v627 = vpop.f32.mrf.mxu0
  %v628 = vpop.f32.mrf.mxu0
  %v629 = vadd.f32 %v557, %v628
  %v630 = vpop.f32.mrf.mxu0
  %631 = vmatprep.mubr.bf16.mxu0 0
  %632 = vmatmul.mubr.bf16.gmra.mxu0 %v508
  %v633 = vpop.f32.mrf.mxu0
  %v634 = vadd.f32 %v562, %v633
  %v635 = vpop.f32.mrf.mxu0
  %v636 = vpop.f32.mrf.mxu0
  %v637 = vadd.f32 %v565, %v636
  %v638 = vpop.f32.mrf.mxu0
  %639 = vmatprep.mubr.bf16.mxu0 0
  %640 = vmatmul.mubr.bf16.gmra.mxu0 %v511
  %v641 = vpop.f32.mrf.mxu0
  %v642 = vadd.f32 %v570, %v641
  %v643 = vpop.f32.mrf.mxu0
  %v644 = vpop.f32.mrf.mxu0
  %v645 = vadd.f32 %v573, %v644
  %v646 = vpop.f32.mrf.mxu0
  %647 = vmatprep.mubr.bf16.mxu0 0
  %648 = vmatmul.mubr.bf16.gmra.mxu0 %v514
  %v649 = vpop.f32.mrf.mxu0
  %v650 = vadd.f32 %v578, %v649
  %v651 = vpop.f32.mrf.mxu0
  %v652 = vpop.f32.mrf.mxu0
  %v653 = vadd.f32 %v581, %v652
  %v654 = vpop.f32.mrf.mxu0
  %655 = vmatprep.mubr.bf16.mxu0 0
  %656 = vmatmul.mubr.bf16.gmra.mxu0 %v517
  %v657 = vpop.f32.mrf.mxu0
  %v658 = vadd.f32 %v586, %v657
  %v659 = vpop.f32.mrf.mxu0
  %v660 = vpop.f32.mrf.mxu0
  %v661 = vpop.f32.mrf.mxu0
  %662 = vdwg.mxu0
  %v663 = vmax.f32 %v379, %v626
  %v664 = vmax.f32 %v382, %v629
  %v665 = vmax.f32 %v387, %v634
  %v666 = vmax.f32 %v390, %v637
  %v667 = vmax.f32 %v395, %v642
  %v668 = vmax.f32 %v398, %v645
  %v669 = vmax.f32 %v403, %v650
  %v670 = vmax.f32 %v406, %v653
  %v671 = vmax.f32 %v411, %v658
  %v672 = vld [vmem:[%s2] sm:$0xff]
  %v673 = vld [vmem:[%s2 + $0x8] sm:$0xf]
  %v674 = vld [vmem:[%s2 + $0xc] sm:$0xff]
  %v675 = vld [vmem:[%s2 + $0x14] sm:$0xf]
  %v676 = vld [vmem:[%s2 + $0x18] sm:$0xff]
  %v677 = vld [vmem:[%s2 + $0x20] sm:$0xf]
  %v678 = vld [vmem:[%s2 + $0x24] sm:$0xff]
  %v679 = vld [vmem:[%s2 + $0x2c] sm:$0xf]
  %v680 = vld [vmem:[%s2 + $0x30] sm:$0xff]
  %v681 = vld [vmem:[%s2 + $0x38] sm:$0xf]
  %v682 = vld [vmem:[%s2 + $0x3c] sm:$0xff]
  %v683 = vld [vmem:[%s2 + $0x44] sm:$0xf]
  %v684 = vld [vmem:[%s2 + $0x48] sm:$0xff]
  %v685 = vld [vmem:[%s2 + $0x50] sm:$0xf]
  %v686 = vld [vmem:[%s2 + $0x54] sm:$0xff]
  %v687 = vld [vmem:[%s2 + $0x5c] sm:$0xf]
  %v688 = vld [vmem:[%s2 + $0x60] sm:$0xff]
  %v689 = vld [vmem:[%s2 + $0x68] sm:$0xf]
  %v708 = vunpack.c.l.b16 %v672
  %v709 = vunpack.c.h.b16 %v672
  %v710 = vunpack.c.l.b16 %v673
  %v711 = vunpack.c.l.b16 %v674
  %v712 = vunpack.c.h.b16 %v674
  %v713 = vunpack.c.l.b16 %v675
  %v714 = vunpack.c.l.b16 %v676
  %v715 = vunpack.c.h.b16 %v676
  %v716 = vunpack.c.l.b16 %v677
  %v717 = vunpack.c.l.b16 %v678
  %v718 = vunpack.c.h.b16 %v678
  %v719 = vunpack.c.l.b16 %v679
  %v720 = vunpack.c.l.b16 %v680
  %v721 = vunpack.c.h.b16 %v680
  %v722 = vunpack.c.l.b16 %v681
  %v723 = vunpack.c.l.b16 %v682
  %v724 = vunpack.c.h.b16 %v682
  %v725 = vunpack.c.l.b16 %v683
  %v726 = vunpack.c.l.b16 %v684
  %v727 = vunpack.c.h.b16 %v684
  %v728 = vunpack.c.l.b16 %v685
  %v729 = vunpack.c.l.b16 %v686
  %v730 = vunpack.c.h.b16 %v686
  %v731 = vunpack.c.l.b16 %v687
  %v732 = vunpack.c.l.b16 %v688
  %v733 = vunpack.c.h.b16 %v688
  %v734 = vunpack.c.l.b16 %v689
  %v735 = vpack.c.b16 %v711, %v708
  %v736 = vpack.c.b16 %v712, %v709
  %v737 = vpack.c.b16 %v713, %v710
  %v738 = vpack.c.b16 %v717, %v714
  %v739 = vpack.c.b16 %v718, %v715
  %v740 = vpack.c.b16 %v719, %v716
  %v741 = vpack.c.b16 %v723, %v720
  %v742 = vpack.c.b16 %v724, %v721
  %v743 = vpack.c.b16 %v725, %v722
  %v744 = vpack.c.b16 %v729, %v726
  %v745 = vpack.c.b16 %v730, %v727
  %v746 = vpack.c.b16 %v731, %v728
  %v747 = vpack.c.b16 %v732, %v732
  %v748 = vpack.c.b16 %v733, %v733
  %v749 = vpack.c.b16 %v734, %v734
  %v761 = vsel %vm256, %v737, 0
  %v764 = vsel %vm256, %v740, 0
  %v767 = vsel %vm256, %v743, 0
  %v770 = vsel %vm256, %v746, 0
  %v773 = vsel %vm256, %v749, 0
  %775 = vmatprep.subr.bf16.mxu0 0
  %776 = vmatpush1.bf16.msra.mxu0 %v227
  %777 = vmatprep.subr.bf16.mxu0 0
  %778 = vmatpush1.bf16.msra.mxu0 %v226
  %779 = vmatprep.subr.bf16.mxu0 0
  %780 = vmatpush1.bf16.msra.mxu0 %v225
  %781 = vmatprep.subr.bf16.mxu0 0
  %782 = vmatpush1.bf16.msra.mxu0 %v224
  %783 = vmatprep.subr.bf16.mxu0 0
  %784 = vmatpush1.bf16.msra.mxu0 %v223
  %785 = vmatprep.subr.bf16.mxu0 0
  %786 = vmatpush1.bf16.msra.mxu0 %v222
  %787 = vmatprep.subr.bf16.mxu0 0
  %788 = vmatpush1.bf16.msra.mxu0 %v221
  %789 = vmatprep.subr.bf16.mxu0 0
  %790 = vmatpush1.bf16.msra.mxu0 %v220
  %791 = vmatprep.subr.bf16.mxu0 0
  %792 = vmatpush2.bf16.msra.mxu0 %v235
  %793 = vmatprep.subr.bf16.mxu0 0
  %794 = vmatpush2.bf16.msra.mxu0 %v234
  %795 = vmatprep.subr.bf16.mxu0 0
  %796 = vmatpush2.bf16.msra.mxu0 %v233
  %797 = vmatprep.subr.bf16.mxu0 0
  %798 = vmatpush2.bf16.msra.mxu0 %v232
  %799 = vmatprep.subr.bf16.mxu0 0
  %800 = vmatpush2.bf16.msra.mxu0 %v231
  %801 = vmatprep.subr.bf16.mxu0 0
  %802 = vmatpush2.bf16.msra.mxu0 %v230
  %803 = vmatprep.subr.bf16.mxu0 0
  %804 = vmatpush2.bf16.msra.mxu0 %v229
  %805 = vmatprep.subr.bf16.mxu0 0
  %806 = vmatpush2.bf16.msra.mxu0 %v228
  %807 = vmatprep.mubr.bf16.mxu0 %v736
  %808 = vmatmul.mubr.bf16.gmra.mxu0 %v735
  %v809 = vpop.f32.mrf.mxu0
  %v810 = vadd.f32 0.0, %v809
  %v811 = vpop.f32.mrf.mxu0
  %v812 = vpop.f32.mrf.mxu0
  %v813 = vadd.f32 0.0, %v812
  %v814 = vpop.f32.mrf.mxu0
  %815 = vmatprep.mubr.bf16.mxu0 %v739
  %816 = vmatmul.mubr.bf16.gmra.mxu0 %v738
  %v817 = vpop.f32.mrf.mxu0
  %v818 = vadd.f32 0.0, %v817
  %v819 = vpop.f32.mrf.mxu0
  %v820 = vpop.f32.mrf.mxu0
  %v821 = vadd.f32 0.0, %v820
  %v822 = vpop.f32.mrf.mxu0
  %823 = vmatprep.mubr.bf16.mxu0 %v742
  %824 = vmatmul.mubr.bf16.gmra.mxu0 %v741
  %v825 = vpop.f32.mrf.mxu0
  %v826 = vadd.f32 0.0, %v825
  %v827 = vpop.f32.mrf.mxu0
  %v828 = vpop.f32.mrf.mxu0
  %v829 = vadd.f32 0.0, %v828
  %v830 = vpop.f32.mrf.mxu0
  %831 = vmatprep.mubr.bf16.mxu0 %v745
  %832 = vmatmul.mubr.bf16.gmra.mxu0 %v744
  %v833 = vpop.f32.mrf.mxu0
  %v834 = vadd.f32 0.0, %v833
  %v835 = vpop.f32.mrf.mxu0
  %v836 = vpop.f32.mrf.mxu0
  %v837 = vadd.f32 0.0, %v836
  %v838 = vpop.f32.mrf.mxu0
  %839 = vmatprep.mubr.bf16.mxu0 %v748
  %840 = vmatmul.mubr.bf16.gmra.mxu0 %v747
  %v841 = vpop.f32.mrf.mxu0
  %v842 = vadd.f32 0.0, %v841
  %v843 = vpop.f32.mrf.mxu0
  %v844 = vpop.f32.mrf.mxu0
  %v845 = vpop.f32.mrf.mxu0
  %846 = vdwg.mxu0
  %847 = vmatprep.subr.bf16.mxu0 0
  %848 = vmatpush1.bf16.msra.mxu0 0
  %849 = vmatprep.subr.bf16.mxu0 0
  %850 = vmatpush1.bf16.msra.mxu0 0
  %851 = vmatprep.subr.bf16.mxu0 0
  %852 = vmatpush1.bf16.msra.mxu0 0
  %853 = vmatprep.subr.bf16.mxu0 0
  %854 = vmatpush1.bf16.msra.mxu0 0
  %855 = vmatprep.subr.bf16.mxu0 0
  %856 = vmatpush1.bf16.msra.mxu0 0
  %857 = vmatprep.subr.bf16.mxu0 0
  %858 = vmatpush1.bf16.msra.mxu0 0
  %859 = vmatprep.subr.bf16.mxu0 0
  %860 = vmatpush1.bf16.msra.mxu0 %v237
  %861 = vmatprep.subr.bf16.mxu0 0
  %862 = vmatpush1.bf16.msra.mxu0 %v236
  %863 = vmatprep.subr.bf16.mxu0 0
  %864 = vmatpush2.bf16.msra.mxu0 0
  %865 = vmatprep.subr.bf16.mxu0 0
  %866 = vmatpush2.bf16.msra.mxu0 0
  %867 = vmatprep.subr.bf16.mxu0 0
  %868 = vmatpush2.bf16.msra.mxu0 0
  %869 = vmatprep.subr.bf16.mxu0 0
  %870 = vmatpush2.bf16.msra.mxu0 0
  %871 = vmatprep.subr.bf16.mxu0 0
  %872 = vmatpush2.bf16.msra.mxu0 0
  %873 = vmatprep.subr.bf16.mxu0 0
  %874 = vmatpush2.bf16.msra.mxu0 0
  %875 = vmatprep.subr.bf16.mxu0 0
  %876 = vmatpush2.bf16.msra.mxu0 0
  %877 = vmatprep.subr.bf16.mxu0 0
  %878 = vmatpush2.bf16.msra.mxu0 0
  %879 = vmatprep.mubr.bf16.mxu0 0
  %880 = vmatmul.mubr.bf16.gmra.mxu0 %v761
  %v881 = vpop.f32.mrf.mxu0
  %v882 = vadd.f32 %v810, %v881
  %v883 = vpop.f32.mrf.mxu0
  %v884 = vpop.f32.mrf.mxu0
  %v885 = vadd.f32 %v813, %v884
  %v886 = vpop.f32.mrf.mxu0
  %887 = vmatprep.mubr.bf16.mxu0 0
  %888 = vmatmul.mubr.bf16.gmra.mxu0 %v764
  %v889 = vpop.f32.mrf.mxu0
  %v890 = vadd.f32 %v818, %v889
  %v891 = vpop.f32.mrf.mxu0
  %v892 = vpop.f32.mrf.mxu0
  %v893 = vadd.f32 %v821, %v892
  %v894 = vpop.f32.mrf.mxu0
  %895 = vmatprep.mubr.bf16.mxu0 0
  %896 = vmatmul.mubr.bf16.gmra.mxu0 %v767
  %v897 = vpop.f32.mrf.mxu0
  %v898 = vadd.f32 %v826, %v897
  %v899 = vpop.f32.mrf.mxu0
  %v900 = vpop.f32.mrf.mxu0
  %v901 = vadd.f32 %v829, %v900
  %v902 = vpop.f32.mrf.mxu0
  %903 = vmatprep.mubr.bf16.mxu0 0
  %904 = vmatmul.mubr.bf16.gmra.mxu0 %v770
  %v905 = vpop.f32.mrf.mxu0
  %v906 = vadd.f32 %v834, %v905
  %v907 = vpop.f32.mrf.mxu0
  %v908 = vpop.f32.mrf.mxu0
  %v909 = vadd.f32 %v837, %v908
  %v910 = vpop.f32.mrf.mxu0
  %911 = vmatprep.mubr.bf16.mxu0 0
  %912 = vmatmul.mubr.bf16.gmra.mxu0 %v773
  %v913 = vpop.f32.mrf.mxu0
  %v914 = vadd.f32 %v842, %v913
  %v915 = vpop.f32.mrf.mxu0
  %v916 = vpop.f32.mrf.mxu0
  %v917 = vpop.f32.mrf.mxu0
  %918 = vdwg.mxu0
  %v919 = vld [vmem:[%s3] sm:$0xff]
  %v920 = vld [vmem:[%s3 + $0x8] sm:$0xf]
  %v921 = vld [vmem:[%s3 + $0xc] sm:$0xff]
  %v922 = vld [vmem:[%s3 + $0x14] sm:$0xf]
  %v923 = vld [vmem:[%s3 + $0x18] sm:$0xff]
  %v924 = vld [vmem:[%s3 + $0x20] sm:$0xf]
  %v925 = vld [vmem:[%s3 + $0x24] sm:$0xff]
  %v926 = vld [vmem:[%s3 + $0x2c] sm:$0xf]
  %v927 = vld [vmem:[%s3 + $0x30] sm:$0xff]
  %v928 = vld [vmem:[%s3 + $0x38] sm:$0xf]
  %v929 = vld [vmem:[%s3 + $0x3c] sm:$0xff]
  %v930 = vld [vmem:[%s3 + $0x44] sm:$0xf]
  %v931 = vld [vmem:[%s3 + $0x48] sm:$0xff]
  %v932 = vld [vmem:[%s3 + $0x50] sm:$0xf]
  %v933 = vld [vmem:[%s3 + $0x54] sm:$0xff]
  %v934 = vld [vmem:[%s3 + $0x5c] sm:$0xf]
  %v935 = vld [vmem:[%s3 + $0x60] sm:$0xff]
  %v936 = vld [vmem:[%s3 + $0x68] sm:$0xf]
  %v955 = vunpack.c.l.b16 %v919
  %v956 = vunpack.c.h.b16 %v919
  %v957 = vunpack.c.l.b16 %v920
  %v958 = vunpack.c.l.b16 %v921
  %v959 = vunpack.c.h.b16 %v921
  %v960 = vunpack.c.l.b16 %v922
  %v961 = vunpack.c.l.b16 %v923
  %v962 = vunpack.c.h.b16 %v923
  %v963 = vunpack.c.l.b16 %v924
  %v964 = vunpack.c.l.b16 %v925
  %v965 = vunpack.c.h.b16 %v925
  %v966 = vunpack.c.l.b16 %v926
  %v967 = vunpack.c.l.b16 %v927
  %v968 = vunpack.c.h.b16 %v927
  %v969 = vunpack.c.l.b16 %v928
  %v970 = vunpack.c.l.b16 %v929
  %v971 = vunpack.c.h.b16 %v929
  %v972 = vunpack.c.l.b16 %v930
  %v973 = vunpack.c.l.b16 %v931
  %v974 = vunpack.c.h.b16 %v931
  %v975 = vunpack.c.l.b16 %v932
  %v976 = vunpack.c.l.b16 %v933
  %v977 = vunpack.c.h.b16 %v933
  %v978 = vunpack.c.l.b16 %v934
  %v979 = vunpack.c.l.b16 %v935
  %v980 = vunpack.c.h.b16 %v935
  %v981 = vunpack.c.l.b16 %v936
  %v982 = vpack.c.b16 %v958, %v955
  %v983 = vpack.c.b16 %v959, %v956
  %v984 = vpack.c.b16 %v960, %v957
  %v985 = vpack.c.b16 %v964, %v961
  %v986 = vpack.c.b16 %v965, %v962
  %v987 = vpack.c.b16 %v966, %v963
  %v988 = vpack.c.b16 %v970, %v967
  %v989 = vpack.c.b16 %v971, %v968
  %v990 = vpack.c.b16 %v972, %v969
  %v991 = vpack.c.b16 %v976, %v973
  %v992 = vpack.c.b16 %v977, %v974
  %v993 = vpack.c.b16 %v978, %v975
  %v994 = vpack.c.b16 %v979, %v979
  %v995 = vpack.c.b16 %v980, %v980
  %v996 = vpack.c.b16 %v981, %v981
  %v1008 = vsel %vm256, %v984, 0
  %v1011 = vsel %vm256, %v987, 0
  %v1014 = vsel %vm256, %v990, 0
  %v1017 = vsel %vm256, %v993, 0
  %v1020 = vsel %vm256, %v996, 0
  %1022 = vmatprep.subr.bf16.mxu0 0
  %1023 = vmatpush1.bf16.msra.mxu0 %v227
  %1024 = vmatprep.subr.bf16.mxu0 0
  %1025 = vmatpush1.bf16.msra.mxu0 %v226
  %1026 = vmatprep.subr.bf16.mxu0 0
  %1027 = vmatpush1.bf16.msra.mxu0 %v225
  %1028 = vmatprep.subr.bf16.mxu0 0
  %1029 = vmatpush1.bf16.msra.mxu0 %v224
  %1030 = vmatprep.subr.bf16.mxu0 0
  %1031 = vmatpush1.bf16.msra.mxu0 %v223
  %1032 = vmatprep.subr.bf16.mxu0 0
  %1033 = vmatpush1.bf16.msra.mxu0 %v222
  %1034 = vmatprep.subr.bf16.mxu0 0
  %1035 = vmatpush1.bf16.msra.mxu0 %v221
  %1036 = vmatprep.subr.bf16.mxu0 0
  %1037 = vmatpush1.bf16.msra.mxu0 %v220
  %1038 = vmatprep.subr.bf16.mxu0 0
  %1039 = vmatpush2.bf16.msra.mxu0 %v235
  %1040 = vmatprep.subr.bf16.mxu0 0
  %1041 = vmatpush2.bf16.msra.mxu0 %v234
  %1042 = vmatprep.subr.bf16.mxu0 0
  %1043 = vmatpush2.bf16.msra.mxu0 %v233
  %1044 = vmatprep.subr.bf16.mxu0 0
  %1045 = vmatpush2.bf16.msra.mxu0 %v232
  %1046 = vmatprep.subr.bf16.mxu0 0
  %1047 = vmatpush2.bf16.msra.mxu0 %v231
  %1048 = vmatprep.subr.bf16.mxu0 0
  %1049 = vmatpush2.bf16.msra.mxu0 %v230
  %1050 = vmatprep.subr.bf16.mxu0 0
  %1051 = vmatpush2.bf16.msra.mxu0 %v229
  %1052 = vmatprep.subr.bf16.mxu0 0
  %1053 = vmatpush2.bf16.msra.mxu0 %v228
  %1054 = vmatprep.mubr.bf16.mxu0 %v983
  %1055 = vmatmul.mubr.bf16.gmra.mxu0 %v982
  %v1056 = vpop.f32.mrf.mxu0
  %v1057 = vadd.f32 0.0, %v1056
  %v1058 = vpop.f32.mrf.mxu0
  %v1059 = vpop.f32.mrf.mxu0
  %v1060 = vadd.f32 0.0, %v1059
  %v1061 = vpop.f32.mrf.mxu0
  %1062 = vmatprep.mubr.bf16.mxu0 %v986
  %1063 = vmatmul.mubr.bf16.gmra.mxu0 %v985
  %v1064 = vpop.f32.mrf.mxu0
  %v1065 = vadd.f32 0.0, %v1064
  %v1066 = vpop.f32.mrf.mxu0
  %v1067 = vpop.f32.mrf.mxu0
  %v1068 = vadd.f32 0.0, %v1067
  %v1069 = vpop.f32.mrf.mxu0
  %1070 = vmatprep.mubr.bf16.mxu0 %v989
  %1071 = vmatmul.mubr.bf16.gmra.mxu0 %v988
  %v1072 = vpop.f32.mrf.mxu0
  %v1073 = vadd.f32 0.0, %v1072
  %v1074 = vpop.f32.mrf.mxu0
  %v1075 = vpop.f32.mrf.mxu0
  %v1076 = vadd.f32 0.0, %v1075
  %v1077 = vpop.f32.mrf.mxu0
  %1078 = vmatprep.mubr.bf16.mxu0 %v992
  %1079 = vmatmul.mubr.bf16.gmra.mxu0 %v991
  %v1080 = vpop.f32.mrf.mxu0
  %v1081 = vadd.f32 0.0, %v1080
  %v1082 = vpop.f32.mrf.mxu0
  %v1083 = vpop.f32.mrf.mxu0
  %v1084 = vadd.f32 0.0, %v1083
  %v1085 = vpop.f32.mrf.mxu0
  %1086 = vmatprep.mubr.bf16.mxu0 %v995
  %1087 = vmatmul.mubr.bf16.gmra.mxu0 %v994
  %v1088 = vpop.f32.mrf.mxu0
  %v1089 = vadd.f32 0.0, %v1088
  %v1090 = vpop.f32.mrf.mxu0
  %v1091 = vpop.f32.mrf.mxu0
  %v1092 = vpop.f32.mrf.mxu0
  %1093 = vdwg.mxu0
  %1094 = vmatprep.subr.bf16.mxu0 0
  %1095 = vmatpush1.bf16.msra.mxu0 0
  %1096 = vmatprep.subr.bf16.mxu0 0
  %1097 = vmatpush1.bf16.msra.mxu0 0
  %1098 = vmatprep.subr.bf16.mxu0 0
  %1099 = vmatpush1.bf16.msra.mxu0 0
  %1100 = vmatprep.subr.bf16.mxu0 0
  %1101 = vmatpush1.bf16.msra.mxu0 0
  %1102 = vmatprep.subr.bf16.mxu0 0
  %1103 = vmatpush1.bf16.msra.mxu0 0
  %1104 = vmatprep.subr.bf16.mxu0 0
  %1105 = vmatpush1.bf16.msra.mxu0 0
  %1106 = vmatprep.subr.bf16.mxu0 0
  %1107 = vmatpush1.bf16.msra.mxu0 %v237
  %1108 = vmatprep.subr.bf16.mxu0 0
  %1109 = vmatpush1.bf16.msra.mxu0 %v236
  %1110 = vmatprep.subr.bf16.mxu0 0
  %1111 = vmatpush2.bf16.msra.mxu0 0
  %1112 = vmatprep.subr.bf16.mxu0 0
  %1113 = vmatpush2.bf16.msra.mxu0 0
  %1114 = vmatprep.subr.bf16.mxu0 0
  %1115 = vmatpush2.bf16.msra.mxu0 0
  %1116 = vmatprep.subr.bf16.mxu0 0
  %1117 = vmatpush2.bf16.msra.mxu0 0
  %1118 = vmatprep.subr.bf16.mxu0 0
  %1119 = vmatpush2.bf16.msra.mxu0 0
  %1120 = vmatprep.subr.bf16.mxu0 0
  %1121 = vmatpush2.bf16.msra.mxu0 0
  %1122 = vmatprep.subr.bf16.mxu0 0
  %1123 = vmatpush2.bf16.msra.mxu0 0
  %1124 = vmatprep.subr.bf16.mxu0 0
  %1125 = vmatpush2.bf16.msra.mxu0 0
  %1126 = vmatprep.mubr.bf16.mxu0 0
  %1127 = vmatmul.mubr.bf16.gmra.mxu0 %v1008
  %v1128 = vpop.f32.mrf.mxu0
  %v1129 = vadd.f32 %v1057, %v1128
  %v1130 = vpop.f32.mrf.mxu0
  %v1131 = vpop.f32.mrf.mxu0
  %v1132 = vadd.f32 %v1060, %v1131
  %v1133 = vpop.f32.mrf.mxu0
  %1134 = vmatprep.mubr.bf16.mxu0 0
  %1135 = vmatmul.mubr.bf16.gmra.mxu0 %v1011
  %v1136 = vpop.f32.mrf.mxu0
  %v1137 = vadd.f32 %v1065, %v1136
  %v1138 = vpop.f32.mrf.mxu0
  %v1139 = vpop.f32.mrf.mxu0
  %v1140 = vadd.f32 %v1068, %v1139
  %v1141 = vpop.f32.mrf.mxu0
  %1142 = vmatprep.mubr.bf16.mxu0 0
  %1143 = vmatmul.mubr.bf16.gmra.mxu0 %v1014
  %v1144 = vpop.f32.mrf.mxu0
  %v1145 = vadd.f32 %v1073, %v1144
  %v1146 = vpop.f32.mrf.mxu0
  %v1147 = vpop.f32.mrf.mxu0
  %v1148 = vadd.f32 %v1076, %v1147
  %v1149 = vpop.f32.mrf.mxu0
  %1150 = vmatprep.mubr.bf16.mxu0 0
  %1151 = vmatmul.mubr.bf16.gmra.mxu0 %v1017
  %v1152 = vpop.f32.mrf.mxu0
  %v1153 = vadd.f32 %v1081, %v1152
  %v1154 = vpop.f32.mrf.mxu0
  %v1155 = vpop.f32.mrf.mxu0
  %v1156 = vadd.f32 %v1084, %v1155
  %v1157 = vpop.f32.mrf.mxu0
  %1158 = vmatprep.mubr.bf16.mxu0 0
  %1159 = vmatmul.mubr.bf16.gmra.mxu0 %v1020
  %v1160 = vpop.f32.mrf.mxu0
  %v1161 = vadd.f32 %v1089, %v1160
  %v1162 = vpop.f32.mrf.mxu0
  %v1163 = vpop.f32.mrf.mxu0
  %v1164 = vpop.f32.mrf.mxu0
  %1165 = vdwg.mxu0
  %v1166 = vmax.f32 %v882, %v1129
  %v1167 = vmax.f32 %v885, %v1132
  %v1168 = vmax.f32 %v890, %v1137
  %v1169 = vmax.f32 %v893, %v1140
  %v1170 = vmax.f32 %v898, %v1145
  %v1171 = vmax.f32 %v901, %v1148
  %v1172 = vmax.f32 %v906, %v1153
  %v1173 = vmax.f32 %v909, %v1156
  %v1174 = vmax.f32 %v914, %v1161
  %v1175 = vmax.f32 %v663, %v1166
  %v1176 = vmax.f32 %v664, %v1167
  %v1177 = vmax.f32 %v665, %v1168
  %v1178 = vmax.f32 %v666, %v1169
  %v1179 = vmax.f32 %v667, %v1170
  %v1180 = vmax.f32 %v668, %v1171
  %v1181 = vmax.f32 %v669, %v1172
  %v1182 = vmax.f32 %v670, %v1173
  %v1183 = vmax.f32 %v671, %v1174
  %v1184 = vld [vmem:[%s5] sm:$0x1]
  %v1186 = vlaneseq
  %v1187 = vshrl.u32 %v1186, 7
  %v1188 = vsub.s32 0, %v1187
  %v1189 = vrot.slane %v1184, %v1188
  %v1191 = vadd.f32 %v1175, %v1189
  %v1192 = vadd.f32 %v1176, %v1189
  %v1193 = vadd.f32 %v1177, %v1189
  %v1194 = vadd.f32 %v1178, %v1189
  %v1195 = vadd.f32 %v1179, %v1189
  %v1196 = vadd.f32 %v1180, %v1189
  %v1197 = vadd.f32 %v1181, %v1189
  %v1198 = vadd.f32 %v1182, %v1189
  %v1199 = vadd.f32 %v1183, %v1189
  %v1200 = vmax.f32 %v1191, 0.0
  %v1201 = vmax.f32 %v1192, 0.0
  %v1202 = vmax.f32 %v1193, 0.0
  %v1203 = vmax.f32 %v1194, 0.0
  %v1204 = vmax.f32 %v1195, 0.0
  %v1205 = vmax.f32 %v1196, 0.0
  %v1206 = vmax.f32 %v1197, 0.0
  %v1207 = vmax.f32 %v1198, 0.0
  %v1208 = vmax.f32 %v1199, 0.0
  %v1209 = vpack.c.bf16 %v1201, %v1200
  %v1210 = vpack.c.bf16 %v1203, %v1202
  %v1211 = vpack.c.bf16 %v1205, %v1204
  %v1212 = vpack.c.bf16 %v1207, %v1206
  %v1213 = vpack.c.bf16 %v1208, %v1208
  %v1219 = vunpack.c.l.b16 %v1209
  %v1220 = vunpack.c.h.b16 %v1209
  %v1221 = vunpack.c.l.b16 %v1210
  %v1222 = vunpack.c.h.b16 %v1210
  %v1223 = vunpack.c.l.b16 %v1211
  %v1224 = vunpack.c.h.b16 %v1211
  %v1225 = vunpack.c.l.b16 %v1212
  %v1226 = vunpack.c.h.b16 %v1212
  %v1227 = vunpack.c.l.b16 %v1213
  %v1228 = vpack.c.b16 %v1219, %v1219
  %v1229 = vpack.c.b16 %v1220, %v1220
  %v1230 = vpack.c.b16 %v1221, %v1221
  %v1231 = vpack.c.b16 %v1222, %v1222
  %v1232 = vpack.c.b16 %v1223, %v1223
  %v1233 = vpack.c.b16 %v1224, %v1224
  %v1234 = vpack.c.b16 %v1225, %v1225
  %v1235 = vpack.c.b16 %v1226, %v1226
  %v1236 = vpack.c.b16 %v1227, %v1227
  %vm1246 = vcmask 519168
  %1247 = vst.msk [vmem:[%s6] sm:$0xf] %vm1246, %v1228
  %1248 = vst.msk [vmem:[%s6 + $0x4] sm:$0xf] %vm1246, %v1229
  %1249 = vst.msk [vmem:[%s6 + $0x8] sm:$0xf] %vm1246, %v1230
  %1250 = vst.msk [vmem:[%s6 + $0xc] sm:$0xf] %vm1246, %v1231
  %1251 = vst.msk [vmem:[%s6 + $0x10] sm:$0xf] %vm1246, %v1232
  %1252 = vst.msk [vmem:[%s6 + $0x14] sm:$0xf] %vm1246, %v1233
  %1253 = vst.msk [vmem:[%s6 + $0x18] sm:$0xf] %vm1246, %v1234
  %1254 = vst.msk [vmem:[%s6 + $0x1c] sm:$0xf] %vm1246, %v1235
  %1255 = vst.msk [vmem:[%s6 + $0x20] sm:$0xf] %vm1246, %v1236
  // Predicated region
  $region26: #{net_forward.6} parent=0 // pred_check
    _
  $region27: #{net_forward.6} parent=0 // pred_check_branch
    %1257 = sbr.rel (0) target = $region29
  $region28: #{net_forward.6} parent=0 // pred_region
    _
  $region29: #{net_forward.6} parent=0 // pred_fallthru
    _
  // Predicated region
  $region30: #{net_forward.6} parent=0 // pred_check
    _
  $region31: #{net_forward.6} parent=0 // pred_check_branch
    %1259 = sbr.rel (0) target = $region33
  $region32: #{net_forward.6} parent=0 // pred_region
    _
  $region33: #{net_forward.6} parent=0 // pred_fallthru
    _

// kernel: net_forward.7
$region0: #{net_forward.7}
  #allocation0 [shape = 'u32[]', space=smem, size = 0x4, offset = 0x4, fixed_abs, tag = 'smem constant byte address 0x4 - core index']
  #allocation1 [shape = 'u32[144,128]{1,0:T(1,128)}', space=vmem, size = 0x12000, scoped, tag = 'internal scratch']
  %s0 = inlined_call_operand.vmem [shape: bf16[8,576], index: 0, kind: input, shape index: {}]
  %s1 = inlined_call_operand.vmem [shape: bf16[576,512], index: 1, kind: input, shape index: {}]
  %s2 = inlined_call_operand.vmem [shape: f32[1,512], index: 2, kind: input, shape index: {}]
  %s3 = inlined_call_operand.vmem [shape: bf16[512,128], index: 3, kind: input, shape index: {}]
  %s4 = inlined_call_operand.vmem [shape: f32[1,128], index: 4, kind: input, shape index: {}]
  %s5 = inlined_call_operand.hbm [shape: f32[8,128], index: 5, kind: output, shape index: {}]
  %s6 = sld [smem:[#allocation0]]
  $region30: #{net_forward.7} parent=0
    _
  %s8 = ssub.s32 1, %s6
  %s9 = scalar_select 0, %s8, %s6
  $region1: #{net_forward.7} parent=0
    #allocation2 [shape = 'u8[4096]{0}', space=vmem, size = 0x1000, scoped, tag = 'output window, operand 0, single buffered']
    #allocation3 [shape = 's32[1]{0}', space=sflag, size = 0x4, scoped, tag = 'scoped memory for net_forward.7']
    %10 = vsyncpa [#allocation3], 0
    // Predicated region
    $region2: #{net_forward.7} parent=1 // pred_check
      _
    $region3: #{net_forward.7} parent=1 // pred_check_branch
      %12 = sbr.rel (0) target = $region5
    $region4: #{net_forward.7} parent=1 // pred_region
      _
    $region5: #{net_forward.7} parent=1 // pred_fallthru
      _
    // Predicated region
    $region6: #{net_forward.7} parent=1 // pred_check
      _
    $region7: #{net_forward.7} parent=1 // pred_check_branch
      %14 = sbr.rel (0) target = $region9
    $region8: #{net_forward.7} parent=1 // pred_region
      _
    $region9: #{net_forward.7} parent=1 // pred_fallthru
      _
    // Predicated region
    $region10: #{net_forward.7} parent=1 // pred_check
      _
    $region11: #{net_forward.7} parent=1 // pred_check_branch
      %16 = sbr.rel (0) target = $region13
    $region12: #{net_forward.7} parent=1 // pred_region
      _
    $region13: #{net_forward.7} parent=1 // pred_fallthru
      _
    // Predicated region
    $region14: #{net_forward.7} parent=1 // pred_check
      _
    $region15: #{net_forward.7} parent=1 // pred_check_branch
      %18 = sbr.rel (0) target = $region17
    $region16: #{net_forward.7} parent=1 // pred_region
      _
    $region17: #{net_forward.7} parent=1 // pred_fallthru
      _
    // Predicated region
    $region18: #{net_forward.7} parent=1 // pred_check
      _
    $region19: #{net_forward.7} parent=1 // pred_check_branch
      %20 = sbr.rel (0) target = $region21
    $region20: #{net_forward.7} parent=1 // pred_region
      _
    $region21: #{net_forward.7} parent=1 // pred_fallthru
      _
    %v22 = vld [vmem:[%s0] sm:$0xff]
    %v23 = vld [vmem:[%s0 + $0x8] sm:$0xff]
    %v24 = vld [vmem:[%s0 + $0x10] sm:$0xf]
    %v25 = vld [vmem:[%s1] sm:$0xff]
    %v26 = vld [vmem:[%s1 + $0x8] sm:$0xff]
    %v27 = vld [vmem:[%s1 + $0x10] sm:$0xff]
    %v28 = vld [vmem:[%s1 + $0x18] sm:$0xff]
    %v29 = vld [vmem:[%s1 + $0x20] sm:$0xff]
    %v30 = vld [vmem:[%s1 + $0x28] sm:$0xff]
    %v31 = vld [vmem:[%s1 + $0x30] sm:$0xff]
    %v32 = vld [vmem:[%s1 + $0x38] sm:$0xff]
    %v33 = vld [vmem:[%s1 + $0x40] sm:$0xff]
    %v34 = vld [vmem:[%s1 + $0x48] sm:$0xff]
    %v35 = vld [vmem:[%s1 + $0x50] sm:$0xff]
    %v36 = vld [vmem:[%s1 + $0x58] sm:$0xff]
    %v37 = vld [vmem:[%s1 + $0x60] sm:$0xff]
    %v38 = vld [vmem:[%s1 + $0x68] sm:$0xff]
    %v39 = vld [vmem:[%s1 + $0x70] sm:$0xff]
    %v40 = vld [vmem:[%s1 + $0x78] sm:$0xff]
    %v41 = vld [vmem:[%s1 + $0x80] sm:$0xff]
    %v42 = vld [vmem:[%s1 + $0x88] sm:$0xff]
    %v43 = vld [vmem:[%s1 + $0x90] sm:$0xff]
    %v44 = vld [vmem:[%s1 + $0x98] sm:$0xff]
    %v45 = vld [vmem:[%s1 + $0xa0] sm:$0xff]
    %v46 = vld [vmem:[%s1 + $0xa8] sm:$0xff]
    %v47 = vld [vmem:[%s1 + $0xb0] sm:$0xff]
    %v48 = vld [vmem:[%s1 + $0xb8] sm:$0xff]
    %v49 = vld [vmem:[%s1 + $0xc0] sm:$0xff]
    %v50 = vld [vmem:[%s1 + $0xc8] sm:$0xff]
    %v51 = vld [vmem:[%s1 + $0xd0] sm:$0xff]
    %v52 = vld [vmem:[%s1 + $0xd8] sm:$0xff]
    %v53 = vld [vmem:[%s1 + $0xe0] sm:$0xff]
    %v54 = vld [vmem:[%s1 + $0xe8] sm:$0xff]
    %v55 = vld [vmem:[%s1 + $0xf0] sm:$0xff]
    %v56 = vld [vmem:[%s1 + $0xf8] sm:$0xff]
    %v57 = vld [vmem:[%s1 + $0x100] sm:$0xff]
    %v58 = vld [vmem:[%s1 + $0x108] sm:$0xff]
    %v59 = vld [vmem:[%s1 + $0x110] sm:$0xff]
    %v60 = vld [vmem:[%s1 + $0x118] sm:$0xff]
    %v61 = vld [vmem:[%s1 + $0x120] sm:$0xff]
    %v62 = vld [vmem:[%s1 + $0x128] sm:$0xff]
    %v63 = vld [vmem:[%s1 + $0x130] sm:$0xff]
    %v64 = vld [vmem:[%s1 + $0x138] sm:$0xff]
    %v65 = vld [vmem:[%s1 + $0x140] sm:$0xff]
    %v66 = vld [vmem:[%s1 + $0x148] sm:$0xff]
    %v67 = vld [vmem:[%s1 + $0x150] sm:$0xff]
    %v68 = vld [vmem:[%s1 + $0x158] sm:$0xff]
    %v69 = vld [vmem:[%s1 + $0x160] sm:$0xff]
    %v70 = vld [vmem:[%s1 + $0x168] sm:$0xff]
    %v71 = vld [vmem:[%s1 + $0x170] sm:$0xff]
    %v72 = vld [vmem:[%s1 + $0x178] sm:$0xff]
    %v73 = vld [vmem:[%s1 + $0x180] sm:$0xff]
    %v74 = vld [vmem:[%s1 + $0x188] sm:$0xff]
    %v75 = vld [vmem:[%s1 + $0x190] sm:$0xff]
    %v76 = vld [vmem:[%s1 + $0x198] sm:$0xff]
    %v77 = vld [vmem:[%s1 + $0x1a0] sm:$0xff]
    %v78 = vld [vmem:[%s1 + $0x1a8] sm:$0xff]
    %v79 = vld [vmem:[%s1 + $0x1b0] sm:$0xff]
    %v80 = vld [vmem:[%s1 + $0x1b8] sm:$0xff]
    %v81 = vld [vmem:[%s1 + $0x1c0] sm:$0xff]
    %v82 = vld [vmem:[%s1 + $0x1c8] sm:$0xff]
    %v83 = vld [vmem:[%s1 + $0x1d0] sm:$0xff]
    %v84 = vld [vmem:[%s1 + $0x1d8] sm:$0xff]
    %v85 = vld [vmem:[%s1 + $0x1e0] sm:$0xff]
    %v86 = vld [vmem:[%s1 + $0x1e8] sm:$0xff]
    %v87 = vld [vmem:[%s1 + $0x1f0] sm:$0xff]
    %v88 = vld [vmem:[%s1 + $0x1f8] sm:$0xff]
    %v89 = vld [vmem:[%s1 + $0x200] sm:$0xff]
    %v90 = vld [vmem:[%s1 + $0x208] sm:$0xff]
    %v91 = vld [vmem:[%s1 + $0x210] sm:$0xff]
    %v92 = vld [vmem:[%s1 + $0x218] sm:$0xff]
    %v93 = vld [vmem:[%s1 + $0x220] sm:$0xff]
    %v94 = vld [vmem:[%s1 + $0x228] sm:$0xff]
    %v95 = vld [vmem:[%s1 + $0x230] sm:$0xff]
    %v96 = vld [vmem:[%s1 + $0x238] sm:$0xff]
    %v97 = vld [vmem:[%s1 + $0x240] sm:$0xff]
    %v98 = vld [vmem:[%s1 + $0x248] sm:$0xff]
    %v99 = vld [vmem:[%s1 + $0x250] sm:$0xff]
    %v100 = vld [vmem:[%s1 + $0x258] sm:$0xff]
    %v101 = vld [vmem:[%s1 + $0x260] sm:$0xff]
    %v102 = vld [vmem:[%s1 + $0x268] sm:$0xff]
    %v103 = vld [vmem:[%s1 + $0x270] sm:$0xff]
    %v104 = vld [vmem:[%s1 + $0x278] sm:$0xff]
    %v105 = vld [vmem:[%s1 + $0x280] sm:$0xff]
    %v106 = vld [vmem:[%s1 + $0x288] sm:$0xff]
    %v107 = vld [vmem:[%s1 + $0x290] sm:$0xff]
    %v108 = vld [vmem:[%s1 + $0x298] sm:$0xff]
    %v109 = vld [vmem:[%s1 + $0x2a0] sm:$0xff]
    %v110 = vld [vmem:[%s1 + $0x2a8] sm:$0xff]
    %v111 = vld [vmem:[%s1 + $0x2b0] sm:$0xff]
    %v112 = vld [vmem:[%s1 + $0x2b8] sm:$0xff]
    %v113 = vld [vmem:[%s1 + $0x2c0] sm:$0xff]
    %v114 = vld [vmem:[%s1 + $0x2c8] sm:$0xff]
    %v115 = vld [vmem:[%s1 + $0x2d0] sm:$0xff]
    %v116 = vld [vmem:[%s1 + $0x2d8] sm:$0xff]
    %v117 = vld [vmem:[%s1 + $0x2e0] sm:$0xff]
    %v118 = vld [vmem:[%s1 + $0x2e8] sm:$0xff]
    %v119 = vld [vmem:[%s1 + $0x2f0] sm:$0xff]
    %v120 = vld [vmem:[%s1 + $0x2f8] sm:$0xff]
    %v121 = vld [vmem:[%s1 + $0x300] sm:$0xff]
    %v122 = vld [vmem:[%s1 + $0x308] sm:$0xff]
    %v123 = vld [vmem:[%s1 + $0x310] sm:$0xff]
    %v124 = vld [vmem:[%s1 + $0x318] sm:$0xff]
    %v125 = vld [vmem:[%s1 + $0x320] sm:$0xff]
    %v126 = vld [vmem:[%s1 + $0x328] sm:$0xff]
    %v127 = vld [vmem:[%s1 + $0x330] sm:$0xff]
    %v128 = vld [vmem:[%s1 + $0x338] sm:$0xff]
    %v129 = vld [vmem:[%s1 + $0x340] sm:$0xff]
    %v130 = vld [vmem:[%s1 + $0x348] sm:$0xff]
    %v131 = vld [vmem:[%s1 + $0x350] sm:$0xff]
    %v132 = vld [vmem:[%s1 + $0x358] sm:$0xff]
    %v133 = vld [vmem:[%s1 + $0x360] sm:$0xff]
    %v134 = vld [vmem:[%s1 + $0x368] sm:$0xff]
    %v135 = vld [vmem:[%s1 + $0x370] sm:$0xff]
    %v136 = vld [vmem:[%s1 + $0x378] sm:$0xff]
    %v137 = vld [vmem:[%s1 + $0x380] sm:$0xff]
    %v138 = vld [vmem:[%s1 + $0x388] sm:$0xff]
    %v139 = vld [vmem:[%s1 + $0x390] sm:$0xff]
    %v140 = vld [vmem:[%s1 + $0x398] sm:$0xff]
    %v141 = vld [vmem:[%s1 + $0x3a0] sm:$0xff]
    %v142 = vld [vmem:[%s1 + $0x3a8] sm:$0xff]
    %v143 = vld [vmem:[%s1 + $0x3b0] sm:$0xff]
    %v144 = vld [vmem:[%s1 + $0x3b8] sm:$0xff]
    %v145 = vld [vmem:[%s1 + $0x3c0] sm:$0xff]
    %v146 = vld [vmem:[%s1 + $0x3c8] sm:$0xff]
    %v147 = vld [vmem:[%s1 + $0x3d0] sm:$0xff]
    %v148 = vld [vmem:[%s1 + $0x3d8] sm:$0xff]
    %v149 = vld [vmem:[%s1 + $0x3e0] sm:$0xff]
    %v150 = vld [vmem:[%s1 + $0x3e8] sm:$0xff]
    %v151 = vld [vmem:[%s1 + $0x3f0] sm:$0xff]
    %v152 = vld [vmem:[%s1 + $0x3f8] sm:$0xff]
    %v153 = vld [vmem:[%s1 + $0x400] sm:$0xff]
    %v154 = vld [vmem:[%s1 + $0x408] sm:$0xff]
    %v155 = vld [vmem:[%s1 + $0x410] sm:$0xff]
    %v156 = vld [vmem:[%s1 + $0x418] sm:$0xff]
    %v157 = vld [vmem:[%s1 + $0x420] sm:$0xff]
    %v158 = vld [vmem:[%s1 + $0x428] sm:$0xff]
    %v159 = vld [vmem:[%s1 + $0x430] sm:$0xff]
    %v160 = vld [vmem:[%s1 + $0x438] sm:$0xff]
    %v161 = vld [vmem:[%s1 + $0x440] sm:$0xff]
    %v162 = vld [vmem:[%s1 + $0x448] sm:$0xff]
    %v163 = vld [vmem:[%s1 + $0x450] sm:$0xff]
    %v164 = vld [vmem:[%s1 + $0x458] sm:$0xff]
    %v165 = vld [vmem:[%s1 + $0x460] sm:$0xff]
    %v166 = vld [vmem:[%s1 + $0x468] sm:$0xff]
    %v167 = vld [vmem:[%s1 + $0x470] sm:$0xff]
    %v168 = vld [vmem:[%s1 + $0x478] sm:$0xff]
    %v169 = vld [vmem:[%s2] sm:$0xf]
    %v171 = vlaneseq
    %v172 = vshrl.u32 %v171, 7
    %v173 = vsub.s32 0, %v172
    %v174 = vrot.slane %v169, %v173
    %v175 = vlaneseq
    %v176 = vshrl.u32 %v175, 7
    %v177 = vsub.s32 1, %v176
    %v178 = vrot.slane %v169, %v177
    %v179 = vlaneseq
    %v180 = vshrl.u32 %v179, 7
    %v181 = vsub.s32 2, %v180
    %v182 = vrot.slane %v169, %v181
    %v183 = vlaneseq
    %v184 = vshrl.u32 %v183, 7
    %v185 = vsub.s32 3, %v184
    %v186 = vrot.slane %v169, %v185
    %v194 = vunpack.c.l.b16 %v22
    %v195 = vunpack.c.h.b16 %v22
    %v196 = vunpack.c.l.b16 %v23
    %v197 = vunpack.c.h.b16 %v23
    %v198 = vunpack.c.l.b16 %v24
    %v199 = vpack.c.b16 %v194, %v194
    %v200 = vpack.c.b16 %v195, %v195
    %v201 = vpack.c.b16 %v196, %v196
    %v202 = vpack.c.b16 %v197, %v197
    %v203 = vpack.c.b16 %v198, %v198
    %v352 = vunpack.c.l.b16 %v25
    %v353 = vunpack.c.h.b16 %v25
    %v354 = vunpack.c.l.b16 %v26
    %v355 = vunpack.c.h.b16 %v26
    %v356 = vunpack.c.l.b16 %v27
    %v357 = vunpack.c.h.b16 %v27
    %v358 = vunpack.c.l.b16 %v28
    %v359 = vunpack.c.h.b16 %v28
    %v360 = vunpack.c.l.b16 %v29
    %v361 = vunpack.c.h.b16 %v29
    %v362 = vunpack.c.l.b16 %v30
    %v363 = vunpack.c.h.b16 %v30
    %v364 = vunpack.c.l.b16 %v31
    %v365 = vunpack.c.h.b16 %v31
    %v366 = vunpack.c.l.b16 %v32
    %v367 = vunpack.c.h.b16 %v32
    %v368 = vunpack.c.l.b16 %v33
    %v369 = vunpack.c.h.b16 %v33
    %v370 = vunpack.c.l.b16 %v34
    %v371 = vunpack.c.h.b16 %v34
    %v372 = vunpack.c.l.b16 %v35
    %v373 = vunpack.c.h.b16 %v35
    %v374 = vunpack.c.l.b16 %v36
    %v375 = vunpack.c.h.b16 %v36
    %v376 = vunpack.c.l.b16 %v37
    %v377 = vunpack.c.h.b16 %v37
    %v378 = vunpack.c.l.b16 %v38
    %v379 = vunpack.c.h.b16 %v38
    %v380 = vunpack.c.l.b16 %v39
    %v381 = vunpack.c.h.b16 %v39
    %v382 = vunpack.c.l.b16 %v40
    %v383 = vunpack.c.h.b16 %v40
    %v384 = vunpack.c.l.b16 %v41
    %v385 = vunpack.c.h.b16 %v41
    %v386 = vunpack.c.l.b16 %v42
    %v387 = vunpack.c.h.b16 %v42
    %v388 = vunpack.c.l.b16 %v43
    %v389 = vunpack.c.h.b16 %v43
    %v390 = vunpack.c.l.b16 %v44
    %v391 = vunpack.c.h.b16 %v44
    %v392 = vunpack.c.l.b16 %v45
    %v393 = vunpack.c.h.b16 %v45
    %v394 = vunpack.c.l.b16 %v46
    %v395 = vunpack.c.h.b16 %v46
    %v396 = vunpack.c.l.b16 %v47
    %v397 = vunpack.c.h.b16 %v47
    %v398 = vunpack.c.l.b16 %v48
    %v399 = vunpack.c.h.b16 %v48
    %v400 = vunpack.c.l.b16 %v49
    %v401 = vunpack.c.h.b16 %v49
    %v402 = vunpack.c.l.b16 %v50
    %v403 = vunpack.c.h.b16 %v50
    %v404 = vunpack.c.l.b16 %v51
    %v405 = vunpack.c.h.b16 %v51
    %v406 = vunpack.c.l.b16 %v52
    %v407 = vunpack.c.h.b16 %v52
    %v408 = vunpack.c.l.b16 %v53
    %v409 = vunpack.c.h.b16 %v53
    %v410 = vunpack.c.l.b16 %v54
    %v411 = vunpack.c.h.b16 %v54
    %v412 = vunpack.c.l.b16 %v55
    %v413 = vunpack.c.h.b16 %v55
    %v414 = vunpack.c.l.b16 %v56
    %v415 = vunpack.c.h.b16 %v56
    %v416 = vunpack.c.l.b16 %v57
    %v417 = vunpack.c.h.b16 %v57
    %v418 = vunpack.c.l.b16 %v58
    %v419 = vunpack.c.h.b16 %v58
    %v420 = vunpack.c.l.b16 %v59
    %v421 = vunpack.c.h.b16 %v59
    %v422 = vunpack.c.l.b16 %v60
    %v423 = vunpack.c.h.b16 %v60
    %v424 = vunpack.c.l.b16 %v61
    %v425 = vunpack.c.h.b16 %v61
    %v426 = vunpack.c.l.b16 %v62
    %v427 = vunpack.c.h.b16 %v62
    %v428 = vunpack.c.l.b16 %v63
    %v429 = vunpack.c.h.b16 %v63
    %v430 = vunpack.c.l.b16 %v64
    %v431 = vunpack.c.h.b16 %v64
    %v432 = vunpack.c.l.b16 %v65
    %v433 = vunpack.c.h.b16 %v65
    %v434 = vunpack.c.l.b16 %v66
    %v435 = vunpack.c.h.b16 %v66
    %v436 = vunpack.c.l.b16 %v67
    %v437 = vunpack.c.h.b16 %v67
    %v438 = vunpack.c.l.b16 %v68
    %v439 = vunpack.c.h.b16 %v68
    %v440 = vunpack.c.l.b16 %v69
    %v441 = vunpack.c.h.b16 %v69
    %v442 = vunpack.c.l.b16 %v70
    %v443 = vunpack.c.h.b16 %v70
    %v444 = vunpack.c.l.b16 %v71
    %v445 = vunpack.c.h.b16 %v71
    %v446 = vunpack.c.l.b16 %v72
    %v447 = vunpack.c.h.b16 %v72
    %v448 = vunpack.c.l.b16 %v73
    %v449 = vunpack.c.h.b16 %v73
    %v450 = vunpack.c.l.b16 %v74
    %v451 = vunpack.c.h.b16 %v74
    %v452 = vunpack.c.l.b16 %v75
    %v453 = vunpack.c.h.b16 %v75
    %v454 = vunpack.c.l.b16 %v76
    %v455 = vunpack.c.h.b16 %v76
    %v456 = vunpack.c.l.b16 %v77
    %v457 = vunpack.c.h.b16 %v77
    %v458 = vunpack.c.l.b16 %v78
    %v459 = vunpack.c.h.b16 %v78
    %v460 = vunpack.c.l.b16 %v79
    %v461 = vunpack.c.h.b16 %v79
    %v462 = vunpack.c.l.b16 %v80
    %v463 = vunpack.c.h.b16 %v80
    %v464 = vunpack.c.l.b16 %v81
    %v465 = vunpack.c.h.b16 %v81
    %v466 = vunpack.c.l.b16 %v82
    %v467 = vunpack.c.h.b16 %v82
    %v468 = vunpack.c.l.b16 %v83
    %v469 = vunpack.c.h.b16 %v83
    %v470 = vunpack.c.l.b16 %v84
    %v471 = vunpack.c.h.b16 %v84
    %v472 = vunpack.c.l.b16 %v85
    %v473 = vunpack.c.h.b16 %v85
    %v474 = vunpack.c.l.b16 %v86
    %v475 = vunpack.c.h.b16 %v86
    %v476 = vunpack.c.l.b16 %v87
    %v477 = vunpack.c.h.b16 %v87
    %v478 = vunpack.c.l.b16 %v88
    %v479 = vunpack.c.h.b16 %v88
    %v480 = vunpack.c.l.b16 %v89
    %v481 = vunpack.c.h.b16 %v89
    %v482 = vunpack.c.l.b16 %v90
    %v483 = vunpack.c.h.b16 %v90
    %v484 = vunpack.c.l.b16 %v91
    %v485 = vunpack.c.h.b16 %v91
    %v486 = vunpack.c.l.b16 %v92
    %v487 = vunpack.c.h.b16 %v92
    %v488 = vunpack.c.l.b16 %v93
    %v489 = vunpack.c.h.b16 %v93
    %v490 = vunpack.c.l.b16 %v94
    %v491 = vunpack.c.h.b16 %v94
    %v492 = vunpack.c.l.b16 %v95
    %v493 = vunpack.c.h.b16 %v95
    %v494 = vunpack.c.l.b16 %v96
    %v495 = vunpack.c.h.b16 %v96
    %v496 = vunpack.c.l.b16 %v97
    %v497 = vunpack.c.h.b16 %v97
    %v498 = vunpack.c.l.b16 %v98
    %v499 = vunpack.c.h.b16 %v98
    %v500 = vunpack.c.l.b16 %v99
    %v501 = vunpack.c.h.b16 %v99
    %v502 = vunpack.c.l.b16 %v100
    %v503 = vunpack.c.h.b16 %v100
    %v504 = vunpack.c.l.b16 %v101
    %v505 = vunpack.c.h.b16 %v101
    %v506 = vunpack.c.l.b16 %v102
    %v507 = vunpack.c.h.b16 %v102
    %v508 = vunpack.c.l.b16 %v103
    %v509 = vunpack.c.h.b16 %v103
    %v510 = vunpack.c.l.b16 %v104
    %v511 = vunpack.c.h.b16 %v104
    %v512 = vunpack.c.l.b16 %v105
    %v513 = vunpack.c.h.b16 %v105
    %v514 = vunpack.c.l.b16 %v106
    %v515 = vunpack.c.h.b16 %v106
    %v516 = vunpack.c.l.b16 %v107
    %v517 = vunpack.c.h.b16 %v107
    %v518 = vunpack.c.l.b16 %v108
    %v519 = vunpack.c.h.b16 %v108
    %v520 = vunpack.c.l.b16 %v109
    %v521 = vunpack.c.h.b16 %v109
    %v522 = vunpack.c.l.b16 %v110
    %v523 = vunpack.c.h.b16 %v110
    %v524 = vunpack.c.l.b16 %v111
    %v525 = vunpack.c.h.b16 %v111
    %v526 = vunpack.c.l.b16 %v112
    %v527 = vunpack.c.h.b16 %v112
    %v528 = vunpack.c.l.b16 %v113
    %v529 = vunpack.c.h.b16 %v113
    %v530 = vunpack.c.l.b16 %v114
    %v531 = vunpack.c.h.b16 %v114
    %v532 = vunpack.c.l.b16 %v115
    %v533 = vunpack.c.h.b16 %v115
    %v534 = vunpack.c.l.b16 %v116
    %v535 = vunpack.c.h.b16 %v116
    %v536 = vunpack.c.l.b16 %v117
    %v537 = vunpack.c.h.b16 %v117
    %v538 = vunpack.c.l.b16 %v118
    %v539 = vunpack.c.h.b16 %v118
    %v540 = vunpack.c.l.b16 %v119
    %v541 = vunpack.c.h.b16 %v119
    %v542 = vunpack.c.l.b16 %v120
    %v543 = vunpack.c.h.b16 %v120
    %v544 = vunpack.c.l.b16 %v121
    %v545 = vunpack.c.h.b16 %v121
    %v546 = vunpack.c.l.b16 %v122
    %v547 = vunpack.c.h.b16 %v122
    %v548 = vunpack.c.l.b16 %v123
    %v549 = vunpack.c.h.b16 %v123
    %v550 = vunpack.c.l.b16 %v124
    %v551 = vunpack.c.h.b16 %v124
    %v552 = vunpack.c.l.b16 %v125
    %v553 = vunpack.c.h.b16 %v125
    %v554 = vunpack.c.l.b16 %v126
    %v555 = vunpack.c.h.b16 %v126
    %v556 = vunpack.c.l.b16 %v127
    %v557 = vunpack.c.h.b16 %v127
    %v558 = vunpack.c.l.b16 %v128
    %v559 = vunpack.c.h.b16 %v128
    %v560 = vunpack.c.l.b16 %v129
    %v561 = vunpack.c.h.b16 %v129
    %v562 = vunpack.c.l.b16 %v130
    %v563 = vunpack.c.h.b16 %v130
    %v564 = vunpack.c.l.b16 %v131
    %v565 = vunpack.c.h.b16 %v131
    %v566 = vunpack.c.l.b16 %v132
    %v567 = vunpack.c.h.b16 %v132
    %v568 = vunpack.c.l.b16 %v133
    %v569 = vunpack.c.h.b16 %v133
    %v570 = vunpack.c.l.b16 %v134
    %v571 = vunpack.c.h.b16 %v134
    %v572 = vunpack.c.l.b16 %v135
    %v573 = vunpack.c.h.b16 %v135
    %v574 = vunpack.c.l.b16 %v136
    %v575 = vunpack.c.h.b16 %v136
    %v576 = vunpack.c.l.b16 %v137
    %v577 = vunpack.c.h.b16 %v137
    %v578 = vunpack.c.l.b16 %v138
    %v579 = vunpack.c.h.b16 %v138
    %v580 = vunpack.c.l.b16 %v139
    %v581 = vunpack.c.h.b16 %v139
    %v582 = vunpack.c.l.b16 %v140
    %v583 = vunpack.c.h.b16 %v140
    %v584 = vunpack.c.l.b16 %v141
    %v585 = vunpack.c.h.b16 %v141
    %v586 = vunpack.c.l.b16 %v142
    %v587 = vunpack.c.h.b16 %v142
    %v588 = vunpack.c.l.b16 %v143
    %v589 = vunpack.c.h.b16 %v143
    %v590 = vunpack.c.l.b16 %v144
    %v591 = vunpack.c.h.b16 %v144
    %v592 = vunpack.c.l.b16 %v145
    %v593 = vunpack.c.h.b16 %v145
    %v594 = vunpack.c.l.b16 %v146
    %v595 = vunpack.c.h.b16 %v146
    %v596 = vunpack.c.l.b16 %v147
    %v597 = vunpack.c.h.b16 %v147
    %v598 = vunpack.c.l.b16 %v148
    %v599 = vunpack.c.h.b16 %v148
    %v600 = vunpack.c.l.b16 %v149
    %v601 = vunpack.c.h.b16 %v149
    %v602 = vunpack.c.l.b16 %v150
    %v603 = vunpack.c.h.b16 %v150
    %v604 = vunpack.c.l.b16 %v151
    %v605 = vunpack.c.h.b16 %v151
    %v606 = vunpack.c.l.b16 %v152
    %v607 = vunpack.c.h.b16 %v152
    %v608 = vunpack.c.l.b16 %v153
    %v609 = vunpack.c.h.b16 %v153
    %v610 = vunpack.c.l.b16 %v154
    %v611 = vunpack.c.h.b16 %v154
    %v612 = vunpack.c.l.b16 %v155
    %v613 = vunpack.c.h.b16 %v155
    %v614 = vunpack.c.l.b16 %v156
    %v615 = vunpack.c.h.b16 %v156
    %v616 = vunpack.c.l.b16 %v157
    %v617 = vunpack.c.h.b16 %v157
    %v618 = vunpack.c.l.b16 %v158
    %v619 = vunpack.c.h.b16 %v158
    %v620 = vunpack.c.l.b16 %v159
    %v621 = vunpack.c.h.b16 %v159
    %v622 = vunpack.c.l.b16 %v160
    %v623 = vunpack.c.h.b16 %v160
    %v624 = vunpack.c.l.b16 %v161
    %v625 = vunpack.c.h.b16 %v161
    %v626 = vunpack.c.l.b16 %v162
    %v627 = vunpack.c.h.b16 %v162
    %v628 = vunpack.c.l.b16 %v163
    %v629 = vunpack.c.h.b16 %v163
    %v630 = vunpack.c.l.b16 %v164
    %v631 = vunpack.c.h.b16 %v164
    %v632 = vunpack.c.l.b16 %v165
    %v633 = vunpack.c.h.b16 %v165
    %v634 = vunpack.c.l.b16 %v166
    %v635 = vunpack.c.h.b16 %v166
    %v636 = vunpack.c.l.b16 %v167
    %v637 = vunpack.c.h.b16 %v167
    %v638 = vunpack.c.l.b16 %v168
    %v639 = vunpack.c.h.b16 %v168
    %v640 = vpack.c.b16 %v356, %v352
    %v641 = vpack.c.b16 %v357, %v353
    %v642 = vpack.c.b16 %v358, %v354
    %v643 = vpack.c.b16 %v359, %v355
    %v644 = vpack.c.b16 %v364, %v360
    %v645 = vpack.c.b16 %v365, %v361
    %v646 = vpack.c.b16 %v366, %v362
    %v647 = vpack.c.b16 %v367, %v363
    %v648 = vpack.c.b16 %v372, %v368
    %v649 = vpack.c.b16 %v373, %v369
    %v650 = vpack.c.b16 %v374, %v370
    %v651 = vpack.c.b16 %v375, %v371
    %v652 = vpack.c.b16 %v380, %v376
    %v653 = vpack.c.b16 %v381, %v377
    %v654 = vpack.c.b16 %v382, %v378
    %v655 = vpack.c.b16 %v383, %v379
    %v656 = vpack.c.b16 %v388, %v384
    %v657 = vpack.c.b16 %v389, %v385
    %v658 = vpack.c.b16 %v390, %v386
    %v659 = vpack.c.b16 %v391, %v387
    %v660 = vpack.c.b16 %v396, %v392
    %v661 = vpack.c.b16 %v397, %v393
    %v662 = vpack.c.b16 %v398, %v394
    %v663 = vpack.c.b16 %v399, %v395
    %v664 = vpack.c.b16 %v404, %v400
    %v665 = vpack.c.b16 %v405, %v401
    %v666 = vpack.c.b16 %v406, %v402
    %v667 = vpack.c.b16 %v407, %v403
    %v668 = vpack.c.b16 %v412, %v408
    %v669 = vpack.c.b16 %v413, %v409
    %v670 = vpack.c.b16 %v414, %v410
    %v671 = vpack.c.b16 %v415, %v411
    %v672 = vpack.c.b16 %v420, %v416
    %v673 = vpack.c.b16 %v421, %v417
    %v674 = vpack.c.b16 %v422, %v418
    %v675 = vpack.c.b16 %v423, %v419
    %v676 = vpack.c.b16 %v428, %v424
    %v677 = vpack.c.b16 %v429, %v425
    %v678 = vpack.c.b16 %v430, %v426
    %v679 = vpack.c.b16 %v431, %v427
    %v680 = vpack.c.b16 %v436, %v432
    %v681 = vpack.c.b16 %v437, %v433
    %v682 = vpack.c.b16 %v438, %v434
    %v683 = vpack.c.b16 %v439, %v435
    %v684 = vpack.c.b16 %v444, %v440
    %v685 = vpack.c.b16 %v445, %v441
    %v686 = vpack.c.b16 %v446, %v442
    %v687 = vpack.c.b16 %v447, %v443
    %v688 = vpack.c.b16 %v452, %v448
    %v689 = vpack.c.b16 %v453, %v449
    %v690 = vpack.c.b16 %v454, %v450
    %v691 = vpack.c.b16 %v455, %v451
    %v692 = vpack.c.b16 %v460, %v456
    %v693 = vpack.c.b16 %v461, %v457
    %v694 = vpack.c.b16 %v462, %v458
    %v695 = vpack.c.b16 %v463, %v459
    %v696 = vpack.c.b16 %v468, %v464
    %v697 = vpack.c.b16 %v469, %v465
    %v698 = vpack.c.b16 %v470, %v466
    %v699 = vpack.c.b16 %v471, %v467
    %v700 = vpack.c.b16 %v476, %v472
    %v701 = vpack.c.b16 %v477, %v473
    %v702 = vpack.c.b16 %v478, %v474
    %v703 = vpack.c.b16 %v479, %v475
    %v704 = vpack.c.b16 %v484, %v480
    %v705 = vpack.c.b16 %v485, %v481
    %v706 = vpack.c.b16 %v486, %v482
    %v707 = vpack.c.b16 %v487, %v483
    %v708 = vpack.c.b16 %v492, %v488
    %v709 = vpack.c.b16 %v493, %v489
    %v710 = vpack.c.b16 %v494, %v490
    %v711 = vpack.c.b16 %v495, %v491
    %v712 = vpack.c.b16 %v500, %v496
    %v713 = vpack.c.b16 %v501, %v497
    %v714 = vpack.c.b16 %v502, %v498
    %v715 = vpack.c.b16 %v503, %v499
    %v716 = vpack.c.b16 %v508, %v504
    %v717 = vpack.c.b16 %v509, %v505
    %v718 = vpack.c.b16 %v510, %v506
    %v719 = vpack.c.b16 %v511, %v507
    %v720 = vpack.c.b16 %v516, %v512
    %v721 = vpack.c.b16 %v517, %v513
    %v722 = vpack.c.b16 %v518, %v514
    %v723 = vpack.c.b16 %v519, %v515
    %v724 = vpack.c.b16 %v524, %v520
    %v725 = vpack.c.b16 %v525, %v521
    %v726 = vpack.c.b16 %v526, %v522
    %v727 = vpack.c.b16 %v527, %v523
    %v728 = vpack.c.b16 %v532, %v528
    %v729 = vpack.c.b16 %v533, %v529
    %v730 = vpack.c.b16 %v534, %v530
    %v731 = vpack.c.b16 %v535, %v531
    %v732 = vpack.c.b16 %v540, %v536
    %v733 = vpack.c.b16 %v541, %v537
    %v734 = vpack.c.b16 %v542, %v538
    %v735 = vpack.c.b16 %v543, %v539
    %v736 = vpack.c.b16 %v548, %v544
    %v737 = vpack.c.b16 %v549, %v545
    %v738 = vpack.c.b16 %v550, %v546
    %v739 = vpack.c.b16 %v551, %v547
    %v740 = vpack.c.b16 %v556, %v552
    %v741 = vpack.c.b16 %v557, %v553
    %v742 = vpack.c.b16 %v558, %v554
    %v743 = vpack.c.b16 %v559, %v555
    %v744 = vpack.c.b16 %v564, %v560
    %v745 = vpack.c.b16 %v565, %v561
    %v746 = vpack.c.b16 %v566, %v562
    %v747 = vpack.c.b16 %v567, %v563
    %v748 = vpack.c.b16 %v572, %v568
    %v749 = vpack.c.b16 %v573, %v569
    %v750 = vpack.c.b16 %v574, %v570
    %v751 = vpack.c.b16 %v575, %v571
    %v752 = vpack.c.b16 %v580, %v576
    %v753 = vpack.c.b16 %v581, %v577
    %v754 = vpack.c.b16 %v582, %v578
    %v755 = vpack.c.b16 %v583, %v579
    %v756 = vpack.c.b16 %v588, %v584
    %v757 = vpack.c.b16 %v589, %v585
    %v758 = vpack.c.b16 %v590, %v586
    %v759 = vpack.c.b16 %v591, %v587
    %v760 = vpack.c.b16 %v596, %v592
    %v761 = vpack.c.b16 %v597, %v593
    %v762 = vpack.c.b16 %v598, %v594
    %v763 = vpack.c.b16 %v599, %v595
    %v764 = vpack.c.b16 %v604, %v600
    %v765 = vpack.c.b16 %v605, %v601
    %v766 = vpack.c.b16 %v606, %v602
    %v767 = vpack.c.b16 %v607, %v603
    %v768 = vpack.c.b16 %v612, %v608
    %v769 = vpack.c.b16 %v613, %v609
    %v770 = vpack.c.b16 %v614, %v610
    %v771 = vpack.c.b16 %v615, %v611
    %v772 = vpack.c.b16 %v620, %v616
    %v773 = vpack.c.b16 %v621, %v617
    %v774 = vpack.c.b16 %v622, %v618
    %v775 = vpack.c.b16 %v623, %v619
    %v776 = vpack.c.b16 %v628, %v624
    %v777 = vpack.c.b16 %v629, %v625
    %v778 = vpack.c.b16 %v630, %v626
    %v779 = vpack.c.b16 %v631, %v627
    %v780 = vpack.c.b16 %v636, %v632
    %v781 = vpack.c.b16 %v637, %v633
    %v782 = vpack.c.b16 %v638, %v634
    %v783 = vpack.c.b16 %v639, %v635
    %vm928 = vcmask 523264
    %v930 = vsel %vm928, %v203, 0
    %932 = vmatprep.subr.bf16.mxu0 %v669
    %933 = vmatpush1.bf16.msra.mxu0 %v668
    %934 = vmatprep.subr.bf16.mxu0 %v665
    %935 = vmatpush1.bf16.msra.mxu0 %v664
    %936 = vmatprep.subr.bf16.mxu0 %v661
    %937 = vmatpush1.bf16.msra.mxu0 %v660
    %938 = vmatprep.subr.bf16.mxu0 %v657
    %939 = vmatpush1.bf16.msra.mxu0 %v656
    %940 = vmatprep.subr.bf16.mxu0 %v653
    %941 = vmatpush1.bf16.msra.mxu0 %v652
    %942 = vmatprep.subr.bf16.mxu0 %v649
    %943 = vmatpush1.bf16.msra.mxu0 %v648
    %944 = vmatprep.subr.bf16.mxu0 %v645
    %945 = vmatpush1.bf16.msra.mxu0 %v644
    %946 = vmatprep.subr.bf16.mxu0 %v641
    %947 = vmatpush1.bf16.msra.mxu0 %v640
    %948 = vmatprep.subr.bf16.mxu0 %v701
    %949 = vmatpush2.bf16.msra.mxu0 %v700
    %950 = vmatprep.subr.bf16.mxu0 %v697
    %951 = vmatpush2.bf16.msra.mxu0 %v696
    %952 = vmatprep.subr.bf16.mxu0 %v693
    %953 = vmatpush2.bf16.msra.mxu0 %v692
    %954 = vmatprep.subr.bf16.mxu0 %v689
    %955 = vmatpush2.bf16.msra.mxu0 %v688
    %956 = vmatprep.subr.bf16.mxu0 %v685
    %957 = vmatpush2.bf16.msra.mxu0 %v684
    %958 = vmatprep.subr.bf16.mxu0 %v681
    %959 = vmatpush2.bf16.msra.mxu0 %v680
    %960 = vmatprep.subr.bf16.mxu0 %v677
    %961 = vmatpush2.bf16.msra.mxu0 %v676
    %962 = vmatprep.subr.bf16.mxu0 %v673
    %963 = vmatpush2.bf16.msra.mxu0 %v672
    %964 = vmatprep.mubr.bf16.mxu0 %v200
    %965 = vmatmul.mubr.bf16.gmra.mxu0 %v199
    %v966 = vpop.f32.mrf.mxu0
    %v967 = vadd.f32 %v174, %v966
    %v968 = vpop.f32.mrf.mxu0
    %v969 = vadd.f32 %v178, %v968
    %v970 = vpop.f32.mrf.mxu0
    %v971 = vpop.f32.mrf.mxu0
    %972 = vdwg.mxu0
    %973 = vmatprep.subr.bf16.mxu0 %v733
    %974 = vmatpush1.bf16.msra.mxu0 %v732
    %975 = vmatprep.subr.bf16.mxu0 %v729
    %976 = vmatpush1.bf16.msra.mxu0 %v728
    %977 = vmatprep.subr.bf16.mxu0 %v725
    %978 = vmatpush1.bf16.msra.mxu0 %v724
    %979 = vmatprep.subr.bf16.mxu0 %v721
    %980 = vmatpush1.bf16.msra.mxu0 %v720
    %981 = vmatprep.subr.bf16.mxu0 %v717
    %982 = vmatpush1.bf16.msra.mxu0 %v716
    %983 = vmatprep.subr.bf16.mxu0 %v713
    %984 = vmatpush1.bf16.msra.mxu0 %v712
    %985 = vmatprep.subr.bf16.mxu0 %v709
    %986 = vmatpush1.bf16.msra.mxu0 %v708
    %987 = vmatprep.subr.bf16.mxu0 %v705
    %988 = vmatpush1.bf16.msra.mxu0 %v704
    %989 = vmatprep.subr.bf16.mxu0 %v765
    %990 = vmatpush2.bf16.msra.mxu0 %v764
    %991 = vmatprep.subr.bf16.mxu0 %v761
    %992 = vmatpush2.bf16.msra.mxu0 %v760
    %993 = vmatprep.subr.bf16.mxu0 %v757
    %994 = vmatpush2.bf16.msra.mxu0 %v756
    %995 = vmatprep.subr.bf16.mxu0 %v753
    %996 = vmatpush2.bf16.msra.mxu0 %v752
    %997 = vmatprep.subr.bf16.mxu0 %v749
    %998 = vmatpush2.bf16.msra.mxu0 %v748
    %999 = vmatprep.subr.bf16.mxu0 %v745
    %1000 = vmatpush2.bf16.msra.mxu0 %v744
    %1001 = vmatprep.subr.bf16.mxu0 %v741
    %1002 = vmatpush2.bf16.msra.mxu0 %v740
    %1003 = vmatprep.subr.bf16.mxu0 %v737
    %1004 = vmatpush2.bf16.msra.mxu0 %v736
    %1005 = vmatprep.mubr.bf16.mxu0 %v202
    %1006 = vmatmul.mubr.bf16.gmra.mxu0 %v201
    %v1007 = vpop.f32.mrf.mxu0
    %v1008 = vadd.f32 %v967, %v1007
    %v1009 = vpop.f32.mrf.mxu0
    %v1010 = vadd.f32 %v969, %v1009
    %v1011 = vpop.f32.mrf.mxu0
    %v1012 = vpop.f32.mrf.mxu0
    %1013 = vdwg.mxu0
    %1014 = vmatprep.subr.bf16.mxu0 0
    %1015 = vmatpush1.bf16.msra.mxu0 0
    %1016 = vmatprep.subr.bf16.mxu0 0
    %1017 = vmatpush1.bf16.msra.mxu0 0
    %1018 = vmatprep.subr.bf16.mxu0 0
    %1019 = vmatpush1.bf16.msra.mxu0 0
    %1020 = vmatprep.subr.bf16.mxu0 0
    %1021 = vmatpush1.bf16.msra.mxu0 0
    %1022 = vmatprep.subr.bf16.mxu0 %v781
    %1023 = vmatpush1.bf16.msra.mxu0 %v780
    %1024 = vmatprep.subr.bf16.mxu0 %v777
    %1025 = vmatpush1.bf16.msra.mxu0 %v776
    %1026 = vmatprep.subr.bf16.mxu0 %v773
    %1027 = vmatpush1.bf16.msra.mxu0 %v772
    %1028 = vmatprep.subr.bf16.mxu0 %v769
    %1029 = vmatpush1.bf16.msra.mxu0 %v768
    %1030 = vmatprep.subr.bf16.mxu0 0
    %1031 = vmatpush2.bf16.msra.mxu0 0
    %1032 = vmatprep.subr.bf16.mxu0 0
    %1033 = vmatpush2.bf16.msra.mxu0 0
    %1034 = vmatprep.subr.bf16.mxu0 0
    %1035 = vmatpush2.bf16.msra.mxu0 0
    %1036 = vmatprep.subr.bf16.mxu0 0
    %1037 = vmatpush2.bf16.msra.mxu0 0
    %1038 = vmatprep.subr.bf16.mxu0 0
    %1039 = vmatpush2.bf16.msra.mxu0 0
    %1040 = vmatprep.subr.bf16.mxu0 0
    %1041 = vmatpush2.bf16.msra.mxu0 0
    %1042 = vmatprep.subr.bf16.mxu0 0
    %1043 = vmatpush2.bf16.msra.mxu0 0
    %1044 = vmatprep.subr.bf16.mxu0 0
    %1045 = vmatpush2.bf16.msra.mxu0 0
    %1046 = vmatprep.mubr.bf16.mxu0 0
    %1047 = vmatmul.mubr.bf16.gmra.mxu0 %v930
    %v1048 = vpop.f32.mrf.mxu0
    %v1049 = vadd.f32 %v1008, %v1048
    %v1050 = vpop.f32.mrf.mxu0
    %v1051 = vadd.f32 %v1010, %v1050
    %v1052 = vpop.f32.mrf.mxu0
    %v1053 = vpop.f32.mrf.mxu0
    %1054 = vdwg.mxu0
    %1055 = vmatprep.subr.bf16.mxu0 %v671
    %1056 = vmatpush1.bf16.msra.mxu0 %v670
    %1057 = vmatprep.subr.bf16.mxu0 %v667
    %1058 = vmatpush1.bf16.msra.mxu0 %v666
    %1059 = vmatprep.subr.bf16.mxu0 %v663
    %1060 = vmatpush1.bf16.msra.mxu0 %v662
    %1061 = vmatprep.subr.bf16.mxu0 %v659
    %1062 = vmatpush1.bf16.msra.mxu0 %v658
    %1063 = vmatprep.subr.bf16.mxu0 %v655
    %1064 = vmatpush1.bf16.msra.mxu0 %v654
    %1065 = vmatprep.subr.bf16.mxu0 %v651
    %1066 = vmatpush1.bf16.msra.mxu0 %v650
    %1067 = vmatprep.subr.bf16.mxu0 %v647
    %1068 = vmatpush1.bf16.msra.mxu0 %v646
    %1069 = vmatprep.subr.bf16.mxu0 %v643
    %1070 = vmatpush1.bf16.msra.mxu0 %v642
    %1071 = vmatprep.subr.bf16.mxu0 %v703
    %1072 = vmatpush2.bf16.msra.mxu0 %v702
    %1073 = vmatprep.subr.bf16.mxu0 %v699
    %1074 = vmatpush2.bf16.msra.mxu0 %v698
    %1075 = vmatprep.subr.bf16.mxu0 %v695
    %1076 = vmatpush2.bf16.msra.mxu0 %v694
    %1077 = vmatprep.subr.bf16.mxu0 %v691
    %1078 = vmatpush2.bf16.msra.mxu0 %v690
    %1079 = vmatprep.subr.bf16.mxu0 %v687
    %1080 = vmatpush2.bf16.msra.mxu0 %v686
    %1081 = vmatprep.subr.bf16.mxu0 %v683
    %1082 = vmatpush2.bf16.msra.mxu0 %v682
    %1083 = vmatprep.subr.bf16.mxu0 %v679
    %1084 = vmatpush2.bf16.msra.mxu0 %v678
    %1085 = vmatprep.subr.bf16.mxu0 %v675
    %1086 = vmatpush2.bf16.msra.mxu0 %v674
    %1087 = vmatprep.mubr.bf16.mxu0 %v200
    %1088 = vmatmul.mubr.bf16.gmra.mxu0 %v199
    %v1089 = vpop.f32.mrf.mxu0
    %v1090 = vadd.f32 %v182, %v1089
    %v1091 = vpop.f32.mrf.mxu0
    %v1092 = vadd.f32 %v186, %v1091
    %v1093 = vpop.f32.mrf.mxu0
    %v1094 = vpop.f32.mrf.mxu0
    %1095 = vdwg.mxu0
    %1096 = vmatprep.subr.bf16.mxu0 %v735
    %1097 = vmatpush1.bf16.msra.mxu0 %v734
    %1098 = vmatprep.subr.bf16.mxu0 %v731
    %1099 = vmatpush1.bf16.msra.mxu0 %v730
    %1100 = vmatprep.subr.bf16.mxu0 %v727
    %1101 = vmatpush1.bf16.msra.mxu0 %v726
    %1102 = vmatprep.subr.bf16.mxu0 %v723
    %1103 = vmatpush1.bf16.msra.mxu0 %v722
    %1104 = vmatprep.subr.bf16.mxu0 %v719
    %1105 = vmatpush1.bf16.msra.mxu0 %v718
    %1106 = vmatprep.subr.bf16.mxu0 %v715
    %1107 = vmatpush1.bf16.msra.mxu0 %v714
    %1108 = vmatprep.subr.bf16.mxu0 %v711
    %1109 = vmatpush1.bf16.msra.mxu0 %v710
    %1110 = vmatprep.subr.bf16.mxu0 %v707
    %1111 = vmatpush1.bf16.msra.mxu0 %v706
    %1112 = vmatprep.subr.bf16.mxu0 %v767
    %1113 = vmatpush2.bf16.msra.mxu0 %v766
    %1114 = vmatprep.subr.bf16.mxu0 %v763
    %1115 = vmatpush2.bf16.msra.mxu0 %v762
    %1116 = vmatprep.subr.bf16.mxu0 %v759
    %1117 = vmatpush2.bf16.msra.mxu0 %v758
    %1118 = vmatprep.subr.bf16.mxu0 %v755
    %1119 = vmatpush2.bf16.msra.mxu0 %v754
    %1120 = vmatprep.subr.bf16.mxu0 %v751
    %1121 = vmatpush2.bf16.msra.mxu0 %v750
    %1122 = vmatprep.subr.bf16.mxu0 %v747
    %1123 = vmatpush2.bf16.msra.mxu0 %v746
    %1124 = vmatprep.subr.bf16.mxu0 %v743
    %1125 = vmatpush2.bf16.msra.mxu0 %v742
    %1126 = vmatprep.subr.bf16.mxu0 %v739
    %1127 = vmatpush2.bf16.msra.mxu0 %v738
    %1128 = vmatprep.mubr.bf16.mxu0 %v202
    %1129 = vmatmul.mubr.bf16.gmra.mxu0 %v201
    %v1130 = vpop.f32.mrf.mxu0
    %v1131 = vadd.f32 %v1090, %v1130
    %v1132 = vpop.f32.mrf.mxu0
    %v1133 = vadd.f32 %v1092, %v1132
    %v1134 = vpop.f32.mrf.mxu0
    %v1135 = vpop.f32.mrf.mxu0
    %1136 = vdwg.mxu0
    %1137 = vmatprep.subr.bf16.mxu0 0
    %1138 = vmatpush1.bf16.msra.mxu0 0
    %1139 = vmatprep.subr.bf16.mxu0 0
    %1140 = vmatpush1.bf16.msra.mxu0 0
    %1141 = vmatprep.subr.bf16.mxu0 0
    %1142 = vmatpush1.bf16.msra.mxu0 0
    %1143 = vmatprep.subr.bf16.mxu0 0
    %1144 = vmatpush1.bf16.msra.mxu0 0
    %1145 = vmatprep.subr.bf16.mxu0 %v783
    %1146 = vmatpush1.bf16.msra.mxu0 %v782
    %1147 = vmatprep.subr.bf16.mxu0 %v779
    %1148 = vmatpush1.bf16.msra.mxu0 %v778
    %1149 = vmatprep.subr.bf16.mxu0 %v775
    %1150 = vmatpush1.bf16.msra.mxu0 %v774
    %1151 = vmatprep.subr.bf16.mxu0 %v771
    %1152 = vmatpush1.bf16.msra.mxu0 %v770
    %1153 = vmatprep.subr.bf16.mxu0 0
    %1154 = vmatpush2.bf16.msra.mxu0 0
    %1155 = vmatprep.subr.bf16.mxu0 0
    %1156 = vmatpush2.bf16.msra.mxu0 0
    %1157 = vmatprep.subr.bf16.mxu0 0
    %1158 = vmatpush2.bf16.msra.mxu0 0
    %1159 = vmatprep.subr.bf16.mxu0 0
    %1160 = vmatpush2.bf16.msra.mxu0 0
    %1161 = vmatprep.subr.bf16.mxu0 0
    %1162 = vmatpush2.bf16.msra.mxu0 0
    %1163 = vmatprep.subr.bf16.mxu0 0
    %1164 = vmatpush2.bf16.msra.mxu0 0
    %1165 = vmatprep.subr.bf16.mxu0 0
    %1166 = vmatpush2.bf16.msra.mxu0 0
    %1167 = vmatprep.subr.bf16.mxu0 0
    %1168 = vmatpush2.bf16.msra.mxu0 0
    %1169 = vmatprep.mubr.bf16.mxu0 0
    %1170 = vmatmul.mubr.bf16.gmra.mxu0 %v930
    %v1171 = vpop.f32.mrf.mxu0
    %v1172 = vadd.f32 %v1131, %v1171
    %v1173 = vpop.f32.mrf.mxu0
    %v1174 = vadd.f32 %v1133, %v1173
    %v1175 = vpop.f32.mrf.mxu0
    %v1176 = vpop.f32.mrf.mxu0
    %1177 = vdwg.mxu0
    %v1178 = vmax.f32 %v1049, 0.0
    %v1179 = vmax.f32 %v1051, 0.0
    %v1180 = vmax.f32 %v1172, 0.0
    %v1181 = vmax.f32 %v1174, 0.0
    %v1182 = vpack.c.bf16 %v1178, %v1178
    %v1183 = vpack.c.bf16 %v1179, %v1179
    %v1184 = vpack.c.bf16 %v1180, %v1180
    %v1185 = vpack.c.bf16 %v1181, %v1181
    %v1186 = vld [vmem:[%s3] sm:$0xf]
    %v1187 = vld [vmem:[%s3 + $0x4] sm:$0xf]
    %v1188 = vld [vmem:[%s3 + $0x8] sm:$0xf]
    %v1189 = vld [vmem:[%s3 + $0xc] sm:$0xf]
    %v1190 = vld [vmem:[%s3 + $0x10] sm:$0xf]
    %v1191 = vld [vmem:[%s3 + $0x14] sm:$0xf]
    %v1192 = vld [vmem:[%s3 + $0x18] sm:$0xf]
    %v1193 = vld [vmem:[%s3 + $0x1c] sm:$0xf]
    %v1194 = vld [vmem:[%s3 + $0x20] sm:$0xf]
    %v1195 = vld [vmem:[%s3 + $0x24] sm:$0xf]
    %v1196 = vld [vmem:[%s3 + $0x28] sm:$0xf]
    %v1197 = vld [vmem:[%s3 + $0x2c] sm:$0xf]
    %v1198 = vld [vmem:[%s3 + $0x30] sm:$0xf]
    %v1199 = vld [vmem:[%s3 + $0x34] sm:$0xf]
    %v1200 = vld [vmem:[%s3 + $0x38] sm:$0xf]
    %v1201 = vld [vmem:[%s3 + $0x3c] sm:$0xf]
    %v1202 = vld [vmem:[%s3 + $0x40] sm:$0xf]
    %v1203 = vld [vmem:[%s3 + $0x44] sm:$0xf]
    %v1204 = vld [vmem:[%s3 + $0x48] sm:$0xf]
    %v1205 = vld [vmem:[%s3 + $0x4c] sm:$0xf]
    %v1206 = vld [vmem:[%s3 + $0x50] sm:$0xf]
    %v1207 = vld [vmem:[%s3 + $0x54] sm:$0xf]
    %v1208 = vld [vmem:[%s3 + $0x58] sm:$0xf]
    %v1209 = vld [vmem:[%s3 + $0x5c] sm:$0xf]
    %v1210 = vld [vmem:[%s3 + $0x60] sm:$0xf]
    %v1211 = vld [vmem:[%s3 + $0x64] sm:$0xf]
    %v1212 = vld [vmem:[%s3 + $0x68] sm:$0xf]
    %v1213 = vld [vmem:[%s3 + $0x6c] sm:$0xf]
    %v1214 = vld [vmem:[%s3 + $0x70] sm:$0xf]
    %v1215 = vld [vmem:[%s3 + $0x74] sm:$0xf]
    %v1216 = vld [vmem:[%s3 + $0x78] sm:$0xf]
    %v1217 = vld [vmem:[%s3 + $0x7c] sm:$0xf]
    %v1218 = vld [vmem:[%s3 + $0x80] sm:$0xf]
    %v1219 = vld [vmem:[%s3 + $0x84] sm:$0xf]
    %v1220 = vld [vmem:[%s3 + $0x88] sm:$0xf]
    %v1221 = vld [vmem:[%s3 + $0x8c] sm:$0xf]
    %v1222 = vld [vmem:[%s3 + $0x90] sm:$0xf]
    %v1223 = vld [vmem:[%s3 + $0x94] sm:$0xf]
    %v1224 = vld [vmem:[%s3 + $0x98] sm:$0xf]
    %v1225 = vld [vmem:[%s3 + $0x9c] sm:$0xf]
    %v1226 = vld [vmem:[%s3 + $0xa0] sm:$0xf]
    %v1227 = vld [vmem:[%s3 + $0xa4] sm:$0xf]
    %v1228 = vld [vmem:[%s3 + $0xa8] sm:$0xf]
    %v1229 = vld [vmem:[%s3 + $0xac] sm:$0xf]
    %v1230 = vld [vmem:[%s3 + $0xb0] sm:$0xf]
    %v1231 = vld [vmem:[%s3 + $0xb4] sm:$0xf]
    %v1232 = vld [vmem:[%s3 + $0xb8] sm:$0xf]
    %v1233 = vld [vmem:[%s3 + $0xbc] sm:$0xf]
    %v1234 = vld [vmem:[%s3 + $0xc0] sm:$0xf]
    %v1235 = vld [vmem:[%s3 + $0xc4] sm:$0xf]
    %v1236 = vld [vmem:[%s3 + $0xc8] sm:$0xf]
    %v1237 = vld [vmem:[%s3 + $0xcc] sm:$0xf]
    %v1238 = vld [vmem:[%s3 + $0xd0] sm:$0xf]
    %v1239 = vld [vmem:[%s3 + $0xd4] sm:$0xf]
    %v1240 = vld [vmem:[%s3 + $0xd8] sm:$0xf]
    %v1241 = vld [vmem:[%s3 + $0xdc] sm:$0xf]
    %v1242 = vld [vmem:[%s3 + $0xe0] sm:$0xf]
    %v1243 = vld [vmem:[%s3 + $0xe4] sm:$0xf]
    %v1244 = vld [vmem:[%s3 + $0xe8] sm:$0xf]
    %v1245 = vld [vmem:[%s3 + $0xec] sm:$0xf]
    %v1246 = vld [vmem:[%s3 + $0xf0] sm:$0xf]
    %v1247 = vld [vmem:[%s3 + $0xf4] sm:$0xf]
    %v1248 = vld [vmem:[%s3 + $0xf8] sm:$0xf]
    %v1249 = vld [vmem:[%s3 + $0xfc] sm:$0xf]
    %v1250 = vld [vmem:[%s4] sm:$0x1]
    %v1252 = vlaneseq
    %v1253 = vshrl.u32 %v1252, 7
    %v1254 = vsub.s32 0, %v1253
    %v1255 = vrot.slane %v1250, %v1254
    %v1321 = vunpack.c.l.b16 %v1186
    %v1322 = vunpack.c.l.b16 %v1187
    %v1323 = vunpack.c.l.b16 %v1188
    %v1324 = vunpack.c.l.b16 %v1189
    %v1325 = vunpack.c.l.b16 %v1190
    %v1326 = vunpack.c.l.b16 %v1191
    %v1327 = vunpack.c.l.b16 %v1192
    %v1328 = vunpack.c.l.b16 %v1193
    %v1329 = vunpack.c.l.b16 %v1194
    %v1330 = vunpack.c.l.b16 %v1195
    %v1331 = vunpack.c.l.b16 %v1196
    %v1332 = vunpack.c.l.b16 %v1197
    %v1333 = vunpack.c.l.b16 %v1198
    %v1334 = vunpack.c.l.b16 %v1199
    %v1335 = vunpack.c.l.b16 %v1200
    %v1336 = vunpack.c.l.b16 %v1201
    %v1337 = vunpack.c.l.b16 %v1202
    %v1338 = vunpack.c.l.b16 %v1203
    %v1339 = vunpack.c.l.b16 %v1204
    %v1340 = vunpack.c.l.b16 %v1205
    %v1341 = vunpack.c.l.b16 %v1206
    %v1342 = vunpack.c.l.b16 %v1207
    %v1343 = vunpack.c.l.b16 %v1208
    %v1344 = vunpack.c.l.b16 %v1209
    %v1345 = vunpack.c.l.b16 %v1210
    %v1346 = vunpack.c.l.b16 %v1211
    %v1347 = vunpack.c.l.b16 %v1212
    %v1348 = vunpack.c.l.b16 %v1213
    %v1349 = vunpack.c.l.b16 %v1214
    %v1350 = vunpack.c.l.b16 %v1215
    %v1351 = vunpack.c.l.b16 %v1216
    %v1352 = vunpack.c.l.b16 %v1217
    %v1353 = vunpack.c.l.b16 %v1218
    %v1354 = vunpack.c.l.b16 %v1219
    %v1355 = vunpack.c.l.b16 %v1220
    %v1356 = vunpack.c.l.b16 %v1221
    %v1357 = vunpack.c.l.b16 %v1222
    %v1358 = vunpack.c.l.b16 %v1223
    %v1359 = vunpack.c.l.b16 %v1224
    %v1360 = vunpack.c.l.b16 %v1225
    %v1361 = vunpack.c.l.b16 %v1226
    %v1362 = vunpack.c.l.b16 %v1227
    %v1363 = vunpack.c.l.b16 %v1228
    %v1364 = vunpack.c.l.b16 %v1229
    %v1365 = vunpack.c.l.b16 %v1230
    %v1366 = vunpack.c.l.b16 %v1231
    %v1367 = vunpack.c.l.b16 %v1232
    %v1368 = vunpack.c.l.b16 %v1233
    %v1369 = vunpack.c.l.b16 %v1234
    %v1370 = vunpack.c.l.b16 %v1235
    %v1371 = vunpack.c.l.b16 %v1236
    %v1372 = vunpack.c.l.b16 %v1237
    %v1373 = vunpack.c.l.b16 %v1238
    %v1374 = vunpack.c.l.b16 %v1239
    %v1375 = vunpack.c.l.b16 %v1240
    %v1376 = vunpack.c.l.b16 %v1241
    %v1377 = vunpack.c.l.b16 %v1242
    %v1378 = vunpack.c.l.b16 %v1243
    %v1379 = vunpack.c.l.b16 %v1244
    %v1380 = vunpack.c.l.b16 %v1245
    %v1381 = vunpack.c.l.b16 %v1246
    %v1382 = vunpack.c.l.b16 %v1247
    %v1383 = vunpack.c.l.b16 %v1248
    %v1384 = vunpack.c.l.b16 %v1249
    %v1385 = vpack.c.b16 %v1322, %v1321
    %v1386 = vpack.c.b16 %v1324, %v1323
    %v1387 = vpack.c.b16 %v1326, %v1325
    %v1388 = vpack.c.b16 %v1328, %v1327
    %v1389 = vpack.c.b16 %v1330, %v1329
    %v1390 = vpack.c.b16 %v1332, %v1331
    %v1391 = vpack.c.b16 %v1334, %v1333
    %v1392 = vpack.c.b16 %v1336, %v1335
    %v1393 = vpack.c.b16 %v1338, %v1337
    %v1394 = vpack.c.b16 %v1340, %v1339
    %v1395 = vpack.c.b16 %v1342, %v1341
    %v1396 = vpack.c.b16 %v1344, %v1343
    %v1397 = vpack.c.b16 %v1346, %v1345
    %v1398 = vpack.c.b16 %v1348, %v1347
    %v1399 = vpack.c.b16 %v1350, %v1349
    %v1400 = vpack.c.b16 %v1352, %v1351
    %v1401 = vpack.c.b16 %v1354, %v1353
    %v1402 = vpack.c.b16 %v1356, %v1355
    %v1403 = vpack.c.b16 %v1358, %v1357
    %v1404 = vpack.c.b16 %v1360, %v1359
    %v1405 = vpack.c.b16 %v1362, %v1361
    %v1406 = vpack.c.b16 %v1364, %v1363
    %v1407 = vpack.c.b16 %v1366, %v1365
    %v1408 = vpack.c.b16 %v1368, %v1367
    %v1409 = vpack.c.b16 %v1370, %v1369
    %v1410 = vpack.c.b16 %v1372, %v1371
    %v1411 = vpack.c.b16 %v1374, %v1373
    %v1412 = vpack.c.b16 %v1376, %v1375
    %v1413 = vpack.c.b16 %v1378, %v1377
    %v1414 = vpack.c.b16 %v1380, %v1379
    %v1415 = vpack.c.b16 %v1382, %v1381
    %v1416 = vpack.c.b16 %v1384, %v1383
    %1449 = vmatprep.subr.bf16.mxu0 0
    %1450 = vmatpush1.bf16.msra.mxu0 %v1392
    %1451 = vmatprep.subr.bf16.mxu0 0
    %1452 = vmatpush1.bf16.msra.mxu0 %v1391
    %1453 = vmatprep.subr.bf16.mxu0 0
    %1454 = vmatpush1.bf16.msra.mxu0 %v1390
    %1455 = vmatprep.subr.bf16.mxu0 0
    %1456 = vmatpush1.bf16.msra.mxu0 %v1389
    %1457 = vmatprep.subr.bf16.mxu0 0
    %1458 = vmatpush1.bf16.msra.mxu0 %v1388
    %1459 = vmatprep.subr.bf16.mxu0 0
    %1460 = vmatpush1.bf16.msra.mxu0 %v1387
    %1461 = vmatprep.subr.bf16.mxu0 0
    %1462 = vmatpush1.bf16.msra.mxu0 %v1386
    %1463 = vmatprep.subr.bf16.mxu0 0
    %1464 = vmatpush1.bf16.msra.mxu0 %v1385
    %1465 = vmatprep.subr.bf16.mxu0 0
    %1466 = vmatpush2.bf16.msra.mxu0 %v1400
    %1467 = vmatprep.subr.bf16.mxu0 0
    %1468 = vmatpush2.bf16.msra.mxu0 %v1399
    %1469 = vmatprep.subr.bf16.mxu0 0
    %1470 = vmatpush2.bf16.msra.mxu0 %v1398
    %1471 = vmatprep.subr.bf16.mxu0 0
    %1472 = vmatpush2.bf16.msra.mxu0 %v1397
    %1473 = vmatprep.subr.bf16.mxu0 0
    %1474 = vmatpush2.bf16.msra.mxu0 %v1396
    %1475 = vmatprep.subr.bf16.mxu0 0
    %1476 = vmatpush2.bf16.msra.mxu0 %v1395
    %1477 = vmatprep.subr.bf16.mxu0 0
    %1478 = vmatpush2.bf16.msra.mxu0 %v1394
    %1479 = vmatprep.subr.bf16.mxu0 0
    %1480 = vmatpush2.bf16.msra.mxu0 %v1393
    %1481 = vmatprep.mubr.bf16.mxu0 %v1183
    %1482 = vmatmul.mubr.bf16.gmra.mxu0 %v1182
    %v1483 = vpop.f32.mrf.mxu0
    %v1484 = vadd.f32 %v1255, %v1483
    %v1485 = vpop.f32.mrf.mxu0
    %v1486 = vpop.f32.mrf.mxu0
    %v1487 = vpop.f32.mrf.mxu0
    %1488 = vdwg.mxu0
    %1489 = vmatprep.subr.bf16.mxu0 0
    %1490 = vmatpush1.bf16.msra.mxu0 %v1408
    %1491 = vmatprep.subr.bf16.mxu0 0
    %1492 = vmatpush1.bf16.msra.mxu0 %v1407
    %1493 = vmatprep.subr.bf16.mxu0 0
    %1494 = vmatpush1.bf16.msra.mxu0 %v1406
    %1495 = vmatprep.subr.bf16.mxu0 0
    %1496 = vmatpush1.bf16.msra.mxu0 %v1405
    %1497 = vmatprep.subr.bf16.mxu0 0
    %1498 = vmatpush1.bf16.msra.mxu0 %v1404
    %1499 = vmatprep.subr.bf16.mxu0 0
    %1500 = vmatpush1.bf16.msra.mxu0 %v1403
    %1501 = vmatprep.subr.bf16.mxu0 0
    %1502 = vmatpush1.bf16.msra.mxu0 %v1402
    %1503 = vmatprep.subr.bf16.mxu0 0
    %1504 = vmatpush1.bf16.msra.mxu0 %v1401
    %1505 = vmatprep.subr.bf16.mxu0 0
    %1506 = vmatpush2.bf16.msra.mxu0 %v1416
    %1507 = vmatprep.subr.bf16.mxu0 0
    %1508 = vmatpush2.bf16.msra.mxu0 %v1415
    %1509 = vmatprep.subr.bf16.mxu0 0
    %1510 = vmatpush2.bf16.msra.mxu0 %v1414
    %1511 = vmatprep.subr.bf16.mxu0 0
    %1512 = vmatpush2.bf16.msra.mxu0 %v1413
    %1513 = vmatprep.subr.bf16.mxu0 0
    %1514 = vmatpush2.bf16.msra.mxu0 %v1412
    %1515 = vmatprep.subr.bf16.mxu0 0
    %1516 = vmatpush2.bf16.msra.mxu0 %v1411
    %1517 = vmatprep.subr.bf16.mxu0 0
    %1518 = vmatpush2.bf16.msra.mxu0 %v1410
    %1519 = vmatprep.subr.bf16.mxu0 0
    %1520 = vmatpush2.bf16.msra.mxu0 %v1409
    %1521 = vmatprep.mubr.bf16.mxu0 %v1185
    %1522 = vmatmul.mubr.bf16.gmra.mxu0 %v1184
    %v1523 = vpop.f32.mrf.mxu0
    %v1524 = vadd.f32 %v1484, %v1523
    %v1525 = vpop.f32.mrf.mxu0
    %v1526 = vpop.f32.mrf.mxu0
    %v1527 = vpop.f32.mrf.mxu0
    %1528 = vdwg.mxu0
    %1529 = vmax.xlane.f32.xlu0 %v1524
    %v1530 = vpop.xlane.xlu0 %1529
    %v1531 = vsub.f32 %v1524, %v1530
    %v1532 = vmul.f32 %v1531, 1.442695
    %v1533 = vpow.pop %v1532
    %1534 = vadd.xlane.f32.xlu0 %v1533
    %v1535 = vpop.xlane.xlu0 %1534
    %v1536 = vlog2.pop %v1535
    %v1537 = vmul.f32 %v1536, 0.6931472
    %v1538 = vsub.f32 %v1531, %v1537
    %1539 = vst [vmem:[#allocation2] sm:$0xff] %v1538
    // Predicated region
    $region22: #{net_forward.7} parent=1 // pred_check
      _
    $region23: #{net_forward.7} parent=1 // pred_check_branch
      %1541 = sbr.rel (0) target = $region25
    $region24: #{net_forward.7} parent=1 // pred_region
      %s1543 = ssub.s32 128, 128
      %1544 = vsyncadd [#allocation3], %s1543
      %s1546 = sshll.u32 [#allocation2], 4
      %s1547 = int_to_ptr.vmem [resolvable:$true] %s1546
      %1549 = dma.vmem_to_hbm [thread:$0]  %s1547, 128, %s5, [#allocation3]
    $region25: #{net_forward.7} parent=1 // pred_fallthru
      _
    // Predicated region
    $region26: #{net_forward.7} parent=1 // pred_check
      _
    $region27: #{net_forward.7} parent=1 // pred_check_branch
      %1551 = sbr.rel (0) target = $region29
    $region28: #{net_forward.7} parent=1 // pred_region
      %1552 = dma.done [#allocation3], 128
    $region29: #{net_forward.7} parent=1 // pred_fallthru
      _
    %1553 = vsyncpa [#allocation3], 1

</llo_original>
